<compile_context>
chip_gen: v5e
topology: v5e:2x2
jax: 0.10.0
libtpu: 0.0.40
codegen_flags: <defaults>
</compile_context>

<pallas_src>
import functools

import numpy as np
import jax
import jax.numpy as jnp
from jax.experimental import pallas as pl
from jax.experimental.pallas import tpu as pltpu

BN_EPS = 1e-5


def _round_up(x, m):
    return (x + m - 1) // m * m


# ----------------------------------------------------------------------------
# Pallas kernels
# ----------------------------------------------------------------------------
def _gemm_bias_act_kernel(x_ref, w_ref, b_ref, o_ref, acc_ref, *, act):
    """Tiled GEMM: o = act(x @ w + b), f32 accumulate over the K grid axis."""
    @pl.when(pl.program_id(2) == 0)
    def _init():
        acc_ref[...] = jnp.zeros_like(acc_ref)

    acc_ref[...] += jnp.dot(x_ref[...], w_ref[...],
                            preferred_element_type=jnp.float32)

    @pl.when(pl.program_id(2) == pl.num_programs(2) - 1)
    def _finalize():
        y = acc_ref[...] + b_ref[...]
        if act == "relu":
            y = jnp.maximum(y, 0.0)
        elif act == "tanh_clamp":
            # x = tanh(x / 100) * 45 ; clamp(x, 0, 45)
            y = jnp.clip(jnp.tanh(y * (1.0 / 100.0)) * 45.0, 0.0, 45.0)
        o_ref[...] = y.astype(o_ref.dtype)


def _maxpool_kernel(x_ref, o_ref, *, c):
    """2x2/s2 max pool; input pre-reshaped to (1, Ho, 2, Wo, 2*C).

    Only leading-dim indexing, static lane slices and element-wise maxes are
    used, and the result is written with one dense store."""
    h0 = x_ref[0, :, 0]                      # (Ho, Wo, 2C)
    h1 = x_ref[0, :, 1]
    m = jnp.maximum(h0, h1)
    o_ref[0] = jnp.maximum(m[..., :c], m[..., c:])


def _fc_chain_kernel(x_ref, w1_ref, b1_ref, w2_ref, b2_ref, w3_ref, b3_ref,
                     w4_ref, b4_ref, w5_ref, b5_ref, o_ref):
    """fc1..fc5 fused: all weights stay VMEM-resident, f32 epilogues."""
    def layer(h, w_ref, b_ref, relu=True):
        y = jnp.dot(h, w_ref[...], preferred_element_type=jnp.float32)
        y = y + b_ref[...]
        if relu:
            return jnp.maximum(y, 0.0).astype(jnp.bfloat16)
        return y

    h = x_ref[...]
    h = layer(h, w1_ref, b1_ref)
    h = layer(h, w2_ref, b2_ref)
    h = layer(h, w3_ref, b3_ref)
    h = layer(h, w4_ref, b4_ref)
    y = layer(h, w5_ref, b5_ref, relu=False)
    y = jnp.clip(jnp.tanh(y * (1.0 / 100.0)) * 45.0, 0.0, 45.0)
    o_ref[...] = y.astype(o_ref.dtype)


# ----------------------------------------------------------------------------
# Kernel wrappers
# ----------------------------------------------------------------------------
def _gemm_bias_act(x, w, b, *, n_out, act, out_dtype):
    """act(x @ w + b)[:, :n_out].  x:(M,K); w:(Kp,Np) bf16 zero-padded;
    b:(1,Np) f32.  Grid over (M, N, K) tiles with a f32 accumulator."""
    m, k = x.shape
    kp, np_ = w.shape

    x = x.astype(jnp.bfloat16)
    if kp != k:
        x = jnp.pad(x, ((0, 0), (0, kp - k)))

    # K tiling: single block when it comfortably fits VMEM, 512-wide otherwise
    # (the real fc1 / big-image convs hit this path).
    if kp <= 1536:
        tile_k = kp
    else:
        tile_k = 512
        kp2 = _round_up(kp, tile_k)
        if kp2 != kp:
            x = jnp.pad(x, ((0, 0), (0, kp2 - kp)))
            w = jnp.pad(w, ((0, kp2 - kp), (0, 0)))
            kp = kp2

    tile_m = min(512, _round_up(max(m, 16), 16))
    mp = _round_up(m, tile_m)
    if mp != m:
        x = jnp.pad(x, ((0, mp - m), (0, 0)))

    tile_n = 256 if (np_ > 128 and np_ % 256 == 0) else 128

    grid = (mp // tile_m, np_ // tile_n, kp // tile_k)
    flops = 2 * mp * np_ * kp
    bytes_accessed = ((x.size + w.size) * 2 + b.size * 4
                      + mp * np_ * np.dtype(out_dtype).itemsize)

    out = pl.pallas_call(
        functools.partial(_gemm_bias_act_kernel, act=act),
        grid=grid,
        in_specs=[
            pl.BlockSpec((tile_m, tile_k), lambda i, j, kk: (i, kk)),
            pl.BlockSpec((tile_k, tile_n), lambda i, j, kk: (kk, j)),
            pl.BlockSpec((1, tile_n), lambda i, j, kk: (0, j)),
        ],
        out_specs=pl.BlockSpec((tile_m, tile_n), lambda i, j, kk: (i, j)),
        out_shape=jax.ShapeDtypeStruct((mp, np_), out_dtype),
        scratch_shapes=[pltpu.VMEM((tile_m, tile_n), jnp.float32)],
        compiler_params=pltpu.CompilerParams(
            dimension_semantics=("parallel", "parallel", "arbitrary"),
            vmem_limit_bytes=32 * 1024 * 1024),
        cost_estimate=pl.CostEstimate(flops=flops, transcendentals=0,
                                      bytes_accessed=bytes_accessed),
    )(x, w, b)
    return out[:m, :n_out]


def _im2col(x, kh, kw, stride, pad):
    """Patch-matrix extraction in XLA (pure data movement), bf16 in/out."""
    # TODO(synk): move this into the conv GEMM kernel (VMEM halo DMA) to avoid
    # the kh*kw HBM expansion of the patch matrix.
    x = jnp.pad(x, ((0, 0), (pad, pad), (pad, pad), (0, 0)))
    n, hp, wp, c = x.shape
    ho = (hp - kh) // stride + 1
    wo = (wp - kw) // stride + 1
    cols = []
    for i in range(kh):
        for j in range(kw):
            cols.append(x[:, i:i + stride * (ho - 1) + 1:stride,
                          j:j + stride * (wo - 1) + 1:stride, :])
    patches = jnp.concatenate(cols, axis=-1)          # (N, Ho, Wo, KH*KW*C)
    return patches.reshape(n * ho * wo, kh * kw * c), (n, ho, wo)


def _conv_layer(x, p, *, n_out, ksz, stride, pad):
    patches, (n, ho, wo) = _im2col(x, ksz, ksz, stride, pad)
    y = _gemm_bias_act(patches, p["w"], p["b"], n_out=n_out,
                       act="relu", out_dtype=jnp.bfloat16)
    return y.reshape(n, ho, wo, n_out)


def _maxpool_2x2_s2_p1(x):
    """PyTorch MaxPool2d(kernel=2, stride=2, padding=1) on NHWC input."""
    n, h, w, c = x.shape
    ho, wo = h // 2 + 1, w // 2 + 1
    xp = jnp.pad(x, ((0, 0), (1, 1), (1, 1), (0, 0)),
                 constant_values=float("-inf"))
    xp = xp[:, :2 * ho, :2 * wo, :]
    xr = xp.reshape(n, ho, 2, wo, 2 * c)              # expose the 2x2 windows
    return pl.pallas_call(
        functools.partial(_maxpool_kernel, c=c),
        grid=(n,),
        in_specs=[pl.BlockSpec((1, ho, 2, wo, 2 * c),
                               lambda i: (i, 0, 0, 0, 0))],
        out_specs=pl.BlockSpec((1, ho, wo, c), lambda i: (i, 0, 0, 0)),
        out_shape=jax.ShapeDtypeStruct((n, ho, wo, c), x.dtype),
        compiler_params=pltpu.CompilerParams(
            dimension_semantics=("parallel",),
            vmem_limit_bytes=32 * 1024 * 1024),
    )(xr)


def _fc_head(x_flat, fc):
    """Fused fc1..fc5 (+ReLUs, tanh/clamp head) in one Pallas kernel."""
    n, d = x_flat.shape
    d1p = fc["w1"].shape[0]
    n_out_p = fc["w5"].shape[1]

    x = x_flat.astype(jnp.bfloat16)
    if d1p != d:
        x = jnp.pad(x, ((0, 0), (0, d1p - d)))
    nb = _round_up(max(n, 16), 16)
    tile_b = nb if nb <= 128 else 128
    nbp = _round_up(nb, tile_b)
    if nbp != n:
        x = jnp.pad(x, ((0, nbp - n), (0, 0)))

    def full(a):
        return pl.BlockSpec(a.shape, lambda i: (0, 0))

    out = pl.pallas_call(
        _fc_chain_kernel,
        grid=(nbp // tile_b,),
        in_specs=[pl.BlockSpec((tile_b, d1p), lambda i: (i, 0)),
                  full(fc["w1"]), full(fc["b1"]),
                  full(fc["w2"]), full(fc["b2"]),
                  full(fc["w3"]), full(fc["b3"]),
                  full(fc["w4"]), full(fc["b4"]),
                  full(fc["w5"]), full(fc["b5"])],
        out_specs=pl.BlockSpec((tile_b, n_out_p), lambda i: (i, 0)),
        out_shape=jax.ShapeDtypeStruct((nbp, n_out_p), jnp.float32),
        compiler_params=pltpu.CompilerParams(
            dimension_semantics=("parallel",),
            vmem_limit_bytes=32 * 1024 * 1024),
    )(x, fc["w1"], fc["b1"], fc["w2"], fc["b2"], fc["w3"], fc["b3"],
      fc["w4"], fc["b4"], fc["w5"], fc["b5"])
    return out[:n, :1]


# ----------------------------------------------------------------------------
# Parameters (kaiming-normal weights, zero biases, eval-mode BatchNorm folded,
# kernel-ready layout: bf16, K/N zero-padded to multiples of 128)
# ----------------------------------------------------------------------------
def init_params(input_channels, feat_h, feat_w):
    key = jax.random.PRNGKey(0)
    ks = jax.random.split(key, 10)
    bn_scale = float(1.0 / np.sqrt(1.0 + BN_EPS))

    def conv_p(k, cin, cout, ksz):
        fan_in = cin * ksz * ksz
        w = jax.random.normal(k, (ksz, ksz, cin, cout), jnp.float32)
        w = w * np.sqrt(2.0 / fan_in)
        # Fold eval-mode BatchNorm (mean 0, var 1, gamma 1, beta 0) into w.
        w = (w * bn_scale).reshape(fan_in, cout)
        kp, np_ = _round_up(fan_in, 128), _round_up(cout, 128)
        w = jnp.pad(w, ((0, kp - fan_in), (0, np_ - cout)))
        return dict(w=w.astype(jnp.bfloat16),
                    b=jnp.zeros((1, np_), jnp.float32))

    def fc_w(k, din, dout):
        # torch Linear weight is (out, in); we build (in, out) == weight.T with
        # the same kaiming_normal std (gain sqrt(2), fan_in = in).
        return jax.random.normal(k, (din, dout), jnp.float32) * np.sqrt(2.0 / din)

    fc1_in = 64 * feat_h * feat_w      # module hardcodes 60352 at full size
    d1p, h1p = _round_up(fc1_in, 128), _round_up(1164, 128)

    w1 = fc_w(ks[5], fc1_in, 1164)
    # Bake torch.flatten's NCHW ordering into fc1 so the kernel consumes the
    # NHWC-flattened conv5 activation directly (no runtime transpose).
    nchw = np.arange(fc1_in).reshape(64, feat_h, feat_w)
    perm = nchw.transpose(1, 2, 0).reshape(-1)
    w1 = jnp.pad(w1[perm, :], ((0, d1p - fc1_in), (0, h1p - 1164)))

    def fc_pad(k, din, dout, dinp, doutp):
        w = jnp.pad(fc_w(k, din, dout), ((0, dinp - din), (0, doutp - dout)))
        return w.astype(jnp.bfloat16), jnp.zeros((1, doutp), jnp.float32)

    w2, b2 = fc_pad(ks[6], 1164, 100, h1p, 128)
    w3, b3 = fc_pad(ks[7], 100, 50, 128, 128)
    w4, b4 = fc_pad(ks[8], 50, 10, 128, 128)
    w5, b5 = fc_pad(ks[9], 10, 1, 128, 128)

    fc = dict(w1=w1.astype(jnp.bfloat16), b1=jnp.zeros((1, h1p), jnp.float32),
              w2=w2, b2=b2, w3=w3, b3=b3, w4=w4, b4=b4, w5=w5, b5=b5)

    return dict(
        conv1=conv_p(ks[0], input_channels, 24, 5),
        conv2=conv_p(ks[1], 24, 36, 5),
        conv3=conv_p(ks[2], 36, 48, 5),
        conv4=conv_p(ks[3], 48, 64, 3),
        conv5=conv_p(ks[4], 64, 64, 3),
        fc=fc,
    )


# ----------------------------------------------------------------------------
# Full forward pass
# ----------------------------------------------------------------------------
@jax.jit
def cnn_forward(images_nchw, params):
    # NCHW -> NHWC once; bf16 activations feed the MXU (f32 accumulate/epilogue).
    x = jnp.transpose(images_nchw, (0, 2, 3, 1)).astype(jnp.bfloat16)

    x = _conv_layer(x, params["conv1"], n_out=24, ksz=5, stride=2, pad=2)
    x = _conv_layer(x, params["conv2"], n_out=36, ksz=5, stride=2, pad=2)
    x = _conv_layer(x, params["conv3"], n_out=48, ksz=5, stride=2, pad=2)
    x = _maxpool_2x2_s2_p1(x)
    x = _conv_layer(x, params["conv4"], n_out=64, ksz=3, stride=1, pad=1)
    x = _conv_layer(x, params["conv5"], n_out=64, ksz=3, stride=1, pad=1)

    n = x.shape[0]
    x = x.reshape(n, -1)     # NHWC flatten; NCHW ordering is baked into fc1.
    # Dropout(p=0.5): inference-mode identity.
    return _fc_head(x, params["fc"])   # (N, 1)


if __name__ == "__main__":
    batch, channels, height, width = 2, 3, 32, 32

    # Spatial trace for 32x32 input: 32 -> 16 -> 8 -> 4 -> pool 3 -> 3 -> 3,
    # 64 channels => flatten 64*3*3 = 576 features feeding fc1.
    feat_h = feat_w = 3

    key = jax.random.PRNGKey(0)
    images = jax.random.normal(key, (batch, channels, height, width),
                               jnp.float32)
    params = init_params(channels, feat_h, feat_w)

    out = jax.block_until_ready(cnn_forward(images, params))
    assert out.shape == (batch, 1), out.shape
    assert bool(jnp.all(jnp.isfinite(out)))
    assert bool(jnp.all((out >= 0.0) & (out <= 45.0)))
    print("KERNEL_OK")
</pallas_src>

<mosaic_0001>
module attributes {stable_mosaic.version = 11 : i64} {
  func.func @_gemm_bias_act_kernel(%arg0: i32, %arg1: i32, %arg2: i32, %arg3: memref<512x128xbf16, #tpu.memory_space<vmem>>, %arg4: memref<128x128xbf16, #tpu.memory_space<vmem>>, %arg5: memref<1x128xf32, #tpu.memory_space<vmem>>, %arg6: memref<512x128xbf16, #tpu.memory_space<vmem>>, %arg7: memref<512x128xf32, #tpu.memory_space<vmem>>) attributes {dimension_semantics = [#tpu.dimension_semantics<parallel>, #tpu.dimension_semantics<parallel>, #tpu.dimension_semantics<arbitrary>], iteration_bounds = array<i64: 1, 1, 1>, scalar_prefetch = 0 : i64, scratch_operands = 1 : i64, tpu.core_type = #tpu.core_type<tc>, window_params = [{transform_indices = @transform_0, window_bounds = array<i64: 512, 128>}, {transform_indices = @transform_1, window_bounds = array<i64: 128, 128>}, {transform_indices = @transform_2, window_bounds = array<i64: 1, 128>}, {transform_indices = @transform_3, window_bounds = array<i64: 512, 128>}]} {
    %c0_i32 = arith.constant 0 : i32
    %0 = arith.cmpi eq, %arg2, %c0_i32 : i32
    %1 = arith.extui %0 : i1 to i32
    %c0_i32_0 = arith.constant 0 : i32
    %2 = arith.cmpi ne, %1, %c0_i32_0 : i32
    scf.if %2 {
      %cst_10 = arith.constant 0.000000e+00 : f32
      %12 = vector.broadcast %cst_10 : f32 to vector<512x128xf32>
      %c0_11 = arith.constant 0 : index
      %c0_12 = arith.constant 0 : index
      %13 = vector.load %arg7[%c0_11, %c0_12] : memref<512x128xf32, #tpu.memory_space<vmem>>, vector<512x128xf32>
      tpu.vector_store %arg7[%c0_11, %c0_12], %12 {strides = array<i32>} : memref<512x128xf32, #tpu.memory_space<vmem>>, vector<512x128xf32>,
    } else {
    }
    %c0 = arith.constant 0 : index
    %c0_1 = arith.constant 0 : index
    %3 = vector.load %arg7[%c0, %c0_1] : memref<512x128xf32, #tpu.memory_space<vmem>>, vector<512x128xf32>
    %c0_2 = arith.constant 0 : index
    %c0_3 = arith.constant 0 : index
    %4 = vector.load %arg3[%c0_2, %c0_3] : memref<512x128xbf16, #tpu.memory_space<vmem>>, vector<512x128xbf16>
    %c0_4 = arith.constant 0 : index
    %c0_5 = arith.constant 0 : index
    %5 = vector.load %arg4[%c0_4, %c0_5] : memref<128x128xbf16, #tpu.memory_space<vmem>>, vector<128x128xbf16>
    %cst = arith.constant dense<0.000000e+00> : vector<512x128xf32>
    %6 = tpu.matmul %4, %5, %cst {dimension_numbers = #tpu.dot_dimension_numbers<[1], [0], [0], [1], [0, 0, 1, 1], [], []>} : vector<512x128xbf16>, vector<128x128xbf16>, vector<512x128xf32> -> vector<512x128xf32>
    %7 = arith.addf %3, %6 : vector<512x128xf32>
    %c0_6 = arith.constant 0 : index
    %c0_7 = arith.constant 0 : index
    %8 = vector.load %arg7[%c0_6, %c0_7] : memref<512x128xf32, #tpu.memory_space<vmem>>, vector<512x128xf32>
    tpu.vector_store %arg7[%c0_6, %c0_7], %7 {strides = array<i32>} : memref<512x128xf32, #tpu.memory_space<vmem>>, vector<512x128xf32>,
    %c0_i32_8 = arith.constant 0 : i32
    %9 = arith.cmpi eq, %arg2, %c0_i32_8 : i32
    %10 = arith.extui %9 : i1 to i32
    %c0_i32_9 = arith.constant 0 : i32
    %11 = arith.cmpi ne, %10, %c0_i32_9 : i32
    scf.if %11 {
      %c0_10 = arith.constant 0 : index
      %c0_11 = arith.constant 0 : index
      %12 = vector.load %arg7[%c0_10, %c0_11] : memref<512x128xf32, #tpu.memory_space<vmem>>, vector<512x128xf32>
      %c0_12 = arith.constant 0 : index
      %c0_13 = arith.constant 0 : index
      %13 = vector.load %arg5[%c0_12, %c0_13] : memref<1x128xf32, #tpu.memory_space<vmem>>, vector<1x128xf32>
      %14 = vector.broadcast %13 : vector<1x128xf32> to vector<512x128xf32>
      %15 = arith.addf %12, %14 : vector<512x128xf32>
      %cst_14 = arith.constant 0.000000e+00 : f32
      %16 = vector.broadcast %cst_14 : f32 to vector<512x128xf32>
      %17 = arith.maximumf %15, %16 : vector<512x128xf32>
      %18 = arith.truncf %17 : vector<512x128xf32> to vector<512x128xbf16>
      %c0_15 = arith.constant 0 : index
      %c0_16 = arith.constant 0 : index
      %19 = vector.load %arg6[%c0_15, %c0_16] : memref<512x128xbf16, #tpu.memory_space<vmem>>, vector<512x128xbf16>
      tpu.vector_store %arg6[%c0_15, %c0_16], %18 {strides = array<i32>} : memref<512x128xbf16, #tpu.memory_space<vmem>>, vector<512x128xbf16>,
    } else {
    }
    return
  }
  func.func @transform_0(%arg0: i32, %arg1: i32, %arg2: i32) -> (i32, i32) {
    %c0_i32 = arith.constant 0 : i32
    return %arg0, %arg2 : i32, i32
  }
  func.func @transform_1(%arg0: i32, %arg1: i32, %arg2: i32) -> (i32, i32) {
    %c0_i32 = arith.constant 0 : i32
    return %arg2, %arg1 : i32, i32
  }
  func.func @transform_2(%arg0: i32, %arg1: i32, %arg2: i32) -> (i32, i32) {
    %c0_i32 = arith.constant 0 : i32
    %c0_i32_0 = arith.constant 0 : i32
    return %c0_i32, %arg1 : i32, i32
  }
  func.func @transform_3(%arg0: i32, %arg1: i32, %arg2: i32) -> (i32, i32) {
    %c0_i32 = arith.constant 0 : i32
    return %arg0, %arg1 : i32, i32
  }
}

module attributes {stable_mosaic.version = 11 : i64} {
  func.func @_gemm_bias_act_kernel(%arg0: i32, %arg1: i32, %arg2: i32, %arg3: memref<128x640xbf16, #tpu.memory_space<vmem>>, %arg4: memref<640x128xbf16, #tpu.memory_space<vmem>>, %arg5: memref<1x128xf32, #tpu.memory_space<vmem>>, %arg6: memref<128x128xbf16, #tpu.memory_space<vmem>>, %arg7: memref<128x128xf32, #tpu.memory_space<vmem>>) attributes {dimension_semantics = [#tpu.dimension_semantics<parallel>, #tpu.dimension_semantics<parallel>, #tpu.dimension_semantics<arbitrary>], iteration_bounds = array<i64: 1, 1, 1>, scalar_prefetch = 0 : i64, scratch_operands = 1 : i64, tpu.core_type = #tpu.core_type<tc>, window_params = [{transform_indices = @transform_0, window_bounds = array<i64: 128, 640>}, {transform_indices = @transform_1, window_bounds = array<i64: 640, 128>}, {transform_indices = @transform_2, window_bounds = array<i64: 1, 128>}, {transform_indices = @transform_3, window_bounds = array<i64: 128, 128>}]} {
    %c0_i32 = arith.constant 0 : i32
    %0 = arith.cmpi eq, %arg2, %c0_i32 : i32
    %1 = arith.extui %0 : i1 to i32
    %c0_i32_0 = arith.constant 0 : i32
    %2 = arith.cmpi ne, %1, %c0_i32_0 : i32
    scf.if %2 {
      %cst_10 = arith.constant 0.000000e+00 : f32
      %12 = vector.broadcast %cst_10 : f32 to vector<128x128xf32>
      %c0_11 = arith.constant 0 : index
      %c0_12 = arith.constant 0 : index
      %13 = vector.load %arg7[%c0_11, %c0_12] : memref<128x128xf32, #tpu.memory_space<vmem>>, vector<128x128xf32>
      tpu.vector_store %arg7[%c0_11, %c0_12], %12 {strides = array<i32>} : memref<128x128xf32, #tpu.memory_space<vmem>>, vector<128x128xf32>,
    } else {
    }
    %c0 = arith.constant 0 : index
    %c0_1 = arith.constant 0 : index
    %3 = vector.load %arg7[%c0, %c0_1] : memref<128x128xf32, #tpu.memory_space<vmem>>, vector<128x128xf32>
    %c0_2 = arith.constant 0 : index
    %c0_3 = arith.constant 0 : index
    %4 = vector.load %arg3[%c0_2, %c0_3] : memref<128x640xbf16, #tpu.memory_space<vmem>>, vector<128x640xbf16>
    %c0_4 = arith.constant 0 : index
    %c0_5 = arith.constant 0 : index
    %5 = vector.load %arg4[%c0_4, %c0_5] : memref<640x128xbf16, #tpu.memory_space<vmem>>, vector<640x128xbf16>
    %cst = arith.constant dense<0.000000e+00> : vector<128x128xf32>
    %6 = tpu.matmul %4, %5, %cst {dimension_numbers = #tpu.dot_dimension_numbers<[1], [0], [0], [1], [0, 0, 1, 1], [], []>} : vector<128x640xbf16>, vector<640x128xbf16>, vector<128x128xf32> -> vector<128x128xf32>
    %7 = arith.addf %3, %6 : vector<128x128xf32>
    %c0_6 = arith.constant 0 : index
    %c0_7 = arith.constant 0 : index
    %8 = vector.load %arg7[%c0_6, %c0_7] : memref<128x128xf32, #tpu.memory_space<vmem>>, vector<128x128xf32>
    tpu.vector_store %arg7[%c0_6, %c0_7], %7 {strides = array<i32>} : memref<128x128xf32, #tpu.memory_space<vmem>>, vector<128x128xf32>,
    %c0_i32_8 = arith.constant 0 : i32
    %9 = arith.cmpi eq, %arg2, %c0_i32_8 : i32
    %10 = arith.extui %9 : i1 to i32
    %c0_i32_9 = arith.constant 0 : i32
    %11 = arith.cmpi ne, %10, %c0_i32_9 : i32
    scf.if %11 {
      %c0_10 = arith.constant 0 : index
      %c0_11 = arith.constant 0 : index
      %12 = vector.load %arg7[%c0_10, %c0_11] : memref<128x128xf32, #tpu.memory_space<vmem>>, vector<128x128xf32>
      %c0_12 = arith.constant 0 : index
      %c0_13 = arith.constant 0 : index
      %13 = vector.load %arg5[%c0_12, %c0_13] : memref<1x128xf32, #tpu.memory_space<vmem>>, vector<1x128xf32>
      %14 = vector.broadcast %13 : vector<1x128xf32> to vector<128x128xf32>
      %15 = arith.addf %12, %14 : vector<128x128xf32>
      %cst_14 = arith.constant 0.000000e+00 : f32
      %16 = vector.broadcast %cst_14 : f32 to vector<128x128xf32>
      %17 = arith.maximumf %15, %16 : vector<128x128xf32>
      %18 = arith.truncf %17 : vector<128x128xf32> to vector<128x128xbf16>
      %c0_15 = arith.constant 0 : index
      %c0_16 = arith.constant 0 : index
      %19 = vector.load %arg6[%c0_15, %c0_16] : memref<128x128xbf16, #tpu.memory_space<vmem>>, vector<128x128xbf16>
      tpu.vector_store %arg6[%c0_15, %c0_16], %18 {strides = array<i32>} : memref<128x128xbf16, #tpu.memory_space<vmem>>, vector<128x128xbf16>,
    } else {
    }
    return
  }
  func.func @transform_0(%arg0: i32, %arg1: i32, %arg2: i32) -> (i32, i32) {
    %c0_i32 = arith.constant 0 : i32
    return %arg0, %arg2 : i32, i32
  }
  func.func @transform_1(%arg0: i32, %arg1: i32, %arg2: i32) -> (i32, i32) {
    %c0_i32 = arith.constant 0 : i32
    return %arg2, %arg1 : i32, i32
  }
  func.func @transform_2(%arg0: i32, %arg1: i32, %arg2: i32) -> (i32, i32) {
    %c0_i32 = arith.constant 0 : i32
    %c0_i32_0 = arith.constant 0 : i32
    return %c0_i32, %arg1 : i32, i32
  }
  func.func @transform_3(%arg0: i32, %arg1: i32, %arg2: i32) -> (i32, i32) {
    %c0_i32 = arith.constant 0 : i32
    return %arg0, %arg1 : i32, i32
  }
}

module attributes {stable_mosaic.version = 11 : i64} {
  func.func @_gemm_bias_act_kernel(%arg0: i32, %arg1: i32, %arg2: i32, %arg3: memref<32x1024xbf16, #tpu.memory_space<vmem>>, %arg4: memref<1024x128xbf16, #tpu.memory_space<vmem>>, %arg5: memref<1x128xf32, #tpu.memory_space<vmem>>, %arg6: memref<32x128xbf16, #tpu.memory_space<vmem>>, %arg7: memref<32x128xf32, #tpu.memory_space<vmem>>) attributes {dimension_semantics = [#tpu.dimension_semantics<parallel>, #tpu.dimension_semantics<parallel>, #tpu.dimension_semantics<arbitrary>], iteration_bounds = array<i64: 1, 1, 1>, scalar_prefetch = 0 : i64, scratch_operands = 1 : i64, tpu.core_type = #tpu.core_type<tc>, window_params = [{transform_indices = @transform_0, window_bounds = array<i64: 32, 1024>}, {transform_indices = @transform_1, window_bounds = array<i64: 1024, 128>}, {transform_indices = @transform_2, window_bounds = array<i64: 1, 128>}, {transform_indices = @transform_3, window_bounds = array<i64: 32, 128>}]} {
    %c0_i32 = arith.constant 0 : i32
    %0 = arith.cmpi eq, %arg2, %c0_i32 : i32
    %1 = arith.extui %0 : i1 to i32
    %c0_i32_0 = arith.constant 0 : i32
    %2 = arith.cmpi ne, %1, %c0_i32_0 : i32
    scf.if %2 {
      %cst_10 = arith.constant 0.000000e+00 : f32
      %12 = vector.broadcast %cst_10 : f32 to vector<32x128xf32>
      %c0_11 = arith.constant 0 : index
      %c0_12 = arith.constant 0 : index
      %13 = vector.load %arg7[%c0_11, %c0_12] : memref<32x128xf32, #tpu.memory_space<vmem>>, vector<32x128xf32>
      tpu.vector_store %arg7[%c0_11, %c0_12], %12 {strides = array<i32>} : memref<32x128xf32, #tpu.memory_space<vmem>>, vector<32x128xf32>,
    } else {
    }
    %c0 = arith.constant 0 : index
    %c0_1 = arith.constant 0 : index
    %3 = vector.load %arg7[%c0, %c0_1] : memref<32x128xf32, #tpu.memory_space<vmem>>, vector<32x128xf32>
    %c0_2 = arith.constant 0 : index
    %c0_3 = arith.constant 0 : index
    %4 = vector.load %arg3[%c0_2, %c0_3] : memref<32x1024xbf16, #tpu.memory_space<vmem>>, vector<32x1024xbf16>
    %c0_4 = arith.constant 0 : index
    %c0_5 = arith.constant 0 : index
    %5 = vector.load %arg4[%c0_4, %c0_5] : memref<1024x128xbf16, #tpu.memory_space<vmem>>, vector<1024x128xbf16>
    %cst = arith.constant dense<0.000000e+00> : vector<32x128xf32>
    %6 = tpu.matmul %4, %5, %cst {dimension_numbers = #tpu.dot_dimension_numbers<[1], [0], [0], [1], [0, 0, 1, 1], [], []>} : vector<32x1024xbf16>, vector<1024x128xbf16>, vector<32x128xf32> -> vector<32x128xf32>
    %7 = arith.addf %3, %6 : vector<32x128xf32>
    %c0_6 = arith.constant 0 : index
    %c0_7 = arith.constant 0 : index
    %8 = vector.load %arg7[%c0_6, %c0_7] : memref<32x128xf32, #tpu.memory_space<vmem>>, vector<32x128xf32>
    tpu.vector_store %arg7[%c0_6, %c0_7], %7 {strides = array<i32>} : memref<32x128xf32, #tpu.memory_space<vmem>>, vector<32x128xf32>,
    %c0_i32_8 = arith.constant 0 : i32
    %9 = arith.cmpi eq, %arg2, %c0_i32_8 : i32
    %10 = arith.extui %9 : i1 to i32
    %c0_i32_9 = arith.constant 0 : i32
    %11 = arith.cmpi ne, %10, %c0_i32_9 : i32
    scf.if %11 {
      %c0_10 = arith.constant 0 : index
      %c0_11 = arith.constant 0 : index
      %12 = vector.load %arg7[%c0_10, %c0_11] : memref<32x128xf32, #tpu.memory_space<vmem>>, vector<32x128xf32>
      %c0_12 = arith.constant 0 : index
      %c0_13 = arith.constant 0 : index
      %13 = vector.load %arg5[%c0_12, %c0_13] : memref<1x128xf32, #tpu.memory_space<vmem>>, vector<1x128xf32>
      %14 = vector.broadcast %13 : vector<1x128xf32> to vector<32x128xf32>
      %15 = arith.addf %12, %14 : vector<32x128xf32>
      %cst_14 = arith.constant 0.000000e+00 : f32
      %16 = vector.broadcast %cst_14 : f32 to vector<32x128xf32>
      %17 = arith.maximumf %15, %16 : vector<32x128xf32>
      %18 = arith.truncf %17 : vector<32x128xf32> to vector<32x128xbf16>
      %c0_15 = arith.constant 0 : index
      %c0_16 = arith.constant 0 : index
      %19 = vector.load %arg6[%c0_15, %c0_16] : memref<32x128xbf16, #tpu.memory_space<vmem>>, vector<32x128xbf16>
      tpu.vector_store %arg6[%c0_15, %c0_16], %18 {strides = array<i32>} : memref<32x128xbf16, #tpu.memory_space<vmem>>, vector<32x128xbf16>,
    } else {
    }
    return
  }
  func.func @transform_0(%arg0: i32, %arg1: i32, %arg2: i32) -> (i32, i32) {
    %c0_i32 = arith.constant 0 : i32
    return %arg0, %arg2 : i32, i32
  }
  func.func @transform_1(%arg0: i32, %arg1: i32, %arg2: i32) -> (i32, i32) {
    %c0_i32 = arith.constant 0 : i32
    return %arg2, %arg1 : i32, i32
  }
  func.func @transform_2(%arg0: i32, %arg1: i32, %arg2: i32) -> (i32, i32) {
    %c0_i32 = arith.constant 0 : i32
    %c0_i32_0 = arith.constant 0 : i32
    return %c0_i32, %arg1 : i32, i32
  }
  func.func @transform_3(%arg0: i32, %arg1: i32, %arg2: i32) -> (i32, i32) {
    %c0_i32 = arith.constant 0 : i32
    return %arg0, %arg1 : i32, i32
  }
}

module attributes {stable_mosaic.version = 11 : i64} {
  func.func @_maxpool_kernel(%arg0: i32, %arg1: memref<1x3x2x3x96xbf16, #tpu.memory_space<vmem>>, %arg2: memref<1x3x3x48xbf16, #tpu.memory_space<vmem>>) attributes {dimension_semantics = [#tpu.dimension_semantics<parallel>], iteration_bounds = array<i64: 2>, scalar_prefetch = 0 : i64, scratch_operands = 0 : i64, tpu.core_type = #tpu.core_type<tc>, window_params = [{transform_indices = @transform_0, window_bounds = array<i64: 1, 3, 2, 3, 96>}, {transform_indices = @transform_1, window_bounds = array<i64: 1, 3, 3, 48>}]} {
    %c0 = arith.constant 0 : index
    %c0_0 = arith.constant 0 : index
    %c0_1 = arith.constant 0 : index
    %c0_2 = arith.constant 0 : index
    %c0_3 = arith.constant 0 : index
    %0 = vector.load %arg1[%c0, %c0_0, %c0_1, %c0_2, %c0_3] : memref<1x3x2x3x96xbf16, #tpu.memory_space<vmem>>, vector<1x3x1x3x96xbf16>
    %1 = vector.shape_cast %0 : vector<1x3x1x3x96xbf16> to vector<3x3x96xbf16>
    %c0_4 = arith.constant 0 : index
    %c0_5 = arith.constant 0 : index
    %c1 = arith.constant 1 : index
    %c0_6 = arith.constant 0 : index
    %c0_7 = arith.constant 0 : index
    %2 = vector.load %arg1[%c0_4, %c0_5, %c1, %c0_6, %c0_7] : memref<1x3x2x3x96xbf16, #tpu.memory_space<vmem>>, vector<1x3x1x3x96xbf16>
    %3 = vector.shape_cast %2 : vector<1x3x1x3x96xbf16> to vector<3x3x96xbf16>
    %4 = arith.maximumf %1, %3 : vector<3x3x96xbf16>
    %5 = vector.extract_strided_slice %4 {offsets = [0, 0, 0], sizes = [3, 3, 48], strides = [1, 1, 1]} : vector<3x3x96xbf16> to vector<3x3x48xbf16>
    %6 = vector.extract_strided_slice %4 {offsets = [0, 0, 48], sizes = [3, 3, 48], strides = [1, 1, 1]} : vector<3x3x96xbf16> to vector<3x3x48xbf16>
    %7 = arith.maximumf %5, %6 : vector<3x3x48xbf16>
    %c0_8 = arith.constant 0 : index
    %c0_9 = arith.constant 0 : index
    %c0_10 = arith.constant 0 : index
    %c0_11 = arith.constant 0 : index
    %8 = vector.load %arg2[%c0_8, %c0_9, %c0_10, %c0_11] : memref<1x3x3x48xbf16, #tpu.memory_space<vmem>>, vector<1x3x3x48xbf16>
    %9 = vector.shape_cast %8 : vector<1x3x3x48xbf16> to vector<3x3x48xbf16>
    %10 = vector.shape_cast %7 : vector<3x3x48xbf16> to vector<1x3x3x48xbf16>
    tpu.vector_store %arg2[%c0_8, %c0_9, %c0_10, %c0_11], %10 {strides = array<i32>} : memref<1x3x3x48xbf16, #tpu.memory_space<vmem>>, vector<1x3x3x48xbf16>,
    return
  }
  func.func @transform_0(%arg0: i32) -> (i32, i32, i32, i32, i32) {
    %c0_i32 = arith.constant 0 : i32
    %c0_i32_0 = arith.constant 0 : i32
    %c0_i32_1 = arith.constant 0 : i32
    %c0_i32_2 = arith.constant 0 : i32
    %c0_i32_3 = arith.constant 0 : i32
    return %arg0, %c0_i32, %c0_i32_0, %c0_i32_1, %c0_i32_2 : i32, i32, i32, i32, i32
  }
  func.func @transform_1(%arg0: i32) -> (i32, i32, i32, i32) {
    %c0_i32 = arith.constant 0 : i32
    %c0_i32_0 = arith.constant 0 : i32
    %c0_i32_1 = arith.constant 0 : i32
    %c0_i32_2 = arith.constant 0 : i32
    return %arg0, %c0_i32, %c0_i32_0, %c0_i32_1 : i32, i32, i32, i32
  }
}

module attributes {stable_mosaic.version = 11 : i64} {
  func.func @_gemm_bias_act_kernel(%arg0: i32, %arg1: i32, %arg2: i32, %arg3: memref<32x512xbf16, #tpu.memory_space<vmem>>, %arg4: memref<512x128xbf16, #tpu.memory_space<vmem>>, %arg5: memref<1x128xf32, #tpu.memory_space<vmem>>, %arg6: memref<32x128xbf16, #tpu.memory_space<vmem>>, %arg7: memref<32x128xf32, #tpu.memory_space<vmem>>) attributes {dimension_semantics = [#tpu.dimension_semantics<parallel>, #tpu.dimension_semantics<parallel>, #tpu.dimension_semantics<arbitrary>], iteration_bounds = array<i64: 1, 1, 1>, scalar_prefetch = 0 : i64, scratch_operands = 1 : i64, tpu.core_type = #tpu.core_type<tc>, window_params = [{transform_indices = @transform_0, window_bounds = array<i64: 32, 512>}, {transform_indices = @transform_1, window_bounds = array<i64: 512, 128>}, {transform_indices = @transform_2, window_bounds = array<i64: 1, 128>}, {transform_indices = @transform_3, window_bounds = array<i64: 32, 128>}]} {
    %c0_i32 = arith.constant 0 : i32
    %0 = arith.cmpi eq, %arg2, %c0_i32 : i32
    %1 = arith.extui %0 : i1 to i32
    %c0_i32_0 = arith.constant 0 : i32
    %2 = arith.cmpi ne, %1, %c0_i32_0 : i32
    scf.if %2 {
      %cst_10 = arith.constant 0.000000e+00 : f32
      %12 = vector.broadcast %cst_10 : f32 to vector<32x128xf32>
      %c0_11 = arith.constant 0 : index
      %c0_12 = arith.constant 0 : index
      %13 = vector.load %arg7[%c0_11, %c0_12] : memref<32x128xf32, #tpu.memory_space<vmem>>, vector<32x128xf32>
      tpu.vector_store %arg7[%c0_11, %c0_12], %12 {strides = array<i32>} : memref<32x128xf32, #tpu.memory_space<vmem>>, vector<32x128xf32>,
    } else {
    }
    %c0 = arith.constant 0 : index
    %c0_1 = arith.constant 0 : index
    %3 = vector.load %arg7[%c0, %c0_1] : memref<32x128xf32, #tpu.memory_space<vmem>>, vector<32x128xf32>
    %c0_2 = arith.constant 0 : index
    %c0_3 = arith.constant 0 : index
    %4 = vector.load %arg3[%c0_2, %c0_3] : memref<32x512xbf16, #tpu.memory_space<vmem>>, vector<32x512xbf16>
    %c0_4 = arith.constant 0 : index
    %c0_5 = arith.constant 0 : index
    %5 = vector.load %arg4[%c0_4, %c0_5] : memref<512x128xbf16, #tpu.memory_space<vmem>>, vector<512x128xbf16>
    %cst = arith.constant dense<0.000000e+00> : vector<32x128xf32>
    %6 = tpu.matmul %4, %5, %cst {dimension_numbers = #tpu.dot_dimension_numbers<[1], [0], [0], [1], [0, 0, 1, 1], [], []>} : vector<32x512xbf16>, vector<512x128xbf16>, vector<32x128xf32> -> vector<32x128xf32>
    %7 = arith.addf %3, %6 : vector<32x128xf32>
    %c0_6 = arith.constant 0 : index
    %c0_7 = arith.constant 0 : index
    %8 = vector.load %arg7[%c0_6, %c0_7] : memref<32x128xf32, #tpu.memory_space<vmem>>, vector<32x128xf32>
    tpu.vector_store %arg7[%c0_6, %c0_7], %7 {strides = array<i32>} : memref<32x128xf32, #tpu.memory_space<vmem>>, vector<32x128xf32>,
    %c0_i32_8 = arith.constant 0 : i32
    %9 = arith.cmpi eq, %arg2, %c0_i32_8 : i32
    %10 = arith.extui %9 : i1 to i32
    %c0_i32_9 = arith.constant 0 : i32
    %11 = arith.cmpi ne, %10, %c0_i32_9 : i32
    scf.if %11 {
      %c0_10 = arith.constant 0 : index
      %c0_11 = arith.constant 0 : index
      %12 = vector.load %arg7[%c0_10, %c0_11] : memref<32x128xf32, #tpu.memory_space<vmem>>, vector<32x128xf32>
      %c0_12 = arith.constant 0 : index
      %c0_13 = arith.constant 0 : index
      %13 = vector.load %arg5[%c0_12, %c0_13] : memref<1x128xf32, #tpu.memory_space<vmem>>, vector<1x128xf32>
      %14 = vector.broadcast %13 : vector<1x128xf32> to vector<32x128xf32>
      %15 = arith.addf %12, %14 : vector<32x128xf32>
      %cst_14 = arith.constant 0.000000e+00 : f32
      %16 = vector.broadcast %cst_14 : f32 to vector<32x128xf32>
      %17 = arith.maximumf %15, %16 : vector<32x128xf32>
      %18 = arith.truncf %17 : vector<32x128xf32> to vector<32x128xbf16>
      %c0_15 = arith.constant 0 : index
      %c0_16 = arith.constant 0 : index
      %19 = vector.load %arg6[%c0_15, %c0_16] : memref<32x128xbf16, #tpu.memory_space<vmem>>, vector<32x128xbf16>
      tpu.vector_store %arg6[%c0_15, %c0_16], %18 {strides = array<i32>} : memref<32x128xbf16, #tpu.memory_space<vmem>>, vector<32x128xbf16>,
    } else {
    }
    return
  }
  func.func @transform_0(%arg0: i32, %arg1: i32, %arg2: i32) -> (i32, i32) {
    %c0_i32 = arith.constant 0 : i32
    return %arg0, %arg2 : i32, i32
  }
  func.func @transform_1(%arg0: i32, %arg1: i32, %arg2: i32) -> (i32, i32) {
    %c0_i32 = arith.constant 0 : i32
    return %arg2, %arg1 : i32, i32
  }
  func.func @transform_2(%arg0: i32, %arg1: i32, %arg2: i32) -> (i32, i32) {
    %c0_i32 = arith.constant 0 : i32
    %c0_i32_0 = arith.constant 0 : i32
    return %c0_i32, %arg1 : i32, i32
  }
  func.func @transform_3(%arg0: i32, %arg1: i32, %arg2: i32) -> (i32, i32) {
    %c0_i32 = arith.constant 0 : i32
    return %arg0, %arg1 : i32, i32
  }
}

module attributes {stable_mosaic.version = 11 : i64} {
  func.func @_gemm_bias_act_kernel(%arg0: i32, %arg1: i32, %arg2: i32, %arg3: memref<32x640xbf16, #tpu.memory_space<vmem>>, %arg4: memref<640x128xbf16, #tpu.memory_space<vmem>>, %arg5: memref<1x128xf32, #tpu.memory_space<vmem>>, %arg6: memref<32x128xbf16, #tpu.memory_space<vmem>>, %arg7: memref<32x128xf32, #tpu.memory_space<vmem>>) attributes {dimension_semantics = [#tpu.dimension_semantics<parallel>, #tpu.dimension_semantics<parallel>, #tpu.dimension_semantics<arbitrary>], iteration_bounds = array<i64: 1, 1, 1>, scalar_prefetch = 0 : i64, scratch_operands = 1 : i64, tpu.core_type = #tpu.core_type<tc>, window_params = [{transform_indices = @transform_0, window_bounds = array<i64: 32, 640>}, {transform_indices = @transform_1, window_bounds = array<i64: 640, 128>}, {transform_indices = @transform_2, window_bounds = array<i64: 1, 128>}, {transform_indices = @transform_3, window_bounds = array<i64: 32, 128>}]} {
    %c0_i32 = arith.constant 0 : i32
    %0 = arith.cmpi eq, %arg2, %c0_i32 : i32
    %1 = arith.extui %0 : i1 to i32
    %c0_i32_0 = arith.constant 0 : i32
    %2 = arith.cmpi ne, %1, %c0_i32_0 : i32
    scf.if %2 {
      %cst_10 = arith.constant 0.000000e+00 : f32
      %12 = vector.broadcast %cst_10 : f32 to vector<32x128xf32>
      %c0_11 = arith.constant 0 : index
      %c0_12 = arith.constant 0 : index
      %13 = vector.load %arg7[%c0_11, %c0_12] : memref<32x128xf32, #tpu.memory_space<vmem>>, vector<32x128xf32>
      tpu.vector_store %arg7[%c0_11, %c0_12], %12 {strides = array<i32>} : memref<32x128xf32, #tpu.memory_space<vmem>>, vector<32x128xf32>,
    } else {
    }
    %c0 = arith.constant 0 : index
    %c0_1 = arith.constant 0 : index
    %3 = vector.load %arg7[%c0, %c0_1] : memref<32x128xf32, #tpu.memory_space<vmem>>, vector<32x128xf32>
    %c0_2 = arith.constant 0 : index
    %c0_3 = arith.constant 0 : index
    %4 = vector.load %arg3[%c0_2, %c0_3] : memref<32x640xbf16, #tpu.memory_space<vmem>>, vector<32x640xbf16>
    %c0_4 = arith.constant 0 : index
    %c0_5 = arith.constant 0 : index
    %5 = vector.load %arg4[%c0_4, %c0_5] : memref<640x128xbf16, #tpu.memory_space<vmem>>, vector<640x128xbf16>
    %cst = arith.constant dense<0.000000e+00> : vector<32x128xf32>
    %6 = tpu.matmul %4, %5, %cst {dimension_numbers = #tpu.dot_dimension_numbers<[1], [0], [0], [1], [0, 0, 1, 1], [], []>} : vector<32x640xbf16>, vector<640x128xbf16>, vector<32x128xf32> -> vector<32x128xf32>
    %7 = arith.addf %3, %6 : vector<32x128xf32>
    %c0_6 = arith.constant 0 : index
    %c0_7 = arith.constant 0 : index
    %8 = vector.load %arg7[%c0_6, %c0_7] : memref<32x128xf32, #tpu.memory_space<vmem>>, vector<32x128xf32>
    tpu.vector_store %arg7[%c0_6, %c0_7], %7 {strides = array<i32>} : memref<32x128xf32, #tpu.memory_space<vmem>>, vector<32x128xf32>,
    %c0_i32_8 = arith.constant 0 : i32
    %9 = arith.cmpi eq, %arg2, %c0_i32_8 : i32
    %10 = arith.extui %9 : i1 to i32
    %c0_i32_9 = arith.constant 0 : i32
    %11 = arith.cmpi ne, %10, %c0_i32_9 : i32
    scf.if %11 {
      %c0_10 = arith.constant 0 : index
      %c0_11 = arith.constant 0 : index
      %12 = vector.load %arg7[%c0_10, %c0_11] : memref<32x128xf32, #tpu.memory_space<vmem>>, vector<32x128xf32>
      %c0_12 = arith.constant 0 : index
      %c0_13 = arith.constant 0 : index
      %13 = vector.load %arg5[%c0_12, %c0_13] : memref<1x128xf32, #tpu.memory_space<vmem>>, vector<1x128xf32>
      %14 = vector.broadcast %13 : vector<1x128xf32> to vector<32x128xf32>
      %15 = arith.addf %12, %14 : vector<32x128xf32>
      %cst_14 = arith.constant 0.000000e+00 : f32
      %16 = vector.broadcast %cst_14 : f32 to vector<32x128xf32>
      %17 = arith.maximumf %15, %16 : vector<32x128xf32>
      %18 = arith.truncf %17 : vector<32x128xf32> to vector<32x128xbf16>
      %c0_15 = arith.constant 0 : index
      %c0_16 = arith.constant 0 : index
      %19 = vector.load %arg6[%c0_15, %c0_16] : memref<32x128xbf16, #tpu.memory_space<vmem>>, vector<32x128xbf16>
      tpu.vector_store %arg6[%c0_15, %c0_16], %18 {strides = array<i32>} : memref<32x128xbf16, #tpu.memory_space<vmem>>, vector<32x128xbf16>,
    } else {
    }
    return
  }
  func.func @transform_0(%arg0: i32, %arg1: i32, %arg2: i32) -> (i32, i32) {
    %c0_i32 = arith.constant 0 : i32
    return %arg0, %arg2 : i32, i32
  }
  func.func @transform_1(%arg0: i32, %arg1: i32, %arg2: i32) -> (i32, i32) {
    %c0_i32 = arith.constant 0 : i32
    return %arg2, %arg1 : i32, i32
  }
  func.func @transform_2(%arg0: i32, %arg1: i32, %arg2: i32) -> (i32, i32) {
    %c0_i32 = arith.constant 0 : i32
    %c0_i32_0 = arith.constant 0 : i32
    return %c0_i32, %arg1 : i32, i32
  }
  func.func @transform_3(%arg0: i32, %arg1: i32, %arg2: i32) -> (i32, i32) {
    %c0_i32 = arith.constant 0 : i32
    return %arg0, %arg1 : i32, i32
  }
}

module attributes {stable_mosaic.version = 11 : i64} {
  func.func @_fc_chain_kernel(%arg0: i32, %arg1: memref<16x640xbf16, #tpu.memory_space<vmem>>, %arg2: memref<640x1280xbf16, #tpu.memory_space<vmem>>, %arg3: memref<1x1280xf32, #tpu.memory_space<vmem>>, %arg4: memref<1280x128xbf16, #tpu.memory_space<vmem>>, %arg5: memref<1x128xf32, #tpu.memory_space<vmem>>, %arg6: memref<128x128xbf16, #tpu.memory_space<vmem>>, %arg7: memref<1x128xf32, #tpu.memory_space<vmem>>, %arg8: memref<128x128xbf16, #tpu.memory_space<vmem>>, %arg9: memref<1x128xf32, #tpu.memory_space<vmem>>, %arg10: memref<128x128xbf16, #tpu.memory_space<vmem>>, %arg11: memref<1x128xf32, #tpu.memory_space<vmem>>, %arg12: memref<16x128xf32, #tpu.memory_space<vmem>>) attributes {dimension_semantics = [#tpu.dimension_semantics<parallel>], iteration_bounds = array<i64: 1>, scalar_prefetch = 0 : i64, scratch_operands = 0 : i64, tpu.core_type = #tpu.core_type<tc>, window_params = [{transform_indices = @transform_0, window_bounds = array<i64: 16, 640>}, {pipeline_mode = #tpu.pipeline_mode<synchronous>, transform_indices = @transform_1, window_bounds = array<i64: 640, 1280>}, {pipeline_mode = #tpu.pipeline_mode<synchronous>, transform_indices = @transform_2, window_bounds = array<i64: 1, 1280>}, {pipeline_mode = #tpu.pipeline_mode<synchronous>, transform_indices = @transform_3, window_bounds = array<i64: 1280, 128>}, {pipeline_mode = #tpu.pipeline_mode<synchronous>, transform_indices = @transform_4, window_bounds = array<i64: 1, 128>}, {pipeline_mode = #tpu.pipeline_mode<synchronous>, transform_indices = @transform_5, window_bounds = array<i64: 128, 128>}, {pipeline_mode = #tpu.pipeline_mode<synchronous>, transform_indices = @transform_6, window_bounds = array<i64: 1, 128>}, {pipeline_mode = #tpu.pipeline_mode<synchronous>, transform_indices = @transform_7, window_bounds = array<i64: 128, 128>}, {pipeline_mode = #tpu.pipeline_mode<synchronous>, transform_indices = @transform_8, window_bounds = array<i64: 1, 128>}, {pipeline_mode = #tpu.pipeline_mode<synchronous>, transform_indices = @transform_9, window_bounds = array<i64: 128, 128>}, {pipeline_mode = #tpu.pipeline_mode<synchronous>, transform_indices = @transform_10, window_bounds = array<i64: 1, 128>}, {transform_indices = @transform_11, window_bounds = array<i64: 16, 128>}]} {
    %c0 = arith.constant 0 : index
    %c0_0 = arith.constant 0 : index
    %0 = vector.load %arg1[%c0, %c0_0] : memref<16x640xbf16, #tpu.memory_space<vmem>>, vector<16x640xbf16>
    %c0_1 = arith.constant 0 : index
    %c0_2 = arith.constant 0 : index
    %1 = vector.load %arg2[%c0_1, %c0_2] : memref<640x1280xbf16, #tpu.memory_space<vmem>>, vector<640x1280xbf16>
    %cst = arith.constant dense<0.000000e+00> : vector<16x1280xf32>
    %2 = tpu.matmul %0, %1, %cst {dimension_numbers = #tpu.dot_dimension_numbers<[1], [0], [0], [1], [0, 0, 1, 1], [], []>} : vector<16x640xbf16>, vector<640x1280xbf16>, vector<16x1280xf32> -> vector<16x1280xf32>
    %c0_3 = arith.constant 0 : index
    %c0_4 = arith.constant 0 : index
    %3 = vector.load %arg3[%c0_3, %c0_4] : memref<1x1280xf32, #tpu.memory_space<vmem>>, vector<1x1280xf32>
    %4 = vector.broadcast %3 : vector<1x1280xf32> to vector<16x1280xf32>
    %5 = arith.addf %2, %4 : vector<16x1280xf32>
    %cst_5 = arith.constant 0.000000e+00 : f32
    %6 = vector.broadcast %cst_5 : f32 to vector<16x1280xf32>
    %7 = arith.maximumf %5, %6 : vector<16x1280xf32>
    %8 = arith.truncf %7 : vector<16x1280xf32> to vector<16x1280xbf16>
    %c0_6 = arith.constant 0 : index
    %c0_7 = arith.constant 0 : index
    %9 = vector.load %arg4[%c0_6, %c0_7] : memref<1280x128xbf16, #tpu.memory_space<vmem>>, vector<1280x128xbf16>
    %cst_8 = arith.constant dense<0.000000e+00> : vector<16x128xf32>
    %10 = tpu.matmul %8, %9, %cst_8 {dimension_numbers = #tpu.dot_dimension_numbers<[1], [0], [0], [1], [0, 0, 1, 1], [], []>} : vector<16x1280xbf16>, vector<1280x128xbf16>, vector<16x128xf32> -> vector<16x128xf32>
    %c0_9 = arith.constant 0 : index
    %c0_10 = arith.constant 0 : index
    %11 = vector.load %arg5[%c0_9, %c0_10] : memref<1x128xf32, #tpu.memory_space<vmem>>, vector<1x128xf32>
    %12 = vector.broadcast %11 : vector<1x128xf32> to vector<16x128xf32>
    %13 = arith.addf %10, %12 : vector<16x128xf32>
    %cst_11 = arith.constant 0.000000e+00 : f32
    %14 = vector.broadcast %cst_11 : f32 to vector<16x128xf32>
    %15 = arith.maximumf %13, %14 : vector<16x128xf32>
    %16 = arith.truncf %15 : vector<16x128xf32> to vector<16x128xbf16>
    %c0_12 = arith.constant 0 : index
    %c0_13 = arith.constant 0 : index
    %17 = vector.load %arg6[%c0_12, %c0_13] : memref<128x128xbf16, #tpu.memory_space<vmem>>, vector<128x128xbf16>
    %cst_14 = arith.constant dense<0.000000e+00> : vector<16x128xf32>
    %18 = tpu.matmul %16, %17, %cst_14 {dimension_numbers = #tpu.dot_dimension_numbers<[1], [0], [0], [1], [0, 0, 1, 1], [], []>} : vector<16x128xbf16>, vector<128x128xbf16>, vector<16x128xf32> -> vector<16x128xf32>
    %c0_15 = arith.constant 0 : index
    %c0_16 = arith.constant 0 : index
    %19 = vector.load %arg7[%c0_15, %c0_16] : memref<1x128xf32, #tpu.memory_space<vmem>>, vector<1x128xf32>
    %20 = vector.broadcast %19 : vector<1x128xf32> to vector<16x128xf32>
    %21 = arith.addf %18, %20 : vector<16x128xf32>
    %cst_17 = arith.constant 0.000000e+00 : f32
    %22 = vector.broadcast %cst_17 : f32 to vector<16x128xf32>
    %23 = arith.maximumf %21, %22 : vector<16x128xf32>
    %24 = arith.truncf %23 : vector<16x128xf32> to vector<16x128xbf16>
    %c0_18 = arith.constant 0 : index
    %c0_19 = arith.constant 0 : index
    %25 = vector.load %arg8[%c0_18, %c0_19] : memref<128x128xbf16, #tpu.memory_space<vmem>>, vector<128x128xbf16>
    %cst_20 = arith.constant dense<0.000000e+00> : vector<16x128xf32>
    %26 = tpu.matmul %24, %25, %cst_20 {dimension_numbers = #tpu.dot_dimension_numbers<[1], [0], [0], [1], [0, 0, 1, 1], [], []>} : vector<16x128xbf16>, vector<128x128xbf16>, vector<16x128xf32> -> vector<16x128xf32>
    %c0_21 = arith.constant 0 : index
    %c0_22 = arith.constant 0 : index
    %27 = vector.load %arg9[%c0_21, %c0_22] : memref<1x128xf32, #tpu.memory_space<vmem>>, vector<1x128xf32>
    %28 = vector.broadcast %27 : vector<1x128xf32> to vector<16x128xf32>
    %29 = arith.addf %26, %28 : vector<16x128xf32>
    %cst_23 = arith.constant 0.000000e+00 : f32
    %30 = vector.broadcast %cst_23 : f32 to vector<16x128xf32>
    %31 = arith.maximumf %29, %30 : vector<16x128xf32>
    %32 = arith.truncf %31 : vector<16x128xf32> to vector<16x128xbf16>
    %c0_24 = arith.constant 0 : index
    %c0_25 = arith.constant 0 : index
    %33 = vector.load %arg10[%c0_24, %c0_25] : memref<128x128xbf16, #tpu.memory_space<vmem>>, vector<128x128xbf16>
    %cst_26 = arith.constant dense<0.000000e+00> : vector<16x128xf32>
    %34 = tpu.matmul %32, %33, %cst_26 {dimension_numbers = #tpu.dot_dimension_numbers<[1], [0], [0], [1], [0, 0, 1, 1], [], []>} : vector<16x128xbf16>, vector<128x128xbf16>, vector<16x128xf32> -> vector<16x128xf32>
    %c0_27 = arith.constant 0 : index
    %c0_28 = arith.constant 0 : index
    %35 = vector.load %arg11[%c0_27, %c0_28] : memref<1x128xf32, #tpu.memory_space<vmem>>, vector<1x128xf32>
    %36 = vector.broadcast %35 : vector<1x128xf32> to vector<16x128xf32>
    %37 = arith.addf %34, %36 : vector<16x128xf32>
    %cst_29 = arith.constant 0.00999999977 : f32
    %38 = vector.broadcast %cst_29 : f32 to vector<16x128xf32>
    %39 = arith.mulf %37, %38 : vector<16x128xf32>
    %40 = math.tanh %39 : vector<16x128xf32>
    %cst_30 = arith.constant 4.500000e+01 : f32
    %41 = vector.broadcast %cst_30 : f32 to vector<16x128xf32>
    %42 = arith.mulf %40, %41 : vector<16x128xf32>
    %cst_31 = arith.constant 0.000000e+00 : f32
    %cst_32 = arith.constant 4.500000e+01 : f32
    %43 = vector.broadcast %cst_31 : f32 to vector<16x128xf32>
    %44 = arith.maximumf %43, %42 : vector<16x128xf32>
    %45 = vector.broadcast %cst_32 : f32 to vector<16x128xf32>
    %46 = arith.minimumf %45, %44 : vector<16x128xf32>
    %c0_33 = arith.constant 0 : index
    %c0_34 = arith.constant 0 : index
    %47 = vector.load %arg12[%c0_33, %c0_34] : memref<16x128xf32, #tpu.memory_space<vmem>>, vector<16x128xf32>
    tpu.vector_store %arg12[%c0_33, %c0_34], %46 {strides = array<i32>} : memref<16x128xf32, #tpu.memory_space<vmem>>, vector<16x128xf32>,
    return
  }
  func.func @transform_0(%arg0: i32) -> (i32, i32) {
    %c0_i32 = arith.constant 0 : i32
    %c0_i32_0 = arith.constant 0 : i32
    return %arg0, %c0_i32 : i32, i32
  }
  func.func @transform_1(%arg0: i32) -> (i32, i32) {
    %c0_i32 = arith.constant 0 : i32
    %c0_i32_0 = arith.constant 0 : i32
    %c0_i32_1 = arith.constant 0 : i32
    return %c0_i32, %c0_i32_0 : i32, i32
  }
  func.func @transform_2(%arg0: i32) -> (i32, i32) {
    %c0_i32 = arith.constant 0 : i32
    %c0_i32_0 = arith.constant 0 : i32
    %c0_i32_1 = arith.constant 0 : i32
    return %c0_i32, %c0_i32_0 : i32, i32
  }
  func.func @transform_3(%arg0: i32) -> (i32, i32) {
    %c0_i32 = arith.constant 0 : i32
    %c0_i32_0 = arith.constant 0 : i32
    %c0_i32_1 = arith.constant 0 : i32
    return %c0_i32, %c0_i32_0 : i32, i32
  }
  func.func @transform_4(%arg0: i32) -> (i32, i32) {
    %c0_i32 = arith.constant 0 : i32
    %c0_i32_0 = arith.constant 0 : i32
    %c0_i32_1 = arith.constant 0 : i32
    return %c0_i32, %c0_i32_0 : i32, i32
  }
  func.func @transform_5(%arg0: i32) -> (i32, i32) {
    %c0_i32 = arith.constant 0 : i32
    %c0_i32_0 = arith.constant 0 : i32
    %c0_i32_1 = arith.constant 0 : i32
    return %c0_i32, %c0_i32_0 : i32, i32
  }
  func.func @transform_6(%arg0: i32) -> (i32, i32) {
    %c0_i32 = arith.constant 0 : i32
    %c0_i32_0 = arith.constant 0 : i32
    %c0_i32_1 = arith.constant 0 : i32
    return %c0_i32, %c0_i32_0 : i32, i32
  }
  func.func @transform_7(%arg0: i32) -> (i32, i32) {
    %c0_i32 = arith.constant 0 : i32
    %c0_i32_0 = arith.constant 0 : i32
    %c0_i32_1 = arith.constant 0 : i32
    return %c0_i32, %c0_i32_0 : i32, i32
  }
  func.func @transform_8(%arg0: i32) -> (i32, i32) {
    %c0_i32 = arith.constant 0 : i32
    %c0_i32_0 = arith.constant 0 : i32
    %c0_i32_1 = arith.constant 0 : i32
    return %c0_i32, %c0_i32_0 : i32, i32
  }
  func.func @transform_9(%arg0: i32) -> (i32, i32) {
    %c0_i32 = arith.constant 0 : i32
    %c0_i32_0 = arith.constant 0 : i32
    %c0_i32_1 = arith.constant 0 : i32
    return %c0_i32, %c0_i32_0 : i32, i32
  }
  func.func @transform_10(%arg0: i32) -> (i32, i32) {
    %c0_i32 = arith.constant 0 : i32
    %c0_i32_0 = arith.constant 0 : i32
    %c0_i32_1 = arith.constant 0 : i32
    return %c0_i32, %c0_i32_0 : i32, i32
  }
  func.func @transform_11(%arg0: i32) -> (i32, i32) {
    %c0_i32 = arith.constant 0 : i32
    %c0_i32_0 = arith.constant 0 : i32
    return %arg0, %c0_i32 : i32, i32
  }
}

</mosaic_0001>

<llo_original>
// kernel: cnn_forward.7
$region0: #{cnn_forward.7}
  #allocation0 [shape = 'u32[]', space=smem, size = 0x4, offset = 0x4, fixed_abs, tag = 'smem constant byte address 0x4 - core index']
  #allocation1 [shape = 'u32[72,128]{1,0:T(1,128)}', space=vmem, size = 0x9000, scoped, tag = 'internal scratch']
  #allocation2 [shape = 'f32[512,128]{1,0:T(8,128)}', space=vmem, size = 0x40000, scoped, tag = 'scratch operand']
  %s0 = inlined_call_operand.vmem [shape: bf16[512,128], index: 0, kind: input, shape index: {}]
  %s1 = inlined_call_operand.vmem [shape: bf16[128,128], index: 1, kind: input, shape index: {}]
  %s2 = inlined_call_operand.vmem [shape: f32[1,128], index: 2, kind: input, shape index: {}]
  %s3 = inlined_call_operand.vmem [shape: bf16[512,128], index: 3, kind: output, shape index: {}]
  %s4 = sld [smem:[#allocation0]]
  $region30: #{cnn_forward.7} parent=0
    _
  %s6 = ssub.s32 1, %s4
  %s7 = scalar_select 0, %s6, %s4
  // Predicated region
  $region2: #{cnn_forward.7} parent=0 // pred_check
    _
  $region3: #{cnn_forward.7} parent=0 // pred_check_branch
    %9 = sbr.rel (0) target = $region5
  $region4: #{cnn_forward.7} parent=0 // pred_region
    _
  $region5: #{cnn_forward.7} parent=0 // pred_fallthru
    _
  // Predicated region
  $region6: #{cnn_forward.7} parent=0 // pred_check
    _
  $region7: #{cnn_forward.7} parent=0 // pred_check_branch
    %11 = sbr.rel (0) target = $region9
  $region8: #{cnn_forward.7} parent=0 // pred_region
    _
  $region9: #{cnn_forward.7} parent=0 // pred_fallthru
    _
  // Predicated region
  $region10: #{cnn_forward.7} parent=0 // pred_check
    _
  $region11: #{cnn_forward.7} parent=0 // pred_check_branch
    %13 = sbr.rel (0) target = $region13
  $region12: #{cnn_forward.7} parent=0 // pred_region
    _
  $region13: #{cnn_forward.7} parent=0 // pred_fallthru
    _
  %p14 = scmp.eq.s32.totalorder 0, 0
  // Predicated region
  $region14: #{cnn_forward.7} parent=0 // pred_check
    %p15 = pneg %p14
  $region15: #{cnn_forward.7} parent=0 // pred_check_branch
    %17 = sbr.rel (%p15) target = $region17
  $region16: #{cnn_forward.7} parent=0 // pred_region
    %18 = vst [vmem:[#allocation2] sm:$0xff] 0.0
    %19 = vst [vmem:[#allocation2 + $0x8] sm:$0xff] 0.0
    %20 = vst [vmem:[#allocation2 + $0x10] sm:$0xff] 0.0
    %21 = vst [vmem:[#allocation2 + $0x18] sm:$0xff] 0.0
    %22 = vst [vmem:[#allocation2 + $0x20] sm:$0xff] 0.0
    %23 = vst [vmem:[#allocation2 + $0x28] sm:$0xff] 0.0
    %24 = vst [vmem:[#allocation2 + $0x30] sm:$0xff] 0.0
    %25 = vst [vmem:[#allocation2 + $0x38] sm:$0xff] 0.0
    %26 = vst [vmem:[#allocation2 + $0x40] sm:$0xff] 0.0
    %27 = vst [vmem:[#allocation2 + $0x48] sm:$0xff] 0.0
    %28 = vst [vmem:[#allocation2 + $0x50] sm:$0xff] 0.0
    %29 = vst [vmem:[#allocation2 + $0x58] sm:$0xff] 0.0
    %30 = vst [vmem:[#allocation2 + $0x60] sm:$0xff] 0.0
    %31 = vst [vmem:[#allocation2 + $0x68] sm:$0xff] 0.0
    %32 = vst [vmem:[#allocation2 + $0x70] sm:$0xff] 0.0
    %33 = vst [vmem:[#allocation2 + $0x78] sm:$0xff] 0.0
    %34 = vst [vmem:[#allocation2 + $0x80] sm:$0xff] 0.0
    %35 = vst [vmem:[#allocation2 + $0x88] sm:$0xff] 0.0
    %36 = vst [vmem:[#allocation2 + $0x90] sm:$0xff] 0.0
    %37 = vst [vmem:[#allocation2 + $0x98] sm:$0xff] 0.0
    %38 = vst [vmem:[#allocation2 + $0xa0] sm:$0xff] 0.0
    %39 = vst [vmem:[#allocation2 + $0xa8] sm:$0xff] 0.0
    %40 = vst [vmem:[#allocation2 + $0xb0] sm:$0xff] 0.0
    %41 = vst [vmem:[#allocation2 + $0xb8] sm:$0xff] 0.0
    %42 = vst [vmem:[#allocation2 + $0xc0] sm:$0xff] 0.0
    %43 = vst [vmem:[#allocation2 + $0xc8] sm:$0xff] 0.0
    %44 = vst [vmem:[#allocation2 + $0xd0] sm:$0xff] 0.0
    %45 = vst [vmem:[#allocation2 + $0xd8] sm:$0xff] 0.0
    %46 = vst [vmem:[#allocation2 + $0xe0] sm:$0xff] 0.0
    %47 = vst [vmem:[#allocation2 + $0xe8] sm:$0xff] 0.0
    %48 = vst [vmem:[#allocation2 + $0xf0] sm:$0xff] 0.0
    %49 = vst [vmem:[#allocation2 + $0xf8] sm:$0xff] 0.0
    %50 = vst [vmem:[#allocation2 + $0x100] sm:$0xff] 0.0
    %51 = vst [vmem:[#allocation2 + $0x108] sm:$0xff] 0.0
    %52 = vst [vmem:[#allocation2 + $0x110] sm:$0xff] 0.0
    %53 = vst [vmem:[#allocation2 + $0x118] sm:$0xff] 0.0
    %54 = vst [vmem:[#allocation2 + $0x120] sm:$0xff] 0.0
    %55 = vst [vmem:[#allocation2 + $0x128] sm:$0xff] 0.0
    %56 = vst [vmem:[#allocation2 + $0x130] sm:$0xff] 0.0
    %57 = vst [vmem:[#allocation2 + $0x138] sm:$0xff] 0.0
    %58 = vst [vmem:[#allocation2 + $0x140] sm:$0xff] 0.0
    %59 = vst [vmem:[#allocation2 + $0x148] sm:$0xff] 0.0
    %60 = vst [vmem:[#allocation2 + $0x150] sm:$0xff] 0.0
    %61 = vst [vmem:[#allocation2 + $0x158] sm:$0xff] 0.0
    %62 = vst [vmem:[#allocation2 + $0x160] sm:$0xff] 0.0
    %63 = vst [vmem:[#allocation2 + $0x168] sm:$0xff] 0.0
    %64 = vst [vmem:[#allocation2 + $0x170] sm:$0xff] 0.0
    %65 = vst [vmem:[#allocation2 + $0x178] sm:$0xff] 0.0
    %66 = vst [vmem:[#allocation2 + $0x180] sm:$0xff] 0.0
    %67 = vst [vmem:[#allocation2 + $0x188] sm:$0xff] 0.0
    %68 = vst [vmem:[#allocation2 + $0x190] sm:$0xff] 0.0
    %69 = vst [vmem:[#allocation2 + $0x198] sm:$0xff] 0.0
    %70 = vst [vmem:[#allocation2 + $0x1a0] sm:$0xff] 0.0
    %71 = vst [vmem:[#allocation2 + $0x1a8] sm:$0xff] 0.0
    %72 = vst [vmem:[#allocation2 + $0x1b0] sm:$0xff] 0.0
    %73 = vst [vmem:[#allocation2 + $0x1b8] sm:$0xff] 0.0
    %74 = vst [vmem:[#allocation2 + $0x1c0] sm:$0xff] 0.0
    %75 = vst [vmem:[#allocation2 + $0x1c8] sm:$0xff] 0.0
    %76 = vst [vmem:[#allocation2 + $0x1d0] sm:$0xff] 0.0
    %77 = vst [vmem:[#allocation2 + $0x1d8] sm:$0xff] 0.0
    %78 = vst [vmem:[#allocation2 + $0x1e0] sm:$0xff] 0.0
    %79 = vst [vmem:[#allocation2 + $0x1e8] sm:$0xff] 0.0
    %80 = vst [vmem:[#allocation2 + $0x1f0] sm:$0xff] 0.0
    %81 = vst [vmem:[#allocation2 + $0x1f8] sm:$0xff] 0.0
  $region17: #{cnn_forward.7} parent=0 // pred_fallthru
    _
  %v82 = vld [vmem:[#allocation2] sm:$0xff]
  %v83 = vld [vmem:[#allocation2 + $0x8] sm:$0xff]
  %v84 = vld [vmem:[#allocation2 + $0x10] sm:$0xff]
  %v85 = vld [vmem:[#allocation2 + $0x18] sm:$0xff]
  %v86 = vld [vmem:[#allocation2 + $0x20] sm:$0xff]
  %v87 = vld [vmem:[#allocation2 + $0x28] sm:$0xff]
  %v88 = vld [vmem:[#allocation2 + $0x30] sm:$0xff]
  %v89 = vld [vmem:[#allocation2 + $0x38] sm:$0xff]
  %v90 = vld [vmem:[#allocation2 + $0x40] sm:$0xff]
  %v91 = vld [vmem:[#allocation2 + $0x48] sm:$0xff]
  %v92 = vld [vmem:[#allocation2 + $0x50] sm:$0xff]
  %v93 = vld [vmem:[#allocation2 + $0x58] sm:$0xff]
  %v94 = vld [vmem:[#allocation2 + $0x60] sm:$0xff]
  %v95 = vld [vmem:[#allocation2 + $0x68] sm:$0xff]
  %v96 = vld [vmem:[#allocation2 + $0x70] sm:$0xff]
  %v97 = vld [vmem:[#allocation2 + $0x78] sm:$0xff]
  %v98 = vld [vmem:[#allocation2 + $0x80] sm:$0xff]
  %v99 = vld [vmem:[#allocation2 + $0x88] sm:$0xff]
  %v100 = vld [vmem:[#allocation2 + $0x90] sm:$0xff]
  %v101 = vld [vmem:[#allocation2 + $0x98] sm:$0xff]
  %v102 = vld [vmem:[#allocation2 + $0xa0] sm:$0xff]
  %v103 = vld [vmem:[#allocation2 + $0xa8] sm:$0xff]
  %v104 = vld [vmem:[#allocation2 + $0xb0] sm:$0xff]
  %v105 = vld [vmem:[#allocation2 + $0xb8] sm:$0xff]
  %v106 = vld [vmem:[#allocation2 + $0xc0] sm:$0xff]
  %v107 = vld [vmem:[#allocation2 + $0xc8] sm:$0xff]
  %v108 = vld [vmem:[#allocation2 + $0xd0] sm:$0xff]
  %v109 = vld [vmem:[#allocation2 + $0xd8] sm:$0xff]
  %v110 = vld [vmem:[#allocation2 + $0xe0] sm:$0xff]
  %v111 = vld [vmem:[#allocation2 + $0xe8] sm:$0xff]
  %v112 = vld [vmem:[#allocation2 + $0xf0] sm:$0xff]
  %v113 = vld [vmem:[#allocation2 + $0xf8] sm:$0xff]
  %v114 = vld [vmem:[#allocation2 + $0x100] sm:$0xff]
  %v115 = vld [vmem:[#allocation2 + $0x108] sm:$0xff]
  %v116 = vld [vmem:[#allocation2 + $0x110] sm:$0xff]
  %v117 = vld [vmem:[#allocation2 + $0x118] sm:$0xff]
  %v118 = vld [vmem:[#allocation2 + $0x120] sm:$0xff]
  %v119 = vld [vmem:[#allocation2 + $0x128] sm:$0xff]
  %v120 = vld [vmem:[#allocation2 + $0x130] sm:$0xff]
  %v121 = vld [vmem:[#allocation2 + $0x138] sm:$0xff]
  %v122 = vld [vmem:[#allocation2 + $0x140] sm:$0xff]
  %v123 = vld [vmem:[#allocation2 + $0x148] sm:$0xff]
  %v124 = vld [vmem:[#allocation2 + $0x150] sm:$0xff]
  %v125 = vld [vmem:[#allocation2 + $0x158] sm:$0xff]
  %v126 = vld [vmem:[#allocation2 + $0x160] sm:$0xff]
  %v127 = vld [vmem:[#allocation2 + $0x168] sm:$0xff]
  %v128 = vld [vmem:[#allocation2 + $0x170] sm:$0xff]
  %v129 = vld [vmem:[#allocation2 + $0x178] sm:$0xff]
  %v130 = vld [vmem:[#allocation2 + $0x180] sm:$0xff]
  %v131 = vld [vmem:[#allocation2 + $0x188] sm:$0xff]
  %v132 = vld [vmem:[#allocation2 + $0x190] sm:$0xff]
  %v133 = vld [vmem:[#allocation2 + $0x198] sm:$0xff]
  %v134 = vld [vmem:[#allocation2 + $0x1a0] sm:$0xff]
  %v135 = vld [vmem:[#allocation2 + $0x1a8] sm:$0xff]
  %v136 = vld [vmem:[#allocation2 + $0x1b0] sm:$0xff]
  %v137 = vld [vmem:[#allocation2 + $0x1b8] sm:$0xff]
  %v138 = vld [vmem:[#allocation2 + $0x1c0] sm:$0xff]
  %v139 = vld [vmem:[#allocation2 + $0x1c8] sm:$0xff]
  %v140 = vld [vmem:[#allocation2 + $0x1d0] sm:$0xff]
  %v141 = vld [vmem:[#allocation2 + $0x1d8] sm:$0xff]
  %v142 = vld [vmem:[#allocation2 + $0x1e0] sm:$0xff]
  %v143 = vld [vmem:[#allocation2 + $0x1e8] sm:$0xff]
  %v144 = vld [vmem:[#allocation2 + $0x1f0] sm:$0xff]
  %v145 = vld [vmem:[#allocation2 + $0x1f8] sm:$0xff]
  %v146 = vld [vmem:[%s0] sm:$0xf]
  %v147 = vld [vmem:[%s0 + $0x4] sm:$0xf]
  %v148 = vld [vmem:[%s0 + $0x8] sm:$0xf]
  %v149 = vld [vmem:[%s0 + $0xc] sm:$0xf]
  %v150 = vld [vmem:[%s0 + $0x10] sm:$0xf]
  %v151 = vld [vmem:[%s0 + $0x14] sm:$0xf]
  %v152 = vld [vmem:[%s0 + $0x18] sm:$0xf]
  %v153 = vld [vmem:[%s0 + $0x1c] sm:$0xf]
  %v154 = vld [vmem:[%s0 + $0x20] sm:$0xf]
  %v155 = vld [vmem:[%s0 + $0x24] sm:$0xf]
  %v156 = vld [vmem:[%s0 + $0x28] sm:$0xf]
  %v157 = vld [vmem:[%s0 + $0x2c] sm:$0xf]
  %v158 = vld [vmem:[%s0 + $0x30] sm:$0xf]
  %v159 = vld [vmem:[%s0 + $0x34] sm:$0xf]
  %v160 = vld [vmem:[%s0 + $0x38] sm:$0xf]
  %v161 = vld [vmem:[%s0 + $0x3c] sm:$0xf]
  %v162 = vld [vmem:[%s0 + $0x40] sm:$0xf]
  %v163 = vld [vmem:[%s0 + $0x44] sm:$0xf]
  %v164 = vld [vmem:[%s0 + $0x48] sm:$0xf]
  %v165 = vld [vmem:[%s0 + $0x4c] sm:$0xf]
  %v166 = vld [vmem:[%s0 + $0x50] sm:$0xf]
  %v167 = vld [vmem:[%s0 + $0x54] sm:$0xf]
  %v168 = vld [vmem:[%s0 + $0x58] sm:$0xf]
  %v169 = vld [vmem:[%s0 + $0x5c] sm:$0xf]
  %v170 = vld [vmem:[%s0 + $0x60] sm:$0xf]
  %v171 = vld [vmem:[%s0 + $0x64] sm:$0xf]
  %v172 = vld [vmem:[%s0 + $0x68] sm:$0xf]
  %v173 = vld [vmem:[%s0 + $0x6c] sm:$0xf]
  %v174 = vld [vmem:[%s0 + $0x70] sm:$0xf]
  %v175 = vld [vmem:[%s0 + $0x74] sm:$0xf]
  %v176 = vld [vmem:[%s0 + $0x78] sm:$0xf]
  %v177 = vld [vmem:[%s0 + $0x7c] sm:$0xf]
  %v178 = vld [vmem:[%s0 + $0x80] sm:$0xf]
  %v179 = vld [vmem:[%s0 + $0x84] sm:$0xf]
  %v180 = vld [vmem:[%s0 + $0x88] sm:$0xf]
  %v181 = vld [vmem:[%s0 + $0x8c] sm:$0xf]
  %v182 = vld [vmem:[%s0 + $0x90] sm:$0xf]
  %v183 = vld [vmem:[%s0 + $0x94] sm:$0xf]
  %v184 = vld [vmem:[%s0 + $0x98] sm:$0xf]
  %v185 = vld [vmem:[%s0 + $0x9c] sm:$0xf]
  %v186 = vld [vmem:[%s0 + $0xa0] sm:$0xf]
  %v187 = vld [vmem:[%s0 + $0xa4] sm:$0xf]
  %v188 = vld [vmem:[%s0 + $0xa8] sm:$0xf]
  %v189 = vld [vmem:[%s0 + $0xac] sm:$0xf]
  %v190 = vld [vmem:[%s0 + $0xb0] sm:$0xf]
  %v191 = vld [vmem:[%s0 + $0xb4] sm:$0xf]
  %v192 = vld [vmem:[%s0 + $0xb8] sm:$0xf]
  %v193 = vld [vmem:[%s0 + $0xbc] sm:$0xf]
  %v194 = vld [vmem:[%s0 + $0xc0] sm:$0xf]
  %v195 = vld [vmem:[%s0 + $0xc4] sm:$0xf]
  %v196 = vld [vmem:[%s0 + $0xc8] sm:$0xf]
  %v197 = vld [vmem:[%s0 + $0xcc] sm:$0xf]
  %v198 = vld [vmem:[%s0 + $0xd0] sm:$0xf]
  %v199 = vld [vmem:[%s0 + $0xd4] sm:$0xf]
  %v200 = vld [vmem:[%s0 + $0xd8] sm:$0xf]
  %v201 = vld [vmem:[%s0 + $0xdc] sm:$0xf]
  %v202 = vld [vmem:[%s0 + $0xe0] sm:$0xf]
  %v203 = vld [vmem:[%s0 + $0xe4] sm:$0xf]
  %v204 = vld [vmem:[%s0 + $0xe8] sm:$0xf]
  %v205 = vld [vmem:[%s0 + $0xec] sm:$0xf]
  %v206 = vld [vmem:[%s0 + $0xf0] sm:$0xf]
  %v207 = vld [vmem:[%s0 + $0xf4] sm:$0xf]
  %v208 = vld [vmem:[%s0 + $0xf8] sm:$0xf]
  %v209 = vld [vmem:[%s0 + $0xfc] sm:$0xf]
  %v210 = vld [vmem:[%s1] sm:$0xf]
  %v211 = vld [vmem:[%s1 + $0x4] sm:$0xf]
  %v212 = vld [vmem:[%s1 + $0x8] sm:$0xf]
  %v213 = vld [vmem:[%s1 + $0xc] sm:$0xf]
  %v214 = vld [vmem:[%s1 + $0x10] sm:$0xf]
  %v215 = vld [vmem:[%s1 + $0x14] sm:$0xf]
  %v216 = vld [vmem:[%s1 + $0x18] sm:$0xf]
  %v217 = vld [vmem:[%s1 + $0x1c] sm:$0xf]
  %v218 = vld [vmem:[%s1 + $0x20] sm:$0xf]
  %v219 = vld [vmem:[%s1 + $0x24] sm:$0xf]
  %v220 = vld [vmem:[%s1 + $0x28] sm:$0xf]
  %v221 = vld [vmem:[%s1 + $0x2c] sm:$0xf]
  %v222 = vld [vmem:[%s1 + $0x30] sm:$0xf]
  %v223 = vld [vmem:[%s1 + $0x34] sm:$0xf]
  %v224 = vld [vmem:[%s1 + $0x38] sm:$0xf]
  %v225 = vld [vmem:[%s1 + $0x3c] sm:$0xf]
  %v290 = vunpack.c.l.b16 %v146
  %v291 = vunpack.c.l.b16 %v147
  %v292 = vunpack.c.l.b16 %v148
  %v293 = vunpack.c.l.b16 %v149
  %v294 = vunpack.c.l.b16 %v150
  %v295 = vunpack.c.l.b16 %v151
  %v296 = vunpack.c.l.b16 %v152
  %v297 = vunpack.c.l.b16 %v153
  %v298 = vunpack.c.l.b16 %v154
  %v299 = vunpack.c.l.b16 %v155
  %v300 = vunpack.c.l.b16 %v156
  %v301 = vunpack.c.l.b16 %v157
  %v302 = vunpack.c.l.b16 %v158
  %v303 = vunpack.c.l.b16 %v159
  %v304 = vunpack.c.l.b16 %v160
  %v305 = vunpack.c.l.b16 %v161
  %v306 = vunpack.c.l.b16 %v162
  %v307 = vunpack.c.l.b16 %v163
  %v308 = vunpack.c.l.b16 %v164
  %v309 = vunpack.c.l.b16 %v165
  %v310 = vunpack.c.l.b16 %v166
  %v311 = vunpack.c.l.b16 %v167
  %v312 = vunpack.c.l.b16 %v168
  %v313 = vunpack.c.l.b16 %v169
  %v314 = vunpack.c.l.b16 %v170
  %v315 = vunpack.c.l.b16 %v171
  %v316 = vunpack.c.l.b16 %v172
  %v317 = vunpack.c.l.b16 %v173
  %v318 = vunpack.c.l.b16 %v174
  %v319 = vunpack.c.l.b16 %v175
  %v320 = vunpack.c.l.b16 %v176
  %v321 = vunpack.c.l.b16 %v177
  %v322 = vunpack.c.l.b16 %v178
  %v323 = vunpack.c.l.b16 %v179
  %v324 = vunpack.c.l.b16 %v180
  %v325 = vunpack.c.l.b16 %v181
  %v326 = vunpack.c.l.b16 %v182
  %v327 = vunpack.c.l.b16 %v183
  %v328 = vunpack.c.l.b16 %v184
  %v329 = vunpack.c.l.b16 %v185
  %v330 = vunpack.c.l.b16 %v186
  %v331 = vunpack.c.l.b16 %v187
  %v332 = vunpack.c.l.b16 %v188
  %v333 = vunpack.c.l.b16 %v189
  %v334 = vunpack.c.l.b16 %v190
  %v335 = vunpack.c.l.b16 %v191
  %v336 = vunpack.c.l.b16 %v192
  %v337 = vunpack.c.l.b16 %v193
  %v338 = vunpack.c.l.b16 %v194
  %v339 = vunpack.c.l.b16 %v195
  %v340 = vunpack.c.l.b16 %v196
  %v341 = vunpack.c.l.b16 %v197
  %v342 = vunpack.c.l.b16 %v198
  %v343 = vunpack.c.l.b16 %v199
  %v344 = vunpack.c.l.b16 %v200
  %v345 = vunpack.c.l.b16 %v201
  %v346 = vunpack.c.l.b16 %v202
  %v347 = vunpack.c.l.b16 %v203
  %v348 = vunpack.c.l.b16 %v204
  %v349 = vunpack.c.l.b16 %v205
  %v350 = vunpack.c.l.b16 %v206
  %v351 = vunpack.c.l.b16 %v207
  %v352 = vunpack.c.l.b16 %v208
  %v353 = vunpack.c.l.b16 %v209
  %v354 = vpack.c.b16 %v291, %v290
  %v355 = vpack.c.b16 %v293, %v292
  %v356 = vpack.c.b16 %v295, %v294
  %v357 = vpack.c.b16 %v297, %v296
  %v358 = vpack.c.b16 %v299, %v298
  %v359 = vpack.c.b16 %v301, %v300
  %v360 = vpack.c.b16 %v303, %v302
  %v361 = vpack.c.b16 %v305, %v304
  %v362 = vpack.c.b16 %v307, %v306
  %v363 = vpack.c.b16 %v309, %v308
  %v364 = vpack.c.b16 %v311, %v310
  %v365 = vpack.c.b16 %v313, %v312
  %v366 = vpack.c.b16 %v315, %v314
  %v367 = vpack.c.b16 %v317, %v316
  %v368 = vpack.c.b16 %v319, %v318
  %v369 = vpack.c.b16 %v321, %v320
  %v370 = vpack.c.b16 %v323, %v322
  %v371 = vpack.c.b16 %v325, %v324
  %v372 = vpack.c.b16 %v327, %v326
  %v373 = vpack.c.b16 %v329, %v328
  %v374 = vpack.c.b16 %v331, %v330
  %v375 = vpack.c.b16 %v333, %v332
  %v376 = vpack.c.b16 %v335, %v334
  %v377 = vpack.c.b16 %v337, %v336
  %v378 = vpack.c.b16 %v339, %v338
  %v379 = vpack.c.b16 %v341, %v340
  %v380 = vpack.c.b16 %v343, %v342
  %v381 = vpack.c.b16 %v345, %v344
  %v382 = vpack.c.b16 %v347, %v346
  %v383 = vpack.c.b16 %v349, %v348
  %v384 = vpack.c.b16 %v351, %v350
  %v385 = vpack.c.b16 %v353, %v352
  %v434 = vunpack.c.l.b16 %v210
  %v435 = vunpack.c.l.b16 %v211
  %v436 = vunpack.c.l.b16 %v212
  %v437 = vunpack.c.l.b16 %v213
  %v438 = vunpack.c.l.b16 %v214
  %v439 = vunpack.c.l.b16 %v215
  %v440 = vunpack.c.l.b16 %v216
  %v441 = vunpack.c.l.b16 %v217
  %v442 = vunpack.c.l.b16 %v218
  %v443 = vunpack.c.l.b16 %v219
  %v444 = vunpack.c.l.b16 %v220
  %v445 = vunpack.c.l.b16 %v221
  %v446 = vunpack.c.l.b16 %v222
  %v447 = vunpack.c.l.b16 %v223
  %v448 = vunpack.c.l.b16 %v224
  %v449 = vunpack.c.l.b16 %v225
  %v450 = vpack.c.b16 %v435, %v434
  %v451 = vpack.c.b16 %v437, %v436
  %v452 = vpack.c.b16 %v439, %v438
  %v453 = vpack.c.b16 %v441, %v440
  %v454 = vpack.c.b16 %v443, %v442
  %v455 = vpack.c.b16 %v445, %v444
  %v456 = vpack.c.b16 %v447, %v446
  %v457 = vpack.c.b16 %v449, %v448
  %466 = vmatpush.bf16.msra.mxu0 %v457
  %467 = vmatpush.bf16.msra.mxu0 %v456
  %468 = vmatpush.bf16.msra.mxu0 %v455
  %469 = vmatpush.bf16.msra.mxu0 %v454
  %470 = vmatpush.bf16.msra.mxu0 %v453
  %471 = vmatpush.bf16.msra.mxu0 %v452
  %472 = vmatpush.bf16.msra.mxu0 %v451
  %473 = vmatpush.bf16.msra.mxu0 %v450
  %474 = vmatmul.bf16.gmra.mxu0 %v354
  %v475 = vpop.f32.mrf.mxu0
  %v476 = vadd.f32 0.0, %v475
  %v477 = vpop.f32.mrf.mxu0
  %v478 = vadd.f32 0.0, %v477
  %479 = vmatmul.bf16.gmra.mxu0 %v355
  %v480 = vpop.f32.mrf.mxu0
  %v481 = vadd.f32 0.0, %v480
  %v482 = vpop.f32.mrf.mxu0
  %v483 = vadd.f32 0.0, %v482
  %484 = vmatmul.bf16.gmra.mxu0 %v356
  %v485 = vpop.f32.mrf.mxu0
  %v486 = vadd.f32 0.0, %v485
  %v487 = vpop.f32.mrf.mxu0
  %v488 = vadd.f32 0.0, %v487
  %489 = vmatmul.bf16.gmra.mxu0 %v357
  %v490 = vpop.f32.mrf.mxu0
  %v491 = vadd.f32 0.0, %v490
  %v492 = vpop.f32.mrf.mxu0
  %v493 = vadd.f32 0.0, %v492
  %494 = vmatmul.bf16.gmra.mxu0 %v358
  %v495 = vpop.f32.mrf.mxu0
  %v496 = vadd.f32 0.0, %v495
  %v497 = vpop.f32.mrf.mxu0
  %v498 = vadd.f32 0.0, %v497
  %499 = vmatmul.bf16.gmra.mxu0 %v359
  %v500 = vpop.f32.mrf.mxu0
  %v501 = vadd.f32 0.0, %v500
  %v502 = vpop.f32.mrf.mxu0
  %v503 = vadd.f32 0.0, %v502
  %504 = vmatmul.bf16.gmra.mxu0 %v360
  %v505 = vpop.f32.mrf.mxu0
  %v506 = vadd.f32 0.0, %v505
  %v507 = vpop.f32.mrf.mxu0
  %v508 = vadd.f32 0.0, %v507
  %509 = vmatmul.bf16.gmra.mxu0 %v361
  %v510 = vpop.f32.mrf.mxu0
  %v511 = vadd.f32 0.0, %v510
  %v512 = vpop.f32.mrf.mxu0
  %v513 = vadd.f32 0.0, %v512
  %514 = vmatmul.bf16.gmra.mxu0 %v362
  %v515 = vpop.f32.mrf.mxu0
  %v516 = vadd.f32 0.0, %v515
  %v517 = vpop.f32.mrf.mxu0
  %v518 = vadd.f32 0.0, %v517
  %519 = vmatmul.bf16.gmra.mxu0 %v363
  %v520 = vpop.f32.mrf.mxu0
  %v521 = vadd.f32 0.0, %v520
  %v522 = vpop.f32.mrf.mxu0
  %v523 = vadd.f32 0.0, %v522
  %524 = vmatmul.bf16.gmra.mxu0 %v364
  %v525 = vpop.f32.mrf.mxu0
  %v526 = vadd.f32 0.0, %v525
  %v527 = vpop.f32.mrf.mxu0
  %v528 = vadd.f32 0.0, %v527
  %529 = vmatmul.bf16.gmra.mxu0 %v365
  %v530 = vpop.f32.mrf.mxu0
  %v531 = vadd.f32 0.0, %v530
  %v532 = vpop.f32.mrf.mxu0
  %v533 = vadd.f32 0.0, %v532
  %534 = vmatmul.bf16.gmra.mxu0 %v366
  %v535 = vpop.f32.mrf.mxu0
  %v536 = vadd.f32 0.0, %v535
  %v537 = vpop.f32.mrf.mxu0
  %v538 = vadd.f32 0.0, %v537
  %539 = vmatmul.bf16.gmra.mxu0 %v367
  %v540 = vpop.f32.mrf.mxu0
  %v541 = vadd.f32 0.0, %v540
  %v542 = vpop.f32.mrf.mxu0
  %v543 = vadd.f32 0.0, %v542
  %544 = vmatmul.bf16.gmra.mxu0 %v368
  %v545 = vpop.f32.mrf.mxu0
  %v546 = vadd.f32 0.0, %v545
  %v547 = vpop.f32.mrf.mxu0
  %v548 = vadd.f32 0.0, %v547
  %549 = vmatmul.bf16.gmra.mxu0 %v369
  %v550 = vpop.f32.mrf.mxu0
  %v551 = vadd.f32 0.0, %v550
  %v552 = vpop.f32.mrf.mxu0
  %v553 = vadd.f32 0.0, %v552
  %554 = vmatmul.bf16.gmra.mxu0 %v370
  %v555 = vpop.f32.mrf.mxu0
  %v556 = vadd.f32 0.0, %v555
  %v557 = vpop.f32.mrf.mxu0
  %v558 = vadd.f32 0.0, %v557
  %559 = vmatmul.bf16.gmra.mxu0 %v371
  %v560 = vpop.f32.mrf.mxu0
  %v561 = vadd.f32 0.0, %v560
  %v562 = vpop.f32.mrf.mxu0
  %v563 = vadd.f32 0.0, %v562
  %564 = vmatmul.bf16.gmra.mxu0 %v372
  %v565 = vpop.f32.mrf.mxu0
  %v566 = vadd.f32 0.0, %v565
  %v567 = vpop.f32.mrf.mxu0
  %v568 = vadd.f32 0.0, %v567
  %569 = vmatmul.bf16.gmra.mxu0 %v373
  %v570 = vpop.f32.mrf.mxu0
  %v571 = vadd.f32 0.0, %v570
  %v572 = vpop.f32.mrf.mxu0
  %v573 = vadd.f32 0.0, %v572
  %574 = vmatmul.bf16.gmra.mxu0 %v374
  %v575 = vpop.f32.mrf.mxu0
  %v576 = vadd.f32 0.0, %v575
  %v577 = vpop.f32.mrf.mxu0
  %v578 = vadd.f32 0.0, %v577
  %579 = vmatmul.bf16.gmra.mxu0 %v375
  %v580 = vpop.f32.mrf.mxu0
  %v581 = vadd.f32 0.0, %v580
  %v582 = vpop.f32.mrf.mxu0
  %v583 = vadd.f32 0.0, %v582
  %584 = vmatmul.bf16.gmra.mxu0 %v376
  %v585 = vpop.f32.mrf.mxu0
  %v586 = vadd.f32 0.0, %v585
  %v587 = vpop.f32.mrf.mxu0
  %v588 = vadd.f32 0.0, %v587
  %589 = vmatmul.bf16.gmra.mxu0 %v377
  %v590 = vpop.f32.mrf.mxu0
  %v591 = vadd.f32 0.0, %v590
  %v592 = vpop.f32.mrf.mxu0
  %v593 = vadd.f32 0.0, %v592
  %594 = vmatmul.bf16.gmra.mxu0 %v378
  %v595 = vpop.f32.mrf.mxu0
  %v596 = vadd.f32 0.0, %v595
  %v597 = vpop.f32.mrf.mxu0
  %v598 = vadd.f32 0.0, %v597
  %599 = vmatmul.bf16.gmra.mxu0 %v379
  %v600 = vpop.f32.mrf.mxu0
  %v601 = vadd.f32 0.0, %v600
  %v602 = vpop.f32.mrf.mxu0
  %v603 = vadd.f32 0.0, %v602
  %604 = vmatmul.bf16.gmra.mxu0 %v380
  %v605 = vpop.f32.mrf.mxu0
  %v606 = vadd.f32 0.0, %v605
  %v607 = vpop.f32.mrf.mxu0
  %v608 = vadd.f32 0.0, %v607
  %609 = vmatmul.bf16.gmra.mxu0 %v381
  %v610 = vpop.f32.mrf.mxu0
  %v611 = vadd.f32 0.0, %v610
  %v612 = vpop.f32.mrf.mxu0
  %v613 = vadd.f32 0.0, %v612
  %614 = vmatmul.bf16.gmra.mxu0 %v382
  %v615 = vpop.f32.mrf.mxu0
  %v616 = vadd.f32 0.0, %v615
  %v617 = vpop.f32.mrf.mxu0
  %v618 = vadd.f32 0.0, %v617
  %619 = vmatmul.bf16.gmra.mxu0 %v383
  %v620 = vpop.f32.mrf.mxu0
  %v621 = vadd.f32 0.0, %v620
  %v622 = vpop.f32.mrf.mxu0
  %v623 = vadd.f32 0.0, %v622
  %624 = vmatmul.bf16.gmra.mxu0 %v384
  %v625 = vpop.f32.mrf.mxu0
  %v626 = vadd.f32 0.0, %v625
  %v627 = vpop.f32.mrf.mxu0
  %v628 = vadd.f32 0.0, %v627
  %629 = vmatmul.bf16.gmra.mxu0 %v385
  %v630 = vpop.f32.mrf.mxu0
  %v631 = vadd.f32 0.0, %v630
  %v632 = vpop.f32.mrf.mxu0
  %v633 = vadd.f32 0.0, %v632
  %634 = vdwg.mxu0
  %v635 = vadd.f32 %v82, %v476
  %v636 = vadd.f32 %v83, %v478
  %v637 = vadd.f32 %v84, %v481
  %v638 = vadd.f32 %v85, %v483
  %v639 = vadd.f32 %v86, %v486
  %v640 = vadd.f32 %v87, %v488
  %v641 = vadd.f32 %v88, %v491
  %v642 = vadd.f32 %v89, %v493
  %v643 = vadd.f32 %v90, %v496
  %v644 = vadd.f32 %v91, %v498
  %v645 = vadd.f32 %v92, %v501
  %v646 = vadd.f32 %v93, %v503
  %v647 = vadd.f32 %v94, %v506
  %v648 = vadd.f32 %v95, %v508
  %v649 = vadd.f32 %v96, %v511
  %v650 = vadd.f32 %v97, %v513
  %v651 = vadd.f32 %v98, %v516
  %v652 = vadd.f32 %v99, %v518
  %v653 = vadd.f32 %v100, %v521
  %v654 = vadd.f32 %v101, %v523
  %v655 = vadd.f32 %v102, %v526
  %v656 = vadd.f32 %v103, %v528
  %v657 = vadd.f32 %v104, %v531
  %v658 = vadd.f32 %v105, %v533
  %v659 = vadd.f32 %v106, %v536
  %v660 = vadd.f32 %v107, %v538
  %v661 = vadd.f32 %v108, %v541
  %v662 = vadd.f32 %v109, %v543
  %v663 = vadd.f32 %v110, %v546
  %v664 = vadd.f32 %v111, %v548
  %v665 = vadd.f32 %v112, %v551
  %v666 = vadd.f32 %v113, %v553
  %v667 = vadd.f32 %v114, %v556
  %v668 = vadd.f32 %v115, %v558
  %v669 = vadd.f32 %v116, %v561
  %v670 = vadd.f32 %v117, %v563
  %v671 = vadd.f32 %v118, %v566
  %v672 = vadd.f32 %v119, %v568
  %v673 = vadd.f32 %v120, %v571
  %v674 = vadd.f32 %v121, %v573
  %v675 = vadd.f32 %v122, %v576
  %v676 = vadd.f32 %v123, %v578
  %v677 = vadd.f32 %v124, %v581
  %v678 = vadd.f32 %v125, %v583
  %v679 = vadd.f32 %v126, %v586
  %v680 = vadd.f32 %v127, %v588
  %v681 = vadd.f32 %v128, %v591
  %v682 = vadd.f32 %v129, %v593
  %v683 = vadd.f32 %v130, %v596
  %v684 = vadd.f32 %v131, %v598
  %v685 = vadd.f32 %v132, %v601
  %v686 = vadd.f32 %v133, %v603
  %v687 = vadd.f32 %v134, %v606
  %v688 = vadd.f32 %v135, %v608
  %v689 = vadd.f32 %v136, %v611
  %v690 = vadd.f32 %v137, %v613
  %v691 = vadd.f32 %v138, %v616
  %v692 = vadd.f32 %v139, %v618
  %v693 = vadd.f32 %v140, %v621
  %v694 = vadd.f32 %v141, %v623
  %v695 = vadd.f32 %v142, %v626
  %v696 = vadd.f32 %v143, %v628
  %v697 = vadd.f32 %v144, %v631
  %v698 = vadd.f32 %v145, %v633
  %699 = vst [vmem:[#allocation2] sm:$0xff] %v635
  %700 = vst [vmem:[#allocation2 + $0x8] sm:$0xff] %v636
  %701 = vst [vmem:[#allocation2 + $0x10] sm:$0xff] %v637
  %702 = vst [vmem:[#allocation2 + $0x18] sm:$0xff] %v638
  %703 = vst [vmem:[#allocation2 + $0x20] sm:$0xff] %v639
  %704 = vst [vmem:[#allocation2 + $0x28] sm:$0xff] %v640
  %705 = vst [vmem:[#allocation2 + $0x30] sm:$0xff] %v641
  %706 = vst [vmem:[#allocation2 + $0x38] sm:$0xff] %v642
  %707 = vst [vmem:[#allocation2 + $0x40] sm:$0xff] %v643
  %708 = vst [vmem:[#allocation2 + $0x48] sm:$0xff] %v644
  %709 = vst [vmem:[#allocation2 + $0x50] sm:$0xff] %v645
  %710 = vst [vmem:[#allocation2 + $0x58] sm:$0xff] %v646
  %711 = vst [vmem:[#allocation2 + $0x60] sm:$0xff] %v647
  %712 = vst [vmem:[#allocation2 + $0x68] sm:$0xff] %v648
  %713 = vst [vmem:[#allocation2 + $0x70] sm:$0xff] %v649
  %714 = vst [vmem:[#allocation2 + $0x78] sm:$0xff] %v650
  %715 = vst [vmem:[#allocation2 + $0x80] sm:$0xff] %v651
  %716 = vst [vmem:[#allocation2 + $0x88] sm:$0xff] %v652
  %717 = vst [vmem:[#allocation2 + $0x90] sm:$0xff] %v653
  %718 = vst [vmem:[#allocation2 + $0x98] sm:$0xff] %v654
  %719 = vst [vmem:[#allocation2 + $0xa0] sm:$0xff] %v655
  %720 = vst [vmem:[#allocation2 + $0xa8] sm:$0xff] %v656
  %721 = vst [vmem:[#allocation2 + $0xb0] sm:$0xff] %v657
  %722 = vst [vmem:[#allocation2 + $0xb8] sm:$0xff] %v658
  %723 = vst [vmem:[#allocation2 + $0xc0] sm:$0xff] %v659
  %724 = vst [vmem:[#allocation2 + $0xc8] sm:$0xff] %v660
  %725 = vst [vmem:[#allocation2 + $0xd0] sm:$0xff] %v661
  %726 = vst [vmem:[#allocation2 + $0xd8] sm:$0xff] %v662
  %727 = vst [vmem:[#allocation2 + $0xe0] sm:$0xff] %v663
  %728 = vst [vmem:[#allocation2 + $0xe8] sm:$0xff] %v664
  %729 = vst [vmem:[#allocation2 + $0xf0] sm:$0xff] %v665
  %730 = vst [vmem:[#allocation2 + $0xf8] sm:$0xff] %v666
  %731 = vst [vmem:[#allocation2 + $0x100] sm:$0xff] %v667
  %732 = vst [vmem:[#allocation2 + $0x108] sm:$0xff] %v668
  %733 = vst [vmem:[#allocation2 + $0x110] sm:$0xff] %v669
  %734 = vst [vmem:[#allocation2 + $0x118] sm:$0xff] %v670
  %735 = vst [vmem:[#allocation2 + $0x120] sm:$0xff] %v671
  %736 = vst [vmem:[#allocation2 + $0x128] sm:$0xff] %v672
  %737 = vst [vmem:[#allocation2 + $0x130] sm:$0xff] %v673
  %738 = vst [vmem:[#allocation2 + $0x138] sm:$0xff] %v674
  %739 = vst [vmem:[#allocation2 + $0x140] sm:$0xff] %v675
  %740 = vst [vmem:[#allocation2 + $0x148] sm:$0xff] %v676
  %741 = vst [vmem:[#allocation2 + $0x150] sm:$0xff] %v677
  %742 = vst [vmem:[#allocation2 + $0x158] sm:$0xff] %v678
  %743 = vst [vmem:[#allocation2 + $0x160] sm:$0xff] %v679
  %744 = vst [vmem:[#allocation2 + $0x168] sm:$0xff] %v680
  %745 = vst [vmem:[#allocation2 + $0x170] sm:$0xff] %v681
  %746 = vst [vmem:[#allocation2 + $0x178] sm:$0xff] %v682
  %747 = vst [vmem:[#allocation2 + $0x180] sm:$0xff] %v683
  %748 = vst [vmem:[#allocation2 + $0x188] sm:$0xff] %v684
  %749 = vst [vmem:[#allocation2 + $0x190] sm:$0xff] %v685
  %750 = vst [vmem:[#allocation2 + $0x198] sm:$0xff] %v686
  %751 = vst [vmem:[#allocation2 + $0x1a0] sm:$0xff] %v687
  %752 = vst [vmem:[#allocation2 + $0x1a8] sm:$0xff] %v688
  %753 = vst [vmem:[#allocation2 + $0x1b0] sm:$0xff] %v689
  %754 = vst [vmem:[#allocation2 + $0x1b8] sm:$0xff] %v690
  %755 = vst [vmem:[#allocation2 + $0x1c0] sm:$0xff] %v691
  %756 = vst [vmem:[#allocation2 + $0x1c8] sm:$0xff] %v692
  %757 = vst [vmem:[#allocation2 + $0x1d0] sm:$0xff] %v693
  %758 = vst [vmem:[#allocation2 + $0x1d8] sm:$0xff] %v694
  %759 = vst [vmem:[#allocation2 + $0x1e0] sm:$0xff] %v695
  %760 = vst [vmem:[#allocation2 + $0x1e8] sm:$0xff] %v696
  %761 = vst [vmem:[#allocation2 + $0x1f0] sm:$0xff] %v697
  %762 = vst [vmem:[#allocation2 + $0x1f8] sm:$0xff] %v698
  // Predicated region
  $region18: #{cnn_forward.7} parent=0 // pred_check
    %p763 = pneg %p14
  $region19: #{cnn_forward.7} parent=0 // pred_check_branch
    %765 = sbr.rel (%p763) target = $region21
  $region20: #{cnn_forward.7} parent=0 // pred_region
    %v766 = vld [vmem:[#allocation2] sm:$0xff]
    %v767 = vld [vmem:[#allocation2 + $0x8] sm:$0xff]
    %v768 = vld [vmem:[#allocation2 + $0x10] sm:$0xff]
    %v769 = vld [vmem:[#allocation2 + $0x18] sm:$0xff]
    %v770 = vld [vmem:[#allocation2 + $0x20] sm:$0xff]
    %v771 = vld [vmem:[#allocation2 + $0x28] sm:$0xff]
    %v772 = vld [vmem:[#allocation2 + $0x30] sm:$0xff]
    %v773 = vld [vmem:[#allocation2 + $0x38] sm:$0xff]
    %v774 = vld [vmem:[#allocation2 + $0x40] sm:$0xff]
    %v775 = vld [vmem:[#allocation2 + $0x48] sm:$0xff]
    %v776 = vld [vmem:[#allocation2 + $0x50] sm:$0xff]
    %v777 = vld [vmem:[#allocation2 + $0x58] sm:$0xff]
    %v778 = vld [vmem:[#allocation2 + $0x60] sm:$0xff]
    %v779 = vld [vmem:[#allocation2 + $0x68] sm:$0xff]
    %v780 = vld [vmem:[#allocation2 + $0x70] sm:$0xff]
    %v781 = vld [vmem:[#allocation2 + $0x78] sm:$0xff]
    %v782 = vld [vmem:[#allocation2 + $0x80] sm:$0xff]
    %v783 = vld [vmem:[#allocation2 + $0x88] sm:$0xff]
    %v784 = vld [vmem:[#allocation2 + $0x90] sm:$0xff]
    %v785 = vld [vmem:[#allocation2 + $0x98] sm:$0xff]
    %v786 = vld [vmem:[#allocation2 + $0xa0] sm:$0xff]
    %v787 = vld [vmem:[#allocation2 + $0xa8] sm:$0xff]
    %v788 = vld [vmem:[#allocation2 + $0xb0] sm:$0xff]
    %v789 = vld [vmem:[#allocation2 + $0xb8] sm:$0xff]
    %v790 = vld [vmem:[#allocation2 + $0xc0] sm:$0xff]
    %v791 = vld [vmem:[#allocation2 + $0xc8] sm:$0xff]
    %v792 = vld [vmem:[#allocation2 + $0xd0] sm:$0xff]
    %v793 = vld [vmem:[#allocation2 + $0xd8] sm:$0xff]
    %v794 = vld [vmem:[#allocation2 + $0xe0] sm:$0xff]
    %v795 = vld [vmem:[#allocation2 + $0xe8] sm:$0xff]
    %v796 = vld [vmem:[#allocation2 + $0xf0] sm:$0xff]
    %v797 = vld [vmem:[#allocation2 + $0xf8] sm:$0xff]
    %v798 = vld [vmem:[#allocation2 + $0x100] sm:$0xff]
    %v799 = vld [vmem:[#allocation2 + $0x108] sm:$0xff]
    %v800 = vld [vmem:[#allocation2 + $0x110] sm:$0xff]
    %v801 = vld [vmem:[#allocation2 + $0x118] sm:$0xff]
    %v802 = vld [vmem:[#allocation2 + $0x120] sm:$0xff]
    %v803 = vld [vmem:[#allocation2 + $0x128] sm:$0xff]
    %v804 = vld [vmem:[#allocation2 + $0x130] sm:$0xff]
    %v805 = vld [vmem:[#allocation2 + $0x138] sm:$0xff]
    %v806 = vld [vmem:[#allocation2 + $0x140] sm:$0xff]
    %v807 = vld [vmem:[#allocation2 + $0x148] sm:$0xff]
    %v808 = vld [vmem:[#allocation2 + $0x150] sm:$0xff]
    %v809 = vld [vmem:[#allocation2 + $0x158] sm:$0xff]
    %v810 = vld [vmem:[#allocation2 + $0x160] sm:$0xff]
    %v811 = vld [vmem:[#allocation2 + $0x168] sm:$0xff]
    %v812 = vld [vmem:[#allocation2 + $0x170] sm:$0xff]
    %v813 = vld [vmem:[#allocation2 + $0x178] sm:$0xff]
    %v814 = vld [vmem:[#allocation2 + $0x180] sm:$0xff]
    %v815 = vld [vmem:[#allocation2 + $0x188] sm:$0xff]
    %v816 = vld [vmem:[#allocation2 + $0x190] sm:$0xff]
    %v817 = vld [vmem:[#allocation2 + $0x198] sm:$0xff]
    %v818 = vld [vmem:[#allocation2 + $0x1a0] sm:$0xff]
    %v819 = vld [vmem:[#allocation2 + $0x1a8] sm:$0xff]
    %v820 = vld [vmem:[#allocation2 + $0x1b0] sm:$0xff]
    %v821 = vld [vmem:[#allocation2 + $0x1b8] sm:$0xff]
    %v822 = vld [vmem:[#allocation2 + $0x1c0] sm:$0xff]
    %v823 = vld [vmem:[#allocation2 + $0x1c8] sm:$0xff]
    %v824 = vld [vmem:[#allocation2 + $0x1d0] sm:$0xff]
    %v825 = vld [vmem:[#allocation2 + $0x1d8] sm:$0xff]
    %v826 = vld [vmem:[#allocation2 + $0x1e0] sm:$0xff]
    %v827 = vld [vmem:[#allocation2 + $0x1e8] sm:$0xff]
    %v828 = vld [vmem:[#allocation2 + $0x1f0] sm:$0xff]
    %v829 = vld [vmem:[#allocation2 + $0x1f8] sm:$0xff]
    %v830 = vld [vmem:[%s2] sm:$0x1]
    %v832 = vperm.slane %v830, 0
    %v834 = vadd.f32 %v766, %v832
    %v835 = vadd.f32 %v767, %v832
    %v836 = vadd.f32 %v768, %v832
    %v837 = vadd.f32 %v769, %v832
    %v838 = vadd.f32 %v770, %v832
    %v839 = vadd.f32 %v771, %v832
    %v840 = vadd.f32 %v772, %v832
    %v841 = vadd.f32 %v773, %v832
    %v842 = vadd.f32 %v774, %v832
    %v843 = vadd.f32 %v775, %v832
    %v844 = vadd.f32 %v776, %v832
    %v845 = vadd.f32 %v777, %v832
    %v846 = vadd.f32 %v778, %v832
    %v847 = vadd.f32 %v779, %v832
    %v848 = vadd.f32 %v780, %v832
    %v849 = vadd.f32 %v781, %v832
    %v850 = vadd.f32 %v782, %v832
    %v851 = vadd.f32 %v783, %v832
    %v852 = vadd.f32 %v784, %v832
    %v853 = vadd.f32 %v785, %v832
    %v854 = vadd.f32 %v786, %v832
    %v855 = vadd.f32 %v787, %v832
    %v856 = vadd.f32 %v788, %v832
    %v857 = vadd.f32 %v789, %v832
    %v858 = vadd.f32 %v790, %v832
    %v859 = vadd.f32 %v791, %v832
    %v860 = vadd.f32 %v792, %v832
    %v861 = vadd.f32 %v793, %v832
    %v862 = vadd.f32 %v794, %v832
    %v863 = vadd.f32 %v795, %v832
    %v864 = vadd.f32 %v796, %v832
    %v865 = vadd.f32 %v797, %v832
    %v866 = vadd.f32 %v798, %v832
    %v867 = vadd.f32 %v799, %v832
    %v868 = vadd.f32 %v800, %v832
    %v869 = vadd.f32 %v801, %v832
    %v870 = vadd.f32 %v802, %v832
    %v871 = vadd.f32 %v803, %v832
    %v872 = vadd.f32 %v804, %v832
    %v873 = vadd.f32 %v805, %v832
    %v874 = vadd.f32 %v806, %v832
    %v875 = vadd.f32 %v807, %v832
    %v876 = vadd.f32 %v808, %v832
    %v877 = vadd.f32 %v809, %v832
    %v878 = vadd.f32 %v810, %v832
    %v879 = vadd.f32 %v811, %v832
    %v880 = vadd.f32 %v812, %v832
    %v881 = vadd.f32 %v813, %v832
    %v882 = vadd.f32 %v814, %v832
    %v883 = vadd.f32 %v815, %v832
    %v884 = vadd.f32 %v816, %v832
    %v885 = vadd.f32 %v817, %v832
    %v886 = vadd.f32 %v818, %v832
    %v887 = vadd.f32 %v819, %v832
    %v888 = vadd.f32 %v820, %v832
    %v889 = vadd.f32 %v821, %v832
    %v890 = vadd.f32 %v822, %v832
    %v891 = vadd.f32 %v823, %v832
    %v892 = vadd.f32 %v824, %v832
    %v893 = vadd.f32 %v825, %v832
    %v894 = vadd.f32 %v826, %v832
    %v895 = vadd.f32 %v827, %v832
    %v896 = vadd.f32 %v828, %v832
    %v897 = vadd.f32 %v829, %v832
    %v898 = vmax.f32 %v834, 0.0
    %v899 = vmax.f32 %v835, 0.0
    %v900 = vmax.f32 %v836, 0.0
    %v901 = vmax.f32 %v837, 0.0
    %v902 = vmax.f32 %v838, 0.0
    %v903 = vmax.f32 %v839, 0.0
    %v904 = vmax.f32 %v840, 0.0
    %v905 = vmax.f32 %v841, 0.0
    %v906 = vmax.f32 %v842, 0.0
    %v907 = vmax.f32 %v843, 0.0
    %v908 = vmax.f32 %v844, 0.0
    %v909 = vmax.f32 %v845, 0.0
    %v910 = vmax.f32 %v846, 0.0
    %v911 = vmax.f32 %v847, 0.0
    %v912 = vmax.f32 %v848, 0.0
    %v913 = vmax.f32 %v849, 0.0
    %v914 = vmax.f32 %v850, 0.0
    %v915 = vmax.f32 %v851, 0.0
    %v916 = vmax.f32 %v852, 0.0
    %v917 = vmax.f32 %v853, 0.0
    %v918 = vmax.f32 %v854, 0.0
    %v919 = vmax.f32 %v855, 0.0
    %v920 = vmax.f32 %v856, 0.0
    %v921 = vmax.f32 %v857, 0.0
    %v922 = vmax.f32 %v858, 0.0
    %v923 = vmax.f32 %v859, 0.0
    %v924 = vmax.f32 %v860, 0.0
    %v925 = vmax.f32 %v861, 0.0
    %v926 = vmax.f32 %v862, 0.0
    %v927 = vmax.f32 %v863, 0.0
    %v928 = vmax.f32 %v864, 0.0
    %v929 = vmax.f32 %v865, 0.0
    %v930 = vmax.f32 %v866, 0.0
    %v931 = vmax.f32 %v867, 0.0
    %v932 = vmax.f32 %v868, 0.0
    %v933 = vmax.f32 %v869, 0.0
    %v934 = vmax.f32 %v870, 0.0
    %v935 = vmax.f32 %v871, 0.0
    %v936 = vmax.f32 %v872, 0.0
    %v937 = vmax.f32 %v873, 0.0
    %v938 = vmax.f32 %v874, 0.0
    %v939 = vmax.f32 %v875, 0.0
    %v940 = vmax.f32 %v876, 0.0
    %v941 = vmax.f32 %v877, 0.0
    %v942 = vmax.f32 %v878, 0.0
    %v943 = vmax.f32 %v879, 0.0
    %v944 = vmax.f32 %v880, 0.0
    %v945 = vmax.f32 %v881, 0.0
    %v946 = vmax.f32 %v882, 0.0
    %v947 = vmax.f32 %v883, 0.0
    %v948 = vmax.f32 %v884, 0.0
    %v949 = vmax.f32 %v885, 0.0
    %v950 = vmax.f32 %v886, 0.0
    %v951 = vmax.f32 %v887, 0.0
    %v952 = vmax.f32 %v888, 0.0
    %v953 = vmax.f32 %v889, 0.0
    %v954 = vmax.f32 %v890, 0.0
    %v955 = vmax.f32 %v891, 0.0
    %v956 = vmax.f32 %v892, 0.0
    %v957 = vmax.f32 %v893, 0.0
    %v958 = vmax.f32 %v894, 0.0
    %v959 = vmax.f32 %v895, 0.0
    %v960 = vmax.f32 %v896, 0.0
    %v961 = vmax.f32 %v897, 0.0
    %v962 = vpack.c.bf16 %v898, %v898
    %v963 = vpack.c.bf16 %v899, %v899
    %v964 = vpack.c.bf16 %v900, %v900
    %v965 = vpack.c.bf16 %v901, %v901
    %v966 = vpack.c.bf16 %v902, %v902
    %v967 = vpack.c.bf16 %v903, %v903
    %v968 = vpack.c.bf16 %v904, %v904
    %v969 = vpack.c.bf16 %v905, %v905
    %v970 = vpack.c.bf16 %v906, %v906
    %v971 = vpack.c.bf16 %v907, %v907
    %v972 = vpack.c.bf16 %v908, %v908
    %v973 = vpack.c.bf16 %v909, %v909
    %v974 = vpack.c.bf16 %v910, %v910
    %v975 = vpack.c.bf16 %v911, %v911
    %v976 = vpack.c.bf16 %v912, %v912
    %v977 = vpack.c.bf16 %v913, %v913
    %v978 = vpack.c.bf16 %v914, %v914
    %v979 = vpack.c.bf16 %v915, %v915
    %v980 = vpack.c.bf16 %v916, %v916
    %v981 = vpack.c.bf16 %v917, %v917
    %v982 = vpack.c.bf16 %v918, %v918
    %v983 = vpack.c.bf16 %v919, %v919
    %v984 = vpack.c.bf16 %v920, %v920
    %v985 = vpack.c.bf16 %v921, %v921
    %v986 = vpack.c.bf16 %v922, %v922
    %v987 = vpack.c.bf16 %v923, %v923
    %v988 = vpack.c.bf16 %v924, %v924
    %v989 = vpack.c.bf16 %v925, %v925
    %v990 = vpack.c.bf16 %v926, %v926
    %v991 = vpack.c.bf16 %v927, %v927
    %v992 = vpack.c.bf16 %v928, %v928
    %v993 = vpack.c.bf16 %v929, %v929
    %v994 = vpack.c.bf16 %v930, %v930
    %v995 = vpack.c.bf16 %v931, %v931
    %v996 = vpack.c.bf16 %v932, %v932
    %v997 = vpack.c.bf16 %v933, %v933
    %v998 = vpack.c.bf16 %v934, %v934
    %v999 = vpack.c.bf16 %v935, %v935
    %v1000 = vpack.c.bf16 %v936, %v936
    %v1001 = vpack.c.bf16 %v937, %v937
    %v1002 = vpack.c.bf16 %v938, %v938
    %v1003 = vpack.c.bf16 %v939, %v939
    %v1004 = vpack.c.bf16 %v940, %v940
    %v1005 = vpack.c.bf16 %v941, %v941
    %v1006 = vpack.c.bf16 %v942, %v942
    %v1007 = vpack.c.bf16 %v943, %v943
    %v1008 = vpack.c.bf16 %v944, %v944
    %v1009 = vpack.c.bf16 %v945, %v945
    %v1010 = vpack.c.bf16 %v946, %v946
    %v1011 = vpack.c.bf16 %v947, %v947
    %v1012 = vpack.c.bf16 %v948, %v948
    %v1013 = vpack.c.bf16 %v949, %v949
    %v1014 = vpack.c.bf16 %v950, %v950
    %v1015 = vpack.c.bf16 %v951, %v951
    %v1016 = vpack.c.bf16 %v952, %v952
    %v1017 = vpack.c.bf16 %v953, %v953
    %v1018 = vpack.c.bf16 %v954, %v954
    %v1019 = vpack.c.bf16 %v955, %v955
    %v1020 = vpack.c.bf16 %v956, %v956
    %v1021 = vpack.c.bf16 %v957, %v957
    %v1022 = vpack.c.bf16 %v958, %v958
    %v1023 = vpack.c.bf16 %v959, %v959
    %v1024 = vpack.c.bf16 %v960, %v960
    %v1025 = vpack.c.bf16 %v961, %v961
    %1026 = vst [vmem:[%s3] sm:$0xf] %v962
    %1027 = vst [vmem:[%s3 + $0x4] sm:$0xf] %v963
    %1028 = vst [vmem:[%s3 + $0x8] sm:$0xf] %v964
    %1029 = vst [vmem:[%s3 + $0xc] sm:$0xf] %v965
    %1030 = vst [vmem:[%s3 + $0x10] sm:$0xf] %v966
    %1031 = vst [vmem:[%s3 + $0x14] sm:$0xf] %v967
    %1032 = vst [vmem:[%s3 + $0x18] sm:$0xf] %v968
    %1033 = vst [vmem:[%s3 + $0x1c] sm:$0xf] %v969
    %1034 = vst [vmem:[%s3 + $0x20] sm:$0xf] %v970
    %1035 = vst [vmem:[%s3 + $0x24] sm:$0xf] %v971
    %1036 = vst [vmem:[%s3 + $0x28] sm:$0xf] %v972
    %1037 = vst [vmem:[%s3 + $0x2c] sm:$0xf] %v973
    %1038 = vst [vmem:[%s3 + $0x30] sm:$0xf] %v974
    %1039 = vst [vmem:[%s3 + $0x34] sm:$0xf] %v975
    %1040 = vst [vmem:[%s3 + $0x38] sm:$0xf] %v976
    %1041 = vst [vmem:[%s3 + $0x3c] sm:$0xf] %v977
    %1042 = vst [vmem:[%s3 + $0x40] sm:$0xf] %v978
    %1043 = vst [vmem:[%s3 + $0x44] sm:$0xf] %v979
    %1044 = vst [vmem:[%s3 + $0x48] sm:$0xf] %v980
    %1045 = vst [vmem:[%s3 + $0x4c] sm:$0xf] %v981
    %1046 = vst [vmem:[%s3 + $0x50] sm:$0xf] %v982
    %1047 = vst [vmem:[%s3 + $0x54] sm:$0xf] %v983
    %1048 = vst [vmem:[%s3 + $0x58] sm:$0xf] %v984
    %1049 = vst [vmem:[%s3 + $0x5c] sm:$0xf] %v985
    %1050 = vst [vmem:[%s3 + $0x60] sm:$0xf] %v986
    %1051 = vst [vmem:[%s3 + $0x64] sm:$0xf] %v987
    %1052 = vst [vmem:[%s3 + $0x68] sm:$0xf] %v988
    %1053 = vst [vmem:[%s3 + $0x6c] sm:$0xf] %v989
    %1054 = vst [vmem:[%s3 + $0x70] sm:$0xf] %v990
    %1055 = vst [vmem:[%s3 + $0x74] sm:$0xf] %v991
    %1056 = vst [vmem:[%s3 + $0x78] sm:$0xf] %v992
    %1057 = vst [vmem:[%s3 + $0x7c] sm:$0xf] %v993
    %1058 = vst [vmem:[%s3 + $0x80] sm:$0xf] %v994
    %1059 = vst [vmem:[%s3 + $0x84] sm:$0xf] %v995
    %1060 = vst [vmem:[%s3 + $0x88] sm:$0xf] %v996
    %1061 = vst [vmem:[%s3 + $0x8c] sm:$0xf] %v997
    %1062 = vst [vmem:[%s3 + $0x90] sm:$0xf] %v998
    %1063 = vst [vmem:[%s3 + $0x94] sm:$0xf] %v999
    %1064 = vst [vmem:[%s3 + $0x98] sm:$0xf] %v1000
    %1065 = vst [vmem:[%s3 + $0x9c] sm:$0xf] %v1001
    %1066 = vst [vmem:[%s3 + $0xa0] sm:$0xf] %v1002
    %1067 = vst [vmem:[%s3 + $0xa4] sm:$0xf] %v1003
    %1068 = vst [vmem:[%s3 + $0xa8] sm:$0xf] %v1004
    %1069 = vst [vmem:[%s3 + $0xac] sm:$0xf] %v1005
    %1070 = vst [vmem:[%s3 + $0xb0] sm:$0xf] %v1006
    %1071 = vst [vmem:[%s3 + $0xb4] sm:$0xf] %v1007
    %1072 = vst [vmem:[%s3 + $0xb8] sm:$0xf] %v1008
    %1073 = vst [vmem:[%s3 + $0xbc] sm:$0xf] %v1009
    %1074 = vst [vmem:[%s3 + $0xc0] sm:$0xf] %v1010
    %1075 = vst [vmem:[%s3 + $0xc4] sm:$0xf] %v1011
    %1076 = vst [vmem:[%s3 + $0xc8] sm:$0xf] %v1012
    %1077 = vst [vmem:[%s3 + $0xcc] sm:$0xf] %v1013
    %1078 = vst [vmem:[%s3 + $0xd0] sm:$0xf] %v1014
    %1079 = vst [vmem:[%s3 + $0xd4] sm:$0xf] %v1015
    %1080 = vst [vmem:[%s3 + $0xd8] sm:$0xf] %v1016
    %1081 = vst [vmem:[%s3 + $0xdc] sm:$0xf] %v1017
    %1082 = vst [vmem:[%s3 + $0xe0] sm:$0xf] %v1018
    %1083 = vst [vmem:[%s3 + $0xe4] sm:$0xf] %v1019
    %1084 = vst [vmem:[%s3 + $0xe8] sm:$0xf] %v1020
    %1085 = vst [vmem:[%s3 + $0xec] sm:$0xf] %v1021
    %1086 = vst [vmem:[%s3 + $0xf0] sm:$0xf] %v1022
    %1087 = vst [vmem:[%s3 + $0xf4] sm:$0xf] %v1023
    %1088 = vst [vmem:[%s3 + $0xf8] sm:$0xf] %v1024
    %1089 = vst [vmem:[%s3 + $0xfc] sm:$0xf] %v1025
  $region21: #{cnn_forward.7} parent=0 // pred_fallthru
    _
  // Predicated region
  $region22: #{cnn_forward.7} parent=0 // pred_check
    _
  $region23: #{cnn_forward.7} parent=0 // pred_check_branch
    %1091 = sbr.rel (0) target = $region25
  $region24: #{cnn_forward.7} parent=0 // pred_region
    _
  $region25: #{cnn_forward.7} parent=0 // pred_fallthru
    _
  // Predicated region
  $region26: #{cnn_forward.7} parent=0 // pred_check
    _
  $region27: #{cnn_forward.7} parent=0 // pred_check_branch
    %1093 = sbr.rel (0) target = $region29
  $region28: #{cnn_forward.7} parent=0 // pred_region
    _
  $region29: #{cnn_forward.7} parent=0 // pred_fallthru
    _

// kernel: cnn_forward.8
$region0: #{cnn_forward.8}
  #allocation0 [shape = 'u32[]', space=smem, size = 0x4, offset = 0x4, fixed_abs, tag = 'smem constant byte address 0x4 - core index']
  #allocation1 [shape = 'u32[72,128]{1,0:T(1,128)}', space=vmem, size = 0x9000, scoped, tag = 'internal scratch']
  #allocation2 [shape = 'f32[128,128]{1,0:T(8,128)}', space=vmem, size = 0x10000, scoped, tag = 'scratch operand']
  %s0 = inlined_call_operand.vmem [shape: bf16[128,640], index: 0, kind: input, shape index: {}]
  %s1 = inlined_call_operand.vmem [shape: bf16[640,128], index: 1, kind: input, shape index: {}]
  %s2 = inlined_call_operand.vmem [shape: f32[1,128], index: 2, kind: input, shape index: {}]
  %s3 = inlined_call_operand.vmem [shape: bf16[128,128], index: 3, kind: output, shape index: {}]
  %s4 = sld [smem:[#allocation0]]
  $region30: #{cnn_forward.8} parent=0
    _
  %s6 = ssub.s32 1, %s4
  %s7 = scalar_select 0, %s6, %s4
  // Predicated region
  $region2: #{cnn_forward.8} parent=0 // pred_check
    _
  $region3: #{cnn_forward.8} parent=0 // pred_check_branch
    %9 = sbr.rel (0) target = $region5
  $region4: #{cnn_forward.8} parent=0 // pred_region
    _
  $region5: #{cnn_forward.8} parent=0 // pred_fallthru
    _
  // Predicated region
  $region6: #{cnn_forward.8} parent=0 // pred_check
    _
  $region7: #{cnn_forward.8} parent=0 // pred_check_branch
    %11 = sbr.rel (0) target = $region9
  $region8: #{cnn_forward.8} parent=0 // pred_region
    _
  $region9: #{cnn_forward.8} parent=0 // pred_fallthru
    _
  // Predicated region
  $region10: #{cnn_forward.8} parent=0 // pred_check
    _
  $region11: #{cnn_forward.8} parent=0 // pred_check_branch
    %13 = sbr.rel (0) target = $region13
  $region12: #{cnn_forward.8} parent=0 // pred_region
    _
  $region13: #{cnn_forward.8} parent=0 // pred_fallthru
    _
  %p14 = scmp.eq.s32.totalorder 0, 0
  // Predicated region
  $region14: #{cnn_forward.8} parent=0 // pred_check
    %p15 = pneg %p14
  $region15: #{cnn_forward.8} parent=0 // pred_check_branch
    %17 = sbr.rel (%p15) target = $region17
  $region16: #{cnn_forward.8} parent=0 // pred_region
    %18 = vst [vmem:[#allocation2] sm:$0xff] 0.0
    %19 = vst [vmem:[#allocation2 + $0x8] sm:$0xff] 0.0
    %20 = vst [vmem:[#allocation2 + $0x10] sm:$0xff] 0.0
    %21 = vst [vmem:[#allocation2 + $0x18] sm:$0xff] 0.0
    %22 = vst [vmem:[#allocation2 + $0x20] sm:$0xff] 0.0
    %23 = vst [vmem:[#allocation2 + $0x28] sm:$0xff] 0.0
    %24 = vst [vmem:[#allocation2 + $0x30] sm:$0xff] 0.0
    %25 = vst [vmem:[#allocation2 + $0x38] sm:$0xff] 0.0
    %26 = vst [vmem:[#allocation2 + $0x40] sm:$0xff] 0.0
    %27 = vst [vmem:[#allocation2 + $0x48] sm:$0xff] 0.0
    %28 = vst [vmem:[#allocation2 + $0x50] sm:$0xff] 0.0
    %29 = vst [vmem:[#allocation2 + $0x58] sm:$0xff] 0.0
    %30 = vst [vmem:[#allocation2 + $0x60] sm:$0xff] 0.0
    %31 = vst [vmem:[#allocation2 + $0x68] sm:$0xff] 0.0
    %32 = vst [vmem:[#allocation2 + $0x70] sm:$0xff] 0.0
    %33 = vst [vmem:[#allocation2 + $0x78] sm:$0xff] 0.0
  $region17: #{cnn_forward.8} parent=0 // pred_fallthru
    _
  %v34 = vld [vmem:[#allocation2] sm:$0xff]
  %v35 = vld [vmem:[#allocation2 + $0x8] sm:$0xff]
  %v36 = vld [vmem:[#allocation2 + $0x10] sm:$0xff]
  %v37 = vld [vmem:[#allocation2 + $0x18] sm:$0xff]
  %v38 = vld [vmem:[#allocation2 + $0x20] sm:$0xff]
  %v39 = vld [vmem:[#allocation2 + $0x28] sm:$0xff]
  %v40 = vld [vmem:[#allocation2 + $0x30] sm:$0xff]
  %v41 = vld [vmem:[#allocation2 + $0x38] sm:$0xff]
  %v42 = vld [vmem:[#allocation2 + $0x40] sm:$0xff]
  %v43 = vld [vmem:[#allocation2 + $0x48] sm:$0xff]
  %v44 = vld [vmem:[#allocation2 + $0x50] sm:$0xff]
  %v45 = vld [vmem:[#allocation2 + $0x58] sm:$0xff]
  %v46 = vld [vmem:[#allocation2 + $0x60] sm:$0xff]
  %v47 = vld [vmem:[#allocation2 + $0x68] sm:$0xff]
  %v48 = vld [vmem:[#allocation2 + $0x70] sm:$0xff]
  %v49 = vld [vmem:[#allocation2 + $0x78] sm:$0xff]
  %v50 = vld [vmem:[%s0] sm:$0xff]
  %v51 = vld [vmem:[%s0 + $0x8] sm:$0xff]
  %v52 = vld [vmem:[%s0 + $0x10] sm:$0xf]
  %v53 = vld [vmem:[%s0 + $0x14] sm:$0xff]
  %v54 = vld [vmem:[%s0 + $0x1c] sm:$0xff]
  %v55 = vld [vmem:[%s0 + $0x24] sm:$0xf]
  %v56 = vld [vmem:[%s0 + $0x28] sm:$0xff]
  %v57 = vld [vmem:[%s0 + $0x30] sm:$0xff]
  %v58 = vld [vmem:[%s0 + $0x38] sm:$0xf]
  %v59 = vld [vmem:[%s0 + $0x3c] sm:$0xff]
  %v60 = vld [vmem:[%s0 + $0x44] sm:$0xff]
  %v61 = vld [vmem:[%s0 + $0x4c] sm:$0xf]
  %v62 = vld [vmem:[%s0 + $0x50] sm:$0xff]
  %v63 = vld [vmem:[%s0 + $0x58] sm:$0xff]
  %v64 = vld [vmem:[%s0 + $0x60] sm:$0xf]
  %v65 = vld [vmem:[%s0 + $0x64] sm:$0xff]
  %v66 = vld [vmem:[%s0 + $0x6c] sm:$0xff]
  %v67 = vld [vmem:[%s0 + $0x74] sm:$0xf]
  %v68 = vld [vmem:[%s0 + $0x78] sm:$0xff]
  %v69 = vld [vmem:[%s0 + $0x80] sm:$0xff]
  %v70 = vld [vmem:[%s0 + $0x88] sm:$0xf]
  %v71 = vld [vmem:[%s0 + $0x8c] sm:$0xff]
  %v72 = vld [vmem:[%s0 + $0x94] sm:$0xff]
  %v73 = vld [vmem:[%s0 + $0x9c] sm:$0xf]
  %v74 = vld [vmem:[%s0 + $0xa0] sm:$0xff]
  %v75 = vld [vmem:[%s0 + $0xa8] sm:$0xff]
  %v76 = vld [vmem:[%s0 + $0xb0] sm:$0xf]
  %v77 = vld [vmem:[%s0 + $0xb4] sm:$0xff]
  %v78 = vld [vmem:[%s0 + $0xbc] sm:$0xff]
  %v79 = vld [vmem:[%s0 + $0xc4] sm:$0xf]
  %v80 = vld [vmem:[%s0 + $0xc8] sm:$0xff]
  %v81 = vld [vmem:[%s0 + $0xd0] sm:$0xff]
  %v82 = vld [vmem:[%s0 + $0xd8] sm:$0xf]
  %v83 = vld [vmem:[%s0 + $0xdc] sm:$0xff]
  %v84 = vld [vmem:[%s0 + $0xe4] sm:$0xff]
  %v85 = vld [vmem:[%s0 + $0xec] sm:$0xf]
  %v86 = vld [vmem:[%s0 + $0xf0] sm:$0xff]
  %v87 = vld [vmem:[%s0 + $0xf8] sm:$0xff]
  %v88 = vld [vmem:[%s0 + $0x100] sm:$0xf]
  %v89 = vld [vmem:[%s0 + $0x104] sm:$0xff]
  %v90 = vld [vmem:[%s0 + $0x10c] sm:$0xff]
  %v91 = vld [vmem:[%s0 + $0x114] sm:$0xf]
  %v92 = vld [vmem:[%s0 + $0x118] sm:$0xff]
  %v93 = vld [vmem:[%s0 + $0x120] sm:$0xff]
  %v94 = vld [vmem:[%s0 + $0x128] sm:$0xf]
  %v95 = vld [vmem:[%s0 + $0x12c] sm:$0xff]
  %v96 = vld [vmem:[%s0 + $0x134] sm:$0xff]
  %v97 = vld [vmem:[%s0 + $0x13c] sm:$0xf]
  %v98 = vld [vmem:[%s1] sm:$0xf]
  %v99 = vld [vmem:[%s1 + $0x4] sm:$0xf]
  %v100 = vld [vmem:[%s1 + $0x8] sm:$0xf]
  %v101 = vld [vmem:[%s1 + $0xc] sm:$0xf]
  %v102 = vld [vmem:[%s1 + $0x10] sm:$0xf]
  %v103 = vld [vmem:[%s1 + $0x14] sm:$0xf]
  %v104 = vld [vmem:[%s1 + $0x18] sm:$0xf]
  %v105 = vld [vmem:[%s1 + $0x1c] sm:$0xf]
  %v106 = vld [vmem:[%s1 + $0x20] sm:$0xf]
  %v107 = vld [vmem:[%s1 + $0x24] sm:$0xf]
  %v108 = vld [vmem:[%s1 + $0x28] sm:$0xf]
  %v109 = vld [vmem:[%s1 + $0x2c] sm:$0xf]
  %v110 = vld [vmem:[%s1 + $0x30] sm:$0xf]
  %v111 = vld [vmem:[%s1 + $0x34] sm:$0xf]
  %v112 = vld [vmem:[%s1 + $0x38] sm:$0xf]
  %v113 = vld [vmem:[%s1 + $0x3c] sm:$0xf]
  %v114 = vld [vmem:[%s1 + $0x40] sm:$0xf]
  %v115 = vld [vmem:[%s1 + $0x44] sm:$0xf]
  %v116 = vld [vmem:[%s1 + $0x48] sm:$0xf]
  %v117 = vld [vmem:[%s1 + $0x4c] sm:$0xf]
  %v118 = vld [vmem:[%s1 + $0x50] sm:$0xf]
  %v119 = vld [vmem:[%s1 + $0x54] sm:$0xf]
  %v120 = vld [vmem:[%s1 + $0x58] sm:$0xf]
  %v121 = vld [vmem:[%s1 + $0x5c] sm:$0xf]
  %v122 = vld [vmem:[%s1 + $0x60] sm:$0xf]
  %v123 = vld [vmem:[%s1 + $0x64] sm:$0xf]
  %v124 = vld [vmem:[%s1 + $0x68] sm:$0xf]
  %v125 = vld [vmem:[%s1 + $0x6c] sm:$0xf]
  %v126 = vld [vmem:[%s1 + $0x70] sm:$0xf]
  %v127 = vld [vmem:[%s1 + $0x74] sm:$0xf]
  %v128 = vld [vmem:[%s1 + $0x78] sm:$0xf]
  %v129 = vld [vmem:[%s1 + $0x7c] sm:$0xf]
  %v130 = vld [vmem:[%s1 + $0x80] sm:$0xf]
  %v131 = vld [vmem:[%s1 + $0x84] sm:$0xf]
  %v132 = vld [vmem:[%s1 + $0x88] sm:$0xf]
  %v133 = vld [vmem:[%s1 + $0x8c] sm:$0xf]
  %v134 = vld [vmem:[%s1 + $0x90] sm:$0xf]
  %v135 = vld [vmem:[%s1 + $0x94] sm:$0xf]
  %v136 = vld [vmem:[%s1 + $0x98] sm:$0xf]
  %v137 = vld [vmem:[%s1 + $0x9c] sm:$0xf]
  %v138 = vld [vmem:[%s1 + $0xa0] sm:$0xf]
  %v139 = vld [vmem:[%s1 + $0xa4] sm:$0xf]
  %v140 = vld [vmem:[%s1 + $0xa8] sm:$0xf]
  %v141 = vld [vmem:[%s1 + $0xac] sm:$0xf]
  %v142 = vld [vmem:[%s1 + $0xb0] sm:$0xf]
  %v143 = vld [vmem:[%s1 + $0xb4] sm:$0xf]
  %v144 = vld [vmem:[%s1 + $0xb8] sm:$0xf]
  %v145 = vld [vmem:[%s1 + $0xbc] sm:$0xf]
  %v146 = vld [vmem:[%s1 + $0xc0] sm:$0xf]
  %v147 = vld [vmem:[%s1 + $0xc4] sm:$0xf]
  %v148 = vld [vmem:[%s1 + $0xc8] sm:$0xf]
  %v149 = vld [vmem:[%s1 + $0xcc] sm:$0xf]
  %v150 = vld [vmem:[%s1 + $0xd0] sm:$0xf]
  %v151 = vld [vmem:[%s1 + $0xd4] sm:$0xf]
  %v152 = vld [vmem:[%s1 + $0xd8] sm:$0xf]
  %v153 = vld [vmem:[%s1 + $0xdc] sm:$0xf]
  %v154 = vld [vmem:[%s1 + $0xe0] sm:$0xf]
  %v155 = vld [vmem:[%s1 + $0xe4] sm:$0xf]
  %v156 = vld [vmem:[%s1 + $0xe8] sm:$0xf]
  %v157 = vld [vmem:[%s1 + $0xec] sm:$0xf]
  %v158 = vld [vmem:[%s1 + $0xf0] sm:$0xf]
  %v159 = vld [vmem:[%s1 + $0xf4] sm:$0xf]
  %v160 = vld [vmem:[%s1 + $0xf8] sm:$0xf]
  %v161 = vld [vmem:[%s1 + $0xfc] sm:$0xf]
  %v162 = vld [vmem:[%s1 + $0x100] sm:$0xf]
  %v163 = vld [vmem:[%s1 + $0x104] sm:$0xf]
  %v164 = vld [vmem:[%s1 + $0x108] sm:$0xf]
  %v165 = vld [vmem:[%s1 + $0x10c] sm:$0xf]
  %v166 = vld [vmem:[%s1 + $0x110] sm:$0xf]
  %v167 = vld [vmem:[%s1 + $0x114] sm:$0xf]
  %v168 = vld [vmem:[%s1 + $0x118] sm:$0xf]
  %v169 = vld [vmem:[%s1 + $0x11c] sm:$0xf]
  %v170 = vld [vmem:[%s1 + $0x120] sm:$0xf]
  %v171 = vld [vmem:[%s1 + $0x124] sm:$0xf]
  %v172 = vld [vmem:[%s1 + $0x128] sm:$0xf]
  %v173 = vld [vmem:[%s1 + $0x12c] sm:$0xf]
  %v174 = vld [vmem:[%s1 + $0x130] sm:$0xf]
  %v175 = vld [vmem:[%s1 + $0x134] sm:$0xf]
  %v176 = vld [vmem:[%s1 + $0x138] sm:$0xf]
  %v177 = vld [vmem:[%s1 + $0x13c] sm:$0xf]
  %v226 = vunpack.c.l.b16 %v50
  %v227 = vunpack.c.h.b16 %v50
  %v228 = vunpack.c.l.b16 %v51
  %v229 = vunpack.c.h.b16 %v51
  %v230 = vunpack.c.l.b16 %v52
  %v231 = vunpack.c.l.b16 %v53
  %v232 = vunpack.c.h.b16 %v53
  %v233 = vunpack.c.l.b16 %v54
  %v234 = vunpack.c.h.b16 %v54
  %v235 = vunpack.c.l.b16 %v55
  %v236 = vunpack.c.l.b16 %v56
  %v237 = vunpack.c.h.b16 %v56
  %v238 = vunpack.c.l.b16 %v57
  %v239 = vunpack.c.h.b16 %v57
  %v240 = vunpack.c.l.b16 %v58
  %v241 = vunpack.c.l.b16 %v59
  %v242 = vunpack.c.h.b16 %v59
  %v243 = vunpack.c.l.b16 %v60
  %v244 = vunpack.c.h.b16 %v60
  %v245 = vunpack.c.l.b16 %v61
  %v246 = vunpack.c.l.b16 %v62
  %v247 = vunpack.c.h.b16 %v62
  %v248 = vunpack.c.l.b16 %v63
  %v249 = vunpack.c.h.b16 %v63
  %v250 = vunpack.c.l.b16 %v64
  %v251 = vunpack.c.l.b16 %v65
  %v252 = vunpack.c.h.b16 %v65
  %v253 = vunpack.c.l.b16 %v66
  %v254 = vunpack.c.h.b16 %v66
  %v255 = vunpack.c.l.b16 %v67
  %v256 = vunpack.c.l.b16 %v68
  %v257 = vunpack.c.h.b16 %v68
  %v258 = vunpack.c.l.b16 %v69
  %v259 = vunpack.c.h.b16 %v69
  %v260 = vunpack.c.l.b16 %v70
  %v261 = vunpack.c.l.b16 %v71
  %v262 = vunpack.c.h.b16 %v71
  %v263 = vunpack.c.l.b16 %v72
  %v264 = vunpack.c.h.b16 %v72
  %v265 = vunpack.c.l.b16 %v73
  %v266 = vunpack.c.l.b16 %v74
  %v267 = vunpack.c.h.b16 %v74
  %v268 = vunpack.c.l.b16 %v75
  %v269 = vunpack.c.h.b16 %v75
  %v270 = vunpack.c.l.b16 %v76
  %v271 = vunpack.c.l.b16 %v77
  %v272 = vunpack.c.h.b16 %v77
  %v273 = vunpack.c.l.b16 %v78
  %v274 = vunpack.c.h.b16 %v78
  %v275 = vunpack.c.l.b16 %v79
  %v276 = vunpack.c.l.b16 %v80
  %v277 = vunpack.c.h.b16 %v80
  %v278 = vunpack.c.l.b16 %v81
  %v279 = vunpack.c.h.b16 %v81
  %v280 = vunpack.c.l.b16 %v82
  %v281 = vunpack.c.l.b16 %v83
  %v282 = vunpack.c.h.b16 %v83
  %v283 = vunpack.c.l.b16 %v84
  %v284 = vunpack.c.h.b16 %v84
  %v285 = vunpack.c.l.b16 %v85
  %v286 = vunpack.c.l.b16 %v86
  %v287 = vunpack.c.h.b16 %v86
  %v288 = vunpack.c.l.b16 %v87
  %v289 = vunpack.c.h.b16 %v87
  %v290 = vunpack.c.l.b16 %v88
  %v291 = vunpack.c.l.b16 %v89
  %v292 = vunpack.c.h.b16 %v89
  %v293 = vunpack.c.l.b16 %v90
  %v294 = vunpack.c.h.b16 %v90
  %v295 = vunpack.c.l.b16 %v91
  %v296 = vunpack.c.l.b16 %v92
  %v297 = vunpack.c.h.b16 %v92
  %v298 = vunpack.c.l.b16 %v93
  %v299 = vunpack.c.h.b16 %v93
  %v300 = vunpack.c.l.b16 %v94
  %v301 = vunpack.c.l.b16 %v95
  %v302 = vunpack.c.h.b16 %v95
  %v303 = vunpack.c.l.b16 %v96
  %v304 = vunpack.c.h.b16 %v96
  %v305 = vunpack.c.l.b16 %v97
  %v306 = vpack.c.b16 %v231, %v226
  %v307 = vpack.c.b16 %v232, %v227
  %v308 = vpack.c.b16 %v233, %v228
  %v309 = vpack.c.b16 %v234, %v229
  %v310 = vpack.c.b16 %v235, %v230
  %v311 = vpack.c.b16 %v241, %v236
  %v312 = vpack.c.b16 %v242, %v237
  %v313 = vpack.c.b16 %v243, %v238
  %v314 = vpack.c.b16 %v244, %v239
  %v315 = vpack.c.b16 %v245, %v240
  %v316 = vpack.c.b16 %v251, %v246
  %v317 = vpack.c.b16 %v252, %v247
  %v318 = vpack.c.b16 %v253, %v248
  %v319 = vpack.c.b16 %v254, %v249
  %v320 = vpack.c.b16 %v255, %v250
  %v321 = vpack.c.b16 %v261, %v256
  %v322 = vpack.c.b16 %v262, %v257
  %v323 = vpack.c.b16 %v263, %v258
  %v324 = vpack.c.b16 %v264, %v259
  %v325 = vpack.c.b16 %v265, %v260
  %v326 = vpack.c.b16 %v271, %v266
  %v327 = vpack.c.b16 %v272, %v267
  %v328 = vpack.c.b16 %v273, %v268
  %v329 = vpack.c.b16 %v274, %v269
  %v330 = vpack.c.b16 %v275, %v270
  %v331 = vpack.c.b16 %v281, %v276
  %v332 = vpack.c.b16 %v282, %v277
  %v333 = vpack.c.b16 %v283, %v278
  %v334 = vpack.c.b16 %v284, %v279
  %v335 = vpack.c.b16 %v285, %v280
  %v336 = vpack.c.b16 %v291, %v286
  %v337 = vpack.c.b16 %v292, %v287
  %v338 = vpack.c.b16 %v293, %v288
  %v339 = vpack.c.b16 %v294, %v289
  %v340 = vpack.c.b16 %v295, %v290
  %v341 = vpack.c.b16 %v301, %v296
  %v342 = vpack.c.b16 %v302, %v297
  %v343 = vpack.c.b16 %v303, %v298
  %v344 = vpack.c.b16 %v304, %v299
  %v345 = vpack.c.b16 %v305, %v300
  %v466 = vunpack.c.l.b16 %v98
  %v467 = vunpack.c.l.b16 %v99
  %v468 = vunpack.c.l.b16 %v100
  %v469 = vunpack.c.l.b16 %v101
  %v470 = vunpack.c.l.b16 %v102
  %v471 = vunpack.c.l.b16 %v103
  %v472 = vunpack.c.l.b16 %v104
  %v473 = vunpack.c.l.b16 %v105
  %v474 = vunpack.c.l.b16 %v106
  %v475 = vunpack.c.l.b16 %v107
  %v476 = vunpack.c.l.b16 %v108
  %v477 = vunpack.c.l.b16 %v109
  %v478 = vunpack.c.l.b16 %v110
  %v479 = vunpack.c.l.b16 %v111
  %v480 = vunpack.c.l.b16 %v112
  %v481 = vunpack.c.l.b16 %v113
  %v482 = vunpack.c.l.b16 %v114
  %v483 = vunpack.c.l.b16 %v115
  %v484 = vunpack.c.l.b16 %v116
  %v485 = vunpack.c.l.b16 %v117
  %v486 = vunpack.c.l.b16 %v118
  %v487 = vunpack.c.l.b16 %v119
  %v488 = vunpack.c.l.b16 %v120
  %v489 = vunpack.c.l.b16 %v121
  %v490 = vunpack.c.l.b16 %v122
  %v491 = vunpack.c.l.b16 %v123
  %v492 = vunpack.c.l.b16 %v124
  %v493 = vunpack.c.l.b16 %v125
  %v494 = vunpack.c.l.b16 %v126
  %v495 = vunpack.c.l.b16 %v127
  %v496 = vunpack.c.l.b16 %v128
  %v497 = vunpack.c.l.b16 %v129
  %v498 = vunpack.c.l.b16 %v130
  %v499 = vunpack.c.l.b16 %v131
  %v500 = vunpack.c.l.b16 %v132
  %v501 = vunpack.c.l.b16 %v133
  %v502 = vunpack.c.l.b16 %v134
  %v503 = vunpack.c.l.b16 %v135
  %v504 = vunpack.c.l.b16 %v136
  %v505 = vunpack.c.l.b16 %v137
  %v506 = vunpack.c.l.b16 %v138
  %v507 = vunpack.c.l.b16 %v139
  %v508 = vunpack.c.l.b16 %v140
  %v509 = vunpack.c.l.b16 %v141
  %v510 = vunpack.c.l.b16 %v142
  %v511 = vunpack.c.l.b16 %v143
  %v512 = vunpack.c.l.b16 %v144
  %v513 = vunpack.c.l.b16 %v145
  %v514 = vunpack.c.l.b16 %v146
  %v515 = vunpack.c.l.b16 %v147
  %v516 = vunpack.c.l.b16 %v148
  %v517 = vunpack.c.l.b16 %v149
  %v518 = vunpack.c.l.b16 %v150
  %v519 = vunpack.c.l.b16 %v151
  %v520 = vunpack.c.l.b16 %v152
  %v521 = vunpack.c.l.b16 %v153
  %v522 = vunpack.c.l.b16 %v154
  %v523 = vunpack.c.l.b16 %v155
  %v524 = vunpack.c.l.b16 %v156
  %v525 = vunpack.c.l.b16 %v157
  %v526 = vunpack.c.l.b16 %v158
  %v527 = vunpack.c.l.b16 %v159
  %v528 = vunpack.c.l.b16 %v160
  %v529 = vunpack.c.l.b16 %v161
  %v530 = vunpack.c.l.b16 %v162
  %v531 = vunpack.c.l.b16 %v163
  %v532 = vunpack.c.l.b16 %v164
  %v533 = vunpack.c.l.b16 %v165
  %v534 = vunpack.c.l.b16 %v166
  %v535 = vunpack.c.l.b16 %v167
  %v536 = vunpack.c.l.b16 %v168
  %v537 = vunpack.c.l.b16 %v169
  %v538 = vunpack.c.l.b16 %v170
  %v539 = vunpack.c.l.b16 %v171
  %v540 = vunpack.c.l.b16 %v172
  %v541 = vunpack.c.l.b16 %v173
  %v542 = vunpack.c.l.b16 %v174
  %v543 = vunpack.c.l.b16 %v175
  %v544 = vunpack.c.l.b16 %v176
  %v545 = vunpack.c.l.b16 %v177
  %v546 = vpack.c.b16 %v467, %v466
  %v547 = vpack.c.b16 %v469, %v468
  %v548 = vpack.c.b16 %v471, %v470
  %v549 = vpack.c.b16 %v473, %v472
  %v550 = vpack.c.b16 %v475, %v474
  %v551 = vpack.c.b16 %v477, %v476
  %v552 = vpack.c.b16 %v479, %v478
  %v553 = vpack.c.b16 %v481, %v480
  %v554 = vpack.c.b16 %v483, %v482
  %v555 = vpack.c.b16 %v485, %v484
  %v556 = vpack.c.b16 %v487, %v486
  %v557 = vpack.c.b16 %v489, %v488
  %v558 = vpack.c.b16 %v491, %v490
  %v559 = vpack.c.b16 %v493, %v492
  %v560 = vpack.c.b16 %v495, %v494
  %v561 = vpack.c.b16 %v497, %v496
  %v562 = vpack.c.b16 %v499, %v498
  %v563 = vpack.c.b16 %v501, %v500
  %v564 = vpack.c.b16 %v503, %v502
  %v565 = vpack.c.b16 %v505, %v504
  %v566 = vpack.c.b16 %v507, %v506
  %v567 = vpack.c.b16 %v509, %v508
  %v568 = vpack.c.b16 %v511, %v510
  %v569 = vpack.c.b16 %v513, %v512
  %v570 = vpack.c.b16 %v515, %v514
  %v571 = vpack.c.b16 %v517, %v516
  %v572 = vpack.c.b16 %v519, %v518
  %v573 = vpack.c.b16 %v521, %v520
  %v574 = vpack.c.b16 %v523, %v522
  %v575 = vpack.c.b16 %v525, %v524
  %v576 = vpack.c.b16 %v527, %v526
  %v577 = vpack.c.b16 %v529, %v528
  %v578 = vpack.c.b16 %v531, %v530
  %v579 = vpack.c.b16 %v533, %v532
  %v580 = vpack.c.b16 %v535, %v534
  %v581 = vpack.c.b16 %v537, %v536
  %v582 = vpack.c.b16 %v539, %v538
  %v583 = vpack.c.b16 %v541, %v540
  %v584 = vpack.c.b16 %v543, %v542
  %v585 = vpack.c.b16 %v545, %v544
  %626 = vmatpush.bf16.msra.mxu0 %v553
  %627 = vmatpush.bf16.msra.mxu0 %v552
  %628 = vmatpush.bf16.msra.mxu0 %v551
  %629 = vmatpush.bf16.msra.mxu0 %v550
  %630 = vmatpush.bf16.msra.mxu0 %v549
  %631 = vmatpush.bf16.msra.mxu0 %v548
  %632 = vmatpush.bf16.msra.mxu0 %v547
  %633 = vmatpush.bf16.msra.mxu0 %v546
  %634 = vmatmul.bf16.gmra.mxu0 %v306
  %v635 = vpop.f32.mrf.mxu0
  %v636 = vadd.f32 0.0, %v635
  %v637 = vpop.f32.mrf.mxu0
  %v638 = vadd.f32 0.0, %v637
  %639 = vmatmul.bf16.gmra.mxu0 %v311
  %v640 = vpop.f32.mrf.mxu0
  %v641 = vadd.f32 0.0, %v640
  %v642 = vpop.f32.mrf.mxu0
  %v643 = vadd.f32 0.0, %v642
  %644 = vmatmul.bf16.gmra.mxu0 %v316
  %v645 = vpop.f32.mrf.mxu0
  %v646 = vadd.f32 0.0, %v645
  %v647 = vpop.f32.mrf.mxu0
  %v648 = vadd.f32 0.0, %v647
  %649 = vmatmul.bf16.gmra.mxu0 %v321
  %v650 = vpop.f32.mrf.mxu0
  %v651 = vadd.f32 0.0, %v650
  %v652 = vpop.f32.mrf.mxu0
  %v653 = vadd.f32 0.0, %v652
  %654 = vmatmul.bf16.gmra.mxu0 %v326
  %v655 = vpop.f32.mrf.mxu0
  %v656 = vadd.f32 0.0, %v655
  %v657 = vpop.f32.mrf.mxu0
  %v658 = vadd.f32 0.0, %v657
  %659 = vmatmul.bf16.gmra.mxu0 %v331
  %v660 = vpop.f32.mrf.mxu0
  %v661 = vadd.f32 0.0, %v660
  %v662 = vpop.f32.mrf.mxu0
  %v663 = vadd.f32 0.0, %v662
  %664 = vmatmul.bf16.gmra.mxu0 %v336
  %v665 = vpop.f32.mrf.mxu0
  %v666 = vadd.f32 0.0, %v665
  %v667 = vpop.f32.mrf.mxu0
  %v668 = vadd.f32 0.0, %v667
  %669 = vmatmul.bf16.gmra.mxu0 %v341
  %v670 = vpop.f32.mrf.mxu0
  %v671 = vadd.f32 0.0, %v670
  %v672 = vpop.f32.mrf.mxu0
  %v673 = vadd.f32 0.0, %v672
  %674 = vdwg.mxu0
  %675 = vmatpush.bf16.msra.mxu0 %v561
  %676 = vmatpush.bf16.msra.mxu0 %v560
  %677 = vmatpush.bf16.msra.mxu0 %v559
  %678 = vmatpush.bf16.msra.mxu0 %v558
  %679 = vmatpush.bf16.msra.mxu0 %v557
  %680 = vmatpush.bf16.msra.mxu0 %v556
  %681 = vmatpush.bf16.msra.mxu0 %v555
  %682 = vmatpush.bf16.msra.mxu0 %v554
  %683 = vmatmul.bf16.gmra.mxu0 %v307
  %v684 = vpop.f32.mrf.mxu0
  %v685 = vadd.f32 %v636, %v684
  %v686 = vpop.f32.mrf.mxu0
  %v687 = vadd.f32 %v638, %v686
  %688 = vmatmul.bf16.gmra.mxu0 %v312
  %v689 = vpop.f32.mrf.mxu0
  %v690 = vadd.f32 %v641, %v689
  %v691 = vpop.f32.mrf.mxu0
  %v692 = vadd.f32 %v643, %v691
  %693 = vmatmul.bf16.gmra.mxu0 %v317
  %v694 = vpop.f32.mrf.mxu0
  %v695 = vadd.f32 %v646, %v694
  %v696 = vpop.f32.mrf.mxu0
  %v697 = vadd.f32 %v648, %v696
  %698 = vmatmul.bf16.gmra.mxu0 %v322
  %v699 = vpop.f32.mrf.mxu0
  %v700 = vadd.f32 %v651, %v699
  %v701 = vpop.f32.mrf.mxu0
  %v702 = vadd.f32 %v653, %v701
  %703 = vmatmul.bf16.gmra.mxu0 %v327
  %v704 = vpop.f32.mrf.mxu0
  %v705 = vadd.f32 %v656, %v704
  %v706 = vpop.f32.mrf.mxu0
  %v707 = vadd.f32 %v658, %v706
  %708 = vmatmul.bf16.gmra.mxu0 %v332
  %v709 = vpop.f32.mrf.mxu0
  %v710 = vadd.f32 %v661, %v709
  %v711 = vpop.f32.mrf.mxu0
  %v712 = vadd.f32 %v663, %v711
  %713 = vmatmul.bf16.gmra.mxu0 %v337
  %v714 = vpop.f32.mrf.mxu0
  %v715 = vadd.f32 %v666, %v714
  %v716 = vpop.f32.mrf.mxu0
  %v717 = vadd.f32 %v668, %v716
  %718 = vmatmul.bf16.gmra.mxu0 %v342
  %v719 = vpop.f32.mrf.mxu0
  %v720 = vadd.f32 %v671, %v719
  %v721 = vpop.f32.mrf.mxu0
  %v722 = vadd.f32 %v673, %v721
  %723 = vdwg.mxu0
  %724 = vmatpush.bf16.msra.mxu0 %v569
  %725 = vmatpush.bf16.msra.mxu0 %v568
  %726 = vmatpush.bf16.msra.mxu0 %v567
  %727 = vmatpush.bf16.msra.mxu0 %v566
  %728 = vmatpush.bf16.msra.mxu0 %v565
  %729 = vmatpush.bf16.msra.mxu0 %v564
  %730 = vmatpush.bf16.msra.mxu0 %v563
  %731 = vmatpush.bf16.msra.mxu0 %v562
  %732 = vmatmul.bf16.gmra.mxu0 %v308
  %v733 = vpop.f32.mrf.mxu0
  %v734 = vadd.f32 %v685, %v733
  %v735 = vpop.f32.mrf.mxu0
  %v736 = vadd.f32 %v687, %v735
  %737 = vmatmul.bf16.gmra.mxu0 %v313
  %v738 = vpop.f32.mrf.mxu0
  %v739 = vadd.f32 %v690, %v738
  %v740 = vpop.f32.mrf.mxu0
  %v741 = vadd.f32 %v692, %v740
  %742 = vmatmul.bf16.gmra.mxu0 %v318
  %v743 = vpop.f32.mrf.mxu0
  %v744 = vadd.f32 %v695, %v743
  %v745 = vpop.f32.mrf.mxu0
  %v746 = vadd.f32 %v697, %v745
  %747 = vmatmul.bf16.gmra.mxu0 %v323
  %v748 = vpop.f32.mrf.mxu0
  %v749 = vadd.f32 %v700, %v748
  %v750 = vpop.f32.mrf.mxu0
  %v751 = vadd.f32 %v702, %v750
  %752 = vmatmul.bf16.gmra.mxu0 %v328
  %v753 = vpop.f32.mrf.mxu0
  %v754 = vadd.f32 %v705, %v753
  %v755 = vpop.f32.mrf.mxu0
  %v756 = vadd.f32 %v707, %v755
  %757 = vmatmul.bf16.gmra.mxu0 %v333
  %v758 = vpop.f32.mrf.mxu0
  %v759 = vadd.f32 %v710, %v758
  %v760 = vpop.f32.mrf.mxu0
  %v761 = vadd.f32 %v712, %v760
  %762 = vmatmul.bf16.gmra.mxu0 %v338
  %v763 = vpop.f32.mrf.mxu0
  %v764 = vadd.f32 %v715, %v763
  %v765 = vpop.f32.mrf.mxu0
  %v766 = vadd.f32 %v717, %v765
  %767 = vmatmul.bf16.gmra.mxu0 %v343
  %v768 = vpop.f32.mrf.mxu0
  %v769 = vadd.f32 %v720, %v768
  %v770 = vpop.f32.mrf.mxu0
  %v771 = vadd.f32 %v722, %v770
  %772 = vdwg.mxu0
  %773 = vmatpush.bf16.msra.mxu0 %v577
  %774 = vmatpush.bf16.msra.mxu0 %v576
  %775 = vmatpush.bf16.msra.mxu0 %v575
  %776 = vmatpush.bf16.msra.mxu0 %v574
  %777 = vmatpush.bf16.msra.mxu0 %v573
  %778 = vmatpush.bf16.msra.mxu0 %v572
  %779 = vmatpush.bf16.msra.mxu0 %v571
  %780 = vmatpush.bf16.msra.mxu0 %v570
  %781 = vmatmul.bf16.gmra.mxu0 %v309
  %v782 = vpop.f32.mrf.mxu0
  %v783 = vadd.f32 %v734, %v782
  %v784 = vpop.f32.mrf.mxu0
  %v785 = vadd.f32 %v736, %v784
  %786 = vmatmul.bf16.gmra.mxu0 %v314
  %v787 = vpop.f32.mrf.mxu0
  %v788 = vadd.f32 %v739, %v787
  %v789 = vpop.f32.mrf.mxu0
  %v790 = vadd.f32 %v741, %v789
  %791 = vmatmul.bf16.gmra.mxu0 %v319
  %v792 = vpop.f32.mrf.mxu0
  %v793 = vadd.f32 %v744, %v792
  %v794 = vpop.f32.mrf.mxu0
  %v795 = vadd.f32 %v746, %v794
  %796 = vmatmul.bf16.gmra.mxu0 %v324
  %v797 = vpop.f32.mrf.mxu0
  %v798 = vadd.f32 %v749, %v797
  %v799 = vpop.f32.mrf.mxu0
  %v800 = vadd.f32 %v751, %v799
  %801 = vmatmul.bf16.gmra.mxu0 %v329
  %v802 = vpop.f32.mrf.mxu0
  %v803 = vadd.f32 %v754, %v802
  %v804 = vpop.f32.mrf.mxu0
  %v805 = vadd.f32 %v756, %v804
  %806 = vmatmul.bf16.gmra.mxu0 %v334
  %v807 = vpop.f32.mrf.mxu0
  %v808 = vadd.f32 %v759, %v807
  %v809 = vpop.f32.mrf.mxu0
  %v810 = vadd.f32 %v761, %v809
  %811 = vmatmul.bf16.gmra.mxu0 %v339
  %v812 = vpop.f32.mrf.mxu0
  %v813 = vadd.f32 %v764, %v812
  %v814 = vpop.f32.mrf.mxu0
  %v815 = vadd.f32 %v766, %v814
  %816 = vmatmul.bf16.gmra.mxu0 %v344
  %v817 = vpop.f32.mrf.mxu0
  %v818 = vadd.f32 %v769, %v817
  %v819 = vpop.f32.mrf.mxu0
  %v820 = vadd.f32 %v771, %v819
  %821 = vdwg.mxu0
  %822 = vmatpush.bf16.msra.mxu0 %v585
  %823 = vmatpush.bf16.msra.mxu0 %v584
  %824 = vmatpush.bf16.msra.mxu0 %v583
  %825 = vmatpush.bf16.msra.mxu0 %v582
  %826 = vmatpush.bf16.msra.mxu0 %v581
  %827 = vmatpush.bf16.msra.mxu0 %v580
  %828 = vmatpush.bf16.msra.mxu0 %v579
  %829 = vmatpush.bf16.msra.mxu0 %v578
  %830 = vmatmul.bf16.gmra.mxu0 %v310
  %v831 = vpop.f32.mrf.mxu0
  %v832 = vadd.f32 %v783, %v831
  %v833 = vpop.f32.mrf.mxu0
  %v834 = vadd.f32 %v785, %v833
  %835 = vmatmul.bf16.gmra.mxu0 %v315
  %v836 = vpop.f32.mrf.mxu0
  %v837 = vadd.f32 %v788, %v836
  %v838 = vpop.f32.mrf.mxu0
  %v839 = vadd.f32 %v790, %v838
  %840 = vmatmul.bf16.gmra.mxu0 %v320
  %v841 = vpop.f32.mrf.mxu0
  %v842 = vadd.f32 %v793, %v841
  %v843 = vpop.f32.mrf.mxu0
  %v844 = vadd.f32 %v795, %v843
  %845 = vmatmul.bf16.gmra.mxu0 %v325
  %v846 = vpop.f32.mrf.mxu0
  %v847 = vadd.f32 %v798, %v846
  %v848 = vpop.f32.mrf.mxu0
  %v849 = vadd.f32 %v800, %v848
  %850 = vmatmul.bf16.gmra.mxu0 %v330
  %v851 = vpop.f32.mrf.mxu0
  %v852 = vadd.f32 %v803, %v851
  %v853 = vpop.f32.mrf.mxu0
  %v854 = vadd.f32 %v805, %v853
  %855 = vmatmul.bf16.gmra.mxu0 %v335
  %v856 = vpop.f32.mrf.mxu0
  %v857 = vadd.f32 %v808, %v856
  %v858 = vpop.f32.mrf.mxu0
  %v859 = vadd.f32 %v810, %v858
  %860 = vmatmul.bf16.gmra.mxu0 %v340
  %v861 = vpop.f32.mrf.mxu0
  %v862 = vadd.f32 %v813, %v861
  %v863 = vpop.f32.mrf.mxu0
  %v864 = vadd.f32 %v815, %v863
  %865 = vmatmul.bf16.gmra.mxu0 %v345
  %v866 = vpop.f32.mrf.mxu0
  %v867 = vadd.f32 %v818, %v866
  %v868 = vpop.f32.mrf.mxu0
  %v869 = vadd.f32 %v820, %v868
  %870 = vdwg.mxu0
  %v871 = vadd.f32 %v34, %v832
  %v872 = vadd.f32 %v35, %v834
  %v873 = vadd.f32 %v36, %v837
  %v874 = vadd.f32 %v37, %v839
  %v875 = vadd.f32 %v38, %v842
  %v876 = vadd.f32 %v39, %v844
  %v877 = vadd.f32 %v40, %v847
  %v878 = vadd.f32 %v41, %v849
  %v879 = vadd.f32 %v42, %v852
  %v880 = vadd.f32 %v43, %v854
  %v881 = vadd.f32 %v44, %v857
  %v882 = vadd.f32 %v45, %v859
  %v883 = vadd.f32 %v46, %v862
  %v884 = vadd.f32 %v47, %v864
  %v885 = vadd.f32 %v48, %v867
  %v886 = vadd.f32 %v49, %v869
  %887 = vst [vmem:[#allocation2] sm:$0xff] %v871
  %888 = vst [vmem:[#allocation2 + $0x8] sm:$0xff] %v872
  %889 = vst [vmem:[#allocation2 + $0x10] sm:$0xff] %v873
  %890 = vst [vmem:[#allocation2 + $0x18] sm:$0xff] %v874
  %891 = vst [vmem:[#allocation2 + $0x20] sm:$0xff] %v875
  %892 = vst [vmem:[#allocation2 + $0x28] sm:$0xff] %v876
  %893 = vst [vmem:[#allocation2 + $0x30] sm:$0xff] %v877
  %894 = vst [vmem:[#allocation2 + $0x38] sm:$0xff] %v878
  %895 = vst [vmem:[#allocation2 + $0x40] sm:$0xff] %v879
  %896 = vst [vmem:[#allocation2 + $0x48] sm:$0xff] %v880
  %897 = vst [vmem:[#allocation2 + $0x50] sm:$0xff] %v881
  %898 = vst [vmem:[#allocation2 + $0x58] sm:$0xff] %v882
  %899 = vst [vmem:[#allocation2 + $0x60] sm:$0xff] %v883
  %900 = vst [vmem:[#allocation2 + $0x68] sm:$0xff] %v884
  %901 = vst [vmem:[#allocation2 + $0x70] sm:$0xff] %v885
  %902 = vst [vmem:[#allocation2 + $0x78] sm:$0xff] %v886
  // Predicated region
  $region18: #{cnn_forward.8} parent=0 // pred_check
    %p903 = pneg %p14
  $region19: #{cnn_forward.8} parent=0 // pred_check_branch
    %905 = sbr.rel (%p903) target = $region21
  $region20: #{cnn_forward.8} parent=0 // pred_region
    %v906 = vld [vmem:[#allocation2] sm:$0xff]
    %v907 = vld [vmem:[#allocation2 + $0x8] sm:$0xff]
    %v908 = vld [vmem:[#allocation2 + $0x10] sm:$0xff]
    %v909 = vld [vmem:[#allocation2 + $0x18] sm:$0xff]
    %v910 = vld [vmem:[#allocation2 + $0x20] sm:$0xff]
    %v911 = vld [vmem:[#allocation2 + $0x28] sm:$0xff]
    %v912 = vld [vmem:[#allocation2 + $0x30] sm:$0xff]
    %v913 = vld [vmem:[#allocation2 + $0x38] sm:$0xff]
    %v914 = vld [vmem:[#allocation2 + $0x40] sm:$0xff]
    %v915 = vld [vmem:[#allocation2 + $0x48] sm:$0xff]
    %v916 = vld [vmem:[#allocation2 + $0x50] sm:$0xff]
    %v917 = vld [vmem:[#allocation2 + $0x58] sm:$0xff]
    %v918 = vld [vmem:[#allocation2 + $0x60] sm:$0xff]
    %v919 = vld [vmem:[#allocation2 + $0x68] sm:$0xff]
    %v920 = vld [vmem:[#allocation2 + $0x70] sm:$0xff]
    %v921 = vld [vmem:[#allocation2 + $0x78] sm:$0xff]
    %v922 = vld [vmem:[%s2] sm:$0x1]
    %v924 = vperm.slane %v922, 0
    %v926 = vadd.f32 %v906, %v924
    %v927 = vadd.f32 %v907, %v924
    %v928 = vadd.f32 %v908, %v924
    %v929 = vadd.f32 %v909, %v924
    %v930 = vadd.f32 %v910, %v924
    %v931 = vadd.f32 %v911, %v924
    %v932 = vadd.f32 %v912, %v924
    %v933 = vadd.f32 %v913, %v924
    %v934 = vadd.f32 %v914, %v924
    %v935 = vadd.f32 %v915, %v924
    %v936 = vadd.f32 %v916, %v924
    %v937 = vadd.f32 %v917, %v924
    %v938 = vadd.f32 %v918, %v924
    %v939 = vadd.f32 %v919, %v924
    %v940 = vadd.f32 %v920, %v924
    %v941 = vadd.f32 %v921, %v924
    %v942 = vmax.f32 %v926, 0.0
    %v943 = vmax.f32 %v927, 0.0
    %v944 = vmax.f32 %v928, 0.0
    %v945 = vmax.f32 %v929, 0.0
    %v946 = vmax.f32 %v930, 0.0
    %v947 = vmax.f32 %v931, 0.0
    %v948 = vmax.f32 %v932, 0.0
    %v949 = vmax.f32 %v933, 0.0
    %v950 = vmax.f32 %v934, 0.0
    %v951 = vmax.f32 %v935, 0.0
    %v952 = vmax.f32 %v936, 0.0
    %v953 = vmax.f32 %v937, 0.0
    %v954 = vmax.f32 %v938, 0.0
    %v955 = vmax.f32 %v939, 0.0
    %v956 = vmax.f32 %v940, 0.0
    %v957 = vmax.f32 %v941, 0.0
    %v958 = vpack.c.bf16 %v942, %v942
    %v959 = vpack.c.bf16 %v943, %v943
    %v960 = vpack.c.bf16 %v944, %v944
    %v961 = vpack.c.bf16 %v945, %v945
    %v962 = vpack.c.bf16 %v946, %v946
    %v963 = vpack.c.bf16 %v947, %v947
    %v964 = vpack.c.bf16 %v948, %v948
    %v965 = vpack.c.bf16 %v949, %v949
    %v966 = vpack.c.bf16 %v950, %v950
    %v967 = vpack.c.bf16 %v951, %v951
    %v968 = vpack.c.bf16 %v952, %v952
    %v969 = vpack.c.bf16 %v953, %v953
    %v970 = vpack.c.bf16 %v954, %v954
    %v971 = vpack.c.bf16 %v955, %v955
    %v972 = vpack.c.bf16 %v956, %v956
    %v973 = vpack.c.bf16 %v957, %v957
    %974 = vst [vmem:[%s3] sm:$0xf] %v958
    %975 = vst [vmem:[%s3 + $0x4] sm:$0xf] %v959
    %976 = vst [vmem:[%s3 + $0x8] sm:$0xf] %v960
    %977 = vst [vmem:[%s3 + $0xc] sm:$0xf] %v961
    %978 = vst [vmem:[%s3 + $0x10] sm:$0xf] %v962
    %979 = vst [vmem:[%s3 + $0x14] sm:$0xf] %v963
    %980 = vst [vmem:[%s3 + $0x18] sm:$0xf] %v964
    %981 = vst [vmem:[%s3 + $0x1c] sm:$0xf] %v965
    %982 = vst [vmem:[%s3 + $0x20] sm:$0xf] %v966
    %983 = vst [vmem:[%s3 + $0x24] sm:$0xf] %v967
    %984 = vst [vmem:[%s3 + $0x28] sm:$0xf] %v968
    %985 = vst [vmem:[%s3 + $0x2c] sm:$0xf] %v969
    %986 = vst [vmem:[%s3 + $0x30] sm:$0xf] %v970
    %987 = vst [vmem:[%s3 + $0x34] sm:$0xf] %v971
    %988 = vst [vmem:[%s3 + $0x38] sm:$0xf] %v972
    %989 = vst [vmem:[%s3 + $0x3c] sm:$0xf] %v973
  $region21: #{cnn_forward.8} parent=0 // pred_fallthru
    _
  // Predicated region
  $region22: #{cnn_forward.8} parent=0 // pred_check
    _
  $region23: #{cnn_forward.8} parent=0 // pred_check_branch
    %991 = sbr.rel (0) target = $region25
  $region24: #{cnn_forward.8} parent=0 // pred_region
    _
  $region25: #{cnn_forward.8} parent=0 // pred_fallthru
    _
  // Predicated region
  $region26: #{cnn_forward.8} parent=0 // pred_check
    _
  $region27: #{cnn_forward.8} parent=0 // pred_check_branch
    %993 = sbr.rel (0) target = $region29
  $region28: #{cnn_forward.8} parent=0 // pred_region
    _
  $region29: #{cnn_forward.8} parent=0 // pred_fallthru
    _

// kernel: cnn_forward.10
$region0: #{cnn_forward.10}
  #allocation0 [shape = 'u32[]', space=smem, size = 0x4, offset = 0x4, fixed_abs, tag = 'smem constant byte address 0x4 - core index']
  #allocation1 [shape = 'u32[72,128]{1,0:T(1,128)}', space=vmem, size = 0x9000, scoped, tag = 'internal scratch']
  %s0 = inlined_call_operand.vmem [shape: bf16[2,3,2,3,96], index: 0, kind: input, shape index: {}]
  %s1 = inlined_call_operand.vmem [shape: bf16[2,3,3,48], index: 1, kind: output, shape index: {}]
  %s2 = sld [smem:[#allocation0]]
  $region37: #{cnn_forward.10} parent=0
    _
  %s4 = ssub.s32 1, %s2
  %s5 = scalar_select 0, %s4, %s2
  loop: start=0, step=1, limit=4
  $region2: #{cnn_forward.10} parent=0 // loop_pre_header
    _
  $region3: #{cnn_forward.10} parent=0 // loop_header
    %s7 = sphi 0, %s11
    %p8 = scmp.ge.s32.totalorder %s7, 4
    %s17 = sphi 0, %s19
    %s20 = sphi 0, %s17
    %s21 = sphi 0, %s20
    %s37 = sphi 0, %s21
    %s43 = sphi 0, %s45
    %s46 = sphi 0, %s43
    %s47 = sphi 0, %s46
    %s63 = sphi 0, %s47
  $region4: #{cnn_forward.10} parent=0 // loop_header_branch
    %10 = sbr.rel (%p8) target = $region8
  $region5: #{cnn_forward.10} parent=0 // loop_body
    %s12 = ssub.s32 %s7, 1
    %s13 = ssub.s32 %s7, 2
    %s14 = sadd.s32 %s7, 1
    %s15 = ssub.s32 %s7, %s14
    %p16 = scmp.eq.s32.totalorder %s15, 0
    %s18 = sadd.s32 %s17, 1
    %s19 = scalar_select %p16, %s17, %s18
    %p22 = pneg %p16
    %p23 = scmp.eq.s32.totalorder %s7, 1
    %p24 = por %p22, %p23
    %p25 = scmp.ne.s32.totalorder %s17, %s20
    %p26 = scmp.eq.s32.totalorder %s7, 0
    %p27 = por %p25, %p26
    %p28 = scmp.ne.s32.totalorder %s17, %s20
    %p29 = scmp.eq.s32.totalorder %s12, 1
    %p30 = por %p28, %p29
    %p31 = scmp.ne.s32.totalorder %s20, %s21
    %p32 = scmp.eq.s32.totalorder %s12, 0
    %p33 = por %p31, %p32
    %p34 = scmp.ne.s32.totalorder %s20, %s21
    %p35 = scmp.eq.s32.totalorder %s13, 1
    %p36 = por %p34, %p35
    %p38 = scmp.ne.s32.totalorder %s21, %s37
    %p39 = scmp.eq.s32.totalorder %s13, 0
    %p40 = por %p38, %p39
    %s41 = ssub.s32 %s7, %s14
    %p42 = scmp.eq.s32.totalorder %s41, 0
    %s44 = sadd.s32 %s43, 1
    %s45 = scalar_select %p42, %s43, %s44
    %p48 = pneg %p42
    %p49 = scmp.eq.s32.totalorder %s7, 1
    %p50 = por %p48, %p49
    %p51 = scmp.ne.s32.totalorder %s43, %s46
    %p52 = scmp.eq.s32.totalorder %s7, 0
    %p53 = por %p51, %p52
    %p54 = scmp.ne.s32.totalorder %s43, %s46
    %p55 = scmp.eq.s32.totalorder %s12, 1
    %p56 = por %p54, %p55
    %p57 = scmp.ne.s32.totalorder %s46, %s47
    %p58 = scmp.eq.s32.totalorder %s12, 0
    %p59 = por %p57, %p58
    %p60 = scmp.ne.s32.totalorder %s46, %s47
    %p61 = scmp.eq.s32.totalorder %s13, 1
    %p62 = por %p60, %p61
    %p64 = scmp.ne.s32.totalorder %s47, %s63
    %p65 = scmp.eq.s32.totalorder %s13, 0
    %p66 = por %p64, %p65
    %p67 = scmp.le.s32.totalorder 1, %s7
    %p68 = scmp.lt.s32.totalorder %s7, 3
    %p69 = pnand %p67, %p68
    %p70 = pneg %p69
    // Predicated region
    $region9: #{cnn_forward.10} parent=5 // pred_check
      _
    $region10: #{cnn_forward.10} parent=5 // pred_check_branch
      %72 = sbr.rel (%p69) target = $region12
    $region11: #{cnn_forward.10} parent=5 // pred_region
      %s73 = ssub.s32 %s7, 1
    $region12: #{cnn_forward.10} parent=5 // pred_fallthru
      _
    %p74 = scmp.lt.s32.totalorder %s7, 2
    // Predicated region
    $region13: #{cnn_forward.10} parent=5 // pred_check
      %p75 = pneg %p74
    $region14: #{cnn_forward.10} parent=5 // pred_check_branch
      %77 = sbr.rel (%p75) target = $region16
    $region15: #{cnn_forward.10} parent=5 // pred_region
      // Predicated region
      $region17: #{cnn_forward.10} parent=15 // pred_check
        %p78 = pneg %p27
      $region18: #{cnn_forward.10} parent=15 // pred_check_branch
        %80 = sbr.rel (%p78) target = $region20
      $region19: #{cnn_forward.10} parent=15 // pred_region
        %p81 = scmp.lt.s32.totalorder %s7, 1
        %s82 = scalar_select %p81, %s7, 1
        %s83 = smul.addr %s82, 6
        %s84 = smul.addr %s83, 2
        %s85 = scalar_lea.vmem %s0, %s84
      $region20: #{cnn_forward.10} parent=15 // pred_fallthru
        _
    $region16: #{cnn_forward.10} parent=5 // pred_fallthru
      _
    %p86 = scmp.le.s32.totalorder 1, %s7
    %p87 = scmp.lt.s32.totalorder %s7, 3
    %p88 = pnand %p86, %p87
    %p89 = pneg %p88
    // Predicated region
    $region21: #{cnn_forward.10} parent=5 // pred_check
      _
    $region22: #{cnn_forward.10} parent=5 // pred_check_branch
      %91 = sbr.rel (%p88) target = $region24
    $region23: #{cnn_forward.10} parent=5 // pred_region
      %s92 = ssub.s32 %s7, 1
      %p93 = scmp.lt.s32.totalorder %s12, 1
      %s94 = scalar_select %p93, %s12, 1
      %s95 = smul.addr %s94, 6
      %s96 = smul.addr %s95, 2
      %s97 = scalar_lea.vmem %s0, %s96
      %p98 = pneg %p33
      %p99 = pneg %p30
      %p100 = pneg %p59
      %p101 = pneg %p56
      %p102 = scmp.lt.s32.totalorder %s12, 1
      %s103 = scalar_select %p102, %s12, 1
      %s104 = smul.addr %s103, 3
      %s105 = smul.addr %s104, 2
      %s106 = scalar_lea.vmem %s1, %s105
      %p107 = scmp.lt.s32.totalorder %s12, 1
      %s108 = scalar_select %p107, %s12, 1
      %s109 = smul.addr %s108, 6
      %s110 = smul.addr %s109, 2
      %s111 = scalar_lea.vmem %s0, %s110
      %p112 = scmp.lt.s32.totalorder %s12, 1
      %s113 = scalar_select %p112, %s12, 1
      %s114 = smul.addr %s113, 3
      %s115 = smul.addr %s114, 2
      %s116 = scalar_lea.vmem %s1, %s115
      %v117 = vld [vmem:[%s111] sm:$0x3]
      %v118 = vld [vmem:[%s111 + $0x4] sm:$0x3]
      %v119 = vld [vmem:[%s111 + $0x8] sm:$0x3]
      %s120 = scalar_lea.vmem %s111, 2
      %v121 = vld [vmem:[%s120] sm:$0x3]
      %v122 = vld [vmem:[%s120 + $0x4] sm:$0x3]
      %v123 = vld [vmem:[%s120 + $0x8] sm:$0x3]
      %v124 = vunpack.c.l.bf16 %v117
      %v125 = vunpack.c.l.bf16 %v118
      %v126 = vunpack.c.l.bf16 %v119
      %v127 = vunpack.c.l.bf16 %v121
      %v128 = vunpack.c.l.bf16 %v122
      %v129 = vunpack.c.l.bf16 %v123
      %v130 = vmax.f32 %v124, %v127
      %v131 = vmax.f32 %v125, %v128
      %v132 = vmax.f32 %v126, %v129
      %v133 = vpack.c.bf16 %v130, %v130
      %v134 = vpack.c.bf16 %v131, %v131
      %v135 = vpack.c.bf16 %v132, %v132
      %v136 = vunpack.c.l.bf16 %v133
      %v137 = vunpack.c.l.bf16 %v134
      %v138 = vunpack.c.l.bf16 %v135
      %142 = vrot.lane.b32.xlu0 %v136, 80
      %v143 = vpop.permute.xlu0 %142
      %144 = vrot.lane.b32.xlu0 %v137, 80
      %v145 = vpop.permute.xlu0 %144
      %146 = vrot.lane.b32.xlu0 %v138, 80
      %v147 = vpop.permute.xlu0 %146
      %v151 = vmax.f32 %v136, %v143
      %v152 = vmax.f32 %v137, %v145
      %v153 = vmax.f32 %v138, %v147
      %v154 = vpack.c.bf16 %v151, %v151
      %v155 = vpack.c.bf16 %v152, %v152
      %v156 = vpack.c.bf16 %v153, %v153
      %vm157 = vcmask 386048
      %vm158 = vsmask.f32 1280
      %vm159 = vmand %vm157, %vm158
      %v160 = vld [vmem:[%s116] sm:$0x3]
      %v161 = vsel %vm159, %v154, %v160
      %162 = vst [vmem:[%s116] sm:$0x3] %v161
      %v163 = vld [vmem:[%s116 + $0x2] sm:$0x3]
      %v164 = vsel %vm159, %v155, %v163
      %165 = vst [vmem:[%s116 + $0x2] sm:$0x3] %v164
      %v166 = vld [vmem:[%s116 + $0x4] sm:$0x3]
      %v167 = vsel %vm159, %v156, %v166
      %168 = vst [vmem:[%s116 + $0x4] sm:$0x3] %v167
      %p169 = scmp.lt.s32.totalorder %s12, 1
      %s170 = scalar_select %p169, %s12, 1
      %s171 = smul.addr %s170, 3
      %s172 = smul.addr %s171, 2
      %s173 = scalar_lea.vmem %s1, %s172
      // Predicated region
      $region25: #{cnn_forward.10} parent=23 // pred_check
        %p174 = pneg %p56
      $region26: #{cnn_forward.10} parent=23 // pred_check_branch
        %176 = sbr.rel (%p174) target = $region28
      $region27: #{cnn_forward.10} parent=23 // pred_region
        _
      $region28: #{cnn_forward.10} parent=23 // pred_fallthru
        _
    $region24: #{cnn_forward.10} parent=5 // pred_fallthru
      _
    %p177 = scmp.le.s32.totalorder 2, %s7
    // Predicated region
    $region29: #{cnn_forward.10} parent=5 // pred_check
      %p178 = pneg %p177
    $region30: #{cnn_forward.10} parent=5 // pred_check_branch
      %180 = sbr.rel (%p178) target = $region32
    $region31: #{cnn_forward.10} parent=5 // pred_region
      %s181 = ssub.s32 %s7, 2
      // Predicated region
      $region33: #{cnn_forward.10} parent=31 // pred_check
        %p182 = pneg %p62
      $region34: #{cnn_forward.10} parent=31 // pred_check_branch
        %184 = sbr.rel (%p182) target = $region36
      $region35: #{cnn_forward.10} parent=31 // pred_region
        %p185 = scmp.lt.s32.totalorder %s13, 1
        %s186 = scalar_select %p185, %s13, 1
        %s187 = smul.addr %s186, 3
        %s188 = smul.addr %s187, 2
        %s189 = scalar_lea.vmem %s1, %s188
      $region36: #{cnn_forward.10} parent=31 // pred_fallthru
        _
    $region32: #{cnn_forward.10} parent=5 // pred_fallthru
      _
  $region6: #{cnn_forward.10} parent=0 // loop_footer
    %s11 = sadd.s32 1, %s7
  $region7: #{cnn_forward.10} parent=0 // loop_footer_branch
    %6 = sbr.rel target = $region3
  $region8: #{cnn_forward.10} parent=0 // loop_exit
    _

// kernel: cnn_forward.9
$region0: #{cnn_forward.9}
  #allocation0 [shape = 'u32[]', space=smem, size = 0x4, offset = 0x4, fixed_abs, tag = 'smem constant byte address 0x4 - core index']
  #allocation1 [shape = 'u32[72,128]{1,0:T(1,128)}', space=vmem, size = 0x9000, scoped, tag = 'internal scratch']
  #allocation2 [shape = 'f32[32,128]{1,0:T(8,128)}', space=vmem, size = 0x4000, scoped, tag = 'scratch operand']
  %s0 = inlined_call_operand.vmem [shape: bf16[32,1024], index: 0, kind: input, shape index: {}]
  %s1 = inlined_call_operand.vmem [shape: bf16[1024,128], index: 1, kind: input, shape index: {}]
  %s2 = inlined_call_operand.vmem [shape: f32[1,128], index: 2, kind: input, shape index: {}]
  %s3 = inlined_call_operand.vmem [shape: bf16[32,128], index: 3, kind: output, shape index: {}]
  %s4 = sld [smem:[#allocation0]]
  $region30: #{cnn_forward.9} parent=0
    _
  %s6 = ssub.s32 1, %s4
  %s7 = scalar_select 0, %s6, %s4
  // Predicated region
  $region2: #{cnn_forward.9} parent=0 // pred_check
    _
  $region3: #{cnn_forward.9} parent=0 // pred_check_branch
    %9 = sbr.rel (0) target = $region5
  $region4: #{cnn_forward.9} parent=0 // pred_region
    _
  $region5: #{cnn_forward.9} parent=0 // pred_fallthru
    _
  // Predicated region
  $region6: #{cnn_forward.9} parent=0 // pred_check
    _
  $region7: #{cnn_forward.9} parent=0 // pred_check_branch
    %11 = sbr.rel (0) target = $region9
  $region8: #{cnn_forward.9} parent=0 // pred_region
    _
  $region9: #{cnn_forward.9} parent=0 // pred_fallthru
    _
  // Predicated region
  $region10: #{cnn_forward.9} parent=0 // pred_check
    _
  $region11: #{cnn_forward.9} parent=0 // pred_check_branch
    %13 = sbr.rel (0) target = $region13
  $region12: #{cnn_forward.9} parent=0 // pred_region
    _
  $region13: #{cnn_forward.9} parent=0 // pred_fallthru
    _
  %p14 = scmp.eq.s32.totalorder 0, 0
  // Predicated region
  $region14: #{cnn_forward.9} parent=0 // pred_check
    %p15 = pneg %p14
  $region15: #{cnn_forward.9} parent=0 // pred_check_branch
    %17 = sbr.rel (%p15) target = $region17
  $region16: #{cnn_forward.9} parent=0 // pred_region
    %18 = vst [vmem:[#allocation2] sm:$0xff] 0.0
    %19 = vst [vmem:[#allocation2 + $0x8] sm:$0xff] 0.0
    %20 = vst [vmem:[#allocation2 + $0x10] sm:$0xff] 0.0
    %21 = vst [vmem:[#allocation2 + $0x18] sm:$0xff] 0.0
  $region17: #{cnn_forward.9} parent=0 // pred_fallthru
    _
  %v22 = vld [vmem:[#allocation2] sm:$0xff]
  %v23 = vld [vmem:[#allocation2 + $0x8] sm:$0xff]
  %v24 = vld [vmem:[#allocation2 + $0x10] sm:$0xff]
  %v25 = vld [vmem:[#allocation2 + $0x18] sm:$0xff]
  %v26 = vld [vmem:[%s0] sm:$0xff]
  %v27 = vld [vmem:[%s0 + $0x8] sm:$0xff]
  %v28 = vld [vmem:[%s0 + $0x10] sm:$0xff]
  %v29 = vld [vmem:[%s0 + $0x18] sm:$0xff]
  %v30 = vld [vmem:[%s0 + $0x20] sm:$0xff]
  %v31 = vld [vmem:[%s0 + $0x28] sm:$0xff]
  %v32 = vld [vmem:[%s0 + $0x30] sm:$0xff]
  %v33 = vld [vmem:[%s0 + $0x38] sm:$0xff]
  %v34 = vld [vmem:[%s0 + $0x40] sm:$0xff]
  %v35 = vld [vmem:[%s0 + $0x48] sm:$0xff]
  %v36 = vld [vmem:[%s0 + $0x50] sm:$0xff]
  %v37 = vld [vmem:[%s0 + $0x58] sm:$0xff]
  %v38 = vld [vmem:[%s0 + $0x60] sm:$0xff]
  %v39 = vld [vmem:[%s0 + $0x68] sm:$0xff]
  %v40 = vld [vmem:[%s0 + $0x70] sm:$0xff]
  %v41 = vld [vmem:[%s0 + $0x78] sm:$0xff]
  %v42 = vld [vmem:[%s1] sm:$0xf]
  %v43 = vld [vmem:[%s1 + $0x4] sm:$0xf]
  %v44 = vld [vmem:[%s1 + $0x8] sm:$0xf]
  %v45 = vld [vmem:[%s1 + $0xc] sm:$0xf]
  %v46 = vld [vmem:[%s1 + $0x10] sm:$0xf]
  %v47 = vld [vmem:[%s1 + $0x14] sm:$0xf]
  %v48 = vld [vmem:[%s1 + $0x18] sm:$0xf]
  %v49 = vld [vmem:[%s1 + $0x1c] sm:$0xf]
  %v50 = vld [vmem:[%s1 + $0x20] sm:$0xf]
  %v51 = vld [vmem:[%s1 + $0x24] sm:$0xf]
  %v52 = vld [vmem:[%s1 + $0x28] sm:$0xf]
  %v53 = vld [vmem:[%s1 + $0x2c] sm:$0xf]
  %v54 = vld [vmem:[%s1 + $0x30] sm:$0xf]
  %v55 = vld [vmem:[%s1 + $0x34] sm:$0xf]
  %v56 = vld [vmem:[%s1 + $0x38] sm:$0xf]
  %v57 = vld [vmem:[%s1 + $0x3c] sm:$0xf]
  %v58 = vld [vmem:[%s1 + $0x40] sm:$0xf]
  %v59 = vld [vmem:[%s1 + $0x44] sm:$0xf]
  %v60 = vld [vmem:[%s1 + $0x48] sm:$0xf]
  %v61 = vld [vmem:[%s1 + $0x4c] sm:$0xf]
  %v62 = vld [vmem:[%s1 + $0x50] sm:$0xf]
  %v63 = vld [vmem:[%s1 + $0x54] sm:$0xf]
  %v64 = vld [vmem:[%s1 + $0x58] sm:$0xf]
  %v65 = vld [vmem:[%s1 + $0x5c] sm:$0xf]
  %v66 = vld [vmem:[%s1 + $0x60] sm:$0xf]
  %v67 = vld [vmem:[%s1 + $0x64] sm:$0xf]
  %v68 = vld [vmem:[%s1 + $0x68] sm:$0xf]
  %v69 = vld [vmem:[%s1 + $0x6c] sm:$0xf]
  %v70 = vld [vmem:[%s1 + $0x70] sm:$0xf]
  %v71 = vld [vmem:[%s1 + $0x74] sm:$0xf]
  %v72 = vld [vmem:[%s1 + $0x78] sm:$0xf]
  %v73 = vld [vmem:[%s1 + $0x7c] sm:$0xf]
  %v74 = vld [vmem:[%s1 + $0x80] sm:$0xf]
  %v75 = vld [vmem:[%s1 + $0x84] sm:$0xf]
  %v76 = vld [vmem:[%s1 + $0x88] sm:$0xf]
  %v77 = vld [vmem:[%s1 + $0x8c] sm:$0xf]
  %v78 = vld [vmem:[%s1 + $0x90] sm:$0xf]
  %v79 = vld [vmem:[%s1 + $0x94] sm:$0xf]
  %v80 = vld [vmem:[%s1 + $0x98] sm:$0xf]
  %v81 = vld [vmem:[%s1 + $0x9c] sm:$0xf]
  %v82 = vld [vmem:[%s1 + $0xa0] sm:$0xf]
  %v83 = vld [vmem:[%s1 + $0xa4] sm:$0xf]
  %v84 = vld [vmem:[%s1 + $0xa8] sm:$0xf]
  %v85 = vld [vmem:[%s1 + $0xac] sm:$0xf]
  %v86 = vld [vmem:[%s1 + $0xb0] sm:$0xf]
  %v87 = vld [vmem:[%s1 + $0xb4] sm:$0xf]
  %v88 = vld [vmem:[%s1 + $0xb8] sm:$0xf]
  %v89 = vld [vmem:[%s1 + $0xbc] sm:$0xf]
  %v90 = vld [vmem:[%s1 + $0xc0] sm:$0xf]
  %v91 = vld [vmem:[%s1 + $0xc4] sm:$0xf]
  %v92 = vld [vmem:[%s1 + $0xc8] sm:$0xf]
  %v93 = vld [vmem:[%s1 + $0xcc] sm:$0xf]
  %v94 = vld [vmem:[%s1 + $0xd0] sm:$0xf]
  %v95 = vld [vmem:[%s1 + $0xd4] sm:$0xf]
  %v96 = vld [vmem:[%s1 + $0xd8] sm:$0xf]
  %v97 = vld [vmem:[%s1 + $0xdc] sm:$0xf]
  %v98 = vld [vmem:[%s1 + $0xe0] sm:$0xf]
  %v99 = vld [vmem:[%s1 + $0xe4] sm:$0xf]
  %v100 = vld [vmem:[%s1 + $0xe8] sm:$0xf]
  %v101 = vld [vmem:[%s1 + $0xec] sm:$0xf]
  %v102 = vld [vmem:[%s1 + $0xf0] sm:$0xf]
  %v103 = vld [vmem:[%s1 + $0xf4] sm:$0xf]
  %v104 = vld [vmem:[%s1 + $0xf8] sm:$0xf]
  %v105 = vld [vmem:[%s1 + $0xfc] sm:$0xf]
  %v106 = vld [vmem:[%s1 + $0x100] sm:$0xf]
  %v107 = vld [vmem:[%s1 + $0x104] sm:$0xf]
  %v108 = vld [vmem:[%s1 + $0x108] sm:$0xf]
  %v109 = vld [vmem:[%s1 + $0x10c] sm:$0xf]
  %v110 = vld [vmem:[%s1 + $0x110] sm:$0xf]
  %v111 = vld [vmem:[%s1 + $0x114] sm:$0xf]
  %v112 = vld [vmem:[%s1 + $0x118] sm:$0xf]
  %v113 = vld [vmem:[%s1 + $0x11c] sm:$0xf]
  %v114 = vld [vmem:[%s1 + $0x120] sm:$0xf]
  %v115 = vld [vmem:[%s1 + $0x124] sm:$0xf]
  %v116 = vld [vmem:[%s1 + $0x128] sm:$0xf]
  %v117 = vld [vmem:[%s1 + $0x12c] sm:$0xf]
  %v118 = vld [vmem:[%s1 + $0x130] sm:$0xf]
  %v119 = vld [vmem:[%s1 + $0x134] sm:$0xf]
  %v120 = vld [vmem:[%s1 + $0x138] sm:$0xf]
  %v121 = vld [vmem:[%s1 + $0x13c] sm:$0xf]
  %v122 = vld [vmem:[%s1 + $0x140] sm:$0xf]
  %v123 = vld [vmem:[%s1 + $0x144] sm:$0xf]
  %v124 = vld [vmem:[%s1 + $0x148] sm:$0xf]
  %v125 = vld [vmem:[%s1 + $0x14c] sm:$0xf]
  %v126 = vld [vmem:[%s1 + $0x150] sm:$0xf]
  %v127 = vld [vmem:[%s1 + $0x154] sm:$0xf]
  %v128 = vld [vmem:[%s1 + $0x158] sm:$0xf]
  %v129 = vld [vmem:[%s1 + $0x15c] sm:$0xf]
  %v130 = vld [vmem:[%s1 + $0x160] sm:$0xf]
  %v131 = vld [vmem:[%s1 + $0x164] sm:$0xf]
  %v132 = vld [vmem:[%s1 + $0x168] sm:$0xf]
  %v133 = vld [vmem:[%s1 + $0x16c] sm:$0xf]
  %v134 = vld [vmem:[%s1 + $0x170] sm:$0xf]
  %v135 = vld [vmem:[%s1 + $0x174] sm:$0xf]
  %v136 = vld [vmem:[%s1 + $0x178] sm:$0xf]
  %v137 = vld [vmem:[%s1 + $0x17c] sm:$0xf]
  %v138 = vld [vmem:[%s1 + $0x180] sm:$0xf]
  %v139 = vld [vmem:[%s1 + $0x184] sm:$0xf]
  %v140 = vld [vmem:[%s1 + $0x188] sm:$0xf]
  %v141 = vld [vmem:[%s1 + $0x18c] sm:$0xf]
  %v142 = vld [vmem:[%s1 + $0x190] sm:$0xf]
  %v143 = vld [vmem:[%s1 + $0x194] sm:$0xf]
  %v144 = vld [vmem:[%s1 + $0x198] sm:$0xf]
  %v145 = vld [vmem:[%s1 + $0x19c] sm:$0xf]
  %v146 = vld [vmem:[%s1 + $0x1a0] sm:$0xf]
  %v147 = vld [vmem:[%s1 + $0x1a4] sm:$0xf]
  %v148 = vld [vmem:[%s1 + $0x1a8] sm:$0xf]
  %v149 = vld [vmem:[%s1 + $0x1ac] sm:$0xf]
  %v150 = vld [vmem:[%s1 + $0x1b0] sm:$0xf]
  %v151 = vld [vmem:[%s1 + $0x1b4] sm:$0xf]
  %v152 = vld [vmem:[%s1 + $0x1b8] sm:$0xf]
  %v153 = vld [vmem:[%s1 + $0x1bc] sm:$0xf]
  %v154 = vld [vmem:[%s1 + $0x1c0] sm:$0xf]
  %v155 = vld [vmem:[%s1 + $0x1c4] sm:$0xf]
  %v156 = vld [vmem:[%s1 + $0x1c8] sm:$0xf]
  %v157 = vld [vmem:[%s1 + $0x1cc] sm:$0xf]
  %v158 = vld [vmem:[%s1 + $0x1d0] sm:$0xf]
  %v159 = vld [vmem:[%s1 + $0x1d4] sm:$0xf]
  %v160 = vld [vmem:[%s1 + $0x1d8] sm:$0xf]
  %v161 = vld [vmem:[%s1 + $0x1dc] sm:$0xf]
  %v162 = vld [vmem:[%s1 + $0x1e0] sm:$0xf]
  %v163 = vld [vmem:[%s1 + $0x1e4] sm:$0xf]
  %v164 = vld [vmem:[%s1 + $0x1e8] sm:$0xf]
  %v165 = vld [vmem:[%s1 + $0x1ec] sm:$0xf]
  %v166 = vld [vmem:[%s1 + $0x1f0] sm:$0xf]
  %v167 = vld [vmem:[%s1 + $0x1f4] sm:$0xf]
  %v168 = vld [vmem:[%s1 + $0x1f8] sm:$0xf]
  %v169 = vld [vmem:[%s1 + $0x1fc] sm:$0xf]
  %v186 = vunpack.c.l.b16 %v26
  %v187 = vunpack.c.h.b16 %v26
  %v188 = vunpack.c.l.b16 %v27
  %v189 = vunpack.c.h.b16 %v27
  %v190 = vunpack.c.l.b16 %v28
  %v191 = vunpack.c.h.b16 %v28
  %v192 = vunpack.c.l.b16 %v29
  %v193 = vunpack.c.h.b16 %v29
  %v194 = vunpack.c.l.b16 %v30
  %v195 = vunpack.c.h.b16 %v30
  %v196 = vunpack.c.l.b16 %v31
  %v197 = vunpack.c.h.b16 %v31
  %v198 = vunpack.c.l.b16 %v32
  %v199 = vunpack.c.h.b16 %v32
  %v200 = vunpack.c.l.b16 %v33
  %v201 = vunpack.c.h.b16 %v33
  %v202 = vunpack.c.l.b16 %v34
  %v203 = vunpack.c.h.b16 %v34
  %v204 = vunpack.c.l.b16 %v35
  %v205 = vunpack.c.h.b16 %v35
  %v206 = vunpack.c.l.b16 %v36
  %v207 = vunpack.c.h.b16 %v36
  %v208 = vunpack.c.l.b16 %v37
  %v209 = vunpack.c.h.b16 %v37
  %v210 = vunpack.c.l.b16 %v38
  %v211 = vunpack.c.h.b16 %v38
  %v212 = vunpack.c.l.b16 %v39
  %v213 = vunpack.c.h.b16 %v39
  %v214 = vunpack.c.l.b16 %v40
  %v215 = vunpack.c.h.b16 %v40
  %v216 = vunpack.c.l.b16 %v41
  %v217 = vunpack.c.h.b16 %v41
  %v218 = vpack.c.b16 %v194, %v186
  %v219 = vpack.c.b16 %v195, %v187
  %v220 = vpack.c.b16 %v196, %v188
  %v221 = vpack.c.b16 %v197, %v189
  %v222 = vpack.c.b16 %v198, %v190
  %v223 = vpack.c.b16 %v199, %v191
  %v224 = vpack.c.b16 %v200, %v192
  %v225 = vpack.c.b16 %v201, %v193
  %v226 = vpack.c.b16 %v210, %v202
  %v227 = vpack.c.b16 %v211, %v203
  %v228 = vpack.c.b16 %v212, %v204
  %v229 = vpack.c.b16 %v213, %v205
  %v230 = vpack.c.b16 %v214, %v206
  %v231 = vpack.c.b16 %v215, %v207
  %v232 = vpack.c.b16 %v216, %v208
  %v233 = vpack.c.b16 %v217, %v209
  %v378 = vunpack.c.l.b16 %v42
  %v379 = vunpack.c.l.b16 %v43
  %v380 = vunpack.c.l.b16 %v44
  %v381 = vunpack.c.l.b16 %v45
  %v382 = vunpack.c.l.b16 %v46
  %v383 = vunpack.c.l.b16 %v47
  %v384 = vunpack.c.l.b16 %v48
  %v385 = vunpack.c.l.b16 %v49
  %v386 = vunpack.c.l.b16 %v50
  %v387 = vunpack.c.l.b16 %v51
  %v388 = vunpack.c.l.b16 %v52
  %v389 = vunpack.c.l.b16 %v53
  %v390 = vunpack.c.l.b16 %v54
  %v391 = vunpack.c.l.b16 %v55
  %v392 = vunpack.c.l.b16 %v56
  %v393 = vunpack.c.l.b16 %v57
  %v394 = vunpack.c.l.b16 %v58
  %v395 = vunpack.c.l.b16 %v59
  %v396 = vunpack.c.l.b16 %v60
  %v397 = vunpack.c.l.b16 %v61
  %v398 = vunpack.c.l.b16 %v62
  %v399 = vunpack.c.l.b16 %v63
  %v400 = vunpack.c.l.b16 %v64
  %v401 = vunpack.c.l.b16 %v65
  %v402 = vunpack.c.l.b16 %v66
  %v403 = vunpack.c.l.b16 %v67
  %v404 = vunpack.c.l.b16 %v68
  %v405 = vunpack.c.l.b16 %v69
  %v406 = vunpack.c.l.b16 %v70
  %v407 = vunpack.c.l.b16 %v71
  %v408 = vunpack.c.l.b16 %v72
  %v409 = vunpack.c.l.b16 %v73
  %v410 = vunpack.c.l.b16 %v74
  %v411 = vunpack.c.l.b16 %v75
  %v412 = vunpack.c.l.b16 %v76
  %v413 = vunpack.c.l.b16 %v77
  %v414 = vunpack.c.l.b16 %v78
  %v415 = vunpack.c.l.b16 %v79
  %v416 = vunpack.c.l.b16 %v80
  %v417 = vunpack.c.l.b16 %v81
  %v418 = vunpack.c.l.b16 %v82
  %v419 = vunpack.c.l.b16 %v83
  %v420 = vunpack.c.l.b16 %v84
  %v421 = vunpack.c.l.b16 %v85
  %v422 = vunpack.c.l.b16 %v86
  %v423 = vunpack.c.l.b16 %v87
  %v424 = vunpack.c.l.b16 %v88
  %v425 = vunpack.c.l.b16 %v89
  %v426 = vunpack.c.l.b16 %v90
  %v427 = vunpack.c.l.b16 %v91
  %v428 = vunpack.c.l.b16 %v92
  %v429 = vunpack.c.l.b16 %v93
  %v430 = vunpack.c.l.b16 %v94
  %v431 = vunpack.c.l.b16 %v95
  %v432 = vunpack.c.l.b16 %v96
  %v433 = vunpack.c.l.b16 %v97
  %v434 = vunpack.c.l.b16 %v98
  %v435 = vunpack.c.l.b16 %v99
  %v436 = vunpack.c.l.b16 %v100
  %v437 = vunpack.c.l.b16 %v101
  %v438 = vunpack.c.l.b16 %v102
  %v439 = vunpack.c.l.b16 %v103
  %v440 = vunpack.c.l.b16 %v104
  %v441 = vunpack.c.l.b16 %v105
  %v442 = vunpack.c.l.b16 %v106
  %v443 = vunpack.c.l.b16 %v107
  %v444 = vunpack.c.l.b16 %v108
  %v445 = vunpack.c.l.b16 %v109
  %v446 = vunpack.c.l.b16 %v110
  %v447 = vunpack.c.l.b16 %v111
  %v448 = vunpack.c.l.b16 %v112
  %v449 = vunpack.c.l.b16 %v113
  %v450 = vunpack.c.l.b16 %v114
  %v451 = vunpack.c.l.b16 %v115
  %v452 = vunpack.c.l.b16 %v116
  %v453 = vunpack.c.l.b16 %v117
  %v454 = vunpack.c.l.b16 %v118
  %v455 = vunpack.c.l.b16 %v119
  %v456 = vunpack.c.l.b16 %v120
  %v457 = vunpack.c.l.b16 %v121
  %v458 = vunpack.c.l.b16 %v122
  %v459 = vunpack.c.l.b16 %v123
  %v460 = vunpack.c.l.b16 %v124
  %v461 = vunpack.c.l.b16 %v125
  %v462 = vunpack.c.l.b16 %v126
  %v463 = vunpack.c.l.b16 %v127
  %v464 = vunpack.c.l.b16 %v128
  %v465 = vunpack.c.l.b16 %v129
  %v466 = vunpack.c.l.b16 %v130
  %v467 = vunpack.c.l.b16 %v131
  %v468 = vunpack.c.l.b16 %v132
  %v469 = vunpack.c.l.b16 %v133
  %v470 = vunpack.c.l.b16 %v134
  %v471 = vunpack.c.l.b16 %v135
  %v472 = vunpack.c.l.b16 %v136
  %v473 = vunpack.c.l.b16 %v137
  %v474 = vunpack.c.l.b16 %v138
  %v475 = vunpack.c.l.b16 %v139
  %v476 = vunpack.c.l.b16 %v140
  %v477 = vunpack.c.l.b16 %v141
  %v478 = vunpack.c.l.b16 %v142
  %v479 = vunpack.c.l.b16 %v143
  %v480 = vunpack.c.l.b16 %v144
  %v481 = vunpack.c.l.b16 %v145
  %v482 = vunpack.c.l.b16 %v146
  %v483 = vunpack.c.l.b16 %v147
  %v484 = vunpack.c.l.b16 %v148
  %v485 = vunpack.c.l.b16 %v149
  %v486 = vunpack.c.l.b16 %v150
  %v487 = vunpack.c.l.b16 %v151
  %v488 = vunpack.c.l.b16 %v152
  %v489 = vunpack.c.l.b16 %v153
  %v490 = vunpack.c.l.b16 %v154
  %v491 = vunpack.c.l.b16 %v155
  %v492 = vunpack.c.l.b16 %v156
  %v493 = vunpack.c.l.b16 %v157
  %v494 = vunpack.c.l.b16 %v158
  %v495 = vunpack.c.l.b16 %v159
  %v496 = vunpack.c.l.b16 %v160
  %v497 = vunpack.c.l.b16 %v161
  %v498 = vunpack.c.l.b16 %v162
  %v499 = vunpack.c.l.b16 %v163
  %v500 = vunpack.c.l.b16 %v164
  %v501 = vunpack.c.l.b16 %v165
  %v502 = vunpack.c.l.b16 %v166
  %v503 = vunpack.c.l.b16 %v167
  %v504 = vunpack.c.l.b16 %v168
  %v505 = vunpack.c.l.b16 %v169
  %v506 = vpack.c.b16 %v379, %v378
  %v507 = vpack.c.b16 %v381, %v380
  %v508 = vpack.c.b16 %v383, %v382
  %v509 = vpack.c.b16 %v385, %v384
  %v510 = vpack.c.b16 %v387, %v386
  %v511 = vpack.c.b16 %v389, %v388
  %v512 = vpack.c.b16 %v391, %v390
  %v513 = vpack.c.b16 %v393, %v392
  %v514 = vpack.c.b16 %v395, %v394
  %v515 = vpack.c.b16 %v397, %v396
  %v516 = vpack.c.b16 %v399, %v398
  %v517 = vpack.c.b16 %v401, %v400
  %v518 = vpack.c.b16 %v403, %v402
  %v519 = vpack.c.b16 %v405, %v404
  %v520 = vpack.c.b16 %v407, %v406
  %v521 = vpack.c.b16 %v409, %v408
  %v522 = vpack.c.b16 %v411, %v410
  %v523 = vpack.c.b16 %v413, %v412
  %v524 = vpack.c.b16 %v415, %v414
  %v525 = vpack.c.b16 %v417, %v416
  %v526 = vpack.c.b16 %v419, %v418
  %v527 = vpack.c.b16 %v421, %v420
  %v528 = vpack.c.b16 %v423, %v422
  %v529 = vpack.c.b16 %v425, %v424
  %v530 = vpack.c.b16 %v427, %v426
  %v531 = vpack.c.b16 %v429, %v428
  %v532 = vpack.c.b16 %v431, %v430
  %v533 = vpack.c.b16 %v433, %v432
  %v534 = vpack.c.b16 %v435, %v434
  %v535 = vpack.c.b16 %v437, %v436
  %v536 = vpack.c.b16 %v439, %v438
  %v537 = vpack.c.b16 %v441, %v440
  %v538 = vpack.c.b16 %v443, %v442
  %v539 = vpack.c.b16 %v445, %v444
  %v540 = vpack.c.b16 %v447, %v446
  %v541 = vpack.c.b16 %v449, %v448
  %v542 = vpack.c.b16 %v451, %v450
  %v543 = vpack.c.b16 %v453, %v452
  %v544 = vpack.c.b16 %v455, %v454
  %v545 = vpack.c.b16 %v457, %v456
  %v546 = vpack.c.b16 %v459, %v458
  %v547 = vpack.c.b16 %v461, %v460
  %v548 = vpack.c.b16 %v463, %v462
  %v549 = vpack.c.b16 %v465, %v464
  %v550 = vpack.c.b16 %v467, %v466
  %v551 = vpack.c.b16 %v469, %v468
  %v552 = vpack.c.b16 %v471, %v470
  %v553 = vpack.c.b16 %v473, %v472
  %v554 = vpack.c.b16 %v475, %v474
  %v555 = vpack.c.b16 %v477, %v476
  %v556 = vpack.c.b16 %v479, %v478
  %v557 = vpack.c.b16 %v481, %v480
  %v558 = vpack.c.b16 %v483, %v482
  %v559 = vpack.c.b16 %v485, %v484
  %v560 = vpack.c.b16 %v487, %v486
  %v561 = vpack.c.b16 %v489, %v488
  %v562 = vpack.c.b16 %v491, %v490
  %v563 = vpack.c.b16 %v493, %v492
  %v564 = vpack.c.b16 %v495, %v494
  %v565 = vpack.c.b16 %v497, %v496
  %v566 = vpack.c.b16 %v499, %v498
  %v567 = vpack.c.b16 %v501, %v500
  %v568 = vpack.c.b16 %v503, %v502
  %v569 = vpack.c.b16 %v505, %v504
  %634 = vmatpush.bf16.msra.mxu0 %v513
  %635 = vmatpush.bf16.msra.mxu0 %v512
  %636 = vmatpush.bf16.msra.mxu0 %v511
  %637 = vmatpush.bf16.msra.mxu0 %v510
  %638 = vmatpush.bf16.msra.mxu0 %v509
  %639 = vmatpush.bf16.msra.mxu0 %v508
  %640 = vmatpush.bf16.msra.mxu0 %v507
  %641 = vmatpush.bf16.msra.mxu0 %v506
  %642 = vmatmul.bf16.gmra.mxu0 %v218
  %v643 = vpop.f32.mrf.mxu0
  %v644 = vadd.f32 0.0, %v643
  %v645 = vpop.f32.mrf.mxu0
  %v646 = vadd.f32 0.0, %v645
  %647 = vmatmul.bf16.gmra.mxu0 %v226
  %v648 = vpop.f32.mrf.mxu0
  %v649 = vadd.f32 0.0, %v648
  %v650 = vpop.f32.mrf.mxu0
  %v651 = vadd.f32 0.0, %v650
  %652 = vdwg.mxu0
  %653 = vmatpush.bf16.msra.mxu0 %v521
  %654 = vmatpush.bf16.msra.mxu0 %v520
  %655 = vmatpush.bf16.msra.mxu0 %v519
  %656 = vmatpush.bf16.msra.mxu0 %v518
  %657 = vmatpush.bf16.msra.mxu0 %v517
  %658 = vmatpush.bf16.msra.mxu0 %v516
  %659 = vmatpush.bf16.msra.mxu0 %v515
  %660 = vmatpush.bf16.msra.mxu0 %v514
  %661 = vmatmul.bf16.gmra.mxu0 %v219
  %v662 = vpop.f32.mrf.mxu0
  %v663 = vadd.f32 %v644, %v662
  %v664 = vpop.f32.mrf.mxu0
  %v665 = vadd.f32 %v646, %v664
  %666 = vmatmul.bf16.gmra.mxu0 %v227
  %v667 = vpop.f32.mrf.mxu0
  %v668 = vadd.f32 %v649, %v667
  %v669 = vpop.f32.mrf.mxu0
  %v670 = vadd.f32 %v651, %v669
  %671 = vdwg.mxu0
  %672 = vmatpush.bf16.msra.mxu0 %v529
  %673 = vmatpush.bf16.msra.mxu0 %v528
  %674 = vmatpush.bf16.msra.mxu0 %v527
  %675 = vmatpush.bf16.msra.mxu0 %v526
  %676 = vmatpush.bf16.msra.mxu0 %v525
  %677 = vmatpush.bf16.msra.mxu0 %v524
  %678 = vmatpush.bf16.msra.mxu0 %v523
  %679 = vmatpush.bf16.msra.mxu0 %v522
  %680 = vmatmul.bf16.gmra.mxu0 %v220
  %v681 = vpop.f32.mrf.mxu0
  %v682 = vadd.f32 %v663, %v681
  %v683 = vpop.f32.mrf.mxu0
  %v684 = vadd.f32 %v665, %v683
  %685 = vmatmul.bf16.gmra.mxu0 %v228
  %v686 = vpop.f32.mrf.mxu0
  %v687 = vadd.f32 %v668, %v686
  %v688 = vpop.f32.mrf.mxu0
  %v689 = vadd.f32 %v670, %v688
  %690 = vdwg.mxu0
  %691 = vmatpush.bf16.msra.mxu0 %v537
  %692 = vmatpush.bf16.msra.mxu0 %v536
  %693 = vmatpush.bf16.msra.mxu0 %v535
  %694 = vmatpush.bf16.msra.mxu0 %v534
  %695 = vmatpush.bf16.msra.mxu0 %v533
  %696 = vmatpush.bf16.msra.mxu0 %v532
  %697 = vmatpush.bf16.msra.mxu0 %v531
  %698 = vmatpush.bf16.msra.mxu0 %v530
  %699 = vmatmul.bf16.gmra.mxu0 %v221
  %v700 = vpop.f32.mrf.mxu0
  %v701 = vadd.f32 %v682, %v700
  %v702 = vpop.f32.mrf.mxu0
  %v703 = vadd.f32 %v684, %v702
  %704 = vmatmul.bf16.gmra.mxu0 %v229
  %v705 = vpop.f32.mrf.mxu0
  %v706 = vadd.f32 %v687, %v705
  %v707 = vpop.f32.mrf.mxu0
  %v708 = vadd.f32 %v689, %v707
  %709 = vdwg.mxu0
  %710 = vmatpush.bf16.msra.mxu0 %v545
  %711 = vmatpush.bf16.msra.mxu0 %v544
  %712 = vmatpush.bf16.msra.mxu0 %v543
  %713 = vmatpush.bf16.msra.mxu0 %v542
  %714 = vmatpush.bf16.msra.mxu0 %v541
  %715 = vmatpush.bf16.msra.mxu0 %v540
  %716 = vmatpush.bf16.msra.mxu0 %v539
  %717 = vmatpush.bf16.msra.mxu0 %v538
  %718 = vmatmul.bf16.gmra.mxu0 %v222
  %v719 = vpop.f32.mrf.mxu0
  %v720 = vadd.f32 %v701, %v719
  %v721 = vpop.f32.mrf.mxu0
  %v722 = vadd.f32 %v703, %v721
  %723 = vmatmul.bf16.gmra.mxu0 %v230
  %v724 = vpop.f32.mrf.mxu0
  %v725 = vadd.f32 %v706, %v724
  %v726 = vpop.f32.mrf.mxu0
  %v727 = vadd.f32 %v708, %v726
  %728 = vdwg.mxu0
  %729 = vmatpush.bf16.msra.mxu0 %v553
  %730 = vmatpush.bf16.msra.mxu0 %v552
  %731 = vmatpush.bf16.msra.mxu0 %v551
  %732 = vmatpush.bf16.msra.mxu0 %v550
  %733 = vmatpush.bf16.msra.mxu0 %v549
  %734 = vmatpush.bf16.msra.mxu0 %v548
  %735 = vmatpush.bf16.msra.mxu0 %v547
  %736 = vmatpush.bf16.msra.mxu0 %v546
  %737 = vmatmul.bf16.gmra.mxu0 %v223
  %v738 = vpop.f32.mrf.mxu0
  %v739 = vadd.f32 %v720, %v738
  %v740 = vpop.f32.mrf.mxu0
  %v741 = vadd.f32 %v722, %v740
  %742 = vmatmul.bf16.gmra.mxu0 %v231
  %v743 = vpop.f32.mrf.mxu0
  %v744 = vadd.f32 %v725, %v743
  %v745 = vpop.f32.mrf.mxu0
  %v746 = vadd.f32 %v727, %v745
  %747 = vdwg.mxu0
  %748 = vmatpush.bf16.msra.mxu0 %v561
  %749 = vmatpush.bf16.msra.mxu0 %v560
  %750 = vmatpush.bf16.msra.mxu0 %v559
  %751 = vmatpush.bf16.msra.mxu0 %v558
  %752 = vmatpush.bf16.msra.mxu0 %v557
  %753 = vmatpush.bf16.msra.mxu0 %v556
  %754 = vmatpush.bf16.msra.mxu0 %v555
  %755 = vmatpush.bf16.msra.mxu0 %v554
  %756 = vmatmul.bf16.gmra.mxu0 %v224
  %v757 = vpop.f32.mrf.mxu0
  %v758 = vadd.f32 %v739, %v757
  %v759 = vpop.f32.mrf.mxu0
  %v760 = vadd.f32 %v741, %v759
  %761 = vmatmul.bf16.gmra.mxu0 %v232
  %v762 = vpop.f32.mrf.mxu0
  %v763 = vadd.f32 %v744, %v762
  %v764 = vpop.f32.mrf.mxu0
  %v765 = vadd.f32 %v746, %v764
  %766 = vdwg.mxu0
  %767 = vmatpush.bf16.msra.mxu0 %v569
  %768 = vmatpush.bf16.msra.mxu0 %v568
  %769 = vmatpush.bf16.msra.mxu0 %v567
  %770 = vmatpush.bf16.msra.mxu0 %v566
  %771 = vmatpush.bf16.msra.mxu0 %v565
  %772 = vmatpush.bf16.msra.mxu0 %v564
  %773 = vmatpush.bf16.msra.mxu0 %v563
  %774 = vmatpush.bf16.msra.mxu0 %v562
  %775 = vmatmul.bf16.gmra.mxu0 %v225
  %v776 = vpop.f32.mrf.mxu0
  %v777 = vadd.f32 %v758, %v776
  %v778 = vpop.f32.mrf.mxu0
  %v779 = vadd.f32 %v760, %v778
  %780 = vmatmul.bf16.gmra.mxu0 %v233
  %v781 = vpop.f32.mrf.mxu0
  %v782 = vadd.f32 %v763, %v781
  %v783 = vpop.f32.mrf.mxu0
  %v784 = vadd.f32 %v765, %v783
  %785 = vdwg.mxu0
  %v786 = vadd.f32 %v22, %v777
  %v787 = vadd.f32 %v23, %v779
  %v788 = vadd.f32 %v24, %v782
  %v789 = vadd.f32 %v25, %v784
  %790 = vst [vmem:[#allocation2] sm:$0xff] %v786
  %791 = vst [vmem:[#allocation2 + $0x8] sm:$0xff] %v787
  %792 = vst [vmem:[#allocation2 + $0x10] sm:$0xff] %v788
  %793 = vst [vmem:[#allocation2 + $0x18] sm:$0xff] %v789
  // Predicated region
  $region18: #{cnn_forward.9} parent=0 // pred_check
    %p794 = pneg %p14
  $region19: #{cnn_forward.9} parent=0 // pred_check_branch
    %796 = sbr.rel (%p794) target = $region21
  $region20: #{cnn_forward.9} parent=0 // pred_region
    %v797 = vld [vmem:[#allocation2] sm:$0xff]
    %v798 = vld [vmem:[#allocation2 + $0x8] sm:$0xff]
    %v799 = vld [vmem:[#allocation2 + $0x10] sm:$0xff]
    %v800 = vld [vmem:[#allocation2 + $0x18] sm:$0xff]
    %v801 = vld [vmem:[%s2] sm:$0x1]
    %v803 = vperm.slane %v801, 0
    %v805 = vadd.f32 %v797, %v803
    %v806 = vadd.f32 %v798, %v803
    %v807 = vadd.f32 %v799, %v803
    %v808 = vadd.f32 %v800, %v803
    %v809 = vmax.f32 %v805, 0.0
    %v810 = vmax.f32 %v806, 0.0
    %v811 = vmax.f32 %v807, 0.0
    %v812 = vmax.f32 %v808, 0.0
    %v813 = vpack.c.bf16 %v809, %v809
    %v814 = vpack.c.bf16 %v810, %v810
    %v815 = vpack.c.bf16 %v811, %v811
    %v816 = vpack.c.bf16 %v812, %v812
    %817 = vst [vmem:[%s3] sm:$0xf] %v813
    %818 = vst [vmem:[%s3 + $0x4] sm:$0xf] %v814
    %819 = vst [vmem:[%s3 + $0x8] sm:$0xf] %v815
    %820 = vst [vmem:[%s3 + $0xc] sm:$0xf] %v816
  $region21: #{cnn_forward.9} parent=0 // pred_fallthru
    _
  // Predicated region
  $region22: #{cnn_forward.9} parent=0 // pred_check
    _
  $region23: #{cnn_forward.9} parent=0 // pred_check_branch
    %822 = sbr.rel (0) target = $region25
  $region24: #{cnn_forward.9} parent=0 // pred_region
    _
  $region25: #{cnn_forward.9} parent=0 // pred_fallthru
    _
  // Predicated region
  $region26: #{cnn_forward.9} parent=0 // pred_check
    _
  $region27: #{cnn_forward.9} parent=0 // pred_check_branch
    %824 = sbr.rel (0) target = $region29
  $region28: #{cnn_forward.9} parent=0 // pred_region
    _
  $region29: #{cnn_forward.9} parent=0 // pred_fallthru
    _

// kernel: cnn_forward.11
$region0: #{cnn_forward.11}
  #allocation0 [shape = 'u32[]', space=smem, size = 0x4, offset = 0x4, fixed_abs, tag = 'smem constant byte address 0x4 - core index']
  #allocation1 [shape = 'u32[72,128]{1,0:T(1,128)}', space=vmem, size = 0x9000, scoped, tag = 'internal scratch']
  #allocation2 [shape = 'f32[32,128]{1,0:T(8,128)}', space=vmem, size = 0x4000, scoped, tag = 'scratch operand']
  %s0 = inlined_call_operand.vmem [shape: bf16[32,512], index: 0, kind: input, shape index: {}]
  %s1 = inlined_call_operand.vmem [shape: bf16[512,128], index: 1, kind: input, shape index: {}]
  %s2 = inlined_call_operand.vmem [shape: f32[1,128], index: 2, kind: input, shape index: {}]
  %s3 = inlined_call_operand.vmem [shape: bf16[32,128], index: 3, kind: output, shape index: {}]
  %s4 = sld [smem:[#allocation0]]
  $region30: #{cnn_forward.11} parent=0
    _
  %s6 = ssub.s32 1, %s4
  %s7 = scalar_select 0, %s6, %s4
  // Predicated region
  $region2: #{cnn_forward.11} parent=0 // pred_check
    _
  $region3: #{cnn_forward.11} parent=0 // pred_check_branch
    %9 = sbr.rel (0) target = $region5
  $region4: #{cnn_forward.11} parent=0 // pred_region
    _
  $region5: #{cnn_forward.11} parent=0 // pred_fallthru
    _
  // Predicated region
  $region6: #{cnn_forward.11} parent=0 // pred_check
    _
  $region7: #{cnn_forward.11} parent=0 // pred_check_branch
    %11 = sbr.rel (0) target = $region9
  $region8: #{cnn_forward.11} parent=0 // pred_region
    _
  $region9: #{cnn_forward.11} parent=0 // pred_fallthru
    _
  // Predicated region
  $region10: #{cnn_forward.11} parent=0 // pred_check
    _
  $region11: #{cnn_forward.11} parent=0 // pred_check_branch
    %13 = sbr.rel (0) target = $region13
  $region12: #{cnn_forward.11} parent=0 // pred_region
    _
  $region13: #{cnn_forward.11} parent=0 // pred_fallthru
    _
  %p14 = scmp.eq.s32.totalorder 0, 0
  // Predicated region
  $region14: #{cnn_forward.11} parent=0 // pred_check
    %p15 = pneg %p14
  $region15: #{cnn_forward.11} parent=0 // pred_check_branch
    %17 = sbr.rel (%p15) target = $region17
  $region16: #{cnn_forward.11} parent=0 // pred_region
    %18 = vst [vmem:[#allocation2] sm:$0xff] 0.0
    %19 = vst [vmem:[#allocation2 + $0x8] sm:$0xff] 0.0
    %20 = vst [vmem:[#allocation2 + $0x10] sm:$0xff] 0.0
    %21 = vst [vmem:[#allocation2 + $0x18] sm:$0xff] 0.0
  $region17: #{cnn_forward.11} parent=0 // pred_fallthru
    _
  %v22 = vld [vmem:[#allocation2] sm:$0xff]
  %v23 = vld [vmem:[#allocation2 + $0x8] sm:$0xff]
  %v24 = vld [vmem:[#allocation2 + $0x10] sm:$0xff]
  %v25 = vld [vmem:[#allocation2 + $0x18] sm:$0xff]
  %v26 = vld [vmem:[%s0] sm:$0xff]
  %v27 = vld [vmem:[%s0 + $0x8] sm:$0xff]
  %v28 = vld [vmem:[%s0 + $0x10] sm:$0xff]
  %v29 = vld [vmem:[%s0 + $0x18] sm:$0xff]
  %v30 = vld [vmem:[%s0 + $0x20] sm:$0xff]
  %v31 = vld [vmem:[%s0 + $0x28] sm:$0xff]
  %v32 = vld [vmem:[%s0 + $0x30] sm:$0xff]
  %v33 = vld [vmem:[%s0 + $0x38] sm:$0xff]
  %v34 = vld [vmem:[%s1] sm:$0xf]
  %v35 = vld [vmem:[%s1 + $0x4] sm:$0xf]
  %v36 = vld [vmem:[%s1 + $0x8] sm:$0xf]
  %v37 = vld [vmem:[%s1 + $0xc] sm:$0xf]
  %v38 = vld [vmem:[%s1 + $0x10] sm:$0xf]
  %v39 = vld [vmem:[%s1 + $0x14] sm:$0xf]
  %v40 = vld [vmem:[%s1 + $0x18] sm:$0xf]
  %v41 = vld [vmem:[%s1 + $0x1c] sm:$0xf]
  %v42 = vld [vmem:[%s1 + $0x20] sm:$0xf]
  %v43 = vld [vmem:[%s1 + $0x24] sm:$0xf]
  %v44 = vld [vmem:[%s1 + $0x28] sm:$0xf]
  %v45 = vld [vmem:[%s1 + $0x2c] sm:$0xf]
  %v46 = vld [vmem:[%s1 + $0x30] sm:$0xf]
  %v47 = vld [vmem:[%s1 + $0x34] sm:$0xf]
  %v48 = vld [vmem:[%s1 + $0x38] sm:$0xf]
  %v49 = vld [vmem:[%s1 + $0x3c] sm:$0xf]
  %v50 = vld [vmem:[%s1 + $0x40] sm:$0xf]
  %v51 = vld [vmem:[%s1 + $0x44] sm:$0xf]
  %v52 = vld [vmem:[%s1 + $0x48] sm:$0xf]
  %v53 = vld [vmem:[%s1 + $0x4c] sm:$0xf]
  %v54 = vld [vmem:[%s1 + $0x50] sm:$0xf]
  %v55 = vld [vmem:[%s1 + $0x54] sm:$0xf]
  %v56 = vld [vmem:[%s1 + $0x58] sm:$0xf]
  %v57 = vld [vmem:[%s1 + $0x5c] sm:$0xf]
  %v58 = vld [vmem:[%s1 + $0x60] sm:$0xf]
  %v59 = vld [vmem:[%s1 + $0x64] sm:$0xf]
  %v60 = vld [vmem:[%s1 + $0x68] sm:$0xf]
  %v61 = vld [vmem:[%s1 + $0x6c] sm:$0xf]
  %v62 = vld [vmem:[%s1 + $0x70] sm:$0xf]
  %v63 = vld [vmem:[%s1 + $0x74] sm:$0xf]
  %v64 = vld [vmem:[%s1 + $0x78] sm:$0xf]
  %v65 = vld [vmem:[%s1 + $0x7c] sm:$0xf]
  %v66 = vld [vmem:[%s1 + $0x80] sm:$0xf]
  %v67 = vld [vmem:[%s1 + $0x84] sm:$0xf]
  %v68 = vld [vmem:[%s1 + $0x88] sm:$0xf]
  %v69 = vld [vmem:[%s1 + $0x8c] sm:$0xf]
  %v70 = vld [vmem:[%s1 + $0x90] sm:$0xf]
  %v71 = vld [vmem:[%s1 + $0x94] sm:$0xf]
  %v72 = vld [vmem:[%s1 + $0x98] sm:$0xf]
  %v73 = vld [vmem:[%s1 + $0x9c] sm:$0xf]
  %v74 = vld [vmem:[%s1 + $0xa0] sm:$0xf]
  %v75 = vld [vmem:[%s1 + $0xa4] sm:$0xf]
  %v76 = vld [vmem:[%s1 + $0xa8] sm:$0xf]
  %v77 = vld [vmem:[%s1 + $0xac] sm:$0xf]
  %v78 = vld [vmem:[%s1 + $0xb0] sm:$0xf]
  %v79 = vld [vmem:[%s1 + $0xb4] sm:$0xf]
  %v80 = vld [vmem:[%s1 + $0xb8] sm:$0xf]
  %v81 = vld [vmem:[%s1 + $0xbc] sm:$0xf]
  %v82 = vld [vmem:[%s1 + $0xc0] sm:$0xf]
  %v83 = vld [vmem:[%s1 + $0xc4] sm:$0xf]
  %v84 = vld [vmem:[%s1 + $0xc8] sm:$0xf]
  %v85 = vld [vmem:[%s1 + $0xcc] sm:$0xf]
  %v86 = vld [vmem:[%s1 + $0xd0] sm:$0xf]
  %v87 = vld [vmem:[%s1 + $0xd4] sm:$0xf]
  %v88 = vld [vmem:[%s1 + $0xd8] sm:$0xf]
  %v89 = vld [vmem:[%s1 + $0xdc] sm:$0xf]
  %v90 = vld [vmem:[%s1 + $0xe0] sm:$0xf]
  %v91 = vld [vmem:[%s1 + $0xe4] sm:$0xf]
  %v92 = vld [vmem:[%s1 + $0xe8] sm:$0xf]
  %v93 = vld [vmem:[%s1 + $0xec] sm:$0xf]
  %v94 = vld [vmem:[%s1 + $0xf0] sm:$0xf]
  %v95 = vld [vmem:[%s1 + $0xf4] sm:$0xf]
  %v96 = vld [vmem:[%s1 + $0xf8] sm:$0xf]
  %v97 = vld [vmem:[%s1 + $0xfc] sm:$0xf]
  %v106 = vunpack.c.l.b16 %v26
  %v107 = vunpack.c.h.b16 %v26
  %v108 = vunpack.c.l.b16 %v27
  %v109 = vunpack.c.h.b16 %v27
  %v110 = vunpack.c.l.b16 %v28
  %v111 = vunpack.c.h.b16 %v28
  %v112 = vunpack.c.l.b16 %v29
  %v113 = vunpack.c.h.b16 %v29
  %v114 = vunpack.c.l.b16 %v30
  %v115 = vunpack.c.h.b16 %v30
  %v116 = vunpack.c.l.b16 %v31
  %v117 = vunpack.c.h.b16 %v31
  %v118 = vunpack.c.l.b16 %v32
  %v119 = vunpack.c.h.b16 %v32
  %v120 = vunpack.c.l.b16 %v33
  %v121 = vunpack.c.h.b16 %v33
  %v122 = vpack.c.b16 %v110, %v106
  %v123 = vpack.c.b16 %v111, %v107
  %v124 = vpack.c.b16 %v112, %v108
  %v125 = vpack.c.b16 %v113, %v109
  %v126 = vpack.c.b16 %v118, %v114
  %v127 = vpack.c.b16 %v119, %v115
  %v128 = vpack.c.b16 %v120, %v116
  %v129 = vpack.c.b16 %v121, %v117
  %v202 = vunpack.c.l.b16 %v34
  %v203 = vunpack.c.l.b16 %v35
  %v204 = vunpack.c.l.b16 %v36
  %v205 = vunpack.c.l.b16 %v37
  %v206 = vunpack.c.l.b16 %v38
  %v207 = vunpack.c.l.b16 %v39
  %v208 = vunpack.c.l.b16 %v40
  %v209 = vunpack.c.l.b16 %v41
  %v210 = vunpack.c.l.b16 %v42
  %v211 = vunpack.c.l.b16 %v43
  %v212 = vunpack.c.l.b16 %v44
  %v213 = vunpack.c.l.b16 %v45
  %v214 = vunpack.c.l.b16 %v46
  %v215 = vunpack.c.l.b16 %v47
  %v216 = vunpack.c.l.b16 %v48
  %v217 = vunpack.c.l.b16 %v49
  %v218 = vunpack.c.l.b16 %v50
  %v219 = vunpack.c.l.b16 %v51
  %v220 = vunpack.c.l.b16 %v52
  %v221 = vunpack.c.l.b16 %v53
  %v222 = vunpack.c.l.b16 %v54
  %v223 = vunpack.c.l.b16 %v55
  %v224 = vunpack.c.l.b16 %v56
  %v225 = vunpack.c.l.b16 %v57
  %v226 = vunpack.c.l.b16 %v58
  %v227 = vunpack.c.l.b16 %v59
  %v228 = vunpack.c.l.b16 %v60
  %v229 = vunpack.c.l.b16 %v61
  %v230 = vunpack.c.l.b16 %v62
  %v231 = vunpack.c.l.b16 %v63
  %v232 = vunpack.c.l.b16 %v64
  %v233 = vunpack.c.l.b16 %v65
  %v234 = vunpack.c.l.b16 %v66
  %v235 = vunpack.c.l.b16 %v67
  %v236 = vunpack.c.l.b16 %v68
  %v237 = vunpack.c.l.b16 %v69
  %v238 = vunpack.c.l.b16 %v70
  %v239 = vunpack.c.l.b16 %v71
  %v240 = vunpack.c.l.b16 %v72
  %v241 = vunpack.c.l.b16 %v73
  %v242 = vunpack.c.l.b16 %v74
  %v243 = vunpack.c.l.b16 %v75
  %v244 = vunpack.c.l.b16 %v76
  %v245 = vunpack.c.l.b16 %v77
  %v246 = vunpack.c.l.b16 %v78
  %v247 = vunpack.c.l.b16 %v79
  %v248 = vunpack.c.l.b16 %v80
  %v249 = vunpack.c.l.b16 %v81
  %v250 = vunpack.c.l.b16 %v82
  %v251 = vunpack.c.l.b16 %v83
  %v252 = vunpack.c.l.b16 %v84
  %v253 = vunpack.c.l.b16 %v85
  %v254 = vunpack.c.l.b16 %v86
  %v255 = vunpack.c.l.b16 %v87
  %v256 = vunpack.c.l.b16 %v88
  %v257 = vunpack.c.l.b16 %v89
  %v258 = vunpack.c.l.b16 %v90
  %v259 = vunpack.c.l.b16 %v91
  %v260 = vunpack.c.l.b16 %v92
  %v261 = vunpack.c.l.b16 %v93
  %v262 = vunpack.c.l.b16 %v94
  %v263 = vunpack.c.l.b16 %v95
  %v264 = vunpack.c.l.b16 %v96
  %v265 = vunpack.c.l.b16 %v97
  %v266 = vpack.c.b16 %v203, %v202
  %v267 = vpack.c.b16 %v205, %v204
  %v268 = vpack.c.b16 %v207, %v206
  %v269 = vpack.c.b16 %v209, %v208
  %v270 = vpack.c.b16 %v211, %v210
  %v271 = vpack.c.b16 %v213, %v212
  %v272 = vpack.c.b16 %v215, %v214
  %v273 = vpack.c.b16 %v217, %v216
  %v274 = vpack.c.b16 %v219, %v218
  %v275 = vpack.c.b16 %v221, %v220
  %v276 = vpack.c.b16 %v223, %v222
  %v277 = vpack.c.b16 %v225, %v224
  %v278 = vpack.c.b16 %v227, %v226
  %v279 = vpack.c.b16 %v229, %v228
  %v280 = vpack.c.b16 %v231, %v230
  %v281 = vpack.c.b16 %v233, %v232
  %v282 = vpack.c.b16 %v235, %v234
  %v283 = vpack.c.b16 %v237, %v236
  %v284 = vpack.c.b16 %v239, %v238
  %v285 = vpack.c.b16 %v241, %v240
  %v286 = vpack.c.b16 %v243, %v242
  %v287 = vpack.c.b16 %v245, %v244
  %v288 = vpack.c.b16 %v247, %v246
  %v289 = vpack.c.b16 %v249, %v248
  %v290 = vpack.c.b16 %v251, %v250
  %v291 = vpack.c.b16 %v253, %v252
  %v292 = vpack.c.b16 %v255, %v254
  %v293 = vpack.c.b16 %v257, %v256
  %v294 = vpack.c.b16 %v259, %v258
  %v295 = vpack.c.b16 %v261, %v260
  %v296 = vpack.c.b16 %v263, %v262
  %v297 = vpack.c.b16 %v265, %v264
  %330 = vmatpush.bf16.msra.mxu0 %v273
  %331 = vmatpush.bf16.msra.mxu0 %v272
  %332 = vmatpush.bf16.msra.mxu0 %v271
  %333 = vmatpush.bf16.msra.mxu0 %v270
  %334 = vmatpush.bf16.msra.mxu0 %v269
  %335 = vmatpush.bf16.msra.mxu0 %v268
  %336 = vmatpush.bf16.msra.mxu0 %v267
  %337 = vmatpush.bf16.msra.mxu0 %v266
  %338 = vmatmul.bf16.gmra.mxu0 %v122
  %v339 = vpop.f32.mrf.mxu0
  %v340 = vadd.f32 0.0, %v339
  %v341 = vpop.f32.mrf.mxu0
  %v342 = vadd.f32 0.0, %v341
  %343 = vmatmul.bf16.gmra.mxu0 %v126
  %v344 = vpop.f32.mrf.mxu0
  %v345 = vadd.f32 0.0, %v344
  %v346 = vpop.f32.mrf.mxu0
  %v347 = vadd.f32 0.0, %v346
  %348 = vdwg.mxu0
  %349 = vmatpush.bf16.msra.mxu0 %v281
  %350 = vmatpush.bf16.msra.mxu0 %v280
  %351 = vmatpush.bf16.msra.mxu0 %v279
  %352 = vmatpush.bf16.msra.mxu0 %v278
  %353 = vmatpush.bf16.msra.mxu0 %v277
  %354 = vmatpush.bf16.msra.mxu0 %v276
  %355 = vmatpush.bf16.msra.mxu0 %v275
  %356 = vmatpush.bf16.msra.mxu0 %v274
  %357 = vmatmul.bf16.gmra.mxu0 %v123
  %v358 = vpop.f32.mrf.mxu0
  %v359 = vadd.f32 %v340, %v358
  %v360 = vpop.f32.mrf.mxu0
  %v361 = vadd.f32 %v342, %v360
  %362 = vmatmul.bf16.gmra.mxu0 %v127
  %v363 = vpop.f32.mrf.mxu0
  %v364 = vadd.f32 %v345, %v363
  %v365 = vpop.f32.mrf.mxu0
  %v366 = vadd.f32 %v347, %v365
  %367 = vdwg.mxu0
  %368 = vmatpush.bf16.msra.mxu0 %v289
  %369 = vmatpush.bf16.msra.mxu0 %v288
  %370 = vmatpush.bf16.msra.mxu0 %v287
  %371 = vmatpush.bf16.msra.mxu0 %v286
  %372 = vmatpush.bf16.msra.mxu0 %v285
  %373 = vmatpush.bf16.msra.mxu0 %v284
  %374 = vmatpush.bf16.msra.mxu0 %v283
  %375 = vmatpush.bf16.msra.mxu0 %v282
  %376 = vmatmul.bf16.gmra.mxu0 %v124
  %v377 = vpop.f32.mrf.mxu0
  %v378 = vadd.f32 %v359, %v377
  %v379 = vpop.f32.mrf.mxu0
  %v380 = vadd.f32 %v361, %v379
  %381 = vmatmul.bf16.gmra.mxu0 %v128
  %v382 = vpop.f32.mrf.mxu0
  %v383 = vadd.f32 %v364, %v382
  %v384 = vpop.f32.mrf.mxu0
  %v385 = vadd.f32 %v366, %v384
  %386 = vdwg.mxu0
  %387 = vmatpush.bf16.msra.mxu0 %v297
  %388 = vmatpush.bf16.msra.mxu0 %v296
  %389 = vmatpush.bf16.msra.mxu0 %v295
  %390 = vmatpush.bf16.msra.mxu0 %v294
  %391 = vmatpush.bf16.msra.mxu0 %v293
  %392 = vmatpush.bf16.msra.mxu0 %v292
  %393 = vmatpush.bf16.msra.mxu0 %v291
  %394 = vmatpush.bf16.msra.mxu0 %v290
  %395 = vmatmul.bf16.gmra.mxu0 %v125
  %v396 = vpop.f32.mrf.mxu0
  %v397 = vadd.f32 %v378, %v396
  %v398 = vpop.f32.mrf.mxu0
  %v399 = vadd.f32 %v380, %v398
  %400 = vmatmul.bf16.gmra.mxu0 %v129
  %v401 = vpop.f32.mrf.mxu0
  %v402 = vadd.f32 %v383, %v401
  %v403 = vpop.f32.mrf.mxu0
  %v404 = vadd.f32 %v385, %v403
  %405 = vdwg.mxu0
  %v406 = vadd.f32 %v22, %v397
  %v407 = vadd.f32 %v23, %v399
  %v408 = vadd.f32 %v24, %v402
  %v409 = vadd.f32 %v25, %v404
  %410 = vst [vmem:[#allocation2] sm:$0xff] %v406
  %411 = vst [vmem:[#allocation2 + $0x8] sm:$0xff] %v407
  %412 = vst [vmem:[#allocation2 + $0x10] sm:$0xff] %v408
  %413 = vst [vmem:[#allocation2 + $0x18] sm:$0xff] %v409
  // Predicated region
  $region18: #{cnn_forward.11} parent=0 // pred_check
    %p414 = pneg %p14
  $region19: #{cnn_forward.11} parent=0 // pred_check_branch
    %416 = sbr.rel (%p414) target = $region21
  $region20: #{cnn_forward.11} parent=0 // pred_region
    %v417 = vld [vmem:[#allocation2] sm:$0xff]
    %v418 = vld [vmem:[#allocation2 + $0x8] sm:$0xff]
    %v419 = vld [vmem:[#allocation2 + $0x10] sm:$0xff]
    %v420 = vld [vmem:[#allocation2 + $0x18] sm:$0xff]
    %v421 = vld [vmem:[%s2] sm:$0x1]
    %v423 = vperm.slane %v421, 0
    %v425 = vadd.f32 %v417, %v423
    %v426 = vadd.f32 %v418, %v423
    %v427 = vadd.f32 %v419, %v423
    %v428 = vadd.f32 %v420, %v423
    %v429 = vmax.f32 %v425, 0.0
    %v430 = vmax.f32 %v426, 0.0
    %v431 = vmax.f32 %v427, 0.0
    %v432 = vmax.f32 %v428, 0.0
    %v433 = vpack.c.bf16 %v429, %v429
    %v434 = vpack.c.bf16 %v430, %v430
    %v435 = vpack.c.bf16 %v431, %v431
    %v436 = vpack.c.bf16 %v432, %v432
    %437 = vst [vmem:[%s3] sm:$0xf] %v433
    %438 = vst [vmem:[%s3 + $0x4] sm:$0xf] %v434
    %439 = vst [vmem:[%s3 + $0x8] sm:$0xf] %v435
    %440 = vst [vmem:[%s3 + $0xc] sm:$0xf] %v436
  $region21: #{cnn_forward.11} parent=0 // pred_fallthru
    _
  // Predicated region
  $region22: #{cnn_forward.11} parent=0 // pred_check
    _
  $region23: #{cnn_forward.11} parent=0 // pred_check_branch
    %442 = sbr.rel (0) target = $region25
  $region24: #{cnn_forward.11} parent=0 // pred_region
    _
  $region25: #{cnn_forward.11} parent=0 // pred_fallthru
    _
  // Predicated region
  $region26: #{cnn_forward.11} parent=0 // pred_check
    _
  $region27: #{cnn_forward.11} parent=0 // pred_check_branch
    %444 = sbr.rel (0) target = $region29
  $region28: #{cnn_forward.11} parent=0 // pred_region
    _
  $region29: #{cnn_forward.11} parent=0 // pred_fallthru
    _

// kernel: cnn_forward.12
$region0: #{cnn_forward.12}
  #allocation0 [shape = 'u32[]', space=smem, size = 0x4, offset = 0x4, fixed_abs, tag = 'smem constant byte address 0x4 - core index']
  #allocation1 [shape = 'u32[72,128]{1,0:T(1,128)}', space=vmem, size = 0x9000, scoped, tag = 'internal scratch']
  #allocation2 [shape = 'f32[32,128]{1,0:T(8,128)}', space=vmem, size = 0x4000, scoped, tag = 'scratch operand']
  %s0 = inlined_call_operand.vmem [shape: bf16[32,640], index: 0, kind: input, shape index: {}]
  %s1 = inlined_call_operand.vmem [shape: bf16[640,128], index: 1, kind: input, shape index: {}]
  %s2 = inlined_call_operand.vmem [shape: f32[1,128], index: 2, kind: input, shape index: {}]
  %s3 = inlined_call_operand.vmem [shape: bf16[32,128], index: 3, kind: output, shape index: {}]
  %s4 = sld [smem:[#allocation0]]
  $region30: #{cnn_forward.12} parent=0
    _
  %s6 = ssub.s32 1, %s4
  %s7 = scalar_select 0, %s6, %s4
  // Predicated region
  $region2: #{cnn_forward.12} parent=0 // pred_check
    _
  $region3: #{cnn_forward.12} parent=0 // pred_check_branch
    %9 = sbr.rel (0) target = $region5
  $region4: #{cnn_forward.12} parent=0 // pred_region
    _
  $region5: #{cnn_forward.12} parent=0 // pred_fallthru
    _
  // Predicated region
  $region6: #{cnn_forward.12} parent=0 // pred_check
    _
  $region7: #{cnn_forward.12} parent=0 // pred_check_branch
    %11 = sbr.rel (0) target = $region9
  $region8: #{cnn_forward.12} parent=0 // pred_region
    _
  $region9: #{cnn_forward.12} parent=0 // pred_fallthru
    _
  // Predicated region
  $region10: #{cnn_forward.12} parent=0 // pred_check
    _
  $region11: #{cnn_forward.12} parent=0 // pred_check_branch
    %13 = sbr.rel (0) target = $region13
  $region12: #{cnn_forward.12} parent=0 // pred_region
    _
  $region13: #{cnn_forward.12} parent=0 // pred_fallthru
    _
  %p14 = scmp.eq.s32.totalorder 0, 0
  // Predicated region
  $region14: #{cnn_forward.12} parent=0 // pred_check
    %p15 = pneg %p14
  $region15: #{cnn_forward.12} parent=0 // pred_check_branch
    %17 = sbr.rel (%p15) target = $region17
  $region16: #{cnn_forward.12} parent=0 // pred_region
    %18 = vst [vmem:[#allocation2] sm:$0xff] 0.0
    %19 = vst [vmem:[#allocation2 + $0x8] sm:$0xff] 0.0
    %20 = vst [vmem:[#allocation2 + $0x10] sm:$0xff] 0.0
    %21 = vst [vmem:[#allocation2 + $0x18] sm:$0xff] 0.0
  $region17: #{cnn_forward.12} parent=0 // pred_fallthru
    _
  %v22 = vld [vmem:[#allocation2] sm:$0xff]
  %v23 = vld [vmem:[#allocation2 + $0x8] sm:$0xff]
  %v24 = vld [vmem:[#allocation2 + $0x10] sm:$0xff]
  %v25 = vld [vmem:[#allocation2 + $0x18] sm:$0xff]
  %v26 = vld [vmem:[%s0] sm:$0xff]
  %v27 = vld [vmem:[%s0 + $0x8] sm:$0xff]
  %v28 = vld [vmem:[%s0 + $0x10] sm:$0xf]
  %v29 = vld [vmem:[%s0 + $0x14] sm:$0xff]
  %v30 = vld [vmem:[%s0 + $0x1c] sm:$0xff]
  %v31 = vld [vmem:[%s0 + $0x24] sm:$0xf]
  %v32 = vld [vmem:[%s0 + $0x28] sm:$0xff]
  %v33 = vld [vmem:[%s0 + $0x30] sm:$0xff]
  %v34 = vld [vmem:[%s0 + $0x38] sm:$0xf]
  %v35 = vld [vmem:[%s0 + $0x3c] sm:$0xff]
  %v36 = vld [vmem:[%s0 + $0x44] sm:$0xff]
  %v37 = vld [vmem:[%s0 + $0x4c] sm:$0xf]
  %v38 = vld [vmem:[%s1] sm:$0xf]
  %v39 = vld [vmem:[%s1 + $0x4] sm:$0xf]
  %v40 = vld [vmem:[%s1 + $0x8] sm:$0xf]
  %v41 = vld [vmem:[%s1 + $0xc] sm:$0xf]
  %v42 = vld [vmem:[%s1 + $0x10] sm:$0xf]
  %v43 = vld [vmem:[%s1 + $0x14] sm:$0xf]
  %v44 = vld [vmem:[%s1 + $0x18] sm:$0xf]
  %v45 = vld [vmem:[%s1 + $0x1c] sm:$0xf]
  %v46 = vld [vmem:[%s1 + $0x20] sm:$0xf]
  %v47 = vld [vmem:[%s1 + $0x24] sm:$0xf]
  %v48 = vld [vmem:[%s1 + $0x28] sm:$0xf]
  %v49 = vld [vmem:[%s1 + $0x2c] sm:$0xf]
  %v50 = vld [vmem:[%s1 + $0x30] sm:$0xf]
  %v51 = vld [vmem:[%s1 + $0x34] sm:$0xf]
  %v52 = vld [vmem:[%s1 + $0x38] sm:$0xf]
  %v53 = vld [vmem:[%s1 + $0x3c] sm:$0xf]
  %v54 = vld [vmem:[%s1 + $0x40] sm:$0xf]
  %v55 = vld [vmem:[%s1 + $0x44] sm:$0xf]
  %v56 = vld [vmem:[%s1 + $0x48] sm:$0xf]
  %v57 = vld [vmem:[%s1 + $0x4c] sm:$0xf]
  %v58 = vld [vmem:[%s1 + $0x50] sm:$0xf]
  %v59 = vld [vmem:[%s1 + $0x54] sm:$0xf]
  %v60 = vld [vmem:[%s1 + $0x58] sm:$0xf]
  %v61 = vld [vmem:[%s1 + $0x5c] sm:$0xf]
  %v62 = vld [vmem:[%s1 + $0x60] sm:$0xf]
  %v63 = vld [vmem:[%s1 + $0x64] sm:$0xf]
  %v64 = vld [vmem:[%s1 + $0x68] sm:$0xf]
  %v65 = vld [vmem:[%s1 + $0x6c] sm:$0xf]
  %v66 = vld [vmem:[%s1 + $0x70] sm:$0xf]
  %v67 = vld [vmem:[%s1 + $0x74] sm:$0xf]
  %v68 = vld [vmem:[%s1 + $0x78] sm:$0xf]
  %v69 = vld [vmem:[%s1 + $0x7c] sm:$0xf]
  %v70 = vld [vmem:[%s1 + $0x80] sm:$0xf]
  %v71 = vld [vmem:[%s1 + $0x84] sm:$0xf]
  %v72 = vld [vmem:[%s1 + $0x88] sm:$0xf]
  %v73 = vld [vmem:[%s1 + $0x8c] sm:$0xf]
  %v74 = vld [vmem:[%s1 + $0x90] sm:$0xf]
  %v75 = vld [vmem:[%s1 + $0x94] sm:$0xf]
  %v76 = vld [vmem:[%s1 + $0x98] sm:$0xf]
  %v77 = vld [vmem:[%s1 + $0x9c] sm:$0xf]
  %v78 = vld [vmem:[%s1 + $0xa0] sm:$0xf]
  %v79 = vld [vmem:[%s1 + $0xa4] sm:$0xf]
  %v80 = vld [vmem:[%s1 + $0xa8] sm:$0xf]
  %v81 = vld [vmem:[%s1 + $0xac] sm:$0xf]
  %v82 = vld [vmem:[%s1 + $0xb0] sm:$0xf]
  %v83 = vld [vmem:[%s1 + $0xb4] sm:$0xf]
  %v84 = vld [vmem:[%s1 + $0xb8] sm:$0xf]
  %v85 = vld [vmem:[%s1 + $0xbc] sm:$0xf]
  %v86 = vld [vmem:[%s1 + $0xc0] sm:$0xf]
  %v87 = vld [vmem:[%s1 + $0xc4] sm:$0xf]
  %v88 = vld [vmem:[%s1 + $0xc8] sm:$0xf]
  %v89 = vld [vmem:[%s1 + $0xcc] sm:$0xf]
  %v90 = vld [vmem:[%s1 + $0xd0] sm:$0xf]
  %v91 = vld [vmem:[%s1 + $0xd4] sm:$0xf]
  %v92 = vld [vmem:[%s1 + $0xd8] sm:$0xf]
  %v93 = vld [vmem:[%s1 + $0xdc] sm:$0xf]
  %v94 = vld [vmem:[%s1 + $0xe0] sm:$0xf]
  %v95 = vld [vmem:[%s1 + $0xe4] sm:$0xf]
  %v96 = vld [vmem:[%s1 + $0xe8] sm:$0xf]
  %v97 = vld [vmem:[%s1 + $0xec] sm:$0xf]
  %v98 = vld [vmem:[%s1 + $0xf0] sm:$0xf]
  %v99 = vld [vmem:[%s1 + $0xf4] sm:$0xf]
  %v100 = vld [vmem:[%s1 + $0xf8] sm:$0xf]
  %v101 = vld [vmem:[%s1 + $0xfc] sm:$0xf]
  %v102 = vld [vmem:[%s1 + $0x100] sm:$0xf]
  %v103 = vld [vmem:[%s1 + $0x104] sm:$0xf]
  %v104 = vld [vmem:[%s1 + $0x108] sm:$0xf]
  %v105 = vld [vmem:[%s1 + $0x10c] sm:$0xf]
  %v106 = vld [vmem:[%s1 + $0x110] sm:$0xf]
  %v107 = vld [vmem:[%s1 + $0x114] sm:$0xf]
  %v108 = vld [vmem:[%s1 + $0x118] sm:$0xf]
  %v109 = vld [vmem:[%s1 + $0x11c] sm:$0xf]
  %v110 = vld [vmem:[%s1 + $0x120] sm:$0xf]
  %v111 = vld [vmem:[%s1 + $0x124] sm:$0xf]
  %v112 = vld [vmem:[%s1 + $0x128] sm:$0xf]
  %v113 = vld [vmem:[%s1 + $0x12c] sm:$0xf]
  %v114 = vld [vmem:[%s1 + $0x130] sm:$0xf]
  %v115 = vld [vmem:[%s1 + $0x134] sm:$0xf]
  %v116 = vld [vmem:[%s1 + $0x138] sm:$0xf]
  %v117 = vld [vmem:[%s1 + $0x13c] sm:$0xf]
  %v130 = vunpack.c.l.b16 %v26
  %v131 = vunpack.c.h.b16 %v26
  %v132 = vunpack.c.l.b16 %v27
  %v133 = vunpack.c.h.b16 %v27
  %v134 = vunpack.c.l.b16 %v28
  %v135 = vunpack.c.l.b16 %v29
  %v136 = vunpack.c.h.b16 %v29
  %v137 = vunpack.c.l.b16 %v30
  %v138 = vunpack.c.h.b16 %v30
  %v139 = vunpack.c.l.b16 %v31
  %v140 = vunpack.c.l.b16 %v32
  %v141 = vunpack.c.h.b16 %v32
  %v142 = vunpack.c.l.b16 %v33
  %v143 = vunpack.c.h.b16 %v33
  %v144 = vunpack.c.l.b16 %v34
  %v145 = vunpack.c.l.b16 %v35
  %v146 = vunpack.c.h.b16 %v35
  %v147 = vunpack.c.l.b16 %v36
  %v148 = vunpack.c.h.b16 %v36
  %v149 = vunpack.c.l.b16 %v37
  %v150 = vpack.c.b16 %v135, %v130
  %v151 = vpack.c.b16 %v136, %v131
  %v152 = vpack.c.b16 %v137, %v132
  %v153 = vpack.c.b16 %v138, %v133
  %v154 = vpack.c.b16 %v139, %v134
  %v155 = vpack.c.b16 %v145, %v140
  %v156 = vpack.c.b16 %v146, %v141
  %v157 = vpack.c.b16 %v147, %v142
  %v158 = vpack.c.b16 %v148, %v143
  %v159 = vpack.c.b16 %v149, %v144
  %v250 = vunpack.c.l.b16 %v38
  %v251 = vunpack.c.l.b16 %v39
  %v252 = vunpack.c.l.b16 %v40
  %v253 = vunpack.c.l.b16 %v41
  %v254 = vunpack.c.l.b16 %v42
  %v255 = vunpack.c.l.b16 %v43
  %v256 = vunpack.c.l.b16 %v44
  %v257 = vunpack.c.l.b16 %v45
  %v258 = vunpack.c.l.b16 %v46
  %v259 = vunpack.c.l.b16 %v47
  %v260 = vunpack.c.l.b16 %v48
  %v261 = vunpack.c.l.b16 %v49
  %v262 = vunpack.c.l.b16 %v50
  %v263 = vunpack.c.l.b16 %v51
  %v264 = vunpack.c.l.b16 %v52
  %v265 = vunpack.c.l.b16 %v53
  %v266 = vunpack.c.l.b16 %v54
  %v267 = vunpack.c.l.b16 %v55
  %v268 = vunpack.c.l.b16 %v56
  %v269 = vunpack.c.l.b16 %v57
  %v270 = vunpack.c.l.b16 %v58
  %v271 = vunpack.c.l.b16 %v59
  %v272 = vunpack.c.l.b16 %v60
  %v273 = vunpack.c.l.b16 %v61
  %v274 = vunpack.c.l.b16 %v62
  %v275 = vunpack.c.l.b16 %v63
  %v276 = vunpack.c.l.b16 %v64
  %v277 = vunpack.c.l.b16 %v65
  %v278 = vunpack.c.l.b16 %v66
  %v279 = vunpack.c.l.b16 %v67
  %v280 = vunpack.c.l.b16 %v68
  %v281 = vunpack.c.l.b16 %v69
  %v282 = vunpack.c.l.b16 %v70
  %v283 = vunpack.c.l.b16 %v71
  %v284 = vunpack.c.l.b16 %v72
  %v285 = vunpack.c.l.b16 %v73
  %v286 = vunpack.c.l.b16 %v74
  %v287 = vunpack.c.l.b16 %v75
  %v288 = vunpack.c.l.b16 %v76
  %v289 = vunpack.c.l.b16 %v77
  %v290 = vunpack.c.l.b16 %v78
  %v291 = vunpack.c.l.b16 %v79
  %v292 = vunpack.c.l.b16 %v80
  %v293 = vunpack.c.l.b16 %v81
  %v294 = vunpack.c.l.b16 %v82
  %v295 = vunpack.c.l.b16 %v83
  %v296 = vunpack.c.l.b16 %v84
  %v297 = vunpack.c.l.b16 %v85
  %v298 = vunpack.c.l.b16 %v86
  %v299 = vunpack.c.l.b16 %v87
  %v300 = vunpack.c.l.b16 %v88
  %v301 = vunpack.c.l.b16 %v89
  %v302 = vunpack.c.l.b16 %v90
  %v303 = vunpack.c.l.b16 %v91
  %v304 = vunpack.c.l.b16 %v92
  %v305 = vunpack.c.l.b16 %v93
  %v306 = vunpack.c.l.b16 %v94
  %v307 = vunpack.c.l.b16 %v95
  %v308 = vunpack.c.l.b16 %v96
  %v309 = vunpack.c.l.b16 %v97
  %v310 = vunpack.c.l.b16 %v98
  %v311 = vunpack.c.l.b16 %v99
  %v312 = vunpack.c.l.b16 %v100
  %v313 = vunpack.c.l.b16 %v101
  %v314 = vunpack.c.l.b16 %v102
  %v315 = vunpack.c.l.b16 %v103
  %v316 = vunpack.c.l.b16 %v104
  %v317 = vunpack.c.l.b16 %v105
  %v318 = vunpack.c.l.b16 %v106
  %v319 = vunpack.c.l.b16 %v107
  %v320 = vunpack.c.l.b16 %v108
  %v321 = vunpack.c.l.b16 %v109
  %v322 = vunpack.c.l.b16 %v110
  %v323 = vunpack.c.l.b16 %v111
  %v324 = vunpack.c.l.b16 %v112
  %v325 = vunpack.c.l.b16 %v113
  %v326 = vunpack.c.l.b16 %v114
  %v327 = vunpack.c.l.b16 %v115
  %v328 = vunpack.c.l.b16 %v116
  %v329 = vunpack.c.l.b16 %v117
  %v330 = vpack.c.b16 %v251, %v250
  %v331 = vpack.c.b16 %v253, %v252
  %v332 = vpack.c.b16 %v255, %v254
  %v333 = vpack.c.b16 %v257, %v256
  %v334 = vpack.c.b16 %v259, %v258
  %v335 = vpack.c.b16 %v261, %v260
  %v336 = vpack.c.b16 %v263, %v262
  %v337 = vpack.c.b16 %v265, %v264
  %v338 = vpack.c.b16 %v267, %v266
  %v339 = vpack.c.b16 %v269, %v268
  %v340 = vpack.c.b16 %v271, %v270
  %v341 = vpack.c.b16 %v273, %v272
  %v342 = vpack.c.b16 %v275, %v274
  %v343 = vpack.c.b16 %v277, %v276
  %v344 = vpack.c.b16 %v279, %v278
  %v345 = vpack.c.b16 %v281, %v280
  %v346 = vpack.c.b16 %v283, %v282
  %v347 = vpack.c.b16 %v285, %v284
  %v348 = vpack.c.b16 %v287, %v286
  %v349 = vpack.c.b16 %v289, %v288
  %v350 = vpack.c.b16 %v291, %v290
  %v351 = vpack.c.b16 %v293, %v292
  %v352 = vpack.c.b16 %v295, %v294
  %v353 = vpack.c.b16 %v297, %v296
  %v354 = vpack.c.b16 %v299, %v298
  %v355 = vpack.c.b16 %v301, %v300
  %v356 = vpack.c.b16 %v303, %v302
  %v357 = vpack.c.b16 %v305, %v304
  %v358 = vpack.c.b16 %v307, %v306
  %v359 = vpack.c.b16 %v309, %v308
  %v360 = vpack.c.b16 %v311, %v310
  %v361 = vpack.c.b16 %v313, %v312
  %v362 = vpack.c.b16 %v315, %v314
  %v363 = vpack.c.b16 %v317, %v316
  %v364 = vpack.c.b16 %v319, %v318
  %v365 = vpack.c.b16 %v321, %v320
  %v366 = vpack.c.b16 %v323, %v322
  %v367 = vpack.c.b16 %v325, %v324
  %v368 = vpack.c.b16 %v327, %v326
  %v369 = vpack.c.b16 %v329, %v328
  %410 = vmatpush.bf16.msra.mxu0 %v337
  %411 = vmatpush.bf16.msra.mxu0 %v336
  %412 = vmatpush.bf16.msra.mxu0 %v335
  %413 = vmatpush.bf16.msra.mxu0 %v334
  %414 = vmatpush.bf16.msra.mxu0 %v333
  %415 = vmatpush.bf16.msra.mxu0 %v332
  %416 = vmatpush.bf16.msra.mxu0 %v331
  %417 = vmatpush.bf16.msra.mxu0 %v330
  %418 = vmatmul.bf16.gmra.mxu0 %v150
  %v419 = vpop.f32.mrf.mxu0
  %v420 = vadd.f32 0.0, %v419
  %v421 = vpop.f32.mrf.mxu0
  %v422 = vadd.f32 0.0, %v421
  %423 = vmatmul.bf16.gmra.mxu0 %v155
  %v424 = vpop.f32.mrf.mxu0
  %v425 = vadd.f32 0.0, %v424
  %v426 = vpop.f32.mrf.mxu0
  %v427 = vadd.f32 0.0, %v426
  %428 = vdwg.mxu0
  %429 = vmatpush.bf16.msra.mxu0 %v345
  %430 = vmatpush.bf16.msra.mxu0 %v344
  %431 = vmatpush.bf16.msra.mxu0 %v343
  %432 = vmatpush.bf16.msra.mxu0 %v342
  %433 = vmatpush.bf16.msra.mxu0 %v341
  %434 = vmatpush.bf16.msra.mxu0 %v340
  %435 = vmatpush.bf16.msra.mxu0 %v339
  %436 = vmatpush.bf16.msra.mxu0 %v338
  %437 = vmatmul.bf16.gmra.mxu0 %v151
  %v438 = vpop.f32.mrf.mxu0
  %v439 = vadd.f32 %v420, %v438
  %v440 = vpop.f32.mrf.mxu0
  %v441 = vadd.f32 %v422, %v440
  %442 = vmatmul.bf16.gmra.mxu0 %v156
  %v443 = vpop.f32.mrf.mxu0
  %v444 = vadd.f32 %v425, %v443
  %v445 = vpop.f32.mrf.mxu0
  %v446 = vadd.f32 %v427, %v445
  %447 = vdwg.mxu0
  %448 = vmatpush.bf16.msra.mxu0 %v353
  %449 = vmatpush.bf16.msra.mxu0 %v352
  %450 = vmatpush.bf16.msra.mxu0 %v351
  %451 = vmatpush.bf16.msra.mxu0 %v350
  %452 = vmatpush.bf16.msra.mxu0 %v349
  %453 = vmatpush.bf16.msra.mxu0 %v348
  %454 = vmatpush.bf16.msra.mxu0 %v347
  %455 = vmatpush.bf16.msra.mxu0 %v346
  %456 = vmatmul.bf16.gmra.mxu0 %v152
  %v457 = vpop.f32.mrf.mxu0
  %v458 = vadd.f32 %v439, %v457
  %v459 = vpop.f32.mrf.mxu0
  %v460 = vadd.f32 %v441, %v459
  %461 = vmatmul.bf16.gmra.mxu0 %v157
  %v462 = vpop.f32.mrf.mxu0
  %v463 = vadd.f32 %v444, %v462
  %v464 = vpop.f32.mrf.mxu0
  %v465 = vadd.f32 %v446, %v464
  %466 = vdwg.mxu0
  %467 = vmatpush.bf16.msra.mxu0 %v361
  %468 = vmatpush.bf16.msra.mxu0 %v360
  %469 = vmatpush.bf16.msra.mxu0 %v359
  %470 = vmatpush.bf16.msra.mxu0 %v358
  %471 = vmatpush.bf16.msra.mxu0 %v357
  %472 = vmatpush.bf16.msra.mxu0 %v356
  %473 = vmatpush.bf16.msra.mxu0 %v355
  %474 = vmatpush.bf16.msra.mxu0 %v354
  %475 = vmatmul.bf16.gmra.mxu0 %v153
  %v476 = vpop.f32.mrf.mxu0
  %v477 = vadd.f32 %v458, %v476
  %v478 = vpop.f32.mrf.mxu0
  %v479 = vadd.f32 %v460, %v478
  %480 = vmatmul.bf16.gmra.mxu0 %v158
  %v481 = vpop.f32.mrf.mxu0
  %v482 = vadd.f32 %v463, %v481
  %v483 = vpop.f32.mrf.mxu0
  %v484 = vadd.f32 %v465, %v483
  %485 = vdwg.mxu0
  %486 = vmatpush.bf16.msra.mxu0 %v369
  %487 = vmatpush.bf16.msra.mxu0 %v368
  %488 = vmatpush.bf16.msra.mxu0 %v367
  %489 = vmatpush.bf16.msra.mxu0 %v366
  %490 = vmatpush.bf16.msra.mxu0 %v365
  %491 = vmatpush.bf16.msra.mxu0 %v364
  %492 = vmatpush.bf16.msra.mxu0 %v363
  %493 = vmatpush.bf16.msra.mxu0 %v362
  %494 = vmatmul.bf16.gmra.mxu0 %v154
  %v495 = vpop.f32.mrf.mxu0
  %v496 = vadd.f32 %v477, %v495
  %v497 = vpop.f32.mrf.mxu0
  %v498 = vadd.f32 %v479, %v497
  %499 = vmatmul.bf16.gmra.mxu0 %v159
  %v500 = vpop.f32.mrf.mxu0
  %v501 = vadd.f32 %v482, %v500
  %v502 = vpop.f32.mrf.mxu0
  %v503 = vadd.f32 %v484, %v502
  %504 = vdwg.mxu0
  %v505 = vadd.f32 %v22, %v496
  %v506 = vadd.f32 %v23, %v498
  %v507 = vadd.f32 %v24, %v501
  %v508 = vadd.f32 %v25, %v503
  %509 = vst [vmem:[#allocation2] sm:$0xff] %v505
  %510 = vst [vmem:[#allocation2 + $0x8] sm:$0xff] %v506
  %511 = vst [vmem:[#allocation2 + $0x10] sm:$0xff] %v507
  %512 = vst [vmem:[#allocation2 + $0x18] sm:$0xff] %v508
  // Predicated region
  $region18: #{cnn_forward.12} parent=0 // pred_check
    %p513 = pneg %p14
  $region19: #{cnn_forward.12} parent=0 // pred_check_branch
    %515 = sbr.rel (%p513) target = $region21
  $region20: #{cnn_forward.12} parent=0 // pred_region
    %v516 = vld [vmem:[#allocation2] sm:$0xff]
    %v517 = vld [vmem:[#allocation2 + $0x8] sm:$0xff]
    %v518 = vld [vmem:[#allocation2 + $0x10] sm:$0xff]
    %v519 = vld [vmem:[#allocation2 + $0x18] sm:$0xff]
    %v520 = vld [vmem:[%s2] sm:$0x1]
    %v522 = vperm.slane %v520, 0
    %v524 = vadd.f32 %v516, %v522
    %v525 = vadd.f32 %v517, %v522
    %v526 = vadd.f32 %v518, %v522
    %v527 = vadd.f32 %v519, %v522
    %v528 = vmax.f32 %v524, 0.0
    %v529 = vmax.f32 %v525, 0.0
    %v530 = vmax.f32 %v526, 0.0
    %v531 = vmax.f32 %v527, 0.0
    %v532 = vpack.c.bf16 %v528, %v528
    %v533 = vpack.c.bf16 %v529, %v529
    %v534 = vpack.c.bf16 %v530, %v530
    %v535 = vpack.c.bf16 %v531, %v531
    %536 = vst [vmem:[%s3] sm:$0xf] %v532
    %537 = vst [vmem:[%s3 + $0x4] sm:$0xf] %v533
    %538 = vst [vmem:[%s3 + $0x8] sm:$0xf] %v534
    %539 = vst [vmem:[%s3 + $0xc] sm:$0xf] %v535
  $region21: #{cnn_forward.12} parent=0 // pred_fallthru
    _
  // Predicated region
  $region22: #{cnn_forward.12} parent=0 // pred_check
    _
  $region23: #{cnn_forward.12} parent=0 // pred_check_branch
    %541 = sbr.rel (0) target = $region25
  $region24: #{cnn_forward.12} parent=0 // pred_region
    _
  $region25: #{cnn_forward.12} parent=0 // pred_fallthru
    _
  // Predicated region
  $region26: #{cnn_forward.12} parent=0 // pred_check
    _
  $region27: #{cnn_forward.12} parent=0 // pred_check_branch
    %543 = sbr.rel (0) target = $region29
  $region28: #{cnn_forward.12} parent=0 // pred_region
    _
  $region29: #{cnn_forward.12} parent=0 // pred_fallthru
    _

// kernel: cnn_forward.13
$region0: #{cnn_forward.13}
  #allocation0 [shape = 'u32[]', space=smem, size = 0x4, offset = 0x4, fixed_abs, tag = 'smem constant byte address 0x4 - core index']
  #allocation1 [shape = 'u32[72,128]{1,0:T(1,128)}', space=vmem, size = 0x9000, scoped, tag = 'internal scratch']
  %s0 = inlined_call_operand.vmem [shape: bf16[16,640], index: 0, kind: input, shape index: {}]
  %s1 = inlined_call_operand.vmem [shape: bf16[640,1280], index: 1, kind: input, shape index: {}]
  %s2 = inlined_call_operand.vmem [shape: f32[1,1280], index: 2, kind: input, shape index: {}]
  %s3 = inlined_call_operand.vmem [shape: bf16[1280,128], index: 3, kind: input, shape index: {}]
  %s4 = inlined_call_operand.vmem [shape: f32[1,128], index: 4, kind: input, shape index: {}]
  %s5 = inlined_call_operand.vmem [shape: bf16[128,128], index: 5, kind: input, shape index: {}]
  %s6 = inlined_call_operand.vmem [shape: f32[1,128], index: 6, kind: input, shape index: {}]
  %s7 = inlined_call_operand.vmem [shape: bf16[128,128], index: 7, kind: input, shape index: {}]
  %s8 = inlined_call_operand.vmem [shape: f32[1,128], index: 8, kind: input, shape index: {}]
  %s9 = inlined_call_operand.vmem [shape: bf16[128,128], index: 9, kind: input, shape index: {}]
  %s10 = inlined_call_operand.vmem [shape: f32[1,128], index: 10, kind: input, shape index: {}]
  %s11 = inlined_call_operand.vmem [shape: f32[16,128], index: 11, kind: output, shape index: {}]
  %s12 = sld [smem:[#allocation0]]
  $region54: #{cnn_forward.13} parent=0
    _
  %s14 = ssub.s32 1, %s12
  %s15 = scalar_select 0, %s14, %s12
  // Predicated region
  $region2: #{cnn_forward.13} parent=0 // pred_check
    _
  $region3: #{cnn_forward.13} parent=0 // pred_check_branch
    %17 = sbr.rel (0) target = $region5
  $region4: #{cnn_forward.13} parent=0 // pred_region
    _
  $region5: #{cnn_forward.13} parent=0 // pred_fallthru
    _
  // Predicated region
  $region6: #{cnn_forward.13} parent=0 // pred_check
    _
  $region7: #{cnn_forward.13} parent=0 // pred_check_branch
    %19 = sbr.rel (0) target = $region9
  $region8: #{cnn_forward.13} parent=0 // pred_region
    _
  $region9: #{cnn_forward.13} parent=0 // pred_fallthru
    _
  // Predicated region
  $region10: #{cnn_forward.13} parent=0 // pred_check
    _
  $region11: #{cnn_forward.13} parent=0 // pred_check_branch
    %21 = sbr.rel (0) target = $region13
  $region12: #{cnn_forward.13} parent=0 // pred_region
    _
  $region13: #{cnn_forward.13} parent=0 // pred_fallthru
    _
  // Predicated region
  $region14: #{cnn_forward.13} parent=0 // pred_check
    _
  $region15: #{cnn_forward.13} parent=0 // pred_check_branch
    %23 = sbr.rel (0) target = $region17
  $region16: #{cnn_forward.13} parent=0 // pred_region
    _
  $region17: #{cnn_forward.13} parent=0 // pred_fallthru
    _
  // Predicated region
  $region18: #{cnn_forward.13} parent=0 // pred_check
    _
  $region19: #{cnn_forward.13} parent=0 // pred_check_branch
    %25 = sbr.rel (0) target = $region21
  $region20: #{cnn_forward.13} parent=0 // pred_region
    _
  $region21: #{cnn_forward.13} parent=0 // pred_fallthru
    _
  // Predicated region
  $region22: #{cnn_forward.13} parent=0 // pred_check
    _
  $region23: #{cnn_forward.13} parent=0 // pred_check_branch
    %27 = sbr.rel (0) target = $region25
  $region24: #{cnn_forward.13} parent=0 // pred_region
    _
  $region25: #{cnn_forward.13} parent=0 // pred_fallthru
    _
  // Predicated region
  $region26: #{cnn_forward.13} parent=0 // pred_check
    _
  $region27: #{cnn_forward.13} parent=0 // pred_check_branch
    %29 = sbr.rel (0) target = $region29
  $region28: #{cnn_forward.13} parent=0 // pred_region
    _
  $region29: #{cnn_forward.13} parent=0 // pred_fallthru
    _
  // Predicated region
  $region30: #{cnn_forward.13} parent=0 // pred_check
    _
  $region31: #{cnn_forward.13} parent=0 // pred_check_branch
    %31 = sbr.rel (0) target = $region33
  $region32: #{cnn_forward.13} parent=0 // pred_region
    _
  $region33: #{cnn_forward.13} parent=0 // pred_fallthru
    _
  // Predicated region
  $region34: #{cnn_forward.13} parent=0 // pred_check
    _
  $region35: #{cnn_forward.13} parent=0 // pred_check_branch
    %33 = sbr.rel (0) target = $region37
  $region36: #{cnn_forward.13} parent=0 // pred_region
    _
  $region37: #{cnn_forward.13} parent=0 // pred_fallthru
    _
  // Predicated region
  $region38: #{cnn_forward.13} parent=0 // pred_check
    _
  $region39: #{cnn_forward.13} parent=0 // pred_check_branch
    %35 = sbr.rel (0) target = $region41
  $region40: #{cnn_forward.13} parent=0 // pred_region
    _
  $region41: #{cnn_forward.13} parent=0 // pred_fallthru
    _
  // Predicated region
  $region42: #{cnn_forward.13} parent=0 // pred_check
    _
  $region43: #{cnn_forward.13} parent=0 // pred_check_branch
    %37 = sbr.rel (0) target = $region45
  $region44: #{cnn_forward.13} parent=0 // pred_region
    _
  $region45: #{cnn_forward.13} parent=0 // pred_fallthru
    _
  %v38 = vld [vmem:[%s0] sm:$0xff]
  %v39 = vld [vmem:[%s0 + $0x8] sm:$0xff]
  %v40 = vld [vmem:[%s0 + $0x10] sm:$0xf]
  %v41 = vld [vmem:[%s0 + $0x14] sm:$0xff]
  %v42 = vld [vmem:[%s0 + $0x1c] sm:$0xff]
  %v43 = vld [vmem:[%s0 + $0x24] sm:$0xf]
  %v44 = vld [vmem:[%s1] sm:$0xff]
  %v45 = vld [vmem:[%s1 + $0x8] sm:$0xff]
  %v46 = vld [vmem:[%s1 + $0x10] sm:$0xff]
  %v47 = vld [vmem:[%s1 + $0x18] sm:$0xff]
  %v48 = vld [vmem:[%s1 + $0x20] sm:$0xff]
  %v49 = vld [vmem:[%s1 + $0x28] sm:$0xff]
  %v50 = vld [vmem:[%s1 + $0x30] sm:$0xff]
  %v51 = vld [vmem:[%s1 + $0x38] sm:$0xff]
  %v52 = vld [vmem:[%s1 + $0x40] sm:$0xff]
  %v53 = vld [vmem:[%s1 + $0x48] sm:$0xff]
  %v54 = vld [vmem:[%s1 + $0x50] sm:$0xff]
  %v55 = vld [vmem:[%s1 + $0x58] sm:$0xff]
  %v56 = vld [vmem:[%s1 + $0x60] sm:$0xff]
  %v57 = vld [vmem:[%s1 + $0x68] sm:$0xff]
  %v58 = vld [vmem:[%s1 + $0x70] sm:$0xff]
  %v59 = vld [vmem:[%s1 + $0x78] sm:$0xff]
  %v60 = vld [vmem:[%s1 + $0x80] sm:$0xff]
  %v61 = vld [vmem:[%s1 + $0x88] sm:$0xff]
  %v62 = vld [vmem:[%s1 + $0x90] sm:$0xff]
  %v63 = vld [vmem:[%s1 + $0x98] sm:$0xff]
  %v64 = vld [vmem:[%s1 + $0xa0] sm:$0xff]
  %v65 = vld [vmem:[%s1 + $0xa8] sm:$0xff]
  %v66 = vld [vmem:[%s1 + $0xb0] sm:$0xff]
  %v67 = vld [vmem:[%s1 + $0xb8] sm:$0xff]
  %v68 = vld [vmem:[%s1 + $0xc0] sm:$0xff]
  %v69 = vld [vmem:[%s1 + $0xc8] sm:$0xff]
  %v70 = vld [vmem:[%s1 + $0xd0] sm:$0xff]
  %v71 = vld [vmem:[%s1 + $0xd8] sm:$0xff]
  %v72 = vld [vmem:[%s1 + $0xe0] sm:$0xff]
  %v73 = vld [vmem:[%s1 + $0xe8] sm:$0xff]
  %v74 = vld [vmem:[%s1 + $0xf0] sm:$0xff]
  %v75 = vld [vmem:[%s1 + $0xf8] sm:$0xff]
  %v76 = vld [vmem:[%s1 + $0x100] sm:$0xff]
  %v77 = vld [vmem:[%s1 + $0x108] sm:$0xff]
  %v78 = vld [vmem:[%s1 + $0x110] sm:$0xff]
  %v79 = vld [vmem:[%s1 + $0x118] sm:$0xff]
  %v80 = vld [vmem:[%s1 + $0x120] sm:$0xff]
  %v81 = vld [vmem:[%s1 + $0x128] sm:$0xff]
  %v82 = vld [vmem:[%s1 + $0x130] sm:$0xff]
  %v83 = vld [vmem:[%s1 + $0x138] sm:$0xff]
  %v84 = vld [vmem:[%s1 + $0x140] sm:$0xff]
  %v85 = vld [vmem:[%s1 + $0x148] sm:$0xff]
  %v86 = vld [vmem:[%s1 + $0x150] sm:$0xff]
  %v87 = vld [vmem:[%s1 + $0x158] sm:$0xff]
  %v88 = vld [vmem:[%s1 + $0x160] sm:$0xff]
  %v89 = vld [vmem:[%s1 + $0x168] sm:$0xff]
  %v90 = vld [vmem:[%s1 + $0x170] sm:$0xff]
  %v91 = vld [vmem:[%s1 + $0x178] sm:$0xff]
  %v92 = vld [vmem:[%s1 + $0x180] sm:$0xff]
  %v93 = vld [vmem:[%s1 + $0x188] sm:$0xff]
  %v94 = vld [vmem:[%s1 + $0x190] sm:$0xff]
  %v95 = vld [vmem:[%s1 + $0x198] sm:$0xff]
  %v96 = vld [vmem:[%s1 + $0x1a0] sm:$0xff]
  %v97 = vld [vmem:[%s1 + $0x1a8] sm:$0xff]
  %v98 = vld [vmem:[%s1 + $0x1b0] sm:$0xff]
  %v99 = vld [vmem:[%s1 + $0x1b8] sm:$0xff]
  %v100 = vld [vmem:[%s1 + $0x1c0] sm:$0xff]
  %v101 = vld [vmem:[%s1 + $0x1c8] sm:$0xff]
  %v102 = vld [vmem:[%s1 + $0x1d0] sm:$0xff]
  %v103 = vld [vmem:[%s1 + $0x1d8] sm:$0xff]
  %v104 = vld [vmem:[%s1 + $0x1e0] sm:$0xff]
  %v105 = vld [vmem:[%s1 + $0x1e8] sm:$0xff]
  %v106 = vld [vmem:[%s1 + $0x1f0] sm:$0xff]
  %v107 = vld [vmem:[%s1 + $0x1f8] sm:$0xff]
  %v108 = vld [vmem:[%s1 + $0x200] sm:$0xff]
  %v109 = vld [vmem:[%s1 + $0x208] sm:$0xff]
  %v110 = vld [vmem:[%s1 + $0x210] sm:$0xff]
  %v111 = vld [vmem:[%s1 + $0x218] sm:$0xff]
  %v112 = vld [vmem:[%s1 + $0x220] sm:$0xff]
  %v113 = vld [vmem:[%s1 + $0x228] sm:$0xff]
  %v114 = vld [vmem:[%s1 + $0x230] sm:$0xff]
  %v115 = vld [vmem:[%s1 + $0x238] sm:$0xff]
  %v116 = vld [vmem:[%s1 + $0x240] sm:$0xff]
  %v117 = vld [vmem:[%s1 + $0x248] sm:$0xff]
  %v118 = vld [vmem:[%s1 + $0x250] sm:$0xff]
  %v119 = vld [vmem:[%s1 + $0x258] sm:$0xff]
  %v120 = vld [vmem:[%s1 + $0x260] sm:$0xff]
  %v121 = vld [vmem:[%s1 + $0x268] sm:$0xff]
  %v122 = vld [vmem:[%s1 + $0x270] sm:$0xff]
  %v123 = vld [vmem:[%s1 + $0x278] sm:$0xff]
  %v124 = vld [vmem:[%s1 + $0x280] sm:$0xff]
  %v125 = vld [vmem:[%s1 + $0x288] sm:$0xff]
  %v126 = vld [vmem:[%s1 + $0x290] sm:$0xff]
  %v127 = vld [vmem:[%s1 + $0x298] sm:$0xff]
  %v128 = vld [vmem:[%s1 + $0x2a0] sm:$0xff]
  %v129 = vld [vmem:[%s1 + $0x2a8] sm:$0xff]
  %v130 = vld [vmem:[%s1 + $0x2b0] sm:$0xff]
  %v131 = vld [vmem:[%s1 + $0x2b8] sm:$0xff]
  %v132 = vld [vmem:[%s1 + $0x2c0] sm:$0xff]
  %v133 = vld [vmem:[%s1 + $0x2c8] sm:$0xff]
  %v134 = vld [vmem:[%s1 + $0x2d0] sm:$0xff]
  %v135 = vld [vmem:[%s1 + $0x2d8] sm:$0xff]
  %v136 = vld [vmem:[%s1 + $0x2e0] sm:$0xff]
  %v137 = vld [vmem:[%s1 + $0x2e8] sm:$0xff]
  %v138 = vld [vmem:[%s1 + $0x2f0] sm:$0xff]
  %v139 = vld [vmem:[%s1 + $0x2f8] sm:$0xff]
  %v140 = vld [vmem:[%s1 + $0x300] sm:$0xff]
  %v141 = vld [vmem:[%s1 + $0x308] sm:$0xff]
  %v142 = vld [vmem:[%s1 + $0x310] sm:$0xff]
  %v143 = vld [vmem:[%s1 + $0x318] sm:$0xff]
  %v144 = vld [vmem:[%s1 + $0x320] sm:$0xff]
  %v145 = vld [vmem:[%s1 + $0x328] sm:$0xff]
  %v146 = vld [vmem:[%s1 + $0x330] sm:$0xff]
  %v147 = vld [vmem:[%s1 + $0x338] sm:$0xff]
  %v148 = vld [vmem:[%s1 + $0x340] sm:$0xff]
  %v149 = vld [vmem:[%s1 + $0x348] sm:$0xff]
  %v150 = vld [vmem:[%s1 + $0x350] sm:$0xff]
  %v151 = vld [vmem:[%s1 + $0x358] sm:$0xff]
  %v152 = vld [vmem:[%s1 + $0x360] sm:$0xff]
  %v153 = vld [vmem:[%s1 + $0x368] sm:$0xff]
  %v154 = vld [vmem:[%s1 + $0x370] sm:$0xff]
  %v155 = vld [vmem:[%s1 + $0x378] sm:$0xff]
  %v156 = vld [vmem:[%s1 + $0x380] sm:$0xff]
  %v157 = vld [vmem:[%s1 + $0x388] sm:$0xff]
  %v158 = vld [vmem:[%s1 + $0x390] sm:$0xff]
  %v159 = vld [vmem:[%s1 + $0x398] sm:$0xff]
  %v160 = vld [vmem:[%s1 + $0x3a0] sm:$0xff]
  %v161 = vld [vmem:[%s1 + $0x3a8] sm:$0xff]
  %v162 = vld [vmem:[%s1 + $0x3b0] sm:$0xff]
  %v163 = vld [vmem:[%s1 + $0x3b8] sm:$0xff]
  %v164 = vld [vmem:[%s1 + $0x3c0] sm:$0xff]
  %v165 = vld [vmem:[%s1 + $0x3c8] sm:$0xff]
  %v166 = vld [vmem:[%s1 + $0x3d0] sm:$0xff]
  %v167 = vld [vmem:[%s1 + $0x3d8] sm:$0xff]
  %v168 = vld [vmem:[%s1 + $0x3e0] sm:$0xff]
  %v169 = vld [vmem:[%s1 + $0x3e8] sm:$0xff]
  %v170 = vld [vmem:[%s1 + $0x3f0] sm:$0xff]
  %v171 = vld [vmem:[%s1 + $0x3f8] sm:$0xff]
  %v172 = vld [vmem:[%s1 + $0x400] sm:$0xff]
  %v173 = vld [vmem:[%s1 + $0x408] sm:$0xff]
  %v174 = vld [vmem:[%s1 + $0x410] sm:$0xff]
  %v175 = vld [vmem:[%s1 + $0x418] sm:$0xff]
  %v176 = vld [vmem:[%s1 + $0x420] sm:$0xff]
  %v177 = vld [vmem:[%s1 + $0x428] sm:$0xff]
  %v178 = vld [vmem:[%s1 + $0x430] sm:$0xff]
  %v179 = vld [vmem:[%s1 + $0x438] sm:$0xff]
  %v180 = vld [vmem:[%s1 + $0x440] sm:$0xff]
  %v181 = vld [vmem:[%s1 + $0x448] sm:$0xff]
  %v182 = vld [vmem:[%s1 + $0x450] sm:$0xff]
  %v183 = vld [vmem:[%s1 + $0x458] sm:$0xff]
  %v184 = vld [vmem:[%s1 + $0x460] sm:$0xff]
  %v185 = vld [vmem:[%s1 + $0x468] sm:$0xff]
  %v186 = vld [vmem:[%s1 + $0x470] sm:$0xff]
  %v187 = vld [vmem:[%s1 + $0x478] sm:$0xff]
  %v188 = vld [vmem:[%s1 + $0x480] sm:$0xff]
  %v189 = vld [vmem:[%s1 + $0x488] sm:$0xff]
  %v190 = vld [vmem:[%s1 + $0x490] sm:$0xff]
  %v191 = vld [vmem:[%s1 + $0x498] sm:$0xff]
  %v192 = vld [vmem:[%s1 + $0x4a0] sm:$0xff]
  %v193 = vld [vmem:[%s1 + $0x4a8] sm:$0xff]
  %v194 = vld [vmem:[%s1 + $0x4b0] sm:$0xff]
  %v195 = vld [vmem:[%s1 + $0x4b8] sm:$0xff]
  %v196 = vld [vmem:[%s1 + $0x4c0] sm:$0xff]
  %v197 = vld [vmem:[%s1 + $0x4c8] sm:$0xff]
  %v198 = vld [vmem:[%s1 + $0x4d0] sm:$0xff]
  %v199 = vld [vmem:[%s1 + $0x4d8] sm:$0xff]
  %v200 = vld [vmem:[%s1 + $0x4e0] sm:$0xff]
  %v201 = vld [vmem:[%s1 + $0x4e8] sm:$0xff]
  %v202 = vld [vmem:[%s1 + $0x4f0] sm:$0xff]
  %v203 = vld [vmem:[%s1 + $0x4f8] sm:$0xff]
  %v204 = vld [vmem:[%s1 + $0x500] sm:$0xff]
  %v205 = vld [vmem:[%s1 + $0x508] sm:$0xff]
  %v206 = vld [vmem:[%s1 + $0x510] sm:$0xff]
  %v207 = vld [vmem:[%s1 + $0x518] sm:$0xff]
  %v208 = vld [vmem:[%s1 + $0x520] sm:$0xff]
  %v209 = vld [vmem:[%s1 + $0x528] sm:$0xff]
  %v210 = vld [vmem:[%s1 + $0x530] sm:$0xff]
  %v211 = vld [vmem:[%s1 + $0x538] sm:$0xff]
  %v212 = vld [vmem:[%s1 + $0x540] sm:$0xff]
  %v213 = vld [vmem:[%s1 + $0x548] sm:$0xff]
  %v214 = vld [vmem:[%s1 + $0x550] sm:$0xff]
  %v215 = vld [vmem:[%s1 + $0x558] sm:$0xff]
  %v216 = vld [vmem:[%s1 + $0x560] sm:$0xff]
  %v217 = vld [vmem:[%s1 + $0x568] sm:$0xff]
  %v218 = vld [vmem:[%s1 + $0x570] sm:$0xff]
  %v219 = vld [vmem:[%s1 + $0x578] sm:$0xff]
  %v220 = vld [vmem:[%s1 + $0x580] sm:$0xff]
  %v221 = vld [vmem:[%s1 + $0x588] sm:$0xff]
  %v222 = vld [vmem:[%s1 + $0x590] sm:$0xff]
  %v223 = vld [vmem:[%s1 + $0x598] sm:$0xff]
  %v224 = vld [vmem:[%s1 + $0x5a0] sm:$0xff]
  %v225 = vld [vmem:[%s1 + $0x5a8] sm:$0xff]
  %v226 = vld [vmem:[%s1 + $0x5b0] sm:$0xff]
  %v227 = vld [vmem:[%s1 + $0x5b8] sm:$0xff]
  %v228 = vld [vmem:[%s1 + $0x5c0] sm:$0xff]
  %v229 = vld [vmem:[%s1 + $0x5c8] sm:$0xff]
  %v230 = vld [vmem:[%s1 + $0x5d0] sm:$0xff]
  %v231 = vld [vmem:[%s1 + $0x5d8] sm:$0xff]
  %v232 = vld [vmem:[%s1 + $0x5e0] sm:$0xff]
  %v233 = vld [vmem:[%s1 + $0x5e8] sm:$0xff]
  %v234 = vld [vmem:[%s1 + $0x5f0] sm:$0xff]
  %v235 = vld [vmem:[%s1 + $0x5f8] sm:$0xff]
  %v236 = vld [vmem:[%s1 + $0x600] sm:$0xff]
  %v237 = vld [vmem:[%s1 + $0x608] sm:$0xff]
  %v238 = vld [vmem:[%s1 + $0x610] sm:$0xff]
  %v239 = vld [vmem:[%s1 + $0x618] sm:$0xff]
  %v240 = vld [vmem:[%s1 + $0x620] sm:$0xff]
  %v241 = vld [vmem:[%s1 + $0x628] sm:$0xff]
  %v242 = vld [vmem:[%s1 + $0x630] sm:$0xff]
  %v243 = vld [vmem:[%s1 + $0x638] sm:$0xff]
  %v244 = vld [vmem:[%s1 + $0x640] sm:$0xff]
  %v245 = vld [vmem:[%s1 + $0x648] sm:$0xff]
  %v246 = vld [vmem:[%s1 + $0x650] sm:$0xff]
  %v247 = vld [vmem:[%s1 + $0x658] sm:$0xff]
  %v248 = vld [vmem:[%s1 + $0x660] sm:$0xff]
  %v249 = vld [vmem:[%s1 + $0x668] sm:$0xff]
  %v250 = vld [vmem:[%s1 + $0x670] sm:$0xff]
  %v251 = vld [vmem:[%s1 + $0x678] sm:$0xff]
  %v252 = vld [vmem:[%s1 + $0x680] sm:$0xff]
  %v253 = vld [vmem:[%s1 + $0x688] sm:$0xff]
  %v254 = vld [vmem:[%s1 + $0x690] sm:$0xff]
  %v255 = vld [vmem:[%s1 + $0x698] sm:$0xff]
  %v256 = vld [vmem:[%s1 + $0x6a0] sm:$0xff]
  %v257 = vld [vmem:[%s1 + $0x6a8] sm:$0xff]
  %v258 = vld [vmem:[%s1 + $0x6b0] sm:$0xff]
  %v259 = vld [vmem:[%s1 + $0x6b8] sm:$0xff]
  %v260 = vld [vmem:[%s1 + $0x6c0] sm:$0xff]
  %v261 = vld [vmem:[%s1 + $0x6c8] sm:$0xff]
  %v262 = vld [vmem:[%s1 + $0x6d0] sm:$0xff]
  %v263 = vld [vmem:[%s1 + $0x6d8] sm:$0xff]
  %v264 = vld [vmem:[%s1 + $0x6e0] sm:$0xff]
  %v265 = vld [vmem:[%s1 + $0x6e8] sm:$0xff]
  %v266 = vld [vmem:[%s1 + $0x6f0] sm:$0xff]
  %v267 = vld [vmem:[%s1 + $0x6f8] sm:$0xff]
  %v268 = vld [vmem:[%s1 + $0x700] sm:$0xff]
  %v269 = vld [vmem:[%s1 + $0x708] sm:$0xff]
  %v270 = vld [vmem:[%s1 + $0x710] sm:$0xff]
  %v271 = vld [vmem:[%s1 + $0x718] sm:$0xff]
  %v272 = vld [vmem:[%s1 + $0x720] sm:$0xff]
  %v273 = vld [vmem:[%s1 + $0x728] sm:$0xff]
  %v274 = vld [vmem:[%s1 + $0x730] sm:$0xff]
  %v275 = vld [vmem:[%s1 + $0x738] sm:$0xff]
  %v276 = vld [vmem:[%s1 + $0x740] sm:$0xff]
  %v277 = vld [vmem:[%s1 + $0x748] sm:$0xff]
  %v278 = vld [vmem:[%s1 + $0x750] sm:$0xff]
  %v279 = vld [vmem:[%s1 + $0x758] sm:$0xff]
  %v280 = vld [vmem:[%s1 + $0x760] sm:$0xff]
  %v281 = vld [vmem:[%s1 + $0x768] sm:$0xff]
  %v282 = vld [vmem:[%s1 + $0x770] sm:$0xff]
  %v283 = vld [vmem:[%s1 + $0x778] sm:$0xff]
  %v284 = vld [vmem:[%s1 + $0x780] sm:$0xff]
  %v285 = vld [vmem:[%s1 + $0x788] sm:$0xff]
  %v286 = vld [vmem:[%s1 + $0x790] sm:$0xff]
  %v287 = vld [vmem:[%s1 + $0x798] sm:$0xff]
  %v288 = vld [vmem:[%s1 + $0x7a0] sm:$0xff]
  %v289 = vld [vmem:[%s1 + $0x7a8] sm:$0xff]
  %v290 = vld [vmem:[%s1 + $0x7b0] sm:$0xff]
  %v291 = vld [vmem:[%s1 + $0x7b8] sm:$0xff]
  %v292 = vld [vmem:[%s1 + $0x7c0] sm:$0xff]
  %v293 = vld [vmem:[%s1 + $0x7c8] sm:$0xff]
  %v294 = vld [vmem:[%s1 + $0x7d0] sm:$0xff]
  %v295 = vld [vmem:[%s1 + $0x7d8] sm:$0xff]
  %v296 = vld [vmem:[%s1 + $0x7e0] sm:$0xff]
  %v297 = vld [vmem:[%s1 + $0x7e8] sm:$0xff]
  %v298 = vld [vmem:[%s1 + $0x7f0] sm:$0xff]
  %v299 = vld [vmem:[%s1 + $0x7f8] sm:$0xff]
  %v300 = vld [vmem:[%s1 + $0x800] sm:$0xff]
  %v301 = vld [vmem:[%s1 + $0x808] sm:$0xff]
  %v302 = vld [vmem:[%s1 + $0x810] sm:$0xff]
  %v303 = vld [vmem:[%s1 + $0x818] sm:$0xff]
  %v304 = vld [vmem:[%s1 + $0x820] sm:$0xff]
  %v305 = vld [vmem:[%s1 + $0x828] sm:$0xff]
  %v306 = vld [vmem:[%s1 + $0x830] sm:$0xff]
  %v307 = vld [vmem:[%s1 + $0x838] sm:$0xff]
  %v308 = vld [vmem:[%s1 + $0x840] sm:$0xff]
  %v309 = vld [vmem:[%s1 + $0x848] sm:$0xff]
  %v310 = vld [vmem:[%s1 + $0x850] sm:$0xff]
  %v311 = vld [vmem:[%s1 + $0x858] sm:$0xff]
  %v312 = vld [vmem:[%s1 + $0x860] sm:$0xff]
  %v313 = vld [vmem:[%s1 + $0x868] sm:$0xff]
  %v314 = vld [vmem:[%s1 + $0x870] sm:$0xff]
  %v315 = vld [vmem:[%s1 + $0x878] sm:$0xff]
  %v316 = vld [vmem:[%s1 + $0x880] sm:$0xff]
  %v317 = vld [vmem:[%s1 + $0x888] sm:$0xff]
  %v318 = vld [vmem:[%s1 + $0x890] sm:$0xff]
  %v319 = vld [vmem:[%s1 + $0x898] sm:$0xff]
  %v320 = vld [vmem:[%s1 + $0x8a0] sm:$0xff]
  %v321 = vld [vmem:[%s1 + $0x8a8] sm:$0xff]
  %v322 = vld [vmem:[%s1 + $0x8b0] sm:$0xff]
  %v323 = vld [vmem:[%s1 + $0x8b8] sm:$0xff]
  %v324 = vld [vmem:[%s1 + $0x8c0] sm:$0xff]
  %v325 = vld [vmem:[%s1 + $0x8c8] sm:$0xff]
  %v326 = vld [vmem:[%s1 + $0x8d0] sm:$0xff]
  %v327 = vld [vmem:[%s1 + $0x8d8] sm:$0xff]
  %v328 = vld [vmem:[%s1 + $0x8e0] sm:$0xff]
  %v329 = vld [vmem:[%s1 + $0x8e8] sm:$0xff]
  %v330 = vld [vmem:[%s1 + $0x8f0] sm:$0xff]
  %v331 = vld [vmem:[%s1 + $0x8f8] sm:$0xff]
  %v332 = vld [vmem:[%s1 + $0x900] sm:$0xff]
  %v333 = vld [vmem:[%s1 + $0x908] sm:$0xff]
  %v334 = vld [vmem:[%s1 + $0x910] sm:$0xff]
  %v335 = vld [vmem:[%s1 + $0x918] sm:$0xff]
  %v336 = vld [vmem:[%s1 + $0x920] sm:$0xff]
  %v337 = vld [vmem:[%s1 + $0x928] sm:$0xff]
  %v338 = vld [vmem:[%s1 + $0x930] sm:$0xff]
  %v339 = vld [vmem:[%s1 + $0x938] sm:$0xff]
  %v340 = vld [vmem:[%s1 + $0x940] sm:$0xff]
  %v341 = vld [vmem:[%s1 + $0x948] sm:$0xff]
  %v342 = vld [vmem:[%s1 + $0x950] sm:$0xff]
  %v343 = vld [vmem:[%s1 + $0x958] sm:$0xff]
  %v344 = vld [vmem:[%s1 + $0x960] sm:$0xff]
  %v345 = vld [vmem:[%s1 + $0x968] sm:$0xff]
  %v346 = vld [vmem:[%s1 + $0x970] sm:$0xff]
  %v347 = vld [vmem:[%s1 + $0x978] sm:$0xff]
  %v348 = vld [vmem:[%s1 + $0x980] sm:$0xff]
  %v349 = vld [vmem:[%s1 + $0x988] sm:$0xff]
  %v350 = vld [vmem:[%s1 + $0x990] sm:$0xff]
  %v351 = vld [vmem:[%s1 + $0x998] sm:$0xff]
  %v352 = vld [vmem:[%s1 + $0x9a0] sm:$0xff]
  %v353 = vld [vmem:[%s1 + $0x9a8] sm:$0xff]
  %v354 = vld [vmem:[%s1 + $0x9b0] sm:$0xff]
  %v355 = vld [vmem:[%s1 + $0x9b8] sm:$0xff]
  %v356 = vld [vmem:[%s1 + $0x9c0] sm:$0xff]
  %v357 = vld [vmem:[%s1 + $0x9c8] sm:$0xff]
  %v358 = vld [vmem:[%s1 + $0x9d0] sm:$0xff]
  %v359 = vld [vmem:[%s1 + $0x9d8] sm:$0xff]
  %v360 = vld [vmem:[%s1 + $0x9e0] sm:$0xff]
  %v361 = vld [vmem:[%s1 + $0x9e8] sm:$0xff]
  %v362 = vld [vmem:[%s1 + $0x9f0] sm:$0xff]
  %v363 = vld [vmem:[%s1 + $0x9f8] sm:$0xff]
  %v364 = vld [vmem:[%s1 + $0xa00] sm:$0xff]
  %v365 = vld [vmem:[%s1 + $0xa08] sm:$0xff]
  %v366 = vld [vmem:[%s1 + $0xa10] sm:$0xff]
  %v367 = vld [vmem:[%s1 + $0xa18] sm:$0xff]
  %v368 = vld [vmem:[%s1 + $0xa20] sm:$0xff]
  %v369 = vld [vmem:[%s1 + $0xa28] sm:$0xff]
  %v370 = vld [vmem:[%s1 + $0xa30] sm:$0xff]
  %v371 = vld [vmem:[%s1 + $0xa38] sm:$0xff]
  %v372 = vld [vmem:[%s1 + $0xa40] sm:$0xff]
  %v373 = vld [vmem:[%s1 + $0xa48] sm:$0xff]
  %v374 = vld [vmem:[%s1 + $0xa50] sm:$0xff]
  %v375 = vld [vmem:[%s1 + $0xa58] sm:$0xff]
  %v376 = vld [vmem:[%s1 + $0xa60] sm:$0xff]
  %v377 = vld [vmem:[%s1 + $0xa68] sm:$0xff]
  %v378 = vld [vmem:[%s1 + $0xa70] sm:$0xff]
  %v379 = vld [vmem:[%s1 + $0xa78] sm:$0xff]
  %v380 = vld [vmem:[%s1 + $0xa80] sm:$0xff]
  %v381 = vld [vmem:[%s1 + $0xa88] sm:$0xff]
  %v382 = vld [vmem:[%s1 + $0xa90] sm:$0xff]
  %v383 = vld [vmem:[%s1 + $0xa98] sm:$0xff]
  %v384 = vld [vmem:[%s1 + $0xaa0] sm:$0xff]
  %v385 = vld [vmem:[%s1 + $0xaa8] sm:$0xff]
  %v386 = vld [vmem:[%s1 + $0xab0] sm:$0xff]
  %v387 = vld [vmem:[%s1 + $0xab8] sm:$0xff]
  %v388 = vld [vmem:[%s1 + $0xac0] sm:$0xff]
  %v389 = vld [vmem:[%s1 + $0xac8] sm:$0xff]
  %v390 = vld [vmem:[%s1 + $0xad0] sm:$0xff]
  %v391 = vld [vmem:[%s1 + $0xad8] sm:$0xff]
  %v392 = vld [vmem:[%s1 + $0xae0] sm:$0xff]
  %v393 = vld [vmem:[%s1 + $0xae8] sm:$0xff]
  %v394 = vld [vmem:[%s1 + $0xaf0] sm:$0xff]
  %v395 = vld [vmem:[%s1 + $0xaf8] sm:$0xff]
  %v396 = vld [vmem:[%s1 + $0xb00] sm:$0xff]
  %v397 = vld [vmem:[%s1 + $0xb08] sm:$0xff]
  %v398 = vld [vmem:[%s1 + $0xb10] sm:$0xff]
  %v399 = vld [vmem:[%s1 + $0xb18] sm:$0xff]
  %v400 = vld [vmem:[%s1 + $0xb20] sm:$0xff]
  %v401 = vld [vmem:[%s1 + $0xb28] sm:$0xff]
  %v402 = vld [vmem:[%s1 + $0xb30] sm:$0xff]
  %v403 = vld [vmem:[%s1 + $0xb38] sm:$0xff]
  %v404 = vld [vmem:[%s1 + $0xb40] sm:$0xff]
  %v405 = vld [vmem:[%s1 + $0xb48] sm:$0xff]
  %v406 = vld [vmem:[%s1 + $0xb50] sm:$0xff]
  %v407 = vld [vmem:[%s1 + $0xb58] sm:$0xff]
  %v408 = vld [vmem:[%s1 + $0xb60] sm:$0xff]
  %v409 = vld [vmem:[%s1 + $0xb68] sm:$0xff]
  %v410 = vld [vmem:[%s1 + $0xb70] sm:$0xff]
  %v411 = vld [vmem:[%s1 + $0xb78] sm:$0xff]
  %v412 = vld [vmem:[%s1 + $0xb80] sm:$0xff]
  %v413 = vld [vmem:[%s1 + $0xb88] sm:$0xff]
  %v414 = vld [vmem:[%s1 + $0xb90] sm:$0xff]
  %v415 = vld [vmem:[%s1 + $0xb98] sm:$0xff]
  %v416 = vld [vmem:[%s1 + $0xba0] sm:$0xff]
  %v417 = vld [vmem:[%s1 + $0xba8] sm:$0xff]
  %v418 = vld [vmem:[%s1 + $0xbb0] sm:$0xff]
  %v419 = vld [vmem:[%s1 + $0xbb8] sm:$0xff]
  %v420 = vld [vmem:[%s1 + $0xbc0] sm:$0xff]
  %v421 = vld [vmem:[%s1 + $0xbc8] sm:$0xff]
  %v422 = vld [vmem:[%s1 + $0xbd0] sm:$0xff]
  %v423 = vld [vmem:[%s1 + $0xbd8] sm:$0xff]
  %v424 = vld [vmem:[%s1 + $0xbe0] sm:$0xff]
  %v425 = vld [vmem:[%s1 + $0xbe8] sm:$0xff]
  %v426 = vld [vmem:[%s1 + $0xbf0] sm:$0xff]
  %v427 = vld [vmem:[%s1 + $0xbf8] sm:$0xff]
  %v428 = vld [vmem:[%s1 + $0xc00] sm:$0xff]
  %v429 = vld [vmem:[%s1 + $0xc08] sm:$0xff]
  %v430 = vld [vmem:[%s1 + $0xc10] sm:$0xff]
  %v431 = vld [vmem:[%s1 + $0xc18] sm:$0xff]
  %v432 = vld [vmem:[%s1 + $0xc20] sm:$0xff]
  %v433 = vld [vmem:[%s1 + $0xc28] sm:$0xff]
  %v434 = vld [vmem:[%s1 + $0xc30] sm:$0xff]
  %v435 = vld [vmem:[%s1 + $0xc38] sm:$0xff]
  %v436 = vld [vmem:[%s1 + $0xc40] sm:$0xff]
  %v437 = vld [vmem:[%s1 + $0xc48] sm:$0xff]
  %v438 = vld [vmem:[%s1 + $0xc50] sm:$0xff]
  %v439 = vld [vmem:[%s1 + $0xc58] sm:$0xff]
  %v440 = vld [vmem:[%s1 + $0xc60] sm:$0xff]
  %v441 = vld [vmem:[%s1 + $0xc68] sm:$0xff]
  %v442 = vld [vmem:[%s1 + $0xc70] sm:$0xff]
  %v443 = vld [vmem:[%s1 + $0xc78] sm:$0xff]
  %v444 = vld [vmem:[%s2] sm:$0xff]
  %v445 = vld [vmem:[%s2 + $0x8] sm:$0x3]
  %v448 = vperm.slane %v444, 0
  %v449 = vperm.slane %v444, 1
  %v450 = vperm.slane %v444, 2
  %v451 = vperm.slane %v444, 3
  %v452 = vperm.slane %v444, 4
  %v453 = vperm.slane %v444, 5
  %v454 = vperm.slane %v444, 6
  %v455 = vperm.slane %v444, 7
  %v456 = vperm.slane %v445, 0
  %v457 = vperm.slane %v445, 1
  %v474 = vunpack.c.l.b16 %v38
  %v475 = vunpack.c.h.b16 %v38
  %v476 = vunpack.c.l.b16 %v39
  %v477 = vunpack.c.h.b16 %v39
  %v478 = vunpack.c.l.b16 %v40
  %v479 = vunpack.c.l.b16 %v41
  %v480 = vunpack.c.h.b16 %v41
  %v481 = vunpack.c.l.b16 %v42
  %v482 = vunpack.c.h.b16 %v42
  %v483 = vunpack.c.l.b16 %v43
  %v484 = vpack.c.b16 %v479, %v474
  %v485 = vpack.c.b16 %v480, %v475
  %v486 = vpack.c.b16 %v481, %v476
  %v487 = vpack.c.b16 %v482, %v477
  %v488 = vpack.c.b16 %v483, %v478
  %v894 = vunpack.c.l.b16 %v44
  %v895 = vunpack.c.h.b16 %v44
  %v896 = vunpack.c.l.b16 %v45
  %v897 = vunpack.c.h.b16 %v45
  %v898 = vunpack.c.l.b16 %v46
  %v899 = vunpack.c.h.b16 %v46
  %v900 = vunpack.c.l.b16 %v47
  %v901 = vunpack.c.h.b16 %v47
  %v902 = vunpack.c.l.b16 %v48
  %v903 = vunpack.c.h.b16 %v48
  %v904 = vunpack.c.l.b16 %v49
  %v905 = vunpack.c.h.b16 %v49
  %v906 = vunpack.c.l.b16 %v50
  %v907 = vunpack.c.h.b16 %v50
  %v908 = vunpack.c.l.b16 %v51
  %v909 = vunpack.c.h.b16 %v51
  %v910 = vunpack.c.l.b16 %v52
  %v911 = vunpack.c.h.b16 %v52
  %v912 = vunpack.c.l.b16 %v53
  %v913 = vunpack.c.h.b16 %v53
  %v914 = vunpack.c.l.b16 %v54
  %v915 = vunpack.c.h.b16 %v54
  %v916 = vunpack.c.l.b16 %v55
  %v917 = vunpack.c.h.b16 %v55
  %v918 = vunpack.c.l.b16 %v56
  %v919 = vunpack.c.h.b16 %v56
  %v920 = vunpack.c.l.b16 %v57
  %v921 = vunpack.c.h.b16 %v57
  %v922 = vunpack.c.l.b16 %v58
  %v923 = vunpack.c.h.b16 %v58
  %v924 = vunpack.c.l.b16 %v59
  %v925 = vunpack.c.h.b16 %v59
  %v926 = vunpack.c.l.b16 %v60
  %v927 = vunpack.c.h.b16 %v60
  %v928 = vunpack.c.l.b16 %v61
  %v929 = vunpack.c.h.b16 %v61
  %v930 = vunpack.c.l.b16 %v62
  %v931 = vunpack.c.h.b16 %v62
  %v932 = vunpack.c.l.b16 %v63
  %v933 = vunpack.c.h.b16 %v63
  %v934 = vunpack.c.l.b16 %v64
  %v935 = vunpack.c.h.b16 %v64
  %v936 = vunpack.c.l.b16 %v65
  %v937 = vunpack.c.h.b16 %v65
  %v938 = vunpack.c.l.b16 %v66
  %v939 = vunpack.c.h.b16 %v66
  %v940 = vunpack.c.l.b16 %v67
  %v941 = vunpack.c.h.b16 %v67
  %v942 = vunpack.c.l.b16 %v68
  %v943 = vunpack.c.h.b16 %v68
  %v944 = vunpack.c.l.b16 %v69
  %v945 = vunpack.c.h.b16 %v69
  %v946 = vunpack.c.l.b16 %v70
  %v947 = vunpack.c.h.b16 %v70
  %v948 = vunpack.c.l.b16 %v71
  %v949 = vunpack.c.h.b16 %v71
  %v950 = vunpack.c.l.b16 %v72
  %v951 = vunpack.c.h.b16 %v72
  %v952 = vunpack.c.l.b16 %v73
  %v953 = vunpack.c.h.b16 %v73
  %v954 = vunpack.c.l.b16 %v74
  %v955 = vunpack.c.h.b16 %v74
  %v956 = vunpack.c.l.b16 %v75
  %v957 = vunpack.c.h.b16 %v75
  %v958 = vunpack.c.l.b16 %v76
  %v959 = vunpack.c.h.b16 %v76
  %v960 = vunpack.c.l.b16 %v77
  %v961 = vunpack.c.h.b16 %v77
  %v962 = vunpack.c.l.b16 %v78
  %v963 = vunpack.c.h.b16 %v78
  %v964 = vunpack.c.l.b16 %v79
  %v965 = vunpack.c.h.b16 %v79
  %v966 = vunpack.c.l.b16 %v80
  %v967 = vunpack.c.h.b16 %v80
  %v968 = vunpack.c.l.b16 %v81
  %v969 = vunpack.c.h.b16 %v81
  %v970 = vunpack.c.l.b16 %v82
  %v971 = vunpack.c.h.b16 %v82
  %v972 = vunpack.c.l.b16 %v83
  %v973 = vunpack.c.h.b16 %v83
  %v974 = vunpack.c.l.b16 %v84
  %v975 = vunpack.c.h.b16 %v84
  %v976 = vunpack.c.l.b16 %v85
  %v977 = vunpack.c.h.b16 %v85
  %v978 = vunpack.c.l.b16 %v86
  %v979 = vunpack.c.h.b16 %v86
  %v980 = vunpack.c.l.b16 %v87
  %v981 = vunpack.c.h.b16 %v87
  %v982 = vunpack.c.l.b16 %v88
  %v983 = vunpack.c.h.b16 %v88
  %v984 = vunpack.c.l.b16 %v89
  %v985 = vunpack.c.h.b16 %v89
  %v986 = vunpack.c.l.b16 %v90
  %v987 = vunpack.c.h.b16 %v90
  %v988 = vunpack.c.l.b16 %v91
  %v989 = vunpack.c.h.b16 %v91
  %v990 = vunpack.c.l.b16 %v92
  %v991 = vunpack.c.h.b16 %v92
  %v992 = vunpack.c.l.b16 %v93
  %v993 = vunpack.c.h.b16 %v93
  %v994 = vunpack.c.l.b16 %v94
  %v995 = vunpack.c.h.b16 %v94
  %v996 = vunpack.c.l.b16 %v95
  %v997 = vunpack.c.h.b16 %v95
  %v998 = vunpack.c.l.b16 %v96
  %v999 = vunpack.c.h.b16 %v96
  %v1000 = vunpack.c.l.b16 %v97
  %v1001 = vunpack.c.h.b16 %v97
  %v1002 = vunpack.c.l.b16 %v98
  %v1003 = vunpack.c.h.b16 %v98
  %v1004 = vunpack.c.l.b16 %v99
  %v1005 = vunpack.c.h.b16 %v99
  %v1006 = vunpack.c.l.b16 %v100
  %v1007 = vunpack.c.h.b16 %v100
  %v1008 = vunpack.c.l.b16 %v101
  %v1009 = vunpack.c.h.b16 %v101
  %v1010 = vunpack.c.l.b16 %v102
  %v1011 = vunpack.c.h.b16 %v102
  %v1012 = vunpack.c.l.b16 %v103
  %v1013 = vunpack.c.h.b16 %v103
  %v1014 = vunpack.c.l.b16 %v104
  %v1015 = vunpack.c.h.b16 %v104
  %v1016 = vunpack.c.l.b16 %v105
  %v1017 = vunpack.c.h.b16 %v105
  %v1018 = vunpack.c.l.b16 %v106
  %v1019 = vunpack.c.h.b16 %v106
  %v1020 = vunpack.c.l.b16 %v107
  %v1021 = vunpack.c.h.b16 %v107
  %v1022 = vunpack.c.l.b16 %v108
  %v1023 = vunpack.c.h.b16 %v108
  %v1024 = vunpack.c.l.b16 %v109
  %v1025 = vunpack.c.h.b16 %v109
  %v1026 = vunpack.c.l.b16 %v110
  %v1027 = vunpack.c.h.b16 %v110
  %v1028 = vunpack.c.l.b16 %v111
  %v1029 = vunpack.c.h.b16 %v111
  %v1030 = vunpack.c.l.b16 %v112
  %v1031 = vunpack.c.h.b16 %v112
  %v1032 = vunpack.c.l.b16 %v113
  %v1033 = vunpack.c.h.b16 %v113
  %v1034 = vunpack.c.l.b16 %v114
  %v1035 = vunpack.c.h.b16 %v114
  %v1036 = vunpack.c.l.b16 %v115
  %v1037 = vunpack.c.h.b16 %v115
  %v1038 = vunpack.c.l.b16 %v116
  %v1039 = vunpack.c.h.b16 %v116
  %v1040 = vunpack.c.l.b16 %v117
  %v1041 = vunpack.c.h.b16 %v117
  %v1042 = vunpack.c.l.b16 %v118
  %v1043 = vunpack.c.h.b16 %v118
  %v1044 = vunpack.c.l.b16 %v119
  %v1045 = vunpack.c.h.b16 %v119
  %v1046 = vunpack.c.l.b16 %v120
  %v1047 = vunpack.c.h.b16 %v120
  %v1048 = vunpack.c.l.b16 %v121
  %v1049 = vunpack.c.h.b16 %v121
  %v1050 = vunpack.c.l.b16 %v122
  %v1051 = vunpack.c.h.b16 %v122
  %v1052 = vunpack.c.l.b16 %v123
  %v1053 = vunpack.c.h.b16 %v123
  %v1054 = vunpack.c.l.b16 %v124
  %v1055 = vunpack.c.h.b16 %v124
  %v1056 = vunpack.c.l.b16 %v125
  %v1057 = vunpack.c.h.b16 %v125
  %v1058 = vunpack.c.l.b16 %v126
  %v1059 = vunpack.c.h.b16 %v126
  %v1060 = vunpack.c.l.b16 %v127
  %v1061 = vunpack.c.h.b16 %v127
  %v1062 = vunpack.c.l.b16 %v128
  %v1063 = vunpack.c.h.b16 %v128
  %v1064 = vunpack.c.l.b16 %v129
  %v1065 = vunpack.c.h.b16 %v129
  %v1066 = vunpack.c.l.b16 %v130
  %v1067 = vunpack.c.h.b16 %v130
  %v1068 = vunpack.c.l.b16 %v131
  %v1069 = vunpack.c.h.b16 %v131
  %v1070 = vunpack.c.l.b16 %v132
  %v1071 = vunpack.c.h.b16 %v132
  %v1072 = vunpack.c.l.b16 %v133
  %v1073 = vunpack.c.h.b16 %v133
  %v1074 = vunpack.c.l.b16 %v134
  %v1075 = vunpack.c.h.b16 %v134
  %v1076 = vunpack.c.l.b16 %v135
  %v1077 = vunpack.c.h.b16 %v135
  %v1078 = vunpack.c.l.b16 %v136
  %v1079 = vunpack.c.h.b16 %v136
  %v1080 = vunpack.c.l.b16 %v137
  %v1081 = vunpack.c.h.b16 %v137
  %v1082 = vunpack.c.l.b16 %v138
  %v1083 = vunpack.c.h.b16 %v138
  %v1084 = vunpack.c.l.b16 %v139
  %v1085 = vunpack.c.h.b16 %v139
  %v1086 = vunpack.c.l.b16 %v140
  %v1087 = vunpack.c.h.b16 %v140
  %v1088 = vunpack.c.l.b16 %v141
  %v1089 = vunpack.c.h.b16 %v141
  %v1090 = vunpack.c.l.b16 %v142
  %v1091 = vunpack.c.h.b16 %v142
  %v1092 = vunpack.c.l.b16 %v143
  %v1093 = vunpack.c.h.b16 %v143
  %v1094 = vunpack.c.l.b16 %v144
  %v1095 = vunpack.c.h.b16 %v144
  %v1096 = vunpack.c.l.b16 %v145
  %v1097 = vunpack.c.h.b16 %v145
  %v1098 = vunpack.c.l.b16 %v146
  %v1099 = vunpack.c.h.b16 %v146
  %v1100 = vunpack.c.l.b16 %v147
  %v1101 = vunpack.c.h.b16 %v147
  %v1102 = vunpack.c.l.b16 %v148
  %v1103 = vunpack.c.h.b16 %v148
  %v1104 = vunpack.c.l.b16 %v149
  %v1105 = vunpack.c.h.b16 %v149
  %v1106 = vunpack.c.l.b16 %v150
  %v1107 = vunpack.c.h.b16 %v150
  %v1108 = vunpack.c.l.b16 %v151
  %v1109 = vunpack.c.h.b16 %v151
  %v1110 = vunpack.c.l.b16 %v152
  %v1111 = vunpack.c.h.b16 %v152
  %v1112 = vunpack.c.l.b16 %v153
  %v1113 = vunpack.c.h.b16 %v153
  %v1114 = vunpack.c.l.b16 %v154
  %v1115 = vunpack.c.h.b16 %v154
  %v1116 = vunpack.c.l.b16 %v155
  %v1117 = vunpack.c.h.b16 %v155
  %v1118 = vunpack.c.l.b16 %v156
  %v1119 = vunpack.c.h.b16 %v156
  %v1120 = vunpack.c.l.b16 %v157
  %v1121 = vunpack.c.h.b16 %v157
  %v1122 = vunpack.c.l.b16 %v158
  %v1123 = vunpack.c.h.b16 %v158
  %v1124 = vunpack.c.l.b16 %v159
  %v1125 = vunpack.c.h.b16 %v159
  %v1126 = vunpack.c.l.b16 %v160
  %v1127 = vunpack.c.h.b16 %v160
  %v1128 = vunpack.c.l.b16 %v161
  %v1129 = vunpack.c.h.b16 %v161
  %v1130 = vunpack.c.l.b16 %v162
  %v1131 = vunpack.c.h.b16 %v162
  %v1132 = vunpack.c.l.b16 %v163
  %v1133 = vunpack.c.h.b16 %v163
  %v1134 = vunpack.c.l.b16 %v164
  %v1135 = vunpack.c.h.b16 %v164
  %v1136 = vunpack.c.l.b16 %v165
  %v1137 = vunpack.c.h.b16 %v165
  %v1138 = vunpack.c.l.b16 %v166
  %v1139 = vunpack.c.h.b16 %v166
  %v1140 = vunpack.c.l.b16 %v167
  %v1141 = vunpack.c.h.b16 %v167
  %v1142 = vunpack.c.l.b16 %v168
  %v1143 = vunpack.c.h.b16 %v168
  %v1144 = vunpack.c.l.b16 %v169
  %v1145 = vunpack.c.h.b16 %v169
  %v1146 = vunpack.c.l.b16 %v170
  %v1147 = vunpack.c.h.b16 %v170
  %v1148 = vunpack.c.l.b16 %v171
  %v1149 = vunpack.c.h.b16 %v171
  %v1150 = vunpack.c.l.b16 %v172
  %v1151 = vunpack.c.h.b16 %v172
  %v1152 = vunpack.c.l.b16 %v173
  %v1153 = vunpack.c.h.b16 %v173
  %v1154 = vunpack.c.l.b16 %v174
  %v1155 = vunpack.c.h.b16 %v174
  %v1156 = vunpack.c.l.b16 %v175
  %v1157 = vunpack.c.h.b16 %v175
  %v1158 = vunpack.c.l.b16 %v176
  %v1159 = vunpack.c.h.b16 %v176
  %v1160 = vunpack.c.l.b16 %v177
  %v1161 = vunpack.c.h.b16 %v177
  %v1162 = vunpack.c.l.b16 %v178
  %v1163 = vunpack.c.h.b16 %v178
  %v1164 = vunpack.c.l.b16 %v179
  %v1165 = vunpack.c.h.b16 %v179
  %v1166 = vunpack.c.l.b16 %v180
  %v1167 = vunpack.c.h.b16 %v180
  %v1168 = vunpack.c.l.b16 %v181
  %v1169 = vunpack.c.h.b16 %v181
  %v1170 = vunpack.c.l.b16 %v182
  %v1171 = vunpack.c.h.b16 %v182
  %v1172 = vunpack.c.l.b16 %v183
  %v1173 = vunpack.c.h.b16 %v183
  %v1174 = vunpack.c.l.b16 %v184
  %v1175 = vunpack.c.h.b16 %v184
  %v1176 = vunpack.c.l.b16 %v185
  %v1177 = vunpack.c.h.b16 %v185
  %v1178 = vunpack.c.l.b16 %v186
  %v1179 = vunpack.c.h.b16 %v186
  %v1180 = vunpack.c.l.b16 %v187
  %v1181 = vunpack.c.h.b16 %v187
  %v1182 = vunpack.c.l.b16 %v188
  %v1183 = vunpack.c.h.b16 %v188
  %v1184 = vunpack.c.l.b16 %v189
  %v1185 = vunpack.c.h.b16 %v189
  %v1186 = vunpack.c.l.b16 %v190
  %v1187 = vunpack.c.h.b16 %v190
  %v1188 = vunpack.c.l.b16 %v191
  %v1189 = vunpack.c.h.b16 %v191
  %v1190 = vunpack.c.l.b16 %v192
  %v1191 = vunpack.c.h.b16 %v192
  %v1192 = vunpack.c.l.b16 %v193
  %v1193 = vunpack.c.h.b16 %v193
  %v1194 = vunpack.c.l.b16 %v194
  %v1195 = vunpack.c.h.b16 %v194
  %v1196 = vunpack.c.l.b16 %v195
  %v1197 = vunpack.c.h.b16 %v195
  %v1198 = vunpack.c.l.b16 %v196
  %v1199 = vunpack.c.h.b16 %v196
  %v1200 = vunpack.c.l.b16 %v197
  %v1201 = vunpack.c.h.b16 %v197
  %v1202 = vunpack.c.l.b16 %v198
  %v1203 = vunpack.c.h.b16 %v198
  %v1204 = vunpack.c.l.b16 %v199
  %v1205 = vunpack.c.h.b16 %v199
  %v1206 = vunpack.c.l.b16 %v200
  %v1207 = vunpack.c.h.b16 %v200
  %v1208 = vunpack.c.l.b16 %v201
  %v1209 = vunpack.c.h.b16 %v201
  %v1210 = vunpack.c.l.b16 %v202
  %v1211 = vunpack.c.h.b16 %v202
  %v1212 = vunpack.c.l.b16 %v203
  %v1213 = vunpack.c.h.b16 %v203
  %v1214 = vunpack.c.l.b16 %v204
  %v1215 = vunpack.c.h.b16 %v204
  %v1216 = vunpack.c.l.b16 %v205
  %v1217 = vunpack.c.h.b16 %v205
  %v1218 = vunpack.c.l.b16 %v206
  %v1219 = vunpack.c.h.b16 %v206
  %v1220 = vunpack.c.l.b16 %v207
  %v1221 = vunpack.c.h.b16 %v207
  %v1222 = vunpack.c.l.b16 %v208
  %v1223 = vunpack.c.h.b16 %v208
  %v1224 = vunpack.c.l.b16 %v209
  %v1225 = vunpack.c.h.b16 %v209
  %v1226 = vunpack.c.l.b16 %v210
  %v1227 = vunpack.c.h.b16 %v210
  %v1228 = vunpack.c.l.b16 %v211
  %v1229 = vunpack.c.h.b16 %v211
  %v1230 = vunpack.c.l.b16 %v212
  %v1231 = vunpack.c.h.b16 %v212
  %v1232 = vunpack.c.l.b16 %v213
  %v1233 = vunpack.c.h.b16 %v213
  %v1234 = vunpack.c.l.b16 %v214
  %v1235 = vunpack.c.h.b16 %v214
  %v1236 = vunpack.c.l.b16 %v215
  %v1237 = vunpack.c.h.b16 %v215
  %v1238 = vunpack.c.l.b16 %v216
  %v1239 = vunpack.c.h.b16 %v216
  %v1240 = vunpack.c.l.b16 %v217
  %v1241 = vunpack.c.h.b16 %v217
  %v1242 = vunpack.c.l.b16 %v218
  %v1243 = vunpack.c.h.b16 %v218
  %v1244 = vunpack.c.l.b16 %v219
  %v1245 = vunpack.c.h.b16 %v219
  %v1246 = vunpack.c.l.b16 %v220
  %v1247 = vunpack.c.h.b16 %v220
  %v1248 = vunpack.c.l.b16 %v221
  %v1249 = vunpack.c.h.b16 %v221
  %v1250 = vunpack.c.l.b16 %v222
  %v1251 = vunpack.c.h.b16 %v222
  %v1252 = vunpack.c.l.b16 %v223
  %v1253 = vunpack.c.h.b16 %v223
  %v1254 = vunpack.c.l.b16 %v224
  %v1255 = vunpack.c.h.b16 %v224
  %v1256 = vunpack.c.l.b16 %v225
  %v1257 = vunpack.c.h.b16 %v225
  %v1258 = vunpack.c.l.b16 %v226
  %v1259 = vunpack.c.h.b16 %v226
  %v1260 = vunpack.c.l.b16 %v227
  %v1261 = vunpack.c.h.b16 %v227
  %v1262 = vunpack.c.l.b16 %v228
  %v1263 = vunpack.c.h.b16 %v228
  %v1264 = vunpack.c.l.b16 %v229
  %v1265 = vunpack.c.h.b16 %v229
  %v1266 = vunpack.c.l.b16 %v230
  %v1267 = vunpack.c.h.b16 %v230
  %v1268 = vunpack.c.l.b16 %v231
  %v1269 = vunpack.c.h.b16 %v231
  %v1270 = vunpack.c.l.b16 %v232
  %v1271 = vunpack.c.h.b16 %v232
  %v1272 = vunpack.c.l.b16 %v233
  %v1273 = vunpack.c.h.b16 %v233
  %v1274 = vunpack.c.l.b16 %v234
  %v1275 = vunpack.c.h.b16 %v234
  %v1276 = vunpack.c.l.b16 %v235
  %v1277 = vunpack.c.h.b16 %v235
  %v1278 = vunpack.c.l.b16 %v236
  %v1279 = vunpack.c.h.b16 %v236
  %v1280 = vunpack.c.l.b16 %v237
  %v1281 = vunpack.c.h.b16 %v237
  %v1282 = vunpack.c.l.b16 %v238
  %v1283 = vunpack.c.h.b16 %v238
  %v1284 = vunpack.c.l.b16 %v239
  %v1285 = vunpack.c.h.b16 %v239
  %v1286 = vunpack.c.l.b16 %v240
  %v1287 = vunpack.c.h.b16 %v240
  %v1288 = vunpack.c.l.b16 %v241
  %v1289 = vunpack.c.h.b16 %v241
  %v1290 = vunpack.c.l.b16 %v242
  %v1291 = vunpack.c.h.b16 %v242
  %v1292 = vunpack.c.l.b16 %v243
  %v1293 = vunpack.c.h.b16 %v243
  %v1294 = vunpack.c.l.b16 %v244
  %v1295 = vunpack.c.h.b16 %v244
  %v1296 = vunpack.c.l.b16 %v245
  %v1297 = vunpack.c.h.b16 %v245
  %v1298 = vunpack.c.l.b16 %v246
  %v1299 = vunpack.c.h.b16 %v246
  %v1300 = vunpack.c.l.b16 %v247
  %v1301 = vunpack.c.h.b16 %v247
  %v1302 = vunpack.c.l.b16 %v248
  %v1303 = vunpack.c.h.b16 %v248
  %v1304 = vunpack.c.l.b16 %v249
  %v1305 = vunpack.c.h.b16 %v249
  %v1306 = vunpack.c.l.b16 %v250
  %v1307 = vunpack.c.h.b16 %v250
  %v1308 = vunpack.c.l.b16 %v251
  %v1309 = vunpack.c.h.b16 %v251
  %v1310 = vunpack.c.l.b16 %v252
  %v1311 = vunpack.c.h.b16 %v252
  %v1312 = vunpack.c.l.b16 %v253
  %v1313 = vunpack.c.h.b16 %v253
  %v1314 = vunpack.c.l.b16 %v254
  %v1315 = vunpack.c.h.b16 %v254
  %v1316 = vunpack.c.l.b16 %v255
  %v1317 = vunpack.c.h.b16 %v255
  %v1318 = vunpack.c.l.b16 %v256
  %v1319 = vunpack.c.h.b16 %v256
  %v1320 = vunpack.c.l.b16 %v257
  %v1321 = vunpack.c.h.b16 %v257
  %v1322 = vunpack.c.l.b16 %v258
  %v1323 = vunpack.c.h.b16 %v258
  %v1324 = vunpack.c.l.b16 %v259
  %v1325 = vunpack.c.h.b16 %v259
  %v1326 = vunpack.c.l.b16 %v260
  %v1327 = vunpack.c.h.b16 %v260
  %v1328 = vunpack.c.l.b16 %v261
  %v1329 = vunpack.c.h.b16 %v261
  %v1330 = vunpack.c.l.b16 %v262
  %v1331 = vunpack.c.h.b16 %v262
  %v1332 = vunpack.c.l.b16 %v263
  %v1333 = vunpack.c.h.b16 %v263
  %v1334 = vunpack.c.l.b16 %v264
  %v1335 = vunpack.c.h.b16 %v264
  %v1336 = vunpack.c.l.b16 %v265
  %v1337 = vunpack.c.h.b16 %v265
  %v1338 = vunpack.c.l.b16 %v266
  %v1339 = vunpack.c.h.b16 %v266
  %v1340 = vunpack.c.l.b16 %v267
  %v1341 = vunpack.c.h.b16 %v267
  %v1342 = vunpack.c.l.b16 %v268
  %v1343 = vunpack.c.h.b16 %v268
  %v1344 = vunpack.c.l.b16 %v269
  %v1345 = vunpack.c.h.b16 %v269
  %v1346 = vunpack.c.l.b16 %v270
  %v1347 = vunpack.c.h.b16 %v270
  %v1348 = vunpack.c.l.b16 %v271
  %v1349 = vunpack.c.h.b16 %v271
  %v1350 = vunpack.c.l.b16 %v272
  %v1351 = vunpack.c.h.b16 %v272
  %v1352 = vunpack.c.l.b16 %v273
  %v1353 = vunpack.c.h.b16 %v273
  %v1354 = vunpack.c.l.b16 %v274
  %v1355 = vunpack.c.h.b16 %v274
  %v1356 = vunpack.c.l.b16 %v275
  %v1357 = vunpack.c.h.b16 %v275
  %v1358 = vunpack.c.l.b16 %v276
  %v1359 = vunpack.c.h.b16 %v276
  %v1360 = vunpack.c.l.b16 %v277
  %v1361 = vunpack.c.h.b16 %v277
  %v1362 = vunpack.c.l.b16 %v278
  %v1363 = vunpack.c.h.b16 %v278
  %v1364 = vunpack.c.l.b16 %v279
  %v1365 = vunpack.c.h.b16 %v279
  %v1366 = vunpack.c.l.b16 %v280
  %v1367 = vunpack.c.h.b16 %v280
  %v1368 = vunpack.c.l.b16 %v281
  %v1369 = vunpack.c.h.b16 %v281
  %v1370 = vunpack.c.l.b16 %v282
  %v1371 = vunpack.c.h.b16 %v282
  %v1372 = vunpack.c.l.b16 %v283
  %v1373 = vunpack.c.h.b16 %v283
  %v1374 = vunpack.c.l.b16 %v284
  %v1375 = vunpack.c.h.b16 %v284
  %v1376 = vunpack.c.l.b16 %v285
  %v1377 = vunpack.c.h.b16 %v285
  %v1378 = vunpack.c.l.b16 %v286
  %v1379 = vunpack.c.h.b16 %v286
  %v1380 = vunpack.c.l.b16 %v287
  %v1381 = vunpack.c.h.b16 %v287
  %v1382 = vunpack.c.l.b16 %v288
  %v1383 = vunpack.c.h.b16 %v288
  %v1384 = vunpack.c.l.b16 %v289
  %v1385 = vunpack.c.h.b16 %v289
  %v1386 = vunpack.c.l.b16 %v290
  %v1387 = vunpack.c.h.b16 %v290
  %v1388 = vunpack.c.l.b16 %v291
  %v1389 = vunpack.c.h.b16 %v291
  %v1390 = vunpack.c.l.b16 %v292
  %v1391 = vunpack.c.h.b16 %v292
  %v1392 = vunpack.c.l.b16 %v293
  %v1393 = vunpack.c.h.b16 %v293
  %v1394 = vunpack.c.l.b16 %v294
  %v1395 = vunpack.c.h.b16 %v294
  %v1396 = vunpack.c.l.b16 %v295
  %v1397 = vunpack.c.h.b16 %v295
  %v1398 = vunpack.c.l.b16 %v296
  %v1399 = vunpack.c.h.b16 %v296
  %v1400 = vunpack.c.l.b16 %v297
  %v1401 = vunpack.c.h.b16 %v297
  %v1402 = vunpack.c.l.b16 %v298
  %v1403 = vunpack.c.h.b16 %v298
  %v1404 = vunpack.c.l.b16 %v299
  %v1405 = vunpack.c.h.b16 %v299
  %v1406 = vunpack.c.l.b16 %v300
  %v1407 = vunpack.c.h.b16 %v300
  %v1408 = vunpack.c.l.b16 %v301
  %v1409 = vunpack.c.h.b16 %v301
  %v1410 = vunpack.c.l.b16 %v302
  %v1411 = vunpack.c.h.b16 %v302
  %v1412 = vunpack.c.l.b16 %v303
  %v1413 = vunpack.c.h.b16 %v303
  %v1414 = vunpack.c.l.b16 %v304
  %v1415 = vunpack.c.h.b16 %v304
  %v1416 = vunpack.c.l.b16 %v305
  %v1417 = vunpack.c.h.b16 %v305
  %v1418 = vunpack.c.l.b16 %v306
  %v1419 = vunpack.c.h.b16 %v306
  %v1420 = vunpack.c.l.b16 %v307
  %v1421 = vunpack.c.h.b16 %v307
  %v1422 = vunpack.c.l.b16 %v308
  %v1423 = vunpack.c.h.b16 %v308
  %v1424 = vunpack.c.l.b16 %v309
  %v1425 = vunpack.c.h.b16 %v309
  %v1426 = vunpack.c.l.b16 %v310
  %v1427 = vunpack.c.h.b16 %v310
  %v1428 = vunpack.c.l.b16 %v311
  %v1429 = vunpack.c.h.b16 %v311
  %v1430 = vunpack.c.l.b16 %v312
  %v1431 = vunpack.c.h.b16 %v312
  %v1432 = vunpack.c.l.b16 %v313
  %v1433 = vunpack.c.h.b16 %v313
  %v1434 = vunpack.c.l.b16 %v314
  %v1435 = vunpack.c.h.b16 %v314
  %v1436 = vunpack.c.l.b16 %v315
  %v1437 = vunpack.c.h.b16 %v315
  %v1438 = vunpack.c.l.b16 %v316
  %v1439 = vunpack.c.h.b16 %v316
  %v1440 = vunpack.c.l.b16 %v317
  %v1441 = vunpack.c.h.b16 %v317
  %v1442 = vunpack.c.l.b16 %v318
  %v1443 = vunpack.c.h.b16 %v318
  %v1444 = vunpack.c.l.b16 %v319
  %v1445 = vunpack.c.h.b16 %v319
  %v1446 = vunpack.c.l.b16 %v320
  %v1447 = vunpack.c.h.b16 %v320
  %v1448 = vunpack.c.l.b16 %v321
  %v1449 = vunpack.c.h.b16 %v321
  %v1450 = vunpack.c.l.b16 %v322
  %v1451 = vunpack.c.h.b16 %v322
  %v1452 = vunpack.c.l.b16 %v323
  %v1453 = vunpack.c.h.b16 %v323
  %v1454 = vunpack.c.l.b16 %v324
  %v1455 = vunpack.c.h.b16 %v324
  %v1456 = vunpack.c.l.b16 %v325
  %v1457 = vunpack.c.h.b16 %v325
  %v1458 = vunpack.c.l.b16 %v326
  %v1459 = vunpack.c.h.b16 %v326
  %v1460 = vunpack.c.l.b16 %v327
  %v1461 = vunpack.c.h.b16 %v327
  %v1462 = vunpack.c.l.b16 %v328
  %v1463 = vunpack.c.h.b16 %v328
  %v1464 = vunpack.c.l.b16 %v329
  %v1465 = vunpack.c.h.b16 %v329
  %v1466 = vunpack.c.l.b16 %v330
  %v1467 = vunpack.c.h.b16 %v330
  %v1468 = vunpack.c.l.b16 %v331
  %v1469 = vunpack.c.h.b16 %v331
  %v1470 = vunpack.c.l.b16 %v332
  %v1471 = vunpack.c.h.b16 %v332
  %v1472 = vunpack.c.l.b16 %v333
  %v1473 = vunpack.c.h.b16 %v333
  %v1474 = vunpack.c.l.b16 %v334
  %v1475 = vunpack.c.h.b16 %v334
  %v1476 = vunpack.c.l.b16 %v335
  %v1477 = vunpack.c.h.b16 %v335
  %v1478 = vunpack.c.l.b16 %v336
  %v1479 = vunpack.c.h.b16 %v336
  %v1480 = vunpack.c.l.b16 %v337
  %v1481 = vunpack.c.h.b16 %v337
  %v1482 = vunpack.c.l.b16 %v338
  %v1483 = vunpack.c.h.b16 %v338
  %v1484 = vunpack.c.l.b16 %v339
  %v1485 = vunpack.c.h.b16 %v339
  %v1486 = vunpack.c.l.b16 %v340
  %v1487 = vunpack.c.h.b16 %v340
  %v1488 = vunpack.c.l.b16 %v341
  %v1489 = vunpack.c.h.b16 %v341
  %v1490 = vunpack.c.l.b16 %v342
  %v1491 = vunpack.c.h.b16 %v342
  %v1492 = vunpack.c.l.b16 %v343
  %v1493 = vunpack.c.h.b16 %v343
  %v1494 = vunpack.c.l.b16 %v344
  %v1495 = vunpack.c.h.b16 %v344
  %v1496 = vunpack.c.l.b16 %v345
  %v1497 = vunpack.c.h.b16 %v345
  %v1498 = vunpack.c.l.b16 %v346
  %v1499 = vunpack.c.h.b16 %v346
  %v1500 = vunpack.c.l.b16 %v347
  %v1501 = vunpack.c.h.b16 %v347
  %v1502 = vunpack.c.l.b16 %v348
  %v1503 = vunpack.c.h.b16 %v348
  %v1504 = vunpack.c.l.b16 %v349
  %v1505 = vunpack.c.h.b16 %v349
  %v1506 = vunpack.c.l.b16 %v350
  %v1507 = vunpack.c.h.b16 %v350
  %v1508 = vunpack.c.l.b16 %v351
  %v1509 = vunpack.c.h.b16 %v351
  %v1510 = vunpack.c.l.b16 %v352
  %v1511 = vunpack.c.h.b16 %v352
  %v1512 = vunpack.c.l.b16 %v353
  %v1513 = vunpack.c.h.b16 %v353
  %v1514 = vunpack.c.l.b16 %v354
  %v1515 = vunpack.c.h.b16 %v354
  %v1516 = vunpack.c.l.b16 %v355
  %v1517 = vunpack.c.h.b16 %v355
  %v1518 = vunpack.c.l.b16 %v356
  %v1519 = vunpack.c.h.b16 %v356
  %v1520 = vunpack.c.l.b16 %v357
  %v1521 = vunpack.c.h.b16 %v357
  %v1522 = vunpack.c.l.b16 %v358
  %v1523 = vunpack.c.h.b16 %v358
  %v1524 = vunpack.c.l.b16 %v359
  %v1525 = vunpack.c.h.b16 %v359
  %v1526 = vunpack.c.l.b16 %v360
  %v1527 = vunpack.c.h.b16 %v360
  %v1528 = vunpack.c.l.b16 %v361
  %v1529 = vunpack.c.h.b16 %v361
  %v1530 = vunpack.c.l.b16 %v362
  %v1531 = vunpack.c.h.b16 %v362
  %v1532 = vunpack.c.l.b16 %v363
  %v1533 = vunpack.c.h.b16 %v363
  %v1534 = vunpack.c.l.b16 %v364
  %v1535 = vunpack.c.h.b16 %v364
  %v1536 = vunpack.c.l.b16 %v365
  %v1537 = vunpack.c.h.b16 %v365
  %v1538 = vunpack.c.l.b16 %v366
  %v1539 = vunpack.c.h.b16 %v366
  %v1540 = vunpack.c.l.b16 %v367
  %v1541 = vunpack.c.h.b16 %v367
  %v1542 = vunpack.c.l.b16 %v368
  %v1543 = vunpack.c.h.b16 %v368
  %v1544 = vunpack.c.l.b16 %v369
  %v1545 = vunpack.c.h.b16 %v369
  %v1546 = vunpack.c.l.b16 %v370
  %v1547 = vunpack.c.h.b16 %v370
  %v1548 = vunpack.c.l.b16 %v371
  %v1549 = vunpack.c.h.b16 %v371
  %v1550 = vunpack.c.l.b16 %v372
  %v1551 = vunpack.c.h.b16 %v372
  %v1552 = vunpack.c.l.b16 %v373
  %v1553 = vunpack.c.h.b16 %v373
  %v1554 = vunpack.c.l.b16 %v374
  %v1555 = vunpack.c.h.b16 %v374
  %v1556 = vunpack.c.l.b16 %v375
  %v1557 = vunpack.c.h.b16 %v375
  %v1558 = vunpack.c.l.b16 %v376
  %v1559 = vunpack.c.h.b16 %v376
  %v1560 = vunpack.c.l.b16 %v377
  %v1561 = vunpack.c.h.b16 %v377
  %v1562 = vunpack.c.l.b16 %v378
  %v1563 = vunpack.c.h.b16 %v378
  %v1564 = vunpack.c.l.b16 %v379
  %v1565 = vunpack.c.h.b16 %v379
  %v1566 = vunpack.c.l.b16 %v380
  %v1567 = vunpack.c.h.b16 %v380
  %v1568 = vunpack.c.l.b16 %v381
  %v1569 = vunpack.c.h.b16 %v381
  %v1570 = vunpack.c.l.b16 %v382
  %v1571 = vunpack.c.h.b16 %v382
  %v1572 = vunpack.c.l.b16 %v383
  %v1573 = vunpack.c.h.b16 %v383
  %v1574 = vunpack.c.l.b16 %v384
  %v1575 = vunpack.c.h.b16 %v384
  %v1576 = vunpack.c.l.b16 %v385
  %v1577 = vunpack.c.h.b16 %v385
  %v1578 = vunpack.c.l.b16 %v386
  %v1579 = vunpack.c.h.b16 %v386
  %v1580 = vunpack.c.l.b16 %v387
  %v1581 = vunpack.c.h.b16 %v387
  %v1582 = vunpack.c.l.b16 %v388
  %v1583 = vunpack.c.h.b16 %v388
  %v1584 = vunpack.c.l.b16 %v389
  %v1585 = vunpack.c.h.b16 %v389
  %v1586 = vunpack.c.l.b16 %v390
  %v1587 = vunpack.c.h.b16 %v390
  %v1588 = vunpack.c.l.b16 %v391
  %v1589 = vunpack.c.h.b16 %v391
  %v1590 = vunpack.c.l.b16 %v392
  %v1591 = vunpack.c.h.b16 %v392
  %v1592 = vunpack.c.l.b16 %v393
  %v1593 = vunpack.c.h.b16 %v393
  %v1594 = vunpack.c.l.b16 %v394
  %v1595 = vunpack.c.h.b16 %v394
  %v1596 = vunpack.c.l.b16 %v395
  %v1597 = vunpack.c.h.b16 %v395
  %v1598 = vunpack.c.l.b16 %v396
  %v1599 = vunpack.c.h.b16 %v396
  %v1600 = vunpack.c.l.b16 %v397
  %v1601 = vunpack.c.h.b16 %v397
  %v1602 = vunpack.c.l.b16 %v398
  %v1603 = vunpack.c.h.b16 %v398
  %v1604 = vunpack.c.l.b16 %v399
  %v1605 = vunpack.c.h.b16 %v399
  %v1606 = vunpack.c.l.b16 %v400
  %v1607 = vunpack.c.h.b16 %v400
  %v1608 = vunpack.c.l.b16 %v401
  %v1609 = vunpack.c.h.b16 %v401
  %v1610 = vunpack.c.l.b16 %v402
  %v1611 = vunpack.c.h.b16 %v402
  %v1612 = vunpack.c.l.b16 %v403
  %v1613 = vunpack.c.h.b16 %v403
  %v1614 = vunpack.c.l.b16 %v404
  %v1615 = vunpack.c.h.b16 %v404
  %v1616 = vunpack.c.l.b16 %v405
  %v1617 = vunpack.c.h.b16 %v405
  %v1618 = vunpack.c.l.b16 %v406
  %v1619 = vunpack.c.h.b16 %v406
  %v1620 = vunpack.c.l.b16 %v407
  %v1621 = vunpack.c.h.b16 %v407
  %v1622 = vunpack.c.l.b16 %v408
  %v1623 = vunpack.c.h.b16 %v408
  %v1624 = vunpack.c.l.b16 %v409
  %v1625 = vunpack.c.h.b16 %v409
  %v1626 = vunpack.c.l.b16 %v410
  %v1627 = vunpack.c.h.b16 %v410
  %v1628 = vunpack.c.l.b16 %v411
  %v1629 = vunpack.c.h.b16 %v411
  %v1630 = vunpack.c.l.b16 %v412
  %v1631 = vunpack.c.h.b16 %v412
  %v1632 = vunpack.c.l.b16 %v413
  %v1633 = vunpack.c.h.b16 %v413
  %v1634 = vunpack.c.l.b16 %v414
  %v1635 = vunpack.c.h.b16 %v414
  %v1636 = vunpack.c.l.b16 %v415
  %v1637 = vunpack.c.h.b16 %v415
  %v1638 = vunpack.c.l.b16 %v416
  %v1639 = vunpack.c.h.b16 %v416
  %v1640 = vunpack.c.l.b16 %v417
  %v1641 = vunpack.c.h.b16 %v417
  %v1642 = vunpack.c.l.b16 %v418
  %v1643 = vunpack.c.h.b16 %v418
  %v1644 = vunpack.c.l.b16 %v419
  %v1645 = vunpack.c.h.b16 %v419
  %v1646 = vunpack.c.l.b16 %v420
  %v1647 = vunpack.c.h.b16 %v420
  %v1648 = vunpack.c.l.b16 %v421
  %v1649 = vunpack.c.h.b16 %v421
  %v1650 = vunpack.c.l.b16 %v422
  %v1651 = vunpack.c.h.b16 %v422
  %v1652 = vunpack.c.l.b16 %v423
  %v1653 = vunpack.c.h.b16 %v423
  %v1654 = vunpack.c.l.b16 %v424
  %v1655 = vunpack.c.h.b16 %v424
  %v1656 = vunpack.c.l.b16 %v425
  %v1657 = vunpack.c.h.b16 %v425
  %v1658 = vunpack.c.l.b16 %v426
  %v1659 = vunpack.c.h.b16 %v426
  %v1660 = vunpack.c.l.b16 %v427
  %v1661 = vunpack.c.h.b16 %v427
  %v1662 = vunpack.c.l.b16 %v428
  %v1663 = vunpack.c.h.b16 %v428
  %v1664 = vunpack.c.l.b16 %v429
  %v1665 = vunpack.c.h.b16 %v429
  %v1666 = vunpack.c.l.b16 %v430
  %v1667 = vunpack.c.h.b16 %v430
  %v1668 = vunpack.c.l.b16 %v431
  %v1669 = vunpack.c.h.b16 %v431
  %v1670 = vunpack.c.l.b16 %v432
  %v1671 = vunpack.c.h.b16 %v432
  %v1672 = vunpack.c.l.b16 %v433
  %v1673 = vunpack.c.h.b16 %v433
  %v1674 = vunpack.c.l.b16 %v434
  %v1675 = vunpack.c.h.b16 %v434
  %v1676 = vunpack.c.l.b16 %v435
  %v1677 = vunpack.c.h.b16 %v435
  %v1678 = vunpack.c.l.b16 %v436
  %v1679 = vunpack.c.h.b16 %v436
  %v1680 = vunpack.c.l.b16 %v437
  %v1681 = vunpack.c.h.b16 %v437
  %v1682 = vunpack.c.l.b16 %v438
  %v1683 = vunpack.c.h.b16 %v438
  %v1684 = vunpack.c.l.b16 %v439
  %v1685 = vunpack.c.h.b16 %v439
  %v1686 = vunpack.c.l.b16 %v440
  %v1687 = vunpack.c.h.b16 %v440
  %v1688 = vunpack.c.l.b16 %v441
  %v1689 = vunpack.c.h.b16 %v441
  %v1690 = vunpack.c.l.b16 %v442
  %v1691 = vunpack.c.h.b16 %v442
  %v1692 = vunpack.c.l.b16 %v443
  %v1693 = vunpack.c.h.b16 %v443
  %v1694 = vpack.c.b16 %v904, %v894
  %v1695 = vpack.c.b16 %v905, %v895
  %v1696 = vpack.c.b16 %v906, %v896
  %v1697 = vpack.c.b16 %v907, %v897
  %v1698 = vpack.c.b16 %v908, %v898
  %v1699 = vpack.c.b16 %v909, %v899
  %v1700 = vpack.c.b16 %v910, %v900
  %v1701 = vpack.c.b16 %v911, %v901
  %v1702 = vpack.c.b16 %v912, %v902
  %v1703 = vpack.c.b16 %v913, %v903
  %v1704 = vpack.c.b16 %v924, %v914
  %v1705 = vpack.c.b16 %v925, %v915
  %v1706 = vpack.c.b16 %v926, %v916
  %v1707 = vpack.c.b16 %v927, %v917
  %v1708 = vpack.c.b16 %v928, %v918
  %v1709 = vpack.c.b16 %v929, %v919
  %v1710 = vpack.c.b16 %v930, %v920
  %v1711 = vpack.c.b16 %v931, %v921
  %v1712 = vpack.c.b16 %v932, %v922
  %v1713 = vpack.c.b16 %v933, %v923
  %v1714 = vpack.c.b16 %v944, %v934
  %v1715 = vpack.c.b16 %v945, %v935
  %v1716 = vpack.c.b16 %v946, %v936
  %v1717 = vpack.c.b16 %v947, %v937
  %v1718 = vpack.c.b16 %v948, %v938
  %v1719 = vpack.c.b16 %v949, %v939
  %v1720 = vpack.c.b16 %v950, %v940
  %v1721 = vpack.c.b16 %v951, %v941
  %v1722 = vpack.c.b16 %v952, %v942
  %v1723 = vpack.c.b16 %v953, %v943
  %v1724 = vpack.c.b16 %v964, %v954
  %v1725 = vpack.c.b16 %v965, %v955
  %v1726 = vpack.c.b16 %v966, %v956
  %v1727 = vpack.c.b16 %v967, %v957
  %v1728 = vpack.c.b16 %v968, %v958
  %v1729 = vpack.c.b16 %v969, %v959
  %v1730 = vpack.c.b16 %v970, %v960
  %v1731 = vpack.c.b16 %v971, %v961
  %v1732 = vpack.c.b16 %v972, %v962
  %v1733 = vpack.c.b16 %v973, %v963
  %v1734 = vpack.c.b16 %v984, %v974
  %v1735 = vpack.c.b16 %v985, %v975
  %v1736 = vpack.c.b16 %v986, %v976
  %v1737 = vpack.c.b16 %v987, %v977
  %v1738 = vpack.c.b16 %v988, %v978
  %v1739 = vpack.c.b16 %v989, %v979
  %v1740 = vpack.c.b16 %v990, %v980
  %v1741 = vpack.c.b16 %v991, %v981
  %v1742 = vpack.c.b16 %v992, %v982
  %v1743 = vpack.c.b16 %v993, %v983
  %v1744 = vpack.c.b16 %v1004, %v994
  %v1745 = vpack.c.b16 %v1005, %v995
  %v1746 = vpack.c.b16 %v1006, %v996
  %v1747 = vpack.c.b16 %v1007, %v997
  %v1748 = vpack.c.b16 %v1008, %v998
  %v1749 = vpack.c.b16 %v1009, %v999
  %v1750 = vpack.c.b16 %v1010, %v1000
  %v1751 = vpack.c.b16 %v1011, %v1001
  %v1752 = vpack.c.b16 %v1012, %v1002
  %v1753 = vpack.c.b16 %v1013, %v1003
  %v1754 = vpack.c.b16 %v1024, %v1014
  %v1755 = vpack.c.b16 %v1025, %v1015
  %v1756 = vpack.c.b16 %v1026, %v1016
  %v1757 = vpack.c.b16 %v1027, %v1017
  %v1758 = vpack.c.b16 %v1028, %v1018
  %v1759 = vpack.c.b16 %v1029, %v1019
  %v1760 = vpack.c.b16 %v1030, %v1020
  %v1761 = vpack.c.b16 %v1031, %v1021
  %v1762 = vpack.c.b16 %v1032, %v1022
  %v1763 = vpack.c.b16 %v1033, %v1023
  %v1764 = vpack.c.b16 %v1044, %v1034
  %v1765 = vpack.c.b16 %v1045, %v1035
  %v1766 = vpack.c.b16 %v1046, %v1036
  %v1767 = vpack.c.b16 %v1047, %v1037
  %v1768 = vpack.c.b16 %v1048, %v1038
  %v1769 = vpack.c.b16 %v1049, %v1039
  %v1770 = vpack.c.b16 %v1050, %v1040
  %v1771 = vpack.c.b16 %v1051, %v1041
  %v1772 = vpack.c.b16 %v1052, %v1042
  %v1773 = vpack.c.b16 %v1053, %v1043
  %v1774 = vpack.c.b16 %v1064, %v1054
  %v1775 = vpack.c.b16 %v1065, %v1055
  %v1776 = vpack.c.b16 %v1066, %v1056
  %v1777 = vpack.c.b16 %v1067, %v1057
  %v1778 = vpack.c.b16 %v1068, %v1058
  %v1779 = vpack.c.b16 %v1069, %v1059
  %v1780 = vpack.c.b16 %v1070, %v1060
  %v1781 = vpack.c.b16 %v1071, %v1061
  %v1782 = vpack.c.b16 %v1072, %v1062
  %v1783 = vpack.c.b16 %v1073, %v1063
  %v1784 = vpack.c.b16 %v1084, %v1074
  %v1785 = vpack.c.b16 %v1085, %v1075
  %v1786 = vpack.c.b16 %v1086, %v1076
  %v1787 = vpack.c.b16 %v1087, %v1077
  %v1788 = vpack.c.b16 %v1088, %v1078
  %v1789 = vpack.c.b16 %v1089, %v1079
  %v1790 = vpack.c.b16 %v1090, %v1080
  %v1791 = vpack.c.b16 %v1091, %v1081
  %v1792 = vpack.c.b16 %v1092, %v1082
  %v1793 = vpack.c.b16 %v1093, %v1083
  %v1794 = vpack.c.b16 %v1104, %v1094
  %v1795 = vpack.c.b16 %v1105, %v1095
  %v1796 = vpack.c.b16 %v1106, %v1096
  %v1797 = vpack.c.b16 %v1107, %v1097
  %v1798 = vpack.c.b16 %v1108, %v1098
  %v1799 = vpack.c.b16 %v1109, %v1099
  %v1800 = vpack.c.b16 %v1110, %v1100
  %v1801 = vpack.c.b16 %v1111, %v1101
  %v1802 = vpack.c.b16 %v1112, %v1102
  %v1803 = vpack.c.b16 %v1113, %v1103
  %v1804 = vpack.c.b16 %v1124, %v1114
  %v1805 = vpack.c.b16 %v1125, %v1115
  %v1806 = vpack.c.b16 %v1126, %v1116
  %v1807 = vpack.c.b16 %v1127, %v1117
  %v1808 = vpack.c.b16 %v1128, %v1118
  %v1809 = vpack.c.b16 %v1129, %v1119
  %v1810 = vpack.c.b16 %v1130, %v1120
  %v1811 = vpack.c.b16 %v1131, %v1121
  %v1812 = vpack.c.b16 %v1132, %v1122
  %v1813 = vpack.c.b16 %v1133, %v1123
  %v1814 = vpack.c.b16 %v1144, %v1134
  %v1815 = vpack.c.b16 %v1145, %v1135
  %v1816 = vpack.c.b16 %v1146, %v1136
  %v1817 = vpack.c.b16 %v1147, %v1137
  %v1818 = vpack.c.b16 %v1148, %v1138
  %v1819 = vpack.c.b16 %v1149, %v1139
  %v1820 = vpack.c.b16 %v1150, %v1140
  %v1821 = vpack.c.b16 %v1151, %v1141
  %v1822 = vpack.c.b16 %v1152, %v1142
  %v1823 = vpack.c.b16 %v1153, %v1143
  %v1824 = vpack.c.b16 %v1164, %v1154
  %v1825 = vpack.c.b16 %v1165, %v1155
  %v1826 = vpack.c.b16 %v1166, %v1156
  %v1827 = vpack.c.b16 %v1167, %v1157
  %v1828 = vpack.c.b16 %v1168, %v1158
  %v1829 = vpack.c.b16 %v1169, %v1159
  %v1830 = vpack.c.b16 %v1170, %v1160
  %v1831 = vpack.c.b16 %v1171, %v1161
  %v1832 = vpack.c.b16 %v1172, %v1162
  %v1833 = vpack.c.b16 %v1173, %v1163
  %v1834 = vpack.c.b16 %v1184, %v1174
  %v1835 = vpack.c.b16 %v1185, %v1175
  %v1836 = vpack.c.b16 %v1186, %v1176
  %v1837 = vpack.c.b16 %v1187, %v1177
  %v1838 = vpack.c.b16 %v1188, %v1178
  %v1839 = vpack.c.b16 %v1189, %v1179
  %v1840 = vpack.c.b16 %v1190, %v1180
  %v1841 = vpack.c.b16 %v1191, %v1181
  %v1842 = vpack.c.b16 %v1192, %v1182
  %v1843 = vpack.c.b16 %v1193, %v1183
  %v1844 = vpack.c.b16 %v1204, %v1194
  %v1845 = vpack.c.b16 %v1205, %v1195
  %v1846 = vpack.c.b16 %v1206, %v1196
  %v1847 = vpack.c.b16 %v1207, %v1197
  %v1848 = vpack.c.b16 %v1208, %v1198
  %v1849 = vpack.c.b16 %v1209, %v1199
  %v1850 = vpack.c.b16 %v1210, %v1200
  %v1851 = vpack.c.b16 %v1211, %v1201
  %v1852 = vpack.c.b16 %v1212, %v1202
  %v1853 = vpack.c.b16 %v1213, %v1203
  %v1854 = vpack.c.b16 %v1224, %v1214
  %v1855 = vpack.c.b16 %v1225, %v1215
  %v1856 = vpack.c.b16 %v1226, %v1216
  %v1857 = vpack.c.b16 %v1227, %v1217
  %v1858 = vpack.c.b16 %v1228, %v1218
  %v1859 = vpack.c.b16 %v1229, %v1219
  %v1860 = vpack.c.b16 %v1230, %v1220
  %v1861 = vpack.c.b16 %v1231, %v1221
  %v1862 = vpack.c.b16 %v1232, %v1222
  %v1863 = vpack.c.b16 %v1233, %v1223
  %v1864 = vpack.c.b16 %v1244, %v1234
  %v1865 = vpack.c.b16 %v1245, %v1235
  %v1866 = vpack.c.b16 %v1246, %v1236
  %v1867 = vpack.c.b16 %v1247, %v1237
  %v1868 = vpack.c.b16 %v1248, %v1238
  %v1869 = vpack.c.b16 %v1249, %v1239
  %v1870 = vpack.c.b16 %v1250, %v1240
  %v1871 = vpack.c.b16 %v1251, %v1241
  %v1872 = vpack.c.b16 %v1252, %v1242
  %v1873 = vpack.c.b16 %v1253, %v1243
  %v1874 = vpack.c.b16 %v1264, %v1254
  %v1875 = vpack.c.b16 %v1265, %v1255
  %v1876 = vpack.c.b16 %v1266, %v1256
  %v1877 = vpack.c.b16 %v1267, %v1257
  %v1878 = vpack.c.b16 %v1268, %v1258
  %v1879 = vpack.c.b16 %v1269, %v1259
  %v1880 = vpack.c.b16 %v1270, %v1260
  %v1881 = vpack.c.b16 %v1271, %v1261
  %v1882 = vpack.c.b16 %v1272, %v1262
  %v1883 = vpack.c.b16 %v1273, %v1263
  %v1884 = vpack.c.b16 %v1284, %v1274
  %v1885 = vpack.c.b16 %v1285, %v1275
  %v1886 = vpack.c.b16 %v1286, %v1276
  %v1887 = vpack.c.b16 %v1287, %v1277
  %v1888 = vpack.c.b16 %v1288, %v1278
  %v1889 = vpack.c.b16 %v1289, %v1279
  %v1890 = vpack.c.b16 %v1290, %v1280
  %v1891 = vpack.c.b16 %v1291, %v1281
  %v1892 = vpack.c.b16 %v1292, %v1282
  %v1893 = vpack.c.b16 %v1293, %v1283
  %v1894 = vpack.c.b16 %v1304, %v1294
  %v1895 = vpack.c.b16 %v1305, %v1295
  %v1896 = vpack.c.b16 %v1306, %v1296
  %v1897 = vpack.c.b16 %v1307, %v1297
  %v1898 = vpack.c.b16 %v1308, %v1298
  %v1899 = vpack.c.b16 %v1309, %v1299
  %v1900 = vpack.c.b16 %v1310, %v1300
  %v1901 = vpack.c.b16 %v1311, %v1301
  %v1902 = vpack.c.b16 %v1312, %v1302
  %v1903 = vpack.c.b16 %v1313, %v1303
  %v1904 = vpack.c.b16 %v1324, %v1314
  %v1905 = vpack.c.b16 %v1325, %v1315
  %v1906 = vpack.c.b16 %v1326, %v1316
  %v1907 = vpack.c.b16 %v1327, %v1317
  %v1908 = vpack.c.b16 %v1328, %v1318
  %v1909 = vpack.c.b16 %v1329, %v1319
  %v1910 = vpack.c.b16 %v1330, %v1320
  %v1911 = vpack.c.b16 %v1331, %v1321
  %v1912 = vpack.c.b16 %v1332, %v1322
  %v1913 = vpack.c.b16 %v1333, %v1323
  %v1914 = vpack.c.b16 %v1344, %v1334
  %v1915 = vpack.c.b16 %v1345, %v1335
  %v1916 = vpack.c.b16 %v1346, %v1336
  %v1917 = vpack.c.b16 %v1347, %v1337
  %v1918 = vpack.c.b16 %v1348, %v1338
  %v1919 = vpack.c.b16 %v1349, %v1339
  %v1920 = vpack.c.b16 %v1350, %v1340
  %v1921 = vpack.c.b16 %v1351, %v1341
  %v1922 = vpack.c.b16 %v1352, %v1342
  %v1923 = vpack.c.b16 %v1353, %v1343
  %v1924 = vpack.c.b16 %v1364, %v1354
  %v1925 = vpack.c.b16 %v1365, %v1355
  %v1926 = vpack.c.b16 %v1366, %v1356
  %v1927 = vpack.c.b16 %v1367, %v1357
  %v1928 = vpack.c.b16 %v1368, %v1358
  %v1929 = vpack.c.b16 %v1369, %v1359
  %v1930 = vpack.c.b16 %v1370, %v1360
  %v1931 = vpack.c.b16 %v1371, %v1361
  %v1932 = vpack.c.b16 %v1372, %v1362
  %v1933 = vpack.c.b16 %v1373, %v1363
  %v1934 = vpack.c.b16 %v1384, %v1374
  %v1935 = vpack.c.b16 %v1385, %v1375
  %v1936 = vpack.c.b16 %v1386, %v1376
  %v1937 = vpack.c.b16 %v1387, %v1377
  %v1938 = vpack.c.b16 %v1388, %v1378
  %v1939 = vpack.c.b16 %v1389, %v1379
  %v1940 = vpack.c.b16 %v1390, %v1380
  %v1941 = vpack.c.b16 %v1391, %v1381
  %v1942 = vpack.c.b16 %v1392, %v1382
  %v1943 = vpack.c.b16 %v1393, %v1383
  %v1944 = vpack.c.b16 %v1404, %v1394
  %v1945 = vpack.c.b16 %v1405, %v1395
  %v1946 = vpack.c.b16 %v1406, %v1396
  %v1947 = vpack.c.b16 %v1407, %v1397
  %v1948 = vpack.c.b16 %v1408, %v1398
  %v1949 = vpack.c.b16 %v1409, %v1399
  %v1950 = vpack.c.b16 %v1410, %v1400
  %v1951 = vpack.c.b16 %v1411, %v1401
  %v1952 = vpack.c.b16 %v1412, %v1402
  %v1953 = vpack.c.b16 %v1413, %v1403
  %v1954 = vpack.c.b16 %v1424, %v1414
  %v1955 = vpack.c.b16 %v1425, %v1415
  %v1956 = vpack.c.b16 %v1426, %v1416
  %v1957 = vpack.c.b16 %v1427, %v1417
  %v1958 = vpack.c.b16 %v1428, %v1418
  %v1959 = vpack.c.b16 %v1429, %v1419
  %v1960 = vpack.c.b16 %v1430, %v1420
  %v1961 = vpack.c.b16 %v1431, %v1421
  %v1962 = vpack.c.b16 %v1432, %v1422
  %v1963 = vpack.c.b16 %v1433, %v1423
  %v1964 = vpack.c.b16 %v1444, %v1434
  %v1965 = vpack.c.b16 %v1445, %v1435
  %v1966 = vpack.c.b16 %v1446, %v1436
  %v1967 = vpack.c.b16 %v1447, %v1437
  %v1968 = vpack.c.b16 %v1448, %v1438
  %v1969 = vpack.c.b16 %v1449, %v1439
  %v1970 = vpack.c.b16 %v1450, %v1440
  %v1971 = vpack.c.b16 %v1451, %v1441
  %v1972 = vpack.c.b16 %v1452, %v1442
  %v1973 = vpack.c.b16 %v1453, %v1443
  %v1974 = vpack.c.b16 %v1464, %v1454
  %v1975 = vpack.c.b16 %v1465, %v1455
  %v1976 = vpack.c.b16 %v1466, %v1456
  %v1977 = vpack.c.b16 %v1467, %v1457
  %v1978 = vpack.c.b16 %v1468, %v1458
  %v1979 = vpack.c.b16 %v1469, %v1459
  %v1980 = vpack.c.b16 %v1470, %v1460
  %v1981 = vpack.c.b16 %v1471, %v1461
  %v1982 = vpack.c.b16 %v1472, %v1462
  %v1983 = vpack.c.b16 %v1473, %v1463
  %v1984 = vpack.c.b16 %v1484, %v1474
  %v1985 = vpack.c.b16 %v1485, %v1475
  %v1986 = vpack.c.b16 %v1486, %v1476
  %v1987 = vpack.c.b16 %v1487, %v1477
  %v1988 = vpack.c.b16 %v1488, %v1478
  %v1989 = vpack.c.b16 %v1489, %v1479
  %v1990 = vpack.c.b16 %v1490, %v1480
  %v1991 = vpack.c.b16 %v1491, %v1481
  %v1992 = vpack.c.b16 %v1492, %v1482
  %v1993 = vpack.c.b16 %v1493, %v1483
  %v1994 = vpack.c.b16 %v1504, %v1494
  %v1995 = vpack.c.b16 %v1505, %v1495
  %v1996 = vpack.c.b16 %v1506, %v1496
  %v1997 = vpack.c.b16 %v1507, %v1497
  %v1998 = vpack.c.b16 %v1508, %v1498
  %v1999 = vpack.c.b16 %v1509, %v1499
  %v2000 = vpack.c.b16 %v1510, %v1500
  %v2001 = vpack.c.b16 %v1511, %v1501
  %v2002 = vpack.c.b16 %v1512, %v1502
  %v2003 = vpack.c.b16 %v1513, %v1503
  %v2004 = vpack.c.b16 %v1524, %v1514
  %v2005 = vpack.c.b16 %v1525, %v1515
  %v2006 = vpack.c.b16 %v1526, %v1516
  %v2007 = vpack.c.b16 %v1527, %v1517
  %v2008 = vpack.c.b16 %v1528, %v1518
  %v2009 = vpack.c.b16 %v1529, %v1519
  %v2010 = vpack.c.b16 %v1530, %v1520
  %v2011 = vpack.c.b16 %v1531, %v1521
  %v2012 = vpack.c.b16 %v1532, %v1522
  %v2013 = vpack.c.b16 %v1533, %v1523
  %v2014 = vpack.c.b16 %v1544, %v1534
  %v2015 = vpack.c.b16 %v1545, %v1535
  %v2016 = vpack.c.b16 %v1546, %v1536
  %v2017 = vpack.c.b16 %v1547, %v1537
  %v2018 = vpack.c.b16 %v1548, %v1538
  %v2019 = vpack.c.b16 %v1549, %v1539
  %v2020 = vpack.c.b16 %v1550, %v1540
  %v2021 = vpack.c.b16 %v1551, %v1541
  %v2022 = vpack.c.b16 %v1552, %v1542
  %v2023 = vpack.c.b16 %v1553, %v1543
  %v2024 = vpack.c.b16 %v1564, %v1554
  %v2025 = vpack.c.b16 %v1565, %v1555
  %v2026 = vpack.c.b16 %v1566, %v1556
  %v2027 = vpack.c.b16 %v1567, %v1557
  %v2028 = vpack.c.b16 %v1568, %v1558
  %v2029 = vpack.c.b16 %v1569, %v1559
  %v2030 = vpack.c.b16 %v1570, %v1560
  %v2031 = vpack.c.b16 %v1571, %v1561
  %v2032 = vpack.c.b16 %v1572, %v1562
  %v2033 = vpack.c.b16 %v1573, %v1563
  %v2034 = vpack.c.b16 %v1584, %v1574
  %v2035 = vpack.c.b16 %v1585, %v1575
  %v2036 = vpack.c.b16 %v1586, %v1576
  %v2037 = vpack.c.b16 %v1587, %v1577
  %v2038 = vpack.c.b16 %v1588, %v1578
  %v2039 = vpack.c.b16 %v1589, %v1579
  %v2040 = vpack.c.b16 %v1590, %v1580
  %v2041 = vpack.c.b16 %v1591, %v1581
  %v2042 = vpack.c.b16 %v1592, %v1582
  %v2043 = vpack.c.b16 %v1593, %v1583
  %v2044 = vpack.c.b16 %v1604, %v1594
  %v2045 = vpack.c.b16 %v1605, %v1595
  %v2046 = vpack.c.b16 %v1606, %v1596
  %v2047 = vpack.c.b16 %v1607, %v1597
  %v2048 = vpack.c.b16 %v1608, %v1598
  %v2049 = vpack.c.b16 %v1609, %v1599
  %v2050 = vpack.c.b16 %v1610, %v1600
  %v2051 = vpack.c.b16 %v1611, %v1601
  %v2052 = vpack.c.b16 %v1612, %v1602
  %v2053 = vpack.c.b16 %v1613, %v1603
  %v2054 = vpack.c.b16 %v1624, %v1614
  %v2055 = vpack.c.b16 %v1625, %v1615
  %v2056 = vpack.c.b16 %v1626, %v1616
  %v2057 = vpack.c.b16 %v1627, %v1617
  %v2058 = vpack.c.b16 %v1628, %v1618
  %v2059 = vpack.c.b16 %v1629, %v1619
  %v2060 = vpack.c.b16 %v1630, %v1620
  %v2061 = vpack.c.b16 %v1631, %v1621
  %v2062 = vpack.c.b16 %v1632, %v1622
  %v2063 = vpack.c.b16 %v1633, %v1623
  %v2064 = vpack.c.b16 %v1644, %v1634
  %v2065 = vpack.c.b16 %v1645, %v1635
  %v2066 = vpack.c.b16 %v1646, %v1636
  %v2067 = vpack.c.b16 %v1647, %v1637
  %v2068 = vpack.c.b16 %v1648, %v1638
  %v2069 = vpack.c.b16 %v1649, %v1639
  %v2070 = vpack.c.b16 %v1650, %v1640
  %v2071 = vpack.c.b16 %v1651, %v1641
  %v2072 = vpack.c.b16 %v1652, %v1642
  %v2073 = vpack.c.b16 %v1653, %v1643
  %v2074 = vpack.c.b16 %v1664, %v1654
  %v2075 = vpack.c.b16 %v1665, %v1655
  %v2076 = vpack.c.b16 %v1666, %v1656
  %v2077 = vpack.c.b16 %v1667, %v1657
  %v2078 = vpack.c.b16 %v1668, %v1658
  %v2079 = vpack.c.b16 %v1669, %v1659
  %v2080 = vpack.c.b16 %v1670, %v1660
  %v2081 = vpack.c.b16 %v1671, %v1661
  %v2082 = vpack.c.b16 %v1672, %v1662
  %v2083 = vpack.c.b16 %v1673, %v1663
  %v2084 = vpack.c.b16 %v1684, %v1674
  %v2085 = vpack.c.b16 %v1685, %v1675
  %v2086 = vpack.c.b16 %v1686, %v1676
  %v2087 = vpack.c.b16 %v1687, %v1677
  %v2088 = vpack.c.b16 %v1688, %v1678
  %v2089 = vpack.c.b16 %v1689, %v1679
  %v2090 = vpack.c.b16 %v1690, %v1680
  %v2091 = vpack.c.b16 %v1691, %v1681
  %v2092 = vpack.c.b16 %v1692, %v1682
  %v2093 = vpack.c.b16 %v1693, %v1683
  %2494 = vmatpush.bf16.msra.mxu0 %v1764
  %2495 = vmatpush.bf16.msra.mxu0 %v1754
  %2496 = vmatpush.bf16.msra.mxu0 %v1744
  %2497 = vmatpush.bf16.msra.mxu0 %v1734
  %2498 = vmatpush.bf16.msra.mxu0 %v1724
  %2499 = vmatpush.bf16.msra.mxu0 %v1714
  %2500 = vmatpush.bf16.msra.mxu0 %v1704
  %2501 = vmatpush.bf16.msra.mxu0 %v1694
  %2502 = vmatmul.bf16.gmra.mxu0 %v484
  %v2503 = vpop.f32.mrf.mxu0
  %v2504 = vadd.f32 %v448, %v2503
  %v2505 = vpop.f32.mrf.mxu0
  %v2506 = vadd.f32 %v448, %v2505
  %2507 = vdwg.mxu0
  %2508 = vmatpush.bf16.msra.mxu0 %v1844
  %2509 = vmatpush.bf16.msra.mxu0 %v1834
  %2510 = vmatpush.bf16.msra.mxu0 %v1824
  %2511 = vmatpush.bf16.msra.mxu0 %v1814
  %2512 = vmatpush.bf16.msra.mxu0 %v1804
  %2513 = vmatpush.bf16.msra.mxu0 %v1794
  %2514 = vmatpush.bf16.msra.mxu0 %v1784
  %2515 = vmatpush.bf16.msra.mxu0 %v1774
  %2516 = vmatmul.bf16.gmra.mxu0 %v485
  %v2517 = vpop.f32.mrf.mxu0
  %v2518 = vadd.f32 %v2504, %v2517
  %v2519 = vpop.f32.mrf.mxu0
  %v2520 = vadd.f32 %v2506, %v2519
  %2521 = vdwg.mxu0
  %2522 = vmatpush.bf16.msra.mxu0 %v1924
  %2523 = vmatpush.bf16.msra.mxu0 %v1914
  %2524 = vmatpush.bf16.msra.mxu0 %v1904
  %2525 = vmatpush.bf16.msra.mxu0 %v1894
  %2526 = vmatpush.bf16.msra.mxu0 %v1884
  %2527 = vmatpush.bf16.msra.mxu0 %v1874
  %2528 = vmatpush.bf16.msra.mxu0 %v1864
  %2529 = vmatpush.bf16.msra.mxu0 %v1854
  %2530 = vmatmul.bf16.gmra.mxu0 %v486
  %v2531 = vpop.f32.mrf.mxu0
  %v2532 = vadd.f32 %v2518, %v2531
  %v2533 = vpop.f32.mrf.mxu0
  %v2534 = vadd.f32 %v2520, %v2533
  %2535 = vdwg.mxu0
  %2536 = vmatpush.bf16.msra.mxu0 %v2004
  %2537 = vmatpush.bf16.msra.mxu0 %v1994
  %2538 = vmatpush.bf16.msra.mxu0 %v1984
  %2539 = vmatpush.bf16.msra.mxu0 %v1974
  %2540 = vmatpush.bf16.msra.mxu0 %v1964
  %2541 = vmatpush.bf16.msra.mxu0 %v1954
  %2542 = vmatpush.bf16.msra.mxu0 %v1944
  %2543 = vmatpush.bf16.msra.mxu0 %v1934
  %2544 = vmatmul.bf16.gmra.mxu0 %v487
  %v2545 = vpop.f32.mrf.mxu0
  %v2546 = vadd.f32 %v2532, %v2545
  %v2547 = vpop.f32.mrf.mxu0
  %v2548 = vadd.f32 %v2534, %v2547
  %2549 = vdwg.mxu0
  %2550 = vmatpush.bf16.msra.mxu0 %v2084
  %2551 = vmatpush.bf16.msra.mxu0 %v2074
  %2552 = vmatpush.bf16.msra.mxu0 %v2064
  %2553 = vmatpush.bf16.msra.mxu0 %v2054
  %2554 = vmatpush.bf16.msra.mxu0 %v2044
  %2555 = vmatpush.bf16.msra.mxu0 %v2034
  %2556 = vmatpush.bf16.msra.mxu0 %v2024
  %2557 = vmatpush.bf16.msra.mxu0 %v2014
  %2558 = vmatmul.bf16.gmra.mxu0 %v488
  %v2559 = vpop.f32.mrf.mxu0
  %v2560 = vadd.f32 %v2546, %v2559
  %v2561 = vpop.f32.mrf.mxu0
  %v2562 = vadd.f32 %v2548, %v2561
  %2563 = vdwg.mxu0
  %2564 = vmatpush.bf16.msra.mxu0 %v1765
  %2565 = vmatpush.bf16.msra.mxu0 %v1755
  %2566 = vmatpush.bf16.msra.mxu0 %v1745
  %2567 = vmatpush.bf16.msra.mxu0 %v1735
  %2568 = vmatpush.bf16.msra.mxu0 %v1725
  %2569 = vmatpush.bf16.msra.mxu0 %v1715
  %2570 = vmatpush.bf16.msra.mxu0 %v1705
  %2571 = vmatpush.bf16.msra.mxu0 %v1695
  %2572 = vmatmul.bf16.gmra.mxu0 %v484
  %v2573 = vpop.f32.mrf.mxu0
  %v2574 = vadd.f32 %v449, %v2573
  %v2575 = vpop.f32.mrf.mxu0
  %v2576 = vadd.f32 %v449, %v2575
  %2577 = vdwg.mxu0
  %2578 = vmatpush.bf16.msra.mxu0 %v1845
  %2579 = vmatpush.bf16.msra.mxu0 %v1835
  %2580 = vmatpush.bf16.msra.mxu0 %v1825
  %2581 = vmatpush.bf16.msra.mxu0 %v1815
  %2582 = vmatpush.bf16.msra.mxu0 %v1805
  %2583 = vmatpush.bf16.msra.mxu0 %v1795
  %2584 = vmatpush.bf16.msra.mxu0 %v1785
  %2585 = vmatpush.bf16.msra.mxu0 %v1775
  %2586 = vmatmul.bf16.gmra.mxu0 %v485
  %v2587 = vpop.f32.mrf.mxu0
  %v2588 = vadd.f32 %v2574, %v2587
  %v2589 = vpop.f32.mrf.mxu0
  %v2590 = vadd.f32 %v2576, %v2589
  %2591 = vdwg.mxu0
  %2592 = vmatpush.bf16.msra.mxu0 %v1925
  %2593 = vmatpush.bf16.msra.mxu0 %v1915
  %2594 = vmatpush.bf16.msra.mxu0 %v1905
  %2595 = vmatpush.bf16.msra.mxu0 %v1895
  %2596 = vmatpush.bf16.msra.mxu0 %v1885
  %2597 = vmatpush.bf16.msra.mxu0 %v1875
  %2598 = vmatpush.bf16.msra.mxu0 %v1865
  %2599 = vmatpush.bf16.msra.mxu0 %v1855
  %2600 = vmatmul.bf16.gmra.mxu0 %v486
  %v2601 = vpop.f32.mrf.mxu0
  %v2602 = vadd.f32 %v2588, %v2601
  %v2603 = vpop.f32.mrf.mxu0
  %v2604 = vadd.f32 %v2590, %v2603
  %2605 = vdwg.mxu0
  %2606 = vmatpush.bf16.msra.mxu0 %v2005
  %2607 = vmatpush.bf16.msra.mxu0 %v1995
  %2608 = vmatpush.bf16.msra.mxu0 %v1985
  %2609 = vmatpush.bf16.msra.mxu0 %v1975
  %2610 = vmatpush.bf16.msra.mxu0 %v1965
  %2611 = vmatpush.bf16.msra.mxu0 %v1955
  %2612 = vmatpush.bf16.msra.mxu0 %v1945
  %2613 = vmatpush.bf16.msra.mxu0 %v1935
  %2614 = vmatmul.bf16.gmra.mxu0 %v487
  %v2615 = vpop.f32.mrf.mxu0
  %v2616 = vadd.f32 %v2602, %v2615
  %v2617 = vpop.f32.mrf.mxu0
  %v2618 = vadd.f32 %v2604, %v2617
  %2619 = vdwg.mxu0
  %2620 = vmatpush.bf16.msra.mxu0 %v2085
  %2621 = vmatpush.bf16.msra.mxu0 %v2075
  %2622 = vmatpush.bf16.msra.mxu0 %v2065
  %2623 = vmatpush.bf16.msra.mxu0 %v2055
  %2624 = vmatpush.bf16.msra.mxu0 %v2045
  %2625 = vmatpush.bf16.msra.mxu0 %v2035
  %2626 = vmatpush.bf16.msra.mxu0 %v2025
  %2627 = vmatpush.bf16.msra.mxu0 %v2015
  %2628 = vmatmul.bf16.gmra.mxu0 %v488
  %v2629 = vpop.f32.mrf.mxu0
  %v2630 = vadd.f32 %v2616, %v2629
  %v2631 = vpop.f32.mrf.mxu0
  %v2632 = vadd.f32 %v2618, %v2631
  %2633 = vdwg.mxu0
  %2634 = vmatpush.bf16.msra.mxu0 %v1766
  %2635 = vmatpush.bf16.msra.mxu0 %v1756
  %2636 = vmatpush.bf16.msra.mxu0 %v1746
  %2637 = vmatpush.bf16.msra.mxu0 %v1736
  %2638 = vmatpush.bf16.msra.mxu0 %v1726
  %2639 = vmatpush.bf16.msra.mxu0 %v1716
  %2640 = vmatpush.bf16.msra.mxu0 %v1706
  %2641 = vmatpush.bf16.msra.mxu0 %v1696
  %2642 = vmatmul.bf16.gmra.mxu0 %v484
  %v2643 = vpop.f32.mrf.mxu0
  %v2644 = vadd.f32 %v450, %v2643
  %v2645 = vpop.f32.mrf.mxu0
  %v2646 = vadd.f32 %v450, %v2645
  %2647 = vdwg.mxu0
  %2648 = vmatpush.bf16.msra.mxu0 %v1846
  %2649 = vmatpush.bf16.msra.mxu0 %v1836
  %2650 = vmatpush.bf16.msra.mxu0 %v1826
  %2651 = vmatpush.bf16.msra.mxu0 %v1816
  %2652 = vmatpush.bf16.msra.mxu0 %v1806
  %2653 = vmatpush.bf16.msra.mxu0 %v1796
  %2654 = vmatpush.bf16.msra.mxu0 %v1786
  %2655 = vmatpush.bf16.msra.mxu0 %v1776
  %2656 = vmatmul.bf16.gmra.mxu0 %v485
  %v2657 = vpop.f32.mrf.mxu0
  %v2658 = vadd.f32 %v2644, %v2657
  %v2659 = vpop.f32.mrf.mxu0
  %v2660 = vadd.f32 %v2646, %v2659
  %2661 = vdwg.mxu0
  %2662 = vmatpush.bf16.msra.mxu0 %v1926
  %2663 = vmatpush.bf16.msra.mxu0 %v1916
  %2664 = vmatpush.bf16.msra.mxu0 %v1906
  %2665 = vmatpush.bf16.msra.mxu0 %v1896
  %2666 = vmatpush.bf16.msra.mxu0 %v1886
  %2667 = vmatpush.bf16.msra.mxu0 %v1876
  %2668 = vmatpush.bf16.msra.mxu0 %v1866
  %2669 = vmatpush.bf16.msra.mxu0 %v1856
  %2670 = vmatmul.bf16.gmra.mxu0 %v486
  %v2671 = vpop.f32.mrf.mxu0
  %v2672 = vadd.f32 %v2658, %v2671
  %v2673 = vpop.f32.mrf.mxu0
  %v2674 = vadd.f32 %v2660, %v2673
  %2675 = vdwg.mxu0
  %2676 = vmatpush.bf16.msra.mxu0 %v2006
  %2677 = vmatpush.bf16.msra.mxu0 %v1996
  %2678 = vmatpush.bf16.msra.mxu0 %v1986
  %2679 = vmatpush.bf16.msra.mxu0 %v1976
  %2680 = vmatpush.bf16.msra.mxu0 %v1966
  %2681 = vmatpush.bf16.msra.mxu0 %v1956
  %2682 = vmatpush.bf16.msra.mxu0 %v1946
  %2683 = vmatpush.bf16.msra.mxu0 %v1936
  %2684 = vmatmul.bf16.gmra.mxu0 %v487
  %v2685 = vpop.f32.mrf.mxu0
  %v2686 = vadd.f32 %v2672, %v2685
  %v2687 = vpop.f32.mrf.mxu0
  %v2688 = vadd.f32 %v2674, %v2687
  %2689 = vdwg.mxu0
  %2690 = vmatpush.bf16.msra.mxu0 %v2086
  %2691 = vmatpush.bf16.msra.mxu0 %v2076
  %2692 = vmatpush.bf16.msra.mxu0 %v2066
  %2693 = vmatpush.bf16.msra.mxu0 %v2056
  %2694 = vmatpush.bf16.msra.mxu0 %v2046
  %2695 = vmatpush.bf16.msra.mxu0 %v2036
  %2696 = vmatpush.bf16.msra.mxu0 %v2026
  %2697 = vmatpush.bf16.msra.mxu0 %v2016
  %2698 = vmatmul.bf16.gmra.mxu0 %v488
  %v2699 = vpop.f32.mrf.mxu0
  %v2700 = vadd.f32 %v2686, %v2699
  %v2701 = vpop.f32.mrf.mxu0
  %v2702 = vadd.f32 %v2688, %v2701
  %2703 = vdwg.mxu0
  %2704 = vmatpush.bf16.msra.mxu0 %v1767
  %2705 = vmatpush.bf16.msra.mxu0 %v1757
  %2706 = vmatpush.bf16.msra.mxu0 %v1747
  %2707 = vmatpush.bf16.msra.mxu0 %v1737
  %2708 = vmatpush.bf16.msra.mxu0 %v1727
  %2709 = vmatpush.bf16.msra.mxu0 %v1717
  %2710 = vmatpush.bf16.msra.mxu0 %v1707
  %2711 = vmatpush.bf16.msra.mxu0 %v1697
  %2712 = vmatmul.bf16.gmra.mxu0 %v484
  %v2713 = vpop.f32.mrf.mxu0
  %v2714 = vadd.f32 %v451, %v2713
  %v2715 = vpop.f32.mrf.mxu0
  %v2716 = vadd.f32 %v451, %v2715
  %2717 = vdwg.mxu0
  %2718 = vmatpush.bf16.msra.mxu0 %v1847
  %2719 = vmatpush.bf16.msra.mxu0 %v1837
  %2720 = vmatpush.bf16.msra.mxu0 %v1827
  %2721 = vmatpush.bf16.msra.mxu0 %v1817
  %2722 = vmatpush.bf16.msra.mxu0 %v1807
  %2723 = vmatpush.bf16.msra.mxu0 %v1797
  %2724 = vmatpush.bf16.msra.mxu0 %v1787
  %2725 = vmatpush.bf16.msra.mxu0 %v1777
  %2726 = vmatmul.bf16.gmra.mxu0 %v485
  %v2727 = vpop.f32.mrf.mxu0
  %v2728 = vadd.f32 %v2714, %v2727
  %v2729 = vpop.f32.mrf.mxu0
  %v2730 = vadd.f32 %v2716, %v2729
  %2731 = vdwg.mxu0
  %2732 = vmatpush.bf16.msra.mxu0 %v1927
  %2733 = vmatpush.bf16.msra.mxu0 %v1917
  %2734 = vmatpush.bf16.msra.mxu0 %v1907
  %2735 = vmatpush.bf16.msra.mxu0 %v1897
  %2736 = vmatpush.bf16.msra.mxu0 %v1887
  %2737 = vmatpush.bf16.msra.mxu0 %v1877
  %2738 = vmatpush.bf16.msra.mxu0 %v1867
  %2739 = vmatpush.bf16.msra.mxu0 %v1857
  %2740 = vmatmul.bf16.gmra.mxu0 %v486
  %v2741 = vpop.f32.mrf.mxu0
  %v2742 = vadd.f32 %v2728, %v2741
  %v2743 = vpop.f32.mrf.mxu0
  %v2744 = vadd.f32 %v2730, %v2743
  %2745 = vdwg.mxu0
  %2746 = vmatpush.bf16.msra.mxu0 %v2007
  %2747 = vmatpush.bf16.msra.mxu0 %v1997
  %2748 = vmatpush.bf16.msra.mxu0 %v1987
  %2749 = vmatpush.bf16.msra.mxu0 %v1977
  %2750 = vmatpush.bf16.msra.mxu0 %v1967
  %2751 = vmatpush.bf16.msra.mxu0 %v1957
  %2752 = vmatpush.bf16.msra.mxu0 %v1947
  %2753 = vmatpush.bf16.msra.mxu0 %v1937
  %2754 = vmatmul.bf16.gmra.mxu0 %v487
  %v2755 = vpop.f32.mrf.mxu0
  %v2756 = vadd.f32 %v2742, %v2755
  %v2757 = vpop.f32.mrf.mxu0
  %v2758 = vadd.f32 %v2744, %v2757
  %2759 = vdwg.mxu0
  %2760 = vmatpush.bf16.msra.mxu0 %v2087
  %2761 = vmatpush.bf16.msra.mxu0 %v2077
  %2762 = vmatpush.bf16.msra.mxu0 %v2067
  %2763 = vmatpush.bf16.msra.mxu0 %v2057
  %2764 = vmatpush.bf16.msra.mxu0 %v2047
  %2765 = vmatpush.bf16.msra.mxu0 %v2037
  %2766 = vmatpush.bf16.msra.mxu0 %v2027
  %2767 = vmatpush.bf16.msra.mxu0 %v2017
  %2768 = vmatmul.bf16.gmra.mxu0 %v488
  %v2769 = vpop.f32.mrf.mxu0
  %v2770 = vadd.f32 %v2756, %v2769
  %v2771 = vpop.f32.mrf.mxu0
  %v2772 = vadd.f32 %v2758, %v2771
  %2773 = vdwg.mxu0
  %2774 = vmatpush.bf16.msra.mxu0 %v1768
  %2775 = vmatpush.bf16.msra.mxu0 %v1758
  %2776 = vmatpush.bf16.msra.mxu0 %v1748
  %2777 = vmatpush.bf16.msra.mxu0 %v1738
  %2778 = vmatpush.bf16.msra.mxu0 %v1728
  %2779 = vmatpush.bf16.msra.mxu0 %v1718
  %2780 = vmatpush.bf16.msra.mxu0 %v1708
  %2781 = vmatpush.bf16.msra.mxu0 %v1698
  %2782 = vmatmul.bf16.gmra.mxu0 %v484
  %v2783 = vpop.f32.mrf.mxu0
  %v2784 = vadd.f32 %v452, %v2783
  %v2785 = vpop.f32.mrf.mxu0
  %v2786 = vadd.f32 %v452, %v2785
  %2787 = vdwg.mxu0
  %2788 = vmatpush.bf16.msra.mxu0 %v1848
  %2789 = vmatpush.bf16.msra.mxu0 %v1838
  %2790 = vmatpush.bf16.msra.mxu0 %v1828
  %2791 = vmatpush.bf16.msra.mxu0 %v1818
  %2792 = vmatpush.bf16.msra.mxu0 %v1808
  %2793 = vmatpush.bf16.msra.mxu0 %v1798
  %2794 = vmatpush.bf16.msra.mxu0 %v1788
  %2795 = vmatpush.bf16.msra.mxu0 %v1778
  %2796 = vmatmul.bf16.gmra.mxu0 %v485
  %v2797 = vpop.f32.mrf.mxu0
  %v2798 = vadd.f32 %v2784, %v2797
  %v2799 = vpop.f32.mrf.mxu0
  %v2800 = vadd.f32 %v2786, %v2799
  %2801 = vdwg.mxu0
  %2802 = vmatpush.bf16.msra.mxu0 %v1928
  %2803 = vmatpush.bf16.msra.mxu0 %v1918
  %2804 = vmatpush.bf16.msra.mxu0 %v1908
  %2805 = vmatpush.bf16.msra.mxu0 %v1898
  %2806 = vmatpush.bf16.msra.mxu0 %v1888
  %2807 = vmatpush.bf16.msra.mxu0 %v1878
  %2808 = vmatpush.bf16.msra.mxu0 %v1868
  %2809 = vmatpush.bf16.msra.mxu0 %v1858
  %2810 = vmatmul.bf16.gmra.mxu0 %v486
  %v2811 = vpop.f32.mrf.mxu0
  %v2812 = vadd.f32 %v2798, %v2811
  %v2813 = vpop.f32.mrf.mxu0
  %v2814 = vadd.f32 %v2800, %v2813
  %2815 = vdwg.mxu0
  %2816 = vmatpush.bf16.msra.mxu0 %v2008
  %2817 = vmatpush.bf16.msra.mxu0 %v1998
  %2818 = vmatpush.bf16.msra.mxu0 %v1988
  %2819 = vmatpush.bf16.msra.mxu0 %v1978
  %2820 = vmatpush.bf16.msra.mxu0 %v1968
  %2821 = vmatpush.bf16.msra.mxu0 %v1958
  %2822 = vmatpush.bf16.msra.mxu0 %v1948
  %2823 = vmatpush.bf16.msra.mxu0 %v1938
  %2824 = vmatmul.bf16.gmra.mxu0 %v487
  %v2825 = vpop.f32.mrf.mxu0
  %v2826 = vadd.f32 %v2812, %v2825
  %v2827 = vpop.f32.mrf.mxu0
  %v2828 = vadd.f32 %v2814, %v2827
  %2829 = vdwg.mxu0
  %2830 = vmatpush.bf16.msra.mxu0 %v2088
  %2831 = vmatpush.bf16.msra.mxu0 %v2078
  %2832 = vmatpush.bf16.msra.mxu0 %v2068
  %2833 = vmatpush.bf16.msra.mxu0 %v2058
  %2834 = vmatpush.bf16.msra.mxu0 %v2048
  %2835 = vmatpush.bf16.msra.mxu0 %v2038
  %2836 = vmatpush.bf16.msra.mxu0 %v2028
  %2837 = vmatpush.bf16.msra.mxu0 %v2018
  %2838 = vmatmul.bf16.gmra.mxu0 %v488
  %v2839 = vpop.f32.mrf.mxu0
  %v2840 = vadd.f32 %v2826, %v2839
  %v2841 = vpop.f32.mrf.mxu0
  %v2842 = vadd.f32 %v2828, %v2841
  %2843 = vdwg.mxu0
  %2844 = vmatpush.bf16.msra.mxu0 %v1769
  %2845 = vmatpush.bf16.msra.mxu0 %v1759
  %2846 = vmatpush.bf16.msra.mxu0 %v1749
  %2847 = vmatpush.bf16.msra.mxu0 %v1739
  %2848 = vmatpush.bf16.msra.mxu0 %v1729
  %2849 = vmatpush.bf16.msra.mxu0 %v1719
  %2850 = vmatpush.bf16.msra.mxu0 %v1709
  %2851 = vmatpush.bf16.msra.mxu0 %v1699
  %2852 = vmatmul.bf16.gmra.mxu0 %v484
  %v2853 = vpop.f32.mrf.mxu0
  %v2854 = vadd.f32 %v453, %v2853
  %v2855 = vpop.f32.mrf.mxu0
  %v2856 = vadd.f32 %v453, %v2855
  %2857 = vdwg.mxu0
  %2858 = vmatpush.bf16.msra.mxu0 %v1849
  %2859 = vmatpush.bf16.msra.mxu0 %v1839
  %2860 = vmatpush.bf16.msra.mxu0 %v1829
  %2861 = vmatpush.bf16.msra.mxu0 %v1819
  %2862 = vmatpush.bf16.msra.mxu0 %v1809
  %2863 = vmatpush.bf16.msra.mxu0 %v1799
  %2864 = vmatpush.bf16.msra.mxu0 %v1789
  %2865 = vmatpush.bf16.msra.mxu0 %v1779
  %2866 = vmatmul.bf16.gmra.mxu0 %v485
  %v2867 = vpop.f32.mrf.mxu0
  %v2868 = vadd.f32 %v2854, %v2867
  %v2869 = vpop.f32.mrf.mxu0
  %v2870 = vadd.f32 %v2856, %v2869
  %2871 = vdwg.mxu0
  %2872 = vmatpush.bf16.msra.mxu0 %v1929
  %2873 = vmatpush.bf16.msra.mxu0 %v1919
  %2874 = vmatpush.bf16.msra.mxu0 %v1909
  %2875 = vmatpush.bf16.msra.mxu0 %v1899
  %2876 = vmatpush.bf16.msra.mxu0 %v1889
  %2877 = vmatpush.bf16.msra.mxu0 %v1879
  %2878 = vmatpush.bf16.msra.mxu0 %v1869
  %2879 = vmatpush.bf16.msra.mxu0 %v1859
  %2880 = vmatmul.bf16.gmra.mxu0 %v486
  %v2881 = vpop.f32.mrf.mxu0
  %v2882 = vadd.f32 %v2868, %v2881
  %v2883 = vpop.f32.mrf.mxu0
  %v2884 = vadd.f32 %v2870, %v2883
  %2885 = vdwg.mxu0
  %2886 = vmatpush.bf16.msra.mxu0 %v2009
  %2887 = vmatpush.bf16.msra.mxu0 %v1999
  %2888 = vmatpush.bf16.msra.mxu0 %v1989
  %2889 = vmatpush.bf16.msra.mxu0 %v1979
  %2890 = vmatpush.bf16.msra.mxu0 %v1969
  %2891 = vmatpush.bf16.msra.mxu0 %v1959
  %2892 = vmatpush.bf16.msra.mxu0 %v1949
  %2893 = vmatpush.bf16.msra.mxu0 %v1939
  %2894 = vmatmul.bf16.gmra.mxu0 %v487
  %v2895 = vpop.f32.mrf.mxu0
  %v2896 = vadd.f32 %v2882, %v2895
  %v2897 = vpop.f32.mrf.mxu0
  %v2898 = vadd.f32 %v2884, %v2897
  %2899 = vdwg.mxu0
  %2900 = vmatpush.bf16.msra.mxu0 %v2089
  %2901 = vmatpush.bf16.msra.mxu0 %v2079
  %2902 = vmatpush.bf16.msra.mxu0 %v2069
  %2903 = vmatpush.bf16.msra.mxu0 %v2059
  %2904 = vmatpush.bf16.msra.mxu0 %v2049
  %2905 = vmatpush.bf16.msra.mxu0 %v2039
  %2906 = vmatpush.bf16.msra.mxu0 %v2029
  %2907 = vmatpush.bf16.msra.mxu0 %v2019
  %2908 = vmatmul.bf16.gmra.mxu0 %v488
  %v2909 = vpop.f32.mrf.mxu0
  %v2910 = vadd.f32 %v2896, %v2909
  %v2911 = vpop.f32.mrf.mxu0
  %v2912 = vadd.f32 %v2898, %v2911
  %2913 = vdwg.mxu0
  %2914 = vmatpush.bf16.msra.mxu0 %v1770
  %2915 = vmatpush.bf16.msra.mxu0 %v1760
  %2916 = vmatpush.bf16.msra.mxu0 %v1750
  %2917 = vmatpush.bf16.msra.mxu0 %v1740
  %2918 = vmatpush.bf16.msra.mxu0 %v1730
  %2919 = vmatpush.bf16.msra.mxu0 %v1720
  %2920 = vmatpush.bf16.msra.mxu0 %v1710
  %2921 = vmatpush.bf16.msra.mxu0 %v1700
  %2922 = vmatmul.bf16.gmra.mxu0 %v484
  %v2923 = vpop.f32.mrf.mxu0
  %v2924 = vadd.f32 %v454, %v2923
  %v2925 = vpop.f32.mrf.mxu0
  %v2926 = vadd.f32 %v454, %v2925
  %2927 = vdwg.mxu0
  %2928 = vmatpush.bf16.msra.mxu0 %v1850
  %2929 = vmatpush.bf16.msra.mxu0 %v1840
  %2930 = vmatpush.bf16.msra.mxu0 %v1830
  %2931 = vmatpush.bf16.msra.mxu0 %v1820
  %2932 = vmatpush.bf16.msra.mxu0 %v1810
  %2933 = vmatpush.bf16.msra.mxu0 %v1800
  %2934 = vmatpush.bf16.msra.mxu0 %v1790
  %2935 = vmatpush.bf16.msra.mxu0 %v1780
  %2936 = vmatmul.bf16.gmra.mxu0 %v485
  %v2937 = vpop.f32.mrf.mxu0
  %v2938 = vadd.f32 %v2924, %v2937
  %v2939 = vpop.f32.mrf.mxu0
  %v2940 = vadd.f32 %v2926, %v2939
  %2941 = vdwg.mxu0
  %2942 = vmatpush.bf16.msra.mxu0 %v1930
  %2943 = vmatpush.bf16.msra.mxu0 %v1920
  %2944 = vmatpush.bf16.msra.mxu0 %v1910
  %2945 = vmatpush.bf16.msra.mxu0 %v1900
  %2946 = vmatpush.bf16.msra.mxu0 %v1890
  %2947 = vmatpush.bf16.msra.mxu0 %v1880
  %2948 = vmatpush.bf16.msra.mxu0 %v1870
  %2949 = vmatpush.bf16.msra.mxu0 %v1860
  %2950 = vmatmul.bf16.gmra.mxu0 %v486
  %v2951 = vpop.f32.mrf.mxu0
  %v2952 = vadd.f32 %v2938, %v2951
  %v2953 = vpop.f32.mrf.mxu0
  %v2954 = vadd.f32 %v2940, %v2953
  %2955 = vdwg.mxu0
  %2956 = vmatpush.bf16.msra.mxu0 %v2010
  %2957 = vmatpush.bf16.msra.mxu0 %v2000
  %2958 = vmatpush.bf16.msra.mxu0 %v1990
  %2959 = vmatpush.bf16.msra.mxu0 %v1980
  %2960 = vmatpush.bf16.msra.mxu0 %v1970
  %2961 = vmatpush.bf16.msra.mxu0 %v1960
  %2962 = vmatpush.bf16.msra.mxu0 %v1950
  %2963 = vmatpush.bf16.msra.mxu0 %v1940
  %2964 = vmatmul.bf16.gmra.mxu0 %v487
  %v2965 = vpop.f32.mrf.mxu0
  %v2966 = vadd.f32 %v2952, %v2965
  %v2967 = vpop.f32.mrf.mxu0
  %v2968 = vadd.f32 %v2954, %v2967
  %2969 = vdwg.mxu0
  %2970 = vmatpush.bf16.msra.mxu0 %v2090
  %2971 = vmatpush.bf16.msra.mxu0 %v2080
  %2972 = vmatpush.bf16.msra.mxu0 %v2070
  %2973 = vmatpush.bf16.msra.mxu0 %v2060
  %2974 = vmatpush.bf16.msra.mxu0 %v2050
  %2975 = vmatpush.bf16.msra.mxu0 %v2040
  %2976 = vmatpush.bf16.msra.mxu0 %v2030
  %2977 = vmatpush.bf16.msra.mxu0 %v2020
  %2978 = vmatmul.bf16.gmra.mxu0 %v488
  %v2979 = vpop.f32.mrf.mxu0
  %v2980 = vadd.f32 %v2966, %v2979
  %v2981 = vpop.f32.mrf.mxu0
  %v2982 = vadd.f32 %v2968, %v2981
  %2983 = vdwg.mxu0
  %2984 = vmatpush.bf16.msra.mxu0 %v1771
  %2985 = vmatpush.bf16.msra.mxu0 %v1761
  %2986 = vmatpush.bf16.msra.mxu0 %v1751
  %2987 = vmatpush.bf16.msra.mxu0 %v1741
  %2988 = vmatpush.bf16.msra.mxu0 %v1731
  %2989 = vmatpush.bf16.msra.mxu0 %v1721
  %2990 = vmatpush.bf16.msra.mxu0 %v1711
  %2991 = vmatpush.bf16.msra.mxu0 %v1701
  %2992 = vmatmul.bf16.gmra.mxu0 %v484
  %v2993 = vpop.f32.mrf.mxu0
  %v2994 = vadd.f32 %v455, %v2993
  %v2995 = vpop.f32.mrf.mxu0
  %v2996 = vadd.f32 %v455, %v2995
  %2997 = vdwg.mxu0
  %2998 = vmatpush.bf16.msra.mxu0 %v1851
  %2999 = vmatpush.bf16.msra.mxu0 %v1841
  %3000 = vmatpush.bf16.msra.mxu0 %v1831
  %3001 = vmatpush.bf16.msra.mxu0 %v1821
  %3002 = vmatpush.bf16.msra.mxu0 %v1811
  %3003 = vmatpush.bf16.msra.mxu0 %v1801
  %3004 = vmatpush.bf16.msra.mxu0 %v1791
  %3005 = vmatpush.bf16.msra.mxu0 %v1781
  %3006 = vmatmul.bf16.gmra.mxu0 %v485
  %v3007 = vpop.f32.mrf.mxu0
  %v3008 = vadd.f32 %v2994, %v3007
  %v3009 = vpop.f32.mrf.mxu0
  %v3010 = vadd.f32 %v2996, %v3009
  %3011 = vdwg.mxu0
  %3012 = vmatpush.bf16.msra.mxu0 %v1931
  %3013 = vmatpush.bf16.msra.mxu0 %v1921
  %3014 = vmatpush.bf16.msra.mxu0 %v1911
  %3015 = vmatpush.bf16.msra.mxu0 %v1901
  %3016 = vmatpush.bf16.msra.mxu0 %v1891
  %3017 = vmatpush.bf16.msra.mxu0 %v1881
  %3018 = vmatpush.bf16.msra.mxu0 %v1871
  %3019 = vmatpush.bf16.msra.mxu0 %v1861
  %3020 = vmatmul.bf16.gmra.mxu0 %v486
  %v3021 = vpop.f32.mrf.mxu0
  %v3022 = vadd.f32 %v3008, %v3021
  %v3023 = vpop.f32.mrf.mxu0
  %v3024 = vadd.f32 %v3010, %v3023
  %3025 = vdwg.mxu0
  %3026 = vmatpush.bf16.msra.mxu0 %v2011
  %3027 = vmatpush.bf16.msra.mxu0 %v2001
  %3028 = vmatpush.bf16.msra.mxu0 %v1991
  %3029 = vmatpush.bf16.msra.mxu0 %v1981
  %3030 = vmatpush.bf16.msra.mxu0 %v1971
  %3031 = vmatpush.bf16.msra.mxu0 %v1961
  %3032 = vmatpush.bf16.msra.mxu0 %v1951
  %3033 = vmatpush.bf16.msra.mxu0 %v1941
  %3034 = vmatmul.bf16.gmra.mxu0 %v487
  %v3035 = vpop.f32.mrf.mxu0
  %v3036 = vadd.f32 %v3022, %v3035
  %v3037 = vpop.f32.mrf.mxu0
  %v3038 = vadd.f32 %v3024, %v3037
  %3039 = vdwg.mxu0
  %3040 = vmatpush.bf16.msra.mxu0 %v2091
  %3041 = vmatpush.bf16.msra.mxu0 %v2081
  %3042 = vmatpush.bf16.msra.mxu0 %v2071
  %3043 = vmatpush.bf16.msra.mxu0 %v2061
  %3044 = vmatpush.bf16.msra.mxu0 %v2051
  %3045 = vmatpush.bf16.msra.mxu0 %v2041
  %3046 = vmatpush.bf16.msra.mxu0 %v2031
  %3047 = vmatpush.bf16.msra.mxu0 %v2021
  %3048 = vmatmul.bf16.gmra.mxu0 %v488
  %v3049 = vpop.f32.mrf.mxu0
  %v3050 = vadd.f32 %v3036, %v3049
  %v3051 = vpop.f32.mrf.mxu0
  %v3052 = vadd.f32 %v3038, %v3051
  %3053 = vdwg.mxu0
  %3054 = vmatpush.bf16.msra.mxu0 %v1772
  %3055 = vmatpush.bf16.msra.mxu0 %v1762
  %3056 = vmatpush.bf16.msra.mxu0 %v1752
  %3057 = vmatpush.bf16.msra.mxu0 %v1742
  %3058 = vmatpush.bf16.msra.mxu0 %v1732
  %3059 = vmatpush.bf16.msra.mxu0 %v1722
  %3060 = vmatpush.bf16.msra.mxu0 %v1712
  %3061 = vmatpush.bf16.msra.mxu0 %v1702
  %3062 = vmatmul.bf16.gmra.mxu0 %v484
  %v3063 = vpop.f32.mrf.mxu0
  %v3064 = vadd.f32 %v456, %v3063
  %v3065 = vpop.f32.mrf.mxu0
  %v3066 = vadd.f32 %v456, %v3065
  %3067 = vdwg.mxu0
  %3068 = vmatpush.bf16.msra.mxu0 %v1852
  %3069 = vmatpush.bf16.msra.mxu0 %v1842
  %3070 = vmatpush.bf16.msra.mxu0 %v1832
  %3071 = vmatpush.bf16.msra.mxu0 %v1822
  %3072 = vmatpush.bf16.msra.mxu0 %v1812
  %3073 = vmatpush.bf16.msra.mxu0 %v1802
  %3074 = vmatpush.bf16.msra.mxu0 %v1792
  %3075 = vmatpush.bf16.msra.mxu0 %v1782
  %3076 = vmatmul.bf16.gmra.mxu0 %v485
  %v3077 = vpop.f32.mrf.mxu0
  %v3078 = vadd.f32 %v3064, %v3077
  %v3079 = vpop.f32.mrf.mxu0
  %v3080 = vadd.f32 %v3066, %v3079
  %3081 = vdwg.mxu0
  %3082 = vmatpush.bf16.msra.mxu0 %v1932
  %3083 = vmatpush.bf16.msra.mxu0 %v1922
  %3084 = vmatpush.bf16.msra.mxu0 %v1912
  %3085 = vmatpush.bf16.msra.mxu0 %v1902
  %3086 = vmatpush.bf16.msra.mxu0 %v1892
  %3087 = vmatpush.bf16.msra.mxu0 %v1882
  %3088 = vmatpush.bf16.msra.mxu0 %v1872
  %3089 = vmatpush.bf16.msra.mxu0 %v1862
  %3090 = vmatmul.bf16.gmra.mxu0 %v486
  %v3091 = vpop.f32.mrf.mxu0
  %v3092 = vadd.f32 %v3078, %v3091
  %v3093 = vpop.f32.mrf.mxu0
  %v3094 = vadd.f32 %v3080, %v3093
  %3095 = vdwg.mxu0
  %3096 = vmatpush.bf16.msra.mxu0 %v2012
  %3097 = vmatpush.bf16.msra.mxu0 %v2002
  %3098 = vmatpush.bf16.msra.mxu0 %v1992
  %3099 = vmatpush.bf16.msra.mxu0 %v1982
  %3100 = vmatpush.bf16.msra.mxu0 %v1972
  %3101 = vmatpush.bf16.msra.mxu0 %v1962
  %3102 = vmatpush.bf16.msra.mxu0 %v1952
  %3103 = vmatpush.bf16.msra.mxu0 %v1942
  %3104 = vmatmul.bf16.gmra.mxu0 %v487
  %v3105 = vpop.f32.mrf.mxu0
  %v3106 = vadd.f32 %v3092, %v3105
  %v3107 = vpop.f32.mrf.mxu0
  %v3108 = vadd.f32 %v3094, %v3107
  %3109 = vdwg.mxu0
  %3110 = vmatpush.bf16.msra.mxu0 %v2092
  %3111 = vmatpush.bf16.msra.mxu0 %v2082
  %3112 = vmatpush.bf16.msra.mxu0 %v2072
  %3113 = vmatpush.bf16.msra.mxu0 %v2062
  %3114 = vmatpush.bf16.msra.mxu0 %v2052
  %3115 = vmatpush.bf16.msra.mxu0 %v2042
  %3116 = vmatpush.bf16.msra.mxu0 %v2032
  %3117 = vmatpush.bf16.msra.mxu0 %v2022
  %3118 = vmatmul.bf16.gmra.mxu0 %v488
  %v3119 = vpop.f32.mrf.mxu0
  %v3120 = vadd.f32 %v3106, %v3119
  %v3121 = vpop.f32.mrf.mxu0
  %v3122 = vadd.f32 %v3108, %v3121
  %3123 = vdwg.mxu0
  %3124 = vmatpush.bf16.msra.mxu0 %v1773
  %3125 = vmatpush.bf16.msra.mxu0 %v1763
  %3126 = vmatpush.bf16.msra.mxu0 %v1753
  %3127 = vmatpush.bf16.msra.mxu0 %v1743
  %3128 = vmatpush.bf16.msra.mxu0 %v1733
  %3129 = vmatpush.bf16.msra.mxu0 %v1723
  %3130 = vmatpush.bf16.msra.mxu0 %v1713
  %3131 = vmatpush.bf16.msra.mxu0 %v1703
  %3132 = vmatmul.bf16.gmra.mxu0 %v484
  %v3133 = vpop.f32.mrf.mxu0
  %v3134 = vadd.f32 %v457, %v3133
  %v3135 = vpop.f32.mrf.mxu0
  %v3136 = vadd.f32 %v457, %v3135
  %3137 = vdwg.mxu0
  %3138 = vmatpush.bf16.msra.mxu0 %v1853
  %3139 = vmatpush.bf16.msra.mxu0 %v1843
  %3140 = vmatpush.bf16.msra.mxu0 %v1833
  %3141 = vmatpush.bf16.msra.mxu0 %v1823
  %3142 = vmatpush.bf16.msra.mxu0 %v1813
  %3143 = vmatpush.bf16.msra.mxu0 %v1803
  %3144 = vmatpush.bf16.msra.mxu0 %v1793
  %3145 = vmatpush.bf16.msra.mxu0 %v1783
  %3146 = vmatmul.bf16.gmra.mxu0 %v485
  %v3147 = vpop.f32.mrf.mxu0
  %v3148 = vadd.f32 %v3134, %v3147
  %v3149 = vpop.f32.mrf.mxu0
  %v3150 = vadd.f32 %v3136, %v3149
  %3151 = vdwg.mxu0
  %3152 = vmatpush.bf16.msra.mxu0 %v1933
  %3153 = vmatpush.bf16.msra.mxu0 %v1923
  %3154 = vmatpush.bf16.msra.mxu0 %v1913
  %3155 = vmatpush.bf16.msra.mxu0 %v1903
  %3156 = vmatpush.bf16.msra.mxu0 %v1893
  %3157 = vmatpush.bf16.msra.mxu0 %v1883
  %3158 = vmatpush.bf16.msra.mxu0 %v1873
  %3159 = vmatpush.bf16.msra.mxu0 %v1863
  %3160 = vmatmul.bf16.gmra.mxu0 %v486
  %v3161 = vpop.f32.mrf.mxu0
  %v3162 = vadd.f32 %v3148, %v3161
  %v3163 = vpop.f32.mrf.mxu0
  %v3164 = vadd.f32 %v3150, %v3163
  %3165 = vdwg.mxu0
  %3166 = vmatpush.bf16.msra.mxu0 %v2013
  %3167 = vmatpush.bf16.msra.mxu0 %v2003
  %3168 = vmatpush.bf16.msra.mxu0 %v1993
  %3169 = vmatpush.bf16.msra.mxu0 %v1983
  %3170 = vmatpush.bf16.msra.mxu0 %v1973
  %3171 = vmatpush.bf16.msra.mxu0 %v1963
  %3172 = vmatpush.bf16.msra.mxu0 %v1953
  %3173 = vmatpush.bf16.msra.mxu0 %v1943
  %3174 = vmatmul.bf16.gmra.mxu0 %v487
  %v3175 = vpop.f32.mrf.mxu0
  %v3176 = vadd.f32 %v3162, %v3175
  %v3177 = vpop.f32.mrf.mxu0
  %v3178 = vadd.f32 %v3164, %v3177
  %3179 = vdwg.mxu0
  %3180 = vmatpush.bf16.msra.mxu0 %v2093
  %3181 = vmatpush.bf16.msra.mxu0 %v2083
  %3182 = vmatpush.bf16.msra.mxu0 %v2073
  %3183 = vmatpush.bf16.msra.mxu0 %v2063
  %3184 = vmatpush.bf16.msra.mxu0 %v2053
  %3185 = vmatpush.bf16.msra.mxu0 %v2043
  %3186 = vmatpush.bf16.msra.mxu0 %v2033
  %3187 = vmatpush.bf16.msra.mxu0 %v2023
  %3188 = vmatmul.bf16.gmra.mxu0 %v488
  %v3189 = vpop.f32.mrf.mxu0
  %v3190 = vadd.f32 %v3176, %v3189
  %v3191 = vpop.f32.mrf.mxu0
  %v3192 = vadd.f32 %v3178, %v3191
  %3193 = vdwg.mxu0
  %v3194 = vmax.f32 %v2560, 0.0
  %v3195 = vmax.f32 %v2630, 0.0
  %v3196 = vmax.f32 %v2700, 0.0
  %v3197 = vmax.f32 %v2770, 0.0
  %v3198 = vmax.f32 %v2840, 0.0
  %v3199 = vmax.f32 %v2910, 0.0
  %v3200 = vmax.f32 %v2980, 0.0
  %v3201 = vmax.f32 %v3050, 0.0
  %v3202 = vmax.f32 %v3120, 0.0
  %v3203 = vmax.f32 %v3190, 0.0
  %v3204 = vmax.f32 %v2562, 0.0
  %v3205 = vmax.f32 %v2632, 0.0
  %v3206 = vmax.f32 %v2702, 0.0
  %v3207 = vmax.f32 %v2772, 0.0
  %v3208 = vmax.f32 %v2842, 0.0
  %v3209 = vmax.f32 %v2912, 0.0
  %v3210 = vmax.f32 %v2982, 0.0
  %v3211 = vmax.f32 %v3052, 0.0
  %v3212 = vmax.f32 %v3122, 0.0
  %v3213 = vmax.f32 %v3192, 0.0
  %v3214 = vpack.c.bf16 %v3204, %v3194
  %v3215 = vpack.c.bf16 %v3205, %v3195
  %v3216 = vpack.c.bf16 %v3206, %v3196
  %v3217 = vpack.c.bf16 %v3207, %v3197
  %v3218 = vpack.c.bf16 %v3208, %v3198
  %v3219 = vpack.c.bf16 %v3209, %v3199
  %v3220 = vpack.c.bf16 %v3210, %v3200
  %v3221 = vpack.c.bf16 %v3211, %v3201
  %v3222 = vpack.c.bf16 %v3212, %v3202
  %v3223 = vpack.c.bf16 %v3213, %v3203
  %v3224 = vld [vmem:[%s3] sm:$0xf]
  %v3225 = vld [vmem:[%s3 + $0x4] sm:$0xf]
  %v3226 = vld [vmem:[%s3 + $0x8] sm:$0xf]
  %v3227 = vld [vmem:[%s3 + $0xc] sm:$0xf]
  %v3228 = vld [vmem:[%s3 + $0x10] sm:$0xf]
  %v3229 = vld [vmem:[%s3 + $0x14] sm:$0xf]
  %v3230 = vld [vmem:[%s3 + $0x18] sm:$0xf]
  %v3231 = vld [vmem:[%s3 + $0x1c] sm:$0xf]
  %v3232 = vld [vmem:[%s3 + $0x20] sm:$0xf]
  %v3233 = vld [vmem:[%s3 + $0x24] sm:$0xf]
  %v3234 = vld [vmem:[%s3 + $0x28] sm:$0xf]
  %v3235 = vld [vmem:[%s3 + $0x2c] sm:$0xf]
  %v3236 = vld [vmem:[%s3 + $0x30] sm:$0xf]
  %v3237 = vld [vmem:[%s3 + $0x34] sm:$0xf]
  %v3238 = vld [vmem:[%s3 + $0x38] sm:$0xf]
  %v3239 = vld [vmem:[%s3 + $0x3c] sm:$0xf]
  %v3240 = vld [vmem:[%s3 + $0x40] sm:$0xf]
  %v3241 = vld [vmem:[%s3 + $0x44] sm:$0xf]
  %v3242 = vld [vmem:[%s3 + $0x48] sm:$0xf]
  %v3243 = vld [vmem:[%s3 + $0x4c] sm:$0xf]
  %v3244 = vld [vmem:[%s3 + $0x50] sm:$0xf]
  %v3245 = vld [vmem:[%s3 + $0x54] sm:$0xf]
  %v3246 = vld [vmem:[%s3 + $0x58] sm:$0xf]
  %v3247 = vld [vmem:[%s3 + $0x5c] sm:$0xf]
  %v3248 = vld [vmem:[%s3 + $0x60] sm:$0xf]
  %v3249 = vld [vmem:[%s3 + $0x64] sm:$0xf]
  %v3250 = vld [vmem:[%s3 + $0x68] sm:$0xf]
  %v3251 = vld [vmem:[%s3 + $0x6c] sm:$0xf]
  %v3252 = vld [vmem:[%s3 + $0x70] sm:$0xf]
  %v3253 = vld [vmem:[%s3 + $0x74] sm:$0xf]
  %v3254 = vld [vmem:[%s3 + $0x78] sm:$0xf]
  %v3255 = vld [vmem:[%s3 + $0x7c] sm:$0xf]
  %v3256 = vld [vmem:[%s3 + $0x80] sm:$0xf]
  %v3257 = vld [vmem:[%s3 + $0x84] sm:$0xf]
  %v3258 = vld [vmem:[%s3 + $0x88] sm:$0xf]
  %v3259 = vld [vmem:[%s3 + $0x8c] sm:$0xf]
  %v3260 = vld [vmem:[%s3 + $0x90] sm:$0xf]
  %v3261 = vld [vmem:[%s3 + $0x94] sm:$0xf]
  %v3262 = vld [vmem:[%s3 + $0x98] sm:$0xf]
  %v3263 = vld [vmem:[%s3 + $0x9c] sm:$0xf]
  %v3264 = vld [vmem:[%s3 + $0xa0] sm:$0xf]
  %v3265 = vld [vmem:[%s3 + $0xa4] sm:$0xf]
  %v3266 = vld [vmem:[%s3 + $0xa8] sm:$0xf]
  %v3267 = vld [vmem:[%s3 + $0xac] sm:$0xf]
  %v3268 = vld [vmem:[%s3 + $0xb0] sm:$0xf]
  %v3269 = vld [vmem:[%s3 + $0xb4] sm:$0xf]
  %v3270 = vld [vmem:[%s3 + $0xb8] sm:$0xf]
  %v3271 = vld [vmem:[%s3 + $0xbc] sm:$0xf]
  %v3272 = vld [vmem:[%s3 + $0xc0] sm:$0xf]
  %v3273 = vld [vmem:[%s3 + $0xc4] sm:$0xf]
  %v3274 = vld [vmem:[%s3 + $0xc8] sm:$0xf]
  %v3275 = vld [vmem:[%s3 + $0xcc] sm:$0xf]
  %v3276 = vld [vmem:[%s3 + $0xd0] sm:$0xf]
  %v3277 = vld [vmem:[%s3 + $0xd4] sm:$0xf]
  %v3278 = vld [vmem:[%s3 + $0xd8] sm:$0xf]
  %v3279 = vld [vmem:[%s3 + $0xdc] sm:$0xf]
  %v3280 = vld [vmem:[%s3 + $0xe0] sm:$0xf]
  %v3281 = vld [vmem:[%s3 + $0xe4] sm:$0xf]
  %v3282 = vld [vmem:[%s3 + $0xe8] sm:$0xf]
  %v3283 = vld [vmem:[%s3 + $0xec] sm:$0xf]
  %v3284 = vld [vmem:[%s3 + $0xf0] sm:$0xf]
  %v3285 = vld [vmem:[%s3 + $0xf4] sm:$0xf]
  %v3286 = vld [vmem:[%s3 + $0xf8] sm:$0xf]
  %v3287 = vld [vmem:[%s3 + $0xfc] sm:$0xf]
  %v3288 = vld [vmem:[%s3 + $0x100] sm:$0xf]
  %v3289 = vld [vmem:[%s3 + $0x104] sm:$0xf]
  %v3290 = vld [vmem:[%s3 + $0x108] sm:$0xf]
  %v3291 = vld [vmem:[%s3 + $0x10c] sm:$0xf]
  %v3292 = vld [vmem:[%s3 + $0x110] sm:$0xf]
  %v3293 = vld [vmem:[%s3 + $0x114] sm:$0xf]
  %v3294 = vld [vmem:[%s3 + $0x118] sm:$0xf]
  %v3295 = vld [vmem:[%s3 + $0x11c] sm:$0xf]
  %v3296 = vld [vmem:[%s3 + $0x120] sm:$0xf]
  %v3297 = vld [vmem:[%s3 + $0x124] sm:$0xf]
  %v3298 = vld [vmem:[%s3 + $0x128] sm:$0xf]
  %v3299 = vld [vmem:[%s3 + $0x12c] sm:$0xf]
  %v3300 = vld [vmem:[%s3 + $0x130] sm:$0xf]
  %v3301 = vld [vmem:[%s3 + $0x134] sm:$0xf]
  %v3302 = vld [vmem:[%s3 + $0x138] sm:$0xf]
  %v3303 = vld [vmem:[%s3 + $0x13c] sm:$0xf]
  %v3304 = vld [vmem:[%s3 + $0x140] sm:$0xf]
  %v3305 = vld [vmem:[%s3 + $0x144] sm:$0xf]
  %v3306 = vld [vmem:[%s3 + $0x148] sm:$0xf]
  %v3307 = vld [vmem:[%s3 + $0x14c] sm:$0xf]
  %v3308 = vld [vmem:[%s3 + $0x150] sm:$0xf]
  %v3309 = vld [vmem:[%s3 + $0x154] sm:$0xf]
  %v3310 = vld [vmem:[%s3 + $0x158] sm:$0xf]
  %v3311 = vld [vmem:[%s3 + $0x15c] sm:$0xf]
  %v3312 = vld [vmem:[%s3 + $0x160] sm:$0xf]
  %v3313 = vld [vmem:[%s3 + $0x164] sm:$0xf]
  %v3314 = vld [vmem:[%s3 + $0x168] sm:$0xf]
  %v3315 = vld [vmem:[%s3 + $0x16c] sm:$0xf]
  %v3316 = vld [vmem:[%s3 + $0x170] sm:$0xf]
  %v3317 = vld [vmem:[%s3 + $0x174] sm:$0xf]
  %v3318 = vld [vmem:[%s3 + $0x178] sm:$0xf]
  %v3319 = vld [vmem:[%s3 + $0x17c] sm:$0xf]
  %v3320 = vld [vmem:[%s3 + $0x180] sm:$0xf]
  %v3321 = vld [vmem:[%s3 + $0x184] sm:$0xf]
  %v3322 = vld [vmem:[%s3 + $0x188] sm:$0xf]
  %v3323 = vld [vmem:[%s3 + $0x18c] sm:$0xf]
  %v3324 = vld [vmem:[%s3 + $0x190] sm:$0xf]
  %v3325 = vld [vmem:[%s3 + $0x194] sm:$0xf]
  %v3326 = vld [vmem:[%s3 + $0x198] sm:$0xf]
  %v3327 = vld [vmem:[%s3 + $0x19c] sm:$0xf]
  %v3328 = vld [vmem:[%s3 + $0x1a0] sm:$0xf]
  %v3329 = vld [vmem:[%s3 + $0x1a4] sm:$0xf]
  %v3330 = vld [vmem:[%s3 + $0x1a8] sm:$0xf]
  %v3331 = vld [vmem:[%s3 + $0x1ac] sm:$0xf]
  %v3332 = vld [vmem:[%s3 + $0x1b0] sm:$0xf]
  %v3333 = vld [vmem:[%s3 + $0x1b4] sm:$0xf]
  %v3334 = vld [vmem:[%s3 + $0x1b8] sm:$0xf]
  %v3335 = vld [vmem:[%s3 + $0x1bc] sm:$0xf]
  %v3336 = vld [vmem:[%s3 + $0x1c0] sm:$0xf]
  %v3337 = vld [vmem:[%s3 + $0x1c4] sm:$0xf]
  %v3338 = vld [vmem:[%s3 + $0x1c8] sm:$0xf]
  %v3339 = vld [vmem:[%s3 + $0x1cc] sm:$0xf]
  %v3340 = vld [vmem:[%s3 + $0x1d0] sm:$0xf]
  %v3341 = vld [vmem:[%s3 + $0x1d4] sm:$0xf]
  %v3342 = vld [vmem:[%s3 + $0x1d8] sm:$0xf]
  %v3343 = vld [vmem:[%s3 + $0x1dc] sm:$0xf]
  %v3344 = vld [vmem:[%s3 + $0x1e0] sm:$0xf]
  %v3345 = vld [vmem:[%s3 + $0x1e4] sm:$0xf]
  %v3346 = vld [vmem:[%s3 + $0x1e8] sm:$0xf]
  %v3347 = vld [vmem:[%s3 + $0x1ec] sm:$0xf]
  %v3348 = vld [vmem:[%s3 + $0x1f0] sm:$0xf]
  %v3349 = vld [vmem:[%s3 + $0x1f4] sm:$0xf]
  %v3350 = vld [vmem:[%s3 + $0x1f8] sm:$0xf]
  %v3351 = vld [vmem:[%s3 + $0x1fc] sm:$0xf]
  %v3352 = vld [vmem:[%s3 + $0x200] sm:$0xf]
  %v3353 = vld [vmem:[%s3 + $0x204] sm:$0xf]
  %v3354 = vld [vmem:[%s3 + $0x208] sm:$0xf]
  %v3355 = vld [vmem:[%s3 + $0x20c] sm:$0xf]
  %v3356 = vld [vmem:[%s3 + $0x210] sm:$0xf]
  %v3357 = vld [vmem:[%s3 + $0x214] sm:$0xf]
  %v3358 = vld [vmem:[%s3 + $0x218] sm:$0xf]
  %v3359 = vld [vmem:[%s3 + $0x21c] sm:$0xf]
  %v3360 = vld [vmem:[%s3 + $0x220] sm:$0xf]
  %v3361 = vld [vmem:[%s3 + $0x224] sm:$0xf]
  %v3362 = vld [vmem:[%s3 + $0x228] sm:$0xf]
  %v3363 = vld [vmem:[%s3 + $0x22c] sm:$0xf]
  %v3364 = vld [vmem:[%s3 + $0x230] sm:$0xf]
  %v3365 = vld [vmem:[%s3 + $0x234] sm:$0xf]
  %v3366 = vld [vmem:[%s3 + $0x238] sm:$0xf]
  %v3367 = vld [vmem:[%s3 + $0x23c] sm:$0xf]
  %v3368 = vld [vmem:[%s3 + $0x240] sm:$0xf]
  %v3369 = vld [vmem:[%s3 + $0x244] sm:$0xf]
  %v3370 = vld [vmem:[%s3 + $0x248] sm:$0xf]
  %v3371 = vld [vmem:[%s3 + $0x24c] sm:$0xf]
  %v3372 = vld [vmem:[%s3 + $0x250] sm:$0xf]
  %v3373 = vld [vmem:[%s3 + $0x254] sm:$0xf]
  %v3374 = vld [vmem:[%s3 + $0x258] sm:$0xf]
  %v3375 = vld [vmem:[%s3 + $0x25c] sm:$0xf]
  %v3376 = vld [vmem:[%s3 + $0x260] sm:$0xf]
  %v3377 = vld [vmem:[%s3 + $0x264] sm:$0xf]
  %v3378 = vld [vmem:[%s3 + $0x268] sm:$0xf]
  %v3379 = vld [vmem:[%s3 + $0x26c] sm:$0xf]
  %v3380 = vld [vmem:[%s3 + $0x270] sm:$0xf]
  %v3381 = vld [vmem:[%s3 + $0x274] sm:$0xf]
  %v3382 = vld [vmem:[%s3 + $0x278] sm:$0xf]
  %v3383 = vld [vmem:[%s3 + $0x27c] sm:$0xf]
  %v3384 = vld [vmem:[%s4] sm:$0x1]
  %v3386 = vperm.slane %v3384, 0
  %v3548 = vunpack.c.l.b16 %v3224
  %v3549 = vunpack.c.l.b16 %v3225
  %v3550 = vunpack.c.l.b16 %v3226
  %v3551 = vunpack.c.l.b16 %v3227
  %v3552 = vunpack.c.l.b16 %v3228
  %v3553 = vunpack.c.l.b16 %v3229
  %v3554 = vunpack.c.l.b16 %v3230
  %v3555 = vunpack.c.l.b16 %v3231
  %v3556 = vunpack.c.l.b16 %v3232
  %v3557 = vunpack.c.l.b16 %v3233
  %v3558 = vunpack.c.l.b16 %v3234
  %v3559 = vunpack.c.l.b16 %v3235
  %v3560 = vunpack.c.l.b16 %v3236
  %v3561 = vunpack.c.l.b16 %v3237
  %v3562 = vunpack.c.l.b16 %v3238
  %v3563 = vunpack.c.l.b16 %v3239
  %v3564 = vunpack.c.l.b16 %v3240
  %v3565 = vunpack.c.l.b16 %v3241
  %v3566 = vunpack.c.l.b16 %v3242
  %v3567 = vunpack.c.l.b16 %v3243
  %v3568 = vunpack.c.l.b16 %v3244
  %v3569 = vunpack.c.l.b16 %v3245
  %v3570 = vunpack.c.l.b16 %v3246
  %v3571 = vunpack.c.l.b16 %v3247
  %v3572 = vunpack.c.l.b16 %v3248
  %v3573 = vunpack.c.l.b16 %v3249
  %v3574 = vunpack.c.l.b16 %v3250
  %v3575 = vunpack.c.l.b16 %v3251
  %v3576 = vunpack.c.l.b16 %v3252
  %v3577 = vunpack.c.l.b16 %v3253
  %v3578 = vunpack.c.l.b16 %v3254
  %v3579 = vunpack.c.l.b16 %v3255
  %v3580 = vunpack.c.l.b16 %v3256
  %v3581 = vunpack.c.l.b16 %v3257
  %v3582 = vunpack.c.l.b16 %v3258
  %v3583 = vunpack.c.l.b16 %v3259
  %v3584 = vunpack.c.l.b16 %v3260
  %v3585 = vunpack.c.l.b16 %v3261
  %v3586 = vunpack.c.l.b16 %v3262
  %v3587 = vunpack.c.l.b16 %v3263
  %v3588 = vunpack.c.l.b16 %v3264
  %v3589 = vunpack.c.l.b16 %v3265
  %v3590 = vunpack.c.l.b16 %v3266
  %v3591 = vunpack.c.l.b16 %v3267
  %v3592 = vunpack.c.l.b16 %v3268
  %v3593 = vunpack.c.l.b16 %v3269
  %v3594 = vunpack.c.l.b16 %v3270
  %v3595 = vunpack.c.l.b16 %v3271
  %v3596 = vunpack.c.l.b16 %v3272
  %v3597 = vunpack.c.l.b16 %v3273
  %v3598 = vunpack.c.l.b16 %v3274
  %v3599 = vunpack.c.l.b16 %v3275
  %v3600 = vunpack.c.l.b16 %v3276
  %v3601 = vunpack.c.l.b16 %v3277
  %v3602 = vunpack.c.l.b16 %v3278
  %v3603 = vunpack.c.l.b16 %v3279
  %v3604 = vunpack.c.l.b16 %v3280
  %v3605 = vunpack.c.l.b16 %v3281
  %v3606 = vunpack.c.l.b16 %v3282
  %v3607 = vunpack.c.l.b16 %v3283
  %v3608 = vunpack.c.l.b16 %v3284
  %v3609 = vunpack.c.l.b16 %v3285
  %v3610 = vunpack.c.l.b16 %v3286
  %v3611 = vunpack.c.l.b16 %v3287
  %v3612 = vunpack.c.l.b16 %v3288
  %v3613 = vunpack.c.l.b16 %v3289
  %v3614 = vunpack.c.l.b16 %v3290
  %v3615 = vunpack.c.l.b16 %v3291
  %v3616 = vunpack.c.l.b16 %v3292
  %v3617 = vunpack.c.l.b16 %v3293
  %v3618 = vunpack.c.l.b16 %v3294
  %v3619 = vunpack.c.l.b16 %v3295
  %v3620 = vunpack.c.l.b16 %v3296
  %v3621 = vunpack.c.l.b16 %v3297
  %v3622 = vunpack.c.l.b16 %v3298
  %v3623 = vunpack.c.l.b16 %v3299
  %v3624 = vunpack.c.l.b16 %v3300
  %v3625 = vunpack.c.l.b16 %v3301
  %v3626 = vunpack.c.l.b16 %v3302
  %v3627 = vunpack.c.l.b16 %v3303
  %v3628 = vunpack.c.l.b16 %v3304
  %v3629 = vunpack.c.l.b16 %v3305
  %v3630 = vunpack.c.l.b16 %v3306
  %v3631 = vunpack.c.l.b16 %v3307
  %v3632 = vunpack.c.l.b16 %v3308
  %v3633 = vunpack.c.l.b16 %v3309
  %v3634 = vunpack.c.l.b16 %v3310
  %v3635 = vunpack.c.l.b16 %v3311
  %v3636 = vunpack.c.l.b16 %v3312
  %v3637 = vunpack.c.l.b16 %v3313
  %v3638 = vunpack.c.l.b16 %v3314
  %v3639 = vunpack.c.l.b16 %v3315
  %v3640 = vunpack.c.l.b16 %v3316
  %v3641 = vunpack.c.l.b16 %v3317
  %v3642 = vunpack.c.l.b16 %v3318
  %v3643 = vunpack.c.l.b16 %v3319
  %v3644 = vunpack.c.l.b16 %v3320
  %v3645 = vunpack.c.l.b16 %v3321
  %v3646 = vunpack.c.l.b16 %v3322
  %v3647 = vunpack.c.l.b16 %v3323
  %v3648 = vunpack.c.l.b16 %v3324
  %v3649 = vunpack.c.l.b16 %v3325
  %v3650 = vunpack.c.l.b16 %v3326
  %v3651 = vunpack.c.l.b16 %v3327
  %v3652 = vunpack.c.l.b16 %v3328
  %v3653 = vunpack.c.l.b16 %v3329
  %v3654 = vunpack.c.l.b16 %v3330
  %v3655 = vunpack.c.l.b16 %v3331
  %v3656 = vunpack.c.l.b16 %v3332
  %v3657 = vunpack.c.l.b16 %v3333
  %v3658 = vunpack.c.l.b16 %v3334
  %v3659 = vunpack.c.l.b16 %v3335
  %v3660 = vunpack.c.l.b16 %v3336
  %v3661 = vunpack.c.l.b16 %v3337
  %v3662 = vunpack.c.l.b16 %v3338
  %v3663 = vunpack.c.l.b16 %v3339
  %v3664 = vunpack.c.l.b16 %v3340
  %v3665 = vunpack.c.l.b16 %v3341
  %v3666 = vunpack.c.l.b16 %v3342
  %v3667 = vunpack.c.l.b16 %v3343
  %v3668 = vunpack.c.l.b16 %v3344
  %v3669 = vunpack.c.l.b16 %v3345
  %v3670 = vunpack.c.l.b16 %v3346
  %v3671 = vunpack.c.l.b16 %v3347
  %v3672 = vunpack.c.l.b16 %v3348
  %v3673 = vunpack.c.l.b16 %v3349
  %v3674 = vunpack.c.l.b16 %v3350
  %v3675 = vunpack.c.l.b16 %v3351
  %v3676 = vunpack.c.l.b16 %v3352
  %v3677 = vunpack.c.l.b16 %v3353
  %v3678 = vunpack.c.l.b16 %v3354
  %v3679 = vunpack.c.l.b16 %v3355
  %v3680 = vunpack.c.l.b16 %v3356
  %v3681 = vunpack.c.l.b16 %v3357
  %v3682 = vunpack.c.l.b16 %v3358
  %v3683 = vunpack.c.l.b16 %v3359
  %v3684 = vunpack.c.l.b16 %v3360
  %v3685 = vunpack.c.l.b16 %v3361
  %v3686 = vunpack.c.l.b16 %v3362
  %v3687 = vunpack.c.l.b16 %v3363
  %v3688 = vunpack.c.l.b16 %v3364
  %v3689 = vunpack.c.l.b16 %v3365
  %v3690 = vunpack.c.l.b16 %v3366
  %v3691 = vunpack.c.l.b16 %v3367
  %v3692 = vunpack.c.l.b16 %v3368
  %v3693 = vunpack.c.l.b16 %v3369
  %v3694 = vunpack.c.l.b16 %v3370
  %v3695 = vunpack.c.l.b16 %v3371
  %v3696 = vunpack.c.l.b16 %v3372
  %v3697 = vunpack.c.l.b16 %v3373
  %v3698 = vunpack.c.l.b16 %v3374
  %v3699 = vunpack.c.l.b16 %v3375
  %v3700 = vunpack.c.l.b16 %v3376
  %v3701 = vunpack.c.l.b16 %v3377
  %v3702 = vunpack.c.l.b16 %v3378
  %v3703 = vunpack.c.l.b16 %v3379
  %v3704 = vunpack.c.l.b16 %v3380
  %v3705 = vunpack.c.l.b16 %v3381
  %v3706 = vunpack.c.l.b16 %v3382
  %v3707 = vunpack.c.l.b16 %v3383
  %v3708 = vpack.c.b16 %v3549, %v3548
  %v3709 = vpack.c.b16 %v3551, %v3550
  %v3710 = vpack.c.b16 %v3553, %v3552
  %v3711 = vpack.c.b16 %v3555, %v3554
  %v3712 = vpack.c.b16 %v3557, %v3556
  %v3713 = vpack.c.b16 %v3559, %v3558
  %v3714 = vpack.c.b16 %v3561, %v3560
  %v3715 = vpack.c.b16 %v3563, %v3562
  %v3716 = vpack.c.b16 %v3565, %v3564
  %v3717 = vpack.c.b16 %v3567, %v3566
  %v3718 = vpack.c.b16 %v3569, %v3568
  %v3719 = vpack.c.b16 %v3571, %v3570
  %v3720 = vpack.c.b16 %v3573, %v3572
  %v3721 = vpack.c.b16 %v3575, %v3574
  %v3722 = vpack.c.b16 %v3577, %v3576
  %v3723 = vpack.c.b16 %v3579, %v3578
  %v3724 = vpack.c.b16 %v3581, %v3580
  %v3725 = vpack.c.b16 %v3583, %v3582
  %v3726 = vpack.c.b16 %v3585, %v3584
  %v3727 = vpack.c.b16 %v3587, %v3586
  %v3728 = vpack.c.b16 %v3589, %v3588
  %v3729 = vpack.c.b16 %v3591, %v3590
  %v3730 = vpack.c.b16 %v3593, %v3592
  %v3731 = vpack.c.b16 %v3595, %v3594
  %v3732 = vpack.c.b16 %v3597, %v3596
  %v3733 = vpack.c.b16 %v3599, %v3598
  %v3734 = vpack.c.b16 %v3601, %v3600
  %v3735 = vpack.c.b16 %v3603, %v3602
  %v3736 = vpack.c.b16 %v3605, %v3604
  %v3737 = vpack.c.b16 %v3607, %v3606
  %v3738 = vpack.c.b16 %v3609, %v3608
  %v3739 = vpack.c.b16 %v3611, %v3610
  %v3740 = vpack.c.b16 %v3613, %v3612
  %v3741 = vpack.c.b16 %v3615, %v3614
  %v3742 = vpack.c.b16 %v3617, %v3616
  %v3743 = vpack.c.b16 %v3619, %v3618
  %v3744 = vpack.c.b16 %v3621, %v3620
  %v3745 = vpack.c.b16 %v3623, %v3622
  %v3746 = vpack.c.b16 %v3625, %v3624
  %v3747 = vpack.c.b16 %v3627, %v3626
  %v3748 = vpack.c.b16 %v3629, %v3628
  %v3749 = vpack.c.b16 %v3631, %v3630
  %v3750 = vpack.c.b16 %v3633, %v3632
  %v3751 = vpack.c.b16 %v3635, %v3634
  %v3752 = vpack.c.b16 %v3637, %v3636
  %v3753 = vpack.c.b16 %v3639, %v3638
  %v3754 = vpack.c.b16 %v3641, %v3640
  %v3755 = vpack.c.b16 %v3643, %v3642
  %v3756 = vpack.c.b16 %v3645, %v3644
  %v3757 = vpack.c.b16 %v3647, %v3646
  %v3758 = vpack.c.b16 %v3649, %v3648
  %v3759 = vpack.c.b16 %v3651, %v3650
  %v3760 = vpack.c.b16 %v3653, %v3652
  %v3761 = vpack.c.b16 %v3655, %v3654
  %v3762 = vpack.c.b16 %v3657, %v3656
  %v3763 = vpack.c.b16 %v3659, %v3658
  %v3764 = vpack.c.b16 %v3661, %v3660
  %v3765 = vpack.c.b16 %v3663, %v3662
  %v3766 = vpack.c.b16 %v3665, %v3664
  %v3767 = vpack.c.b16 %v3667, %v3666
  %v3768 = vpack.c.b16 %v3669, %v3668
  %v3769 = vpack.c.b16 %v3671, %v3670
  %v3770 = vpack.c.b16 %v3673, %v3672
  %v3771 = vpack.c.b16 %v3675, %v3674
  %v3772 = vpack.c.b16 %v3677, %v3676
  %v3773 = vpack.c.b16 %v3679, %v3678
  %v3774 = vpack.c.b16 %v3681, %v3680
  %v3775 = vpack.c.b16 %v3683, %v3682
  %v3776 = vpack.c.b16 %v3685, %v3684
  %v3777 = vpack.c.b16 %v3687, %v3686
  %v3778 = vpack.c.b16 %v3689, %v3688
  %v3779 = vpack.c.b16 %v3691, %v3690
  %v3780 = vpack.c.b16 %v3693, %v3692
  %v3781 = vpack.c.b16 %v3695, %v3694
  %v3782 = vpack.c.b16 %v3697, %v3696
  %v3783 = vpack.c.b16 %v3699, %v3698
  %v3784 = vpack.c.b16 %v3701, %v3700
  %v3785 = vpack.c.b16 %v3703, %v3702
  %v3786 = vpack.c.b16 %v3705, %v3704
  %v3787 = vpack.c.b16 %v3707, %v3706
  %3868 = vmatpush.bf16.msra.mxu0 %v3715
  %3869 = vmatpush.bf16.msra.mxu0 %v3714
  %3870 = vmatpush.bf16.msra.mxu0 %v3713
  %3871 = vmatpush.bf16.msra.mxu0 %v3712
  %3872 = vmatpush.bf16.msra.mxu0 %v3711
  %3873 = vmatpush.bf16.msra.mxu0 %v3710
  %3874 = vmatpush.bf16.msra.mxu0 %v3709
  %3875 = vmatpush.bf16.msra.mxu0 %v3708
  %3876 = vmatmul.bf16.gmra.mxu0 %v3214
  %v3877 = vpop.f32.mrf.mxu0
  %v3878 = vadd.f32 %v3386, %v3877
  %v3879 = vpop.f32.mrf.mxu0
  %v3880 = vadd.f32 %v3386, %v3879
  %3881 = vdwg.mxu0
  %3882 = vmatpush.bf16.msra.mxu0 %v3723
  %3883 = vmatpush.bf16.msra.mxu0 %v3722
  %3884 = vmatpush.bf16.msra.mxu0 %v3721
  %3885 = vmatpush.bf16.msra.mxu0 %v3720
  %3886 = vmatpush.bf16.msra.mxu0 %v3719
  %3887 = vmatpush.bf16.msra.mxu0 %v3718
  %3888 = vmatpush.bf16.msra.mxu0 %v3717
  %3889 = vmatpush.bf16.msra.mxu0 %v3716
  %3890 = vmatmul.bf16.gmra.mxu0 %v3215
  %v3891 = vpop.f32.mrf.mxu0
  %v3892 = vadd.f32 %v3878, %v3891
  %v3893 = vpop.f32.mrf.mxu0
  %v3894 = vadd.f32 %v3880, %v3893
  %3895 = vdwg.mxu0
  %3896 = vmatpush.bf16.msra.mxu0 %v3731
  %3897 = vmatpush.bf16.msra.mxu0 %v3730
  %3898 = vmatpush.bf16.msra.mxu0 %v3729
  %3899 = vmatpush.bf16.msra.mxu0 %v3728
  %3900 = vmatpush.bf16.msra.mxu0 %v3727
  %3901 = vmatpush.bf16.msra.mxu0 %v3726
  %3902 = vmatpush.bf16.msra.mxu0 %v3725
  %3903 = vmatpush.bf16.msra.mxu0 %v3724
  %3904 = vmatmul.bf16.gmra.mxu0 %v3216
  %v3905 = vpop.f32.mrf.mxu0
  %v3906 = vadd.f32 %v3892, %v3905
  %v3907 = vpop.f32.mrf.mxu0
  %v3908 = vadd.f32 %v3894, %v3907
  %3909 = vdwg.mxu0
  %3910 = vmatpush.bf16.msra.mxu0 %v3739
  %3911 = vmatpush.bf16.msra.mxu0 %v3738
  %3912 = vmatpush.bf16.msra.mxu0 %v3737
  %3913 = vmatpush.bf16.msra.mxu0 %v3736
  %3914 = vmatpush.bf16.msra.mxu0 %v3735
  %3915 = vmatpush.bf16.msra.mxu0 %v3734
  %3916 = vmatpush.bf16.msra.mxu0 %v3733
  %3917 = vmatpush.bf16.msra.mxu0 %v3732
  %3918 = vmatmul.bf16.gmra.mxu0 %v3217
  %v3919 = vpop.f32.mrf.mxu0
  %v3920 = vadd.f32 %v3906, %v3919
  %v3921 = vpop.f32.mrf.mxu0
  %v3922 = vadd.f32 %v3908, %v3921
  %3923 = vdwg.mxu0
  %3924 = vmatpush.bf16.msra.mxu0 %v3747
  %3925 = vmatpush.bf16.msra.mxu0 %v3746
  %3926 = vmatpush.bf16.msra.mxu0 %v3745
  %3927 = vmatpush.bf16.msra.mxu0 %v3744
  %3928 = vmatpush.bf16.msra.mxu0 %v3743
  %3929 = vmatpush.bf16.msra.mxu0 %v3742
  %3930 = vmatpush.bf16.msra.mxu0 %v3741
  %3931 = vmatpush.bf16.msra.mxu0 %v3740
  %3932 = vmatmul.bf16.gmra.mxu0 %v3218
  %v3933 = vpop.f32.mrf.mxu0
  %v3934 = vadd.f32 %v3920, %v3933
  %v3935 = vpop.f32.mrf.mxu0
  %v3936 = vadd.f32 %v3922, %v3935
  %3937 = vdwg.mxu0
  %3938 = vmatpush.bf16.msra.mxu0 %v3755
  %3939 = vmatpush.bf16.msra.mxu0 %v3754
  %3940 = vmatpush.bf16.msra.mxu0 %v3753
  %3941 = vmatpush.bf16.msra.mxu0 %v3752
  %3942 = vmatpush.bf16.msra.mxu0 %v3751
  %3943 = vmatpush.bf16.msra.mxu0 %v3750
  %3944 = vmatpush.bf16.msra.mxu0 %v3749
  %3945 = vmatpush.bf16.msra.mxu0 %v3748
  %3946 = vmatmul.bf16.gmra.mxu0 %v3219
  %v3947 = vpop.f32.mrf.mxu0
  %v3948 = vadd.f32 %v3934, %v3947
  %v3949 = vpop.f32.mrf.mxu0
  %v3950 = vadd.f32 %v3936, %v3949
  %3951 = vdwg.mxu0
  %3952 = vmatpush.bf16.msra.mxu0 %v3763
  %3953 = vmatpush.bf16.msra.mxu0 %v3762
  %3954 = vmatpush.bf16.msra.mxu0 %v3761
  %3955 = vmatpush.bf16.msra.mxu0 %v3760
  %3956 = vmatpush.bf16.msra.mxu0 %v3759
  %3957 = vmatpush.bf16.msra.mxu0 %v3758
  %3958 = vmatpush.bf16.msra.mxu0 %v3757
  %3959 = vmatpush.bf16.msra.mxu0 %v3756
  %3960 = vmatmul.bf16.gmra.mxu0 %v3220
  %v3961 = vpop.f32.mrf.mxu0
  %v3962 = vadd.f32 %v3948, %v3961
  %v3963 = vpop.f32.mrf.mxu0
  %v3964 = vadd.f32 %v3950, %v3963
  %3965 = vdwg.mxu0
  %3966 = vmatpush.bf16.msra.mxu0 %v3771
  %3967 = vmatpush.bf16.msra.mxu0 %v3770
  %3968 = vmatpush.bf16.msra.mxu0 %v3769
  %3969 = vmatpush.bf16.msra.mxu0 %v3768
  %3970 = vmatpush.bf16.msra.mxu0 %v3767
  %3971 = vmatpush.bf16.msra.mxu0 %v3766
  %3972 = vmatpush.bf16.msra.mxu0 %v3765
  %3973 = vmatpush.bf16.msra.mxu0 %v3764
  %3974 = vmatmul.bf16.gmra.mxu0 %v3221
  %v3975 = vpop.f32.mrf.mxu0
  %v3976 = vadd.f32 %v3962, %v3975
  %v3977 = vpop.f32.mrf.mxu0
  %v3978 = vadd.f32 %v3964, %v3977
  %3979 = vdwg.mxu0
  %3980 = vmatpush.bf16.msra.mxu0 %v3779
  %3981 = vmatpush.bf16.msra.mxu0 %v3778
  %3982 = vmatpush.bf16.msra.mxu0 %v3777
  %3983 = vmatpush.bf16.msra.mxu0 %v3776
  %3984 = vmatpush.bf16.msra.mxu0 %v3775
  %3985 = vmatpush.bf16.msra.mxu0 %v3774
  %3986 = vmatpush.bf16.msra.mxu0 %v3773
  %3987 = vmatpush.bf16.msra.mxu0 %v3772
  %3988 = vmatmul.bf16.gmra.mxu0 %v3222
  %v3989 = vpop.f32.mrf.mxu0
  %v3990 = vadd.f32 %v3976, %v3989
  %v3991 = vpop.f32.mrf.mxu0
  %v3992 = vadd.f32 %v3978, %v3991
  %3993 = vdwg.mxu0
  %3994 = vmatpush.bf16.msra.mxu0 %v3787
  %3995 = vmatpush.bf16.msra.mxu0 %v3786
  %3996 = vmatpush.bf16.msra.mxu0 %v3785
  %3997 = vmatpush.bf16.msra.mxu0 %v3784
  %3998 = vmatpush.bf16.msra.mxu0 %v3783
  %3999 = vmatpush.bf16.msra.mxu0 %v3782
  %4000 = vmatpush.bf16.msra.mxu0 %v3781
  %4001 = vmatpush.bf16.msra.mxu0 %v3780
  %4002 = vmatmul.bf16.gmra.mxu0 %v3223
  %v4003 = vpop.f32.mrf.mxu0
  %v4004 = vadd.f32 %v3990, %v4003
  %v4005 = vpop.f32.mrf.mxu0
  %v4006 = vadd.f32 %v3992, %v4005
  %4007 = vdwg.mxu0
  %v4008 = vmax.f32 %v4004, 0.0
  %v4009 = vmax.f32 %v4006, 0.0
  %v4010 = vpack.c.bf16 %v4009, %v4008
  %v4011 = vld [vmem:[%s5] sm:$0xf]
  %v4012 = vld [vmem:[%s5 + $0x4] sm:$0xf]
  %v4013 = vld [vmem:[%s5 + $0x8] sm:$0xf]
  %v4014 = vld [vmem:[%s5 + $0xc] sm:$0xf]
  %v4015 = vld [vmem:[%s5 + $0x10] sm:$0xf]
  %v4016 = vld [vmem:[%s5 + $0x14] sm:$0xf]
  %v4017 = vld [vmem:[%s5 + $0x18] sm:$0xf]
  %v4018 = vld [vmem:[%s5 + $0x1c] sm:$0xf]
  %v4019 = vld [vmem:[%s5 + $0x20] sm:$0xf]
  %v4020 = vld [vmem:[%s5 + $0x24] sm:$0xf]
  %v4021 = vld [vmem:[%s5 + $0x28] sm:$0xf]
  %v4022 = vld [vmem:[%s5 + $0x2c] sm:$0xf]
  %v4023 = vld [vmem:[%s5 + $0x30] sm:$0xf]
  %v4024 = vld [vmem:[%s5 + $0x34] sm:$0xf]
  %v4025 = vld [vmem:[%s5 + $0x38] sm:$0xf]
  %v4026 = vld [vmem:[%s5 + $0x3c] sm:$0xf]
  %v4027 = vld [vmem:[%s6] sm:$0x1]
  %v4029 = vperm.slane %v4027, 0
  %v4047 = vunpack.c.l.b16 %v4011
  %v4048 = vunpack.c.l.b16 %v4012
  %v4049 = vunpack.c.l.b16 %v4013
  %v4050 = vunpack.c.l.b16 %v4014
  %v4051 = vunpack.c.l.b16 %v4015
  %v4052 = vunpack.c.l.b16 %v4016
  %v4053 = vunpack.c.l.b16 %v4017
  %v4054 = vunpack.c.l.b16 %v4018
  %v4055 = vunpack.c.l.b16 %v4019
  %v4056 = vunpack.c.l.b16 %v4020
  %v4057 = vunpack.c.l.b16 %v4021
  %v4058 = vunpack.c.l.b16 %v4022
  %v4059 = vunpack.c.l.b16 %v4023
  %v4060 = vunpack.c.l.b16 %v4024
  %v4061 = vunpack.c.l.b16 %v4025
  %v4062 = vunpack.c.l.b16 %v4026
  %v4063 = vpack.c.b16 %v4048, %v4047
  %v4064 = vpack.c.b16 %v4050, %v4049
  %v4065 = vpack.c.b16 %v4052, %v4051
  %v4066 = vpack.c.b16 %v4054, %v4053
  %v4067 = vpack.c.b16 %v4056, %v4055
  %v4068 = vpack.c.b16 %v4058, %v4057
  %v4069 = vpack.c.b16 %v4060, %v4059
  %v4070 = vpack.c.b16 %v4062, %v4061
  %4079 = vmatpush.bf16.msra.mxu0 %v4070
  %4080 = vmatpush.bf16.msra.mxu0 %v4069
  %4081 = vmatpush.bf16.msra.mxu0 %v4068
  %4082 = vmatpush.bf16.msra.mxu0 %v4067
  %4083 = vmatpush.bf16.msra.mxu0 %v4066
  %4084 = vmatpush.bf16.msra.mxu0 %v4065
  %4085 = vmatpush.bf16.msra.mxu0 %v4064
  %4086 = vmatpush.bf16.msra.mxu0 %v4063
  %4087 = vmatmul.bf16.gmra.mxu0 %v4010
  %v4088 = vpop.f32.mrf.mxu0
  %v4089 = vadd.f32 %v4029, %v4088
  %v4090 = vpop.f32.mrf.mxu0
  %v4091 = vadd.f32 %v4029, %v4090
  %4092 = vdwg.mxu0
  %v4093 = vmax.f32 %v4089, 0.0
  %v4094 = vmax.f32 %v4091, 0.0
  %v4095 = vpack.c.bf16 %v4094, %v4093
  %v4096 = vld [vmem:[%s7] sm:$0xf]
  %v4097 = vld [vmem:[%s7 + $0x4] sm:$0xf]
  %v4098 = vld [vmem:[%s7 + $0x8] sm:$0xf]
  %v4099 = vld [vmem:[%s7 + $0xc] sm:$0xf]
  %v4100 = vld [vmem:[%s7 + $0x10] sm:$0xf]
  %v4101 = vld [vmem:[%s7 + $0x14] sm:$0xf]
  %v4102 = vld [vmem:[%s7 + $0x18] sm:$0xf]
  %v4103 = vld [vmem:[%s7 + $0x1c] sm:$0xf]
  %v4104 = vld [vmem:[%s7 + $0x20] sm:$0xf]
  %v4105 = vld [vmem:[%s7 + $0x24] sm:$0xf]
  %v4106 = vld [vmem:[%s7 + $0x28] sm:$0xf]
  %v4107 = vld [vmem:[%s7 + $0x2c] sm:$0xf]
  %v4108 = vld [vmem:[%s7 + $0x30] sm:$0xf]
  %v4109 = vld [vmem:[%s7 + $0x34] sm:$0xf]
  %v4110 = vld [vmem:[%s7 + $0x38] sm:$0xf]
  %v4111 = vld [vmem:[%s7 + $0x3c] sm:$0xf]
  %v4112 = vld [vmem:[%s8] sm:$0x1]
  %v4114 = vperm.slane %v4112, 0
  %v4132 = vunpack.c.l.b16 %v4096
  %v4133 = vunpack.c.l.b16 %v4097
  %v4134 = vunpack.c.l.b16 %v4098
  %v4135 = vunpack.c.l.b16 %v4099
  %v4136 = vunpack.c.l.b16 %v4100
  %v4137 = vunpack.c.l.b16 %v4101
  %v4138 = vunpack.c.l.b16 %v4102
  %v4139 = vunpack.c.l.b16 %v4103
  %v4140 = vunpack.c.l.b16 %v4104
  %v4141 = vunpack.c.l.b16 %v4105
  %v4142 = vunpack.c.l.b16 %v4106
  %v4143 = vunpack.c.l.b16 %v4107
  %v4144 = vunpack.c.l.b16 %v4108
  %v4145 = vunpack.c.l.b16 %v4109
  %v4146 = vunpack.c.l.b16 %v4110
  %v4147 = vunpack.c.l.b16 %v4111
  %v4148 = vpack.c.b16 %v4133, %v4132
  %v4149 = vpack.c.b16 %v4135, %v4134
  %v4150 = vpack.c.b16 %v4137, %v4136
  %v4151 = vpack.c.b16 %v4139, %v4138
  %v4152 = vpack.c.b16 %v4141, %v4140
  %v4153 = vpack.c.b16 %v4143, %v4142
  %v4154 = vpack.c.b16 %v4145, %v4144
  %v4155 = vpack.c.b16 %v4147, %v4146
  %4164 = vmatpush.bf16.msra.mxu0 %v4155
  %4165 = vmatpush.bf16.msra.mxu0 %v4154
  %4166 = vmatpush.bf16.msra.mxu0 %v4153
  %4167 = vmatpush.bf16.msra.mxu0 %v4152
  %4168 = vmatpush.bf16.msra.mxu0 %v4151
  %4169 = vmatpush.bf16.msra.mxu0 %v4150
  %4170 = vmatpush.bf16.msra.mxu0 %v4149
  %4171 = vmatpush.bf16.msra.mxu0 %v4148
  %4172 = vmatmul.bf16.gmra.mxu0 %v4095
  %v4173 = vpop.f32.mrf.mxu0
  %v4174 = vadd.f32 %v4114, %v4173
  %v4175 = vpop.f32.mrf.mxu0
  %v4176 = vadd.f32 %v4114, %v4175
  %4177 = vdwg.mxu0
  %v4178 = vmax.f32 %v4174, 0.0
  %v4179 = vmax.f32 %v4176, 0.0
  %v4180 = vpack.c.bf16 %v4179, %v4178
  %v4181 = vld [vmem:[%s9] sm:$0xf]
  %v4182 = vld [vmem:[%s9 + $0x4] sm:$0xf]
  %v4183 = vld [vmem:[%s9 + $0x8] sm:$0xf]
  %v4184 = vld [vmem:[%s9 + $0xc] sm:$0xf]
  %v4185 = vld [vmem:[%s9 + $0x10] sm:$0xf]
  %v4186 = vld [vmem:[%s9 + $0x14] sm:$0xf]
  %v4187 = vld [vmem:[%s9 + $0x18] sm:$0xf]
  %v4188 = vld [vmem:[%s9 + $0x1c] sm:$0xf]
  %v4189 = vld [vmem:[%s9 + $0x20] sm:$0xf]
  %v4190 = vld [vmem:[%s9 + $0x24] sm:$0xf]
  %v4191 = vld [vmem:[%s9 + $0x28] sm:$0xf]
  %v4192 = vld [vmem:[%s9 + $0x2c] sm:$0xf]
  %v4193 = vld [vmem:[%s9 + $0x30] sm:$0xf]
  %v4194 = vld [vmem:[%s9 + $0x34] sm:$0xf]
  %v4195 = vld [vmem:[%s9 + $0x38] sm:$0xf]
  %v4196 = vld [vmem:[%s9 + $0x3c] sm:$0xf]
  %v4197 = vld [vmem:[%s10] sm:$0x1]
  %v4199 = vperm.slane %v4197, 0
  %v4217 = vunpack.c.l.b16 %v4181
  %v4218 = vunpack.c.l.b16 %v4182
  %v4219 = vunpack.c.l.b16 %v4183
  %v4220 = vunpack.c.l.b16 %v4184
  %v4221 = vunpack.c.l.b16 %v4185
  %v4222 = vunpack.c.l.b16 %v4186
  %v4223 = vunpack.c.l.b16 %v4187
  %v4224 = vunpack.c.l.b16 %v4188
  %v4225 = vunpack.c.l.b16 %v4189
  %v4226 = vunpack.c.l.b16 %v4190
  %v4227 = vunpack.c.l.b16 %v4191
  %v4228 = vunpack.c.l.b16 %v4192
  %v4229 = vunpack.c.l.b16 %v4193
  %v4230 = vunpack.c.l.b16 %v4194
  %v4231 = vunpack.c.l.b16 %v4195
  %v4232 = vunpack.c.l.b16 %v4196
  %v4233 = vpack.c.b16 %v4218, %v4217
  %v4234 = vpack.c.b16 %v4220, %v4219
  %v4235 = vpack.c.b16 %v4222, %v4221
  %v4236 = vpack.c.b16 %v4224, %v4223
  %v4237 = vpack.c.b16 %v4226, %v4225
  %v4238 = vpack.c.b16 %v4228, %v4227
  %v4239 = vpack.c.b16 %v4230, %v4229
  %v4240 = vpack.c.b16 %v4232, %v4231
  %4249 = vmatpush.bf16.msra.mxu0 %v4240
  %4250 = vmatpush.bf16.msra.mxu0 %v4239
  %4251 = vmatpush.bf16.msra.mxu0 %v4238
  %4252 = vmatpush.bf16.msra.mxu0 %v4237
  %4253 = vmatpush.bf16.msra.mxu0 %v4236
  %4254 = vmatpush.bf16.msra.mxu0 %v4235
  %4255 = vmatpush.bf16.msra.mxu0 %v4234
  %4256 = vmatpush.bf16.msra.mxu0 %v4233
  %4257 = vmatmul.bf16.gmra.mxu0 %v4180
  %v4258 = vpop.f32.mrf.mxu0
  %v4259 = vadd.f32 %v4199, %v4258
  %v4260 = vpop.f32.mrf.mxu0
  %v4261 = vadd.f32 %v4199, %v4260
  %4262 = vdwg.mxu0
  %v4263 = vmul.f32 %v4259, 0.01
  %v4264 = vmul.f32 %v4261, 0.01
  %v4265 = vtanh.pop %v4263
  %v4266 = vtanh.pop %v4264
  %v4267 = vmul.f32 %v4265, 45.0
  %v4268 = vmul.f32 %v4266, 45.0
  %v4269 = vmax.f32 %v4267, 0.0
  %v4270 = vmax.f32 %v4268, 0.0
  %v4271 = vmin.f32 %v4269, 45.0
  %v4272 = vmin.f32 %v4270, 45.0
  %4273 = vst [vmem:[%s11] sm:$0xff] %v4271
  %4274 = vst [vmem:[%s11 + $0x8] sm:$0xff] %v4272
  // Predicated region
  $region46: #{cnn_forward.13} parent=0 // pred_check
    _
  $region47: #{cnn_forward.13} parent=0 // pred_check_branch
    %4276 = sbr.rel (0) target = $region49
  $region48: #{cnn_forward.13} parent=0 // pred_region
    _
  $region49: #{cnn_forward.13} parent=0 // pred_fallthru
    _
  // Predicated region
  $region50: #{cnn_forward.13} parent=0 // pred_check
    _
  $region51: #{cnn_forward.13} parent=0 // pred_check_branch
    %4278 = sbr.rel (0) target = $region53
  $region52: #{cnn_forward.13} parent=0 // pred_region
    _
  $region53: #{cnn_forward.13} parent=0 // pred_fallthru
    _

</llo_original>
